<compile_context>
chip_gen: v5e
topology: v5e:2x2
jax: 0.10.0
libtpu: 0.0.40
codegen_flags: <defaults>
</compile_context>

<pallas_src>
import functools

import jax
import jax.numpy as jnp
from jax import lax
from jax.experimental import pallas as pl
from jax.experimental.pallas import tpu as pltpu

HALO = 4  # two stacked 3x3 convs need a 2-row halo on each side of a row tile


# ----------------------------------------------------------------------------
# Kernel
# ----------------------------------------------------------------------------
def _conv3x3_bn_relu(src, n_rows, n_cols, cin, w, shift):
    """3x3 'valid' conv + folded-BN shift + ReLU via 9 accumulating matmuls.

    src:   (n_rows + 2, >= n_cols + 2, cin) value in the compute dtype (bf16).
    w:     (9, cin, cch) BN-scale-folded weights (bf16), tap order (kh, kw).
    shift: (1, cch) f32 folded BN shift.
    Returns (n_rows * n_cols, cch) f32 activations.

    No im2col matrix / lane concatenation is materialized: each tap is a
    K=cin MXU matmul over a contiguous row slab, accumulated in f32.
    """
    acc = None
    for dh in range(3):
        rows = src[dh:dh + n_rows]                        # contiguous row slab
        for dw in range(3):
            lhs = rows[:, dw:dw + n_cols, :].reshape(n_rows * n_cols, cin)
            p = jnp.dot(lhs, w[dh * 3 + dw],
                        preferred_element_type=jnp.float32)
            acc = p if acc is None else acc + p
    return jnp.maximum(acc + shift, 0.0)


def _double_conv_kernel(x_ref, xh_ref, w1_ref, b1_ref, w2_ref, b2_ref,
                        out_ref, y1_ref, *, TH, W, Cin, Cmid, Cout):
    xm = x_ref[0]           # (TH, W + 4, Cin) main row tile of padded input
    xh = xh_ref[0]          # (4,  W + 4, Cin) halo rows below the tile
    w1 = w1_ref[...]
    b1 = b1_ref[...]

    # ---- stage 1: conv3x3 (BN scale folded into w1) + shift + ReLU ---------
    # Computed on an extended (TH+2, W+2) window so the second conv's
    # ReflectionPad(1) halo lives entirely in the VMEM scratch.  The first
    # TH-2 output rows only need the main tile; the last 4 rows also need the
    # halo, via a tiny 6-row slab (no full-tile concat per grid step).
    head = _conv3x3_bn_relu(xm, TH - 2, W + 2, Cin, w1, b1)
    tail_src = jnp.concatenate([xm[TH - 2:TH], xh], axis=0)     # (6, W+4, Cin)
    tail = _conv3x3_bn_relu(tail_src, 4, W + 2, Cin, w1, b1)
    y1_ref[0:TH - 2] = head.reshape(TH - 2, W + 2, Cmid).astype(y1_ref.dtype)
    y1_ref[TH - 2:TH + 2] = tail.reshape(4, W + 2, Cmid).astype(y1_ref.dtype)

    # ReflectionPad2d(1) of the *intermediate* activation, done in VMEM: the
    # extended border rows/cols computed above (from the pad-2 input) are not
    # the reflected values, so overwrite them with the true reflections.
    # Columns first, then rows, so the corners resolve correctly.
    y1_ref[:, 0:1, :] = y1_ref[:, 2:3, :]
    y1_ref[:, W + 1:W + 2, :] = y1_ref[:, W - 1:W, :]

    i = pl.program_id(1)

    @pl.when(i == 0)
    def _():
        y1_ref[0:1] = y1_ref[2:3]

    @pl.when(i == pl.num_programs(1) - 1)
    def _():
        y1_ref[TH + 1:TH + 2] = y1_ref[TH - 1:TH]

    # ---- stage 2: conv3x3 (BN scale folded into w2) + shift + ReLU ---------
    y2 = _conv3x3_bn_relu(y1_ref[...], TH, W, Cmid, w2_ref[...], b2_ref[...])
    out_ref[0] = y2.reshape(TH, W, Cout).astype(out_ref.dtype)


# ----------------------------------------------------------------------------
# VMEM budgeting / tiling
# ----------------------------------------------------------------------------
def _vmem_budget():
    """Generation-aware working-set budget and scoped VMEM limit (bytes)."""
    try:
        cap = int(pltpu.get_tpu_info().vmem_capacity_bytes)
    except Exception:
        cap = 64 * 1024 * 1024          # conservative (v7x-sized) fallback
    limit = min(int(cap * 0.75), 100 * 1024 * 1024)
    budget = min(int(cap * 0.55), 72 * 1024 * 1024)
    return budget, limit


def _pick_row_tile(N, H, W, Cin, Cmid, Cout, act_bytes, out_bytes, budget):
    """Largest multiple-of-4 divisor of H whose working set fits the budget."""
    def cost(th):
        inp = 2 * th * (W + 4) * Cin * act_bytes          # double-buffered main tile
        halo = 2 * HALO * (W + 4) * Cin * act_bytes       # double-buffered halo tile
        outp = 2 * th * W * Cout * out_bytes              # double-buffered output tile
        y1 = (th + 2) * (W + 2) * Cmid * act_bytes        # bf16 intermediate scratch
        acc1 = (th + 2) * (W + 2) * Cmid * 4               # f32 stage-1 accumulator
        acc2 = th * W * Cout * 4                           # f32 stage-2 accumulator
        lhs = 2 * (th + 2) * (W + 2) * max(Cin, Cmid) * act_bytes  # operand temps
        wts = 9 * (Cin * Cmid + Cmid * Cout) * act_bytes + 4 * (Cmid + Cout)
        return int(1.25 * (inp + halo + outp + y1 + acc1 + acc2 + lhs + wts))

    cands = [d for d in range(4, H + 1, 4) if H % d == 0]
    if not cands:
        # TODO(synk): support H not divisible by 4 (ragged last row tile).
        raise ValueError(f"H={H} must be a multiple of 4")
    fitting = [d for d in cands if cost(d) <= budget]
    if not fitting:
        raise ValueError(
            f"DoubleConvBlock row tile does not fit the VMEM budget: even "
            f"TH=4 needs {cost(4)} bytes > {budget}; reduce W/channels.")
    th = max(fitting)
    # v7x shards "parallel" grid axes across its 2 TensorCores: avoid an
    # effective grid of a single step when a 2-way row split also fits.
    if N * (H // th) < 2:
        halved = [d for d in fitting if H // d >= 2]
        if halved:
            th = max(halved)
    return th


# ----------------------------------------------------------------------------
# Wrapper
# ----------------------------------------------------------------------------
def prepare_kernel_params(raw, eps=1e-5, compute_dtype=jnp.bfloat16):
    """Fold inference-mode BatchNorm into the conv weights + a shift vector."""
    def fold(w_oihw, bn):
        gamma, beta, mean, var = bn
        scale = gamma * lax.rsqrt(var + eps)
        w = jnp.transpose(w_oihw, (2, 3, 1, 0)) * scale[None, None, None, :]
        cin, cout = w.shape[2], w.shape[3]
        # Tap order (kh, kw) matches the per-tap loop order in the kernel.
        return (w.reshape(9, cin, cout).astype(compute_dtype),
                (beta - mean * scale).reshape(1, cout).astype(jnp.float32))

    w1mat, shift1 = fold(raw["w1"], raw["bn1"])
    w2mat, shift2 = fold(raw["w2"], raw["bn2"])
    return {"w1mat": w1mat, "shift1": shift1, "w2mat": w2mat, "shift2": shift2}


def double_conv_block(x_nchw, params, *, row_tile=None):
    """DoubleConvBlock.forward — input/output in PyTorch NCHW layout."""
    N, Cin, H, W = x_nchw.shape
    w1, b1 = params["w1mat"], params["shift1"]
    w2, b2 = params["w2mat"], params["shift2"]
    Cmid, Cout = w1.shape[2], w2.shape[2]
    assert w1.shape == (9, Cin, Cmid) and w2.shape == (9, Cmid, Cout)
    assert H >= 3 and W >= 3, "reflection padding needs spatial dims >= 3"
    cdt = w1.dtype                           # compute dtype (bf16 by default)

    # Single wrapper pre-pass: NCHW -> NHWC, reflect-pad by 2 (covers the halo
    # of both conv stages; stage 2's pad is done in VMEM), cast to bf16.
    x = jnp.transpose(x_nchw, (0, 2, 3, 1))
    xp = jnp.pad(x, ((0, 0), (2, 2), (2, 2), (0, 0)), mode="reflect").astype(cdt)

    budget, vmem_limit = _vmem_budget()
    act_bytes = jnp.dtype(cdt).itemsize
    out_bytes = jnp.dtype(x_nchw.dtype).itemsize
    if row_tile is None:
        TH = _pick_row_tile(N, H, W, Cin, Cmid, Cout, act_bytes, out_bytes, budget)
    else:
        TH = row_tile
    assert TH >= 4 and TH % 4 == 0 and H % TH == 0, (H, TH)
    nH = H // TH

    kernel = functools.partial(_double_conv_kernel, TH=TH, W=W,
                               Cin=Cin, Cmid=Cmid, Cout=Cout)

    out_nhwc = pl.pallas_call(
        kernel,
        out_shape=jax.ShapeDtypeStruct((N, H, W, Cout), x_nchw.dtype),
        grid=(N, nH),
        in_specs=[
            # main row tile of the padded input: padded rows [i*TH, i*TH+TH)
            pl.BlockSpec((1, TH, W + 4, Cin), lambda n, i: (n, i, 0, 0)),
            # 4-row halo: padded rows [(i+1)*TH, (i+1)*TH + 4)
            pl.BlockSpec((1, HALO, W + 4, Cin),
                         lambda n, i: (n, (i + 1) * (TH // HALO), 0, 0)),
            # weights / shifts stay resident in VMEM (constant block index)
            pl.BlockSpec((9, Cin, Cmid), lambda n, i: (0, 0, 0)),
            pl.BlockSpec((1, Cmid), lambda n, i: (0, 0)),
            pl.BlockSpec((9, Cmid, Cout), lambda n, i: (0, 0, 0)),
            pl.BlockSpec((1, Cout), lambda n, i: (0, 0)),
        ],
        out_specs=pl.BlockSpec((1, TH, W, Cout), lambda n, i: (n, i, 0, 0)),
        scratch_shapes=[pltpu.VMEM((TH + 2, W + 2, Cmid), cdt)],
        compiler_params=pltpu.CompilerParams(
            dimension_semantics=("parallel", "parallel"),
            vmem_limit_bytes=vmem_limit,
        ),
    )(xp, xp, w1, b1, w2, b2)

    return jnp.transpose(out_nhwc, (0, 3, 1, 2))  # NHWC -> NCHW


# ----------------------------------------------------------------------------
# Params + pure-JAX reference (PyTorch-faithful, inference-mode BN)
# ----------------------------------------------------------------------------
def init_params(key, ch_in, ch_out, ch_mid=None):
    if ch_mid is None:
        ch_mid = ch_out
    ks = jax.random.split(key, 10)

    def bn(k0, k1, k2, k3, c):
        return (1.0 + 0.1 * jax.random.normal(k0, (c,), jnp.float32),          # gamma
                0.1 * jax.random.normal(k1, (c,), jnp.float32),                # beta
                0.1 * jax.random.normal(k2, (c,), jnp.float32),                # running_mean
                1.0 + 0.1 * jnp.abs(jax.random.normal(k3, (c,), jnp.float32)))  # running_var

    return {
        "w1": 0.1 * jax.random.normal(ks[0], (ch_mid, ch_in, 3, 3), jnp.float32),
        "bn1": bn(ks[1], ks[2], ks[3], ks[4], ch_mid),
        "w2": 0.1 * jax.random.normal(ks[5], (ch_out, ch_mid, 3, 3), jnp.float32),
        "bn2": bn(ks[6], ks[7], ks[8], ks[9], ch_out),
    }


def reference_forward(x_nchw, raw, eps=1e-5):
    """ReflectionPad -> Conv -> BN(running stats) -> ReLU, twice (XLA conv)."""
    def stage(x, w_oihw, bn):
        gamma, beta, mean, var = bn
        xpad = jnp.pad(x, ((0, 0), (0, 0), (1, 1), (1, 1)), mode="reflect")
        y = lax.conv_general_dilated(
            xpad, w_oihw, window_strides=(1, 1), padding="VALID",
            dimension_numbers=("NCHW", "OIHW", "NCHW"),
            precision=lax.Precision.HIGHEST)
        scale = (gamma * lax.rsqrt(var + eps))[None, :, None, None]
        y = (y - mean[None, :, None, None]) * scale + beta[None, :, None, None]
        return jnp.maximum(y, 0.0)

    x = stage(x_nchw, raw["w1"], raw["bn1"])
    x = stage(x, raw["w2"], raw["bn2"])
    return x


# ----------------------------------------------------------------------------
if __name__ == "__main__":
    key = jax.random.PRNGKey(0)
    k_x, k_p = jax.random.split(key)

    B, CH_IN, CH_OUT, HW = 2, 4, 8, 16
    x = jax.random.normal(k_x, (B, CH_IN, HW, HW), jnp.float32)  # NCHW
    raw = init_params(k_p, CH_IN, CH_OUT)
    kparams = prepare_kernel_params(raw)

    # Default tiling (auto-picked row tile) ...
    out = jax.block_until_ready(
        jax.jit(lambda a: double_conv_block(a, kparams))(x))
    # ... plus explicit multi-tile runs that exercise the halo BlockSpec and
    # the boundary reflection fix-ups across row tiles.
    out_t8 = jax.block_until_ready(
        jax.jit(lambda a: double_conv_block(a, kparams, row_tile=8))(x))
    out_t4 = jax.block_until_ready(
        jax.jit(lambda a: double_conv_block(a, kparams, row_tile=4))(x))

    ref = jax.block_until_ready(reference_forward(x, raw))

    assert out.shape == (B, CH_OUT, HW, HW), out.shape
    # bf16 MXU operands vs. an f32 HIGHEST-precision reference -> loose tol.
    for o in (out, out_t8, out_t4):
        assert jnp.allclose(o, ref, atol=5e-2, rtol=5e-2), \
            float(jnp.max(jnp.abs(o - ref)))
    print("KERNEL_OK")
</pallas_src>

<mosaic_0001>
module attributes {stable_mosaic.version = 11 : i64} {
  func.func @_double_conv_kernel(%arg0: i32, %arg1: i32, %arg2: memref<1x16x20x4xbf16, #tpu.memory_space<vmem>>, %arg3: memref<1x4x20x4xbf16, #tpu.memory_space<vmem>>, %arg4: memref<9x4x8xbf16, #tpu.memory_space<vmem>>, %arg5: memref<1x8xf32, #tpu.memory_space<vmem>>, %arg6: memref<9x8x8xbf16, #tpu.memory_space<vmem>>, %arg7: memref<1x8xf32, #tpu.memory_space<vmem>>, %arg8: memref<1x16x16x8xf32, #tpu.memory_space<vmem>>, %arg9: memref<18x18x8xbf16, #tpu.memory_space<vmem>>) attributes {dimension_semantics = [#tpu.dimension_semantics<parallel>, #tpu.dimension_semantics<parallel>], iteration_bounds = array<i64: 2, 1>, scalar_prefetch = 0 : i64, scratch_operands = 1 : i64, tpu.core_type = #tpu.core_type<tc>, window_params = [{transform_indices = @transform_0, window_bounds = array<i64: 1, 16, 20, 4>}, {transform_indices = @transform_1, window_bounds = array<i64: 1, 4, 20, 4>}, {pipeline_mode = #tpu.pipeline_mode<synchronous>, transform_indices = @transform_2, window_bounds = array<i64: 9, 4, 8>}, {pipeline_mode = #tpu.pipeline_mode<synchronous>, transform_indices = @transform_3, window_bounds = array<i64: 1, 8>}, {pipeline_mode = #tpu.pipeline_mode<synchronous>, transform_indices = @transform_4, window_bounds = array<i64: 9, 8, 8>}, {pipeline_mode = #tpu.pipeline_mode<synchronous>, transform_indices = @transform_5, window_bounds = array<i64: 1, 8>}, {transform_indices = @transform_6, window_bounds = array<i64: 1, 16, 16, 8>}]} {
    %c0 = arith.constant 0 : index
    %c0_0 = arith.constant 0 : index
    %c0_1 = arith.constant 0 : index
    %c0_2 = arith.constant 0 : index
    %0 = vector.load %arg2[%c0, %c0_0, %c0_1, %c0_2] : memref<1x16x20x4xbf16, #tpu.memory_space<vmem>>, vector<1x16x20x4xbf16>
    %1 = vector.shape_cast %0 : vector<1x16x20x4xbf16> to vector<16x20x4xbf16>
    %c0_3 = arith.constant 0 : index
    %c0_4 = arith.constant 0 : index
    %c0_5 = arith.constant 0 : index
    %c0_6 = arith.constant 0 : index
    %2 = vector.load %arg3[%c0_3, %c0_4, %c0_5, %c0_6] : memref<1x4x20x4xbf16, #tpu.memory_space<vmem>>, vector<1x4x20x4xbf16>
    %3 = vector.shape_cast %2 : vector<1x4x20x4xbf16> to vector<4x20x4xbf16>
    %c0_7 = arith.constant 0 : index
    %c0_8 = arith.constant 0 : index
    %c0_9 = arith.constant 0 : index
    %4 = vector.load %arg4[%c0_7, %c0_8, %c0_9] : memref<9x4x8xbf16, #tpu.memory_space<vmem>>, vector<9x4x8xbf16>
    %c0_10 = arith.constant 0 : index
    %c0_11 = arith.constant 0 : index
    %5 = vector.load %arg5[%c0_10, %c0_11] : memref<1x8xf32, #tpu.memory_space<vmem>>, vector<1x8xf32>
    %6 = vector.extract_strided_slice %1 {offsets = [0, 0, 0], sizes = [14, 20, 4], strides = [1, 1, 1]} : vector<16x20x4xbf16> to vector<14x20x4xbf16>
    %7 = vector.extract_strided_slice %6 {offsets = [0, 0, 0], sizes = [14, 18, 4], strides = [1, 1, 1]} : vector<14x20x4xbf16> to vector<14x18x4xbf16>
    %8 = vector.shape_cast %7 : vector<14x18x4xbf16> to vector<252x4xbf16>
    %9 = vector.extract_strided_slice %4 {offsets = [0, 0, 0], sizes = [1, 4, 8], strides = [1, 1, 1]} : vector<9x4x8xbf16> to vector<1x4x8xbf16>
    %10 = vector.shape_cast %9 : vector<1x4x8xbf16> to vector<4x8xbf16>
    %cst = arith.constant dense<0.000000e+00> : vector<252x8xf32>
    %11 = tpu.matmul %8, %10, %cst {dimension_numbers = #tpu.dot_dimension_numbers<[1], [0], [0], [1], [0, 0, 1, 1], [], []>} : vector<252x4xbf16>, vector<4x8xbf16>, vector<252x8xf32> -> vector<252x8xf32>
    %12 = vector.extract_strided_slice %6 {offsets = [0, 1, 0], sizes = [14, 18, 4], strides = [1, 1, 1]} : vector<14x20x4xbf16> to vector<14x18x4xbf16>
    %13 = vector.shape_cast %12 : vector<14x18x4xbf16> to vector<252x4xbf16>
    %14 = vector.extract_strided_slice %4 {offsets = [1, 0, 0], sizes = [1, 4, 8], strides = [1, 1, 1]} : vector<9x4x8xbf16> to vector<1x4x8xbf16>
    %15 = vector.shape_cast %14 : vector<1x4x8xbf16> to vector<4x8xbf16>
    %cst_12 = arith.constant dense<0.000000e+00> : vector<252x8xf32>
    %16 = tpu.matmul %13, %15, %cst_12 {dimension_numbers = #tpu.dot_dimension_numbers<[1], [0], [0], [1], [0, 0, 1, 1], [], []>} : vector<252x4xbf16>, vector<4x8xbf16>, vector<252x8xf32> -> vector<252x8xf32>
    %17 = arith.addf %11, %16 : vector<252x8xf32>
    %18 = vector.extract_strided_slice %6 {offsets = [0, 2, 0], sizes = [14, 18, 4], strides = [1, 1, 1]} : vector<14x20x4xbf16> to vector<14x18x4xbf16>
    %19 = vector.shape_cast %18 : vector<14x18x4xbf16> to vector<252x4xbf16>
    %20 = vector.extract_strided_slice %4 {offsets = [2, 0, 0], sizes = [1, 4, 8], strides = [1, 1, 1]} : vector<9x4x8xbf16> to vector<1x4x8xbf16>
    %21 = vector.shape_cast %20 : vector<1x4x8xbf16> to vector<4x8xbf16>
    %cst_13 = arith.constant dense<0.000000e+00> : vector<252x8xf32>
    %22 = tpu.matmul %19, %21, %cst_13 {dimension_numbers = #tpu.dot_dimension_numbers<[1], [0], [0], [1], [0, 0, 1, 1], [], []>} : vector<252x4xbf16>, vector<4x8xbf16>, vector<252x8xf32> -> vector<252x8xf32>
    %23 = arith.addf %17, %22 : vector<252x8xf32>
    %24 = vector.extract_strided_slice %1 {offsets = [1, 0, 0], sizes = [14, 20, 4], strides = [1, 1, 1]} : vector<16x20x4xbf16> to vector<14x20x4xbf16>
    %25 = vector.extract_strided_slice %24 {offsets = [0, 0, 0], sizes = [14, 18, 4], strides = [1, 1, 1]} : vector<14x20x4xbf16> to vector<14x18x4xbf16>
    %26 = vector.shape_cast %25 : vector<14x18x4xbf16> to vector<252x4xbf16>
    %27 = vector.extract_strided_slice %4 {offsets = [3, 0, 0], sizes = [1, 4, 8], strides = [1, 1, 1]} : vector<9x4x8xbf16> to vector<1x4x8xbf16>
    %28 = vector.shape_cast %27 : vector<1x4x8xbf16> to vector<4x8xbf16>
    %cst_14 = arith.constant dense<0.000000e+00> : vector<252x8xf32>
    %29 = tpu.matmul %26, %28, %cst_14 {dimension_numbers = #tpu.dot_dimension_numbers<[1], [0], [0], [1], [0, 0, 1, 1], [], []>} : vector<252x4xbf16>, vector<4x8xbf16>, vector<252x8xf32> -> vector<252x8xf32>
    %30 = arith.addf %23, %29 : vector<252x8xf32>
    %31 = vector.extract_strided_slice %24 {offsets = [0, 1, 0], sizes = [14, 18, 4], strides = [1, 1, 1]} : vector<14x20x4xbf16> to vector<14x18x4xbf16>
    %32 = vector.shape_cast %31 : vector<14x18x4xbf16> to vector<252x4xbf16>
    %33 = vector.extract_strided_slice %4 {offsets = [4, 0, 0], sizes = [1, 4, 8], strides = [1, 1, 1]} : vector<9x4x8xbf16> to vector<1x4x8xbf16>
    %34 = vector.shape_cast %33 : vector<1x4x8xbf16> to vector<4x8xbf16>
    %cst_15 = arith.constant dense<0.000000e+00> : vector<252x8xf32>
    %35 = tpu.matmul %32, %34, %cst_15 {dimension_numbers = #tpu.dot_dimension_numbers<[1], [0], [0], [1], [0, 0, 1, 1], [], []>} : vector<252x4xbf16>, vector<4x8xbf16>, vector<252x8xf32> -> vector<252x8xf32>
    %36 = arith.addf %30, %35 : vector<252x8xf32>
    %37 = vector.extract_strided_slice %24 {offsets = [0, 2, 0], sizes = [14, 18, 4], strides = [1, 1, 1]} : vector<14x20x4xbf16> to vector<14x18x4xbf16>
    %38 = vector.shape_cast %37 : vector<14x18x4xbf16> to vector<252x4xbf16>
    %39 = vector.extract_strided_slice %4 {offsets = [5, 0, 0], sizes = [1, 4, 8], strides = [1, 1, 1]} : vector<9x4x8xbf16> to vector<1x4x8xbf16>
    %40 = vector.shape_cast %39 : vector<1x4x8xbf16> to vector<4x8xbf16>
    %cst_16 = arith.constant dense<0.000000e+00> : vector<252x8xf32>
    %41 = tpu.matmul %38, %40, %cst_16 {dimension_numbers = #tpu.dot_dimension_numbers<[1], [0], [0], [1], [0, 0, 1, 1], [], []>} : vector<252x4xbf16>, vector<4x8xbf16>, vector<252x8xf32> -> vector<252x8xf32>
    %42 = arith.addf %36, %41 : vector<252x8xf32>
    %43 = vector.extract_strided_slice %1 {offsets = [2, 0, 0], sizes = [14, 20, 4], strides = [1, 1, 1]} : vector<16x20x4xbf16> to vector<14x20x4xbf16>
    %44 = vector.extract_strided_slice %43 {offsets = [0, 0, 0], sizes = [14, 18, 4], strides = [1, 1, 1]} : vector<14x20x4xbf16> to vector<14x18x4xbf16>
    %45 = vector.shape_cast %44 : vector<14x18x4xbf16> to vector<252x4xbf16>
    %46 = vector.extract_strided_slice %4 {offsets = [6, 0, 0], sizes = [1, 4, 8], strides = [1, 1, 1]} : vector<9x4x8xbf16> to vector<1x4x8xbf16>
    %47 = vector.shape_cast %46 : vector<1x4x8xbf16> to vector<4x8xbf16>
    %cst_17 = arith.constant dense<0.000000e+00> : vector<252x8xf32>
    %48 = tpu.matmul %45, %47, %cst_17 {dimension_numbers = #tpu.dot_dimension_numbers<[1], [0], [0], [1], [0, 0, 1, 1], [], []>} : vector<252x4xbf16>, vector<4x8xbf16>, vector<252x8xf32> -> vector<252x8xf32>
    %49 = arith.addf %42, %48 : vector<252x8xf32>
    %50 = vector.extract_strided_slice %43 {offsets = [0, 1, 0], sizes = [14, 18, 4], strides = [1, 1, 1]} : vector<14x20x4xbf16> to vector<14x18x4xbf16>
    %51 = vector.shape_cast %50 : vector<14x18x4xbf16> to vector<252x4xbf16>
    %52 = vector.extract_strided_slice %4 {offsets = [7, 0, 0], sizes = [1, 4, 8], strides = [1, 1, 1]} : vector<9x4x8xbf16> to vector<1x4x8xbf16>
    %53 = vector.shape_cast %52 : vector<1x4x8xbf16> to vector<4x8xbf16>
    %cst_18 = arith.constant dense<0.000000e+00> : vector<252x8xf32>
    %54 = tpu.matmul %51, %53, %cst_18 {dimension_numbers = #tpu.dot_dimension_numbers<[1], [0], [0], [1], [0, 0, 1, 1], [], []>} : vector<252x4xbf16>, vector<4x8xbf16>, vector<252x8xf32> -> vector<252x8xf32>
    %55 = arith.addf %49, %54 : vector<252x8xf32>
    %56 = vector.extract_strided_slice %43 {offsets = [0, 2, 0], sizes = [14, 18, 4], strides = [1, 1, 1]} : vector<14x20x4xbf16> to vector<14x18x4xbf16>
    %57 = vector.shape_cast %56 : vector<14x18x4xbf16> to vector<252x4xbf16>
    %58 = vector.extract_strided_slice %4 {offsets = [8, 0, 0], sizes = [1, 4, 8], strides = [1, 1, 1]} : vector<9x4x8xbf16> to vector<1x4x8xbf16>
    %59 = vector.shape_cast %58 : vector<1x4x8xbf16> to vector<4x8xbf16>
    %cst_19 = arith.constant dense<0.000000e+00> : vector<252x8xf32>
    %60 = tpu.matmul %57, %59, %cst_19 {dimension_numbers = #tpu.dot_dimension_numbers<[1], [0], [0], [1], [0, 0, 1, 1], [], []>} : vector<252x4xbf16>, vector<4x8xbf16>, vector<252x8xf32> -> vector<252x8xf32>
    %61 = arith.addf %55, %60 : vector<252x8xf32>
    %62 = vector.broadcast %5 : vector<1x8xf32> to vector<252x8xf32>
    %63 = arith.addf %61, %62 : vector<252x8xf32>
    %cst_20 = arith.constant 0.000000e+00 : f32
    %64 = vector.broadcast %cst_20 : f32 to vector<252x8xf32>
    %65 = arith.maximumf %63, %64 : vector<252x8xf32>
    %66 = vector.extract_strided_slice %1 {offsets = [14, 0, 0], sizes = [2, 20, 4], strides = [1, 1, 1]} : vector<16x20x4xbf16> to vector<2x20x4xbf16>
    %67 = tpu.concatenate %66, %3 in 0 : vector<2x20x4xbf16>, vector<4x20x4xbf16> -> vector<6x20x4xbf16>
    %68 = vector.extract_strided_slice %67 {offsets = [0, 0, 0], sizes = [4, 20, 4], strides = [1, 1, 1]} : vector<6x20x4xbf16> to vector<4x20x4xbf16>
    %69 = vector.extract_strided_slice %68 {offsets = [0, 0, 0], sizes = [4, 18, 4], strides = [1, 1, 1]} : vector<4x20x4xbf16> to vector<4x18x4xbf16>
    %70 = vector.shape_cast %69 : vector<4x18x4xbf16> to vector<72x4xbf16>
    %71 = vector.extract_strided_slice %4 {offsets = [0, 0, 0], sizes = [1, 4, 8], strides = [1, 1, 1]} : vector<9x4x8xbf16> to vector<1x4x8xbf16>
    %72 = vector.shape_cast %71 : vector<1x4x8xbf16> to vector<4x8xbf16>
    %cst_21 = arith.constant dense<0.000000e+00> : vector<72x8xf32>
    %73 = tpu.matmul %70, %72, %cst_21 {dimension_numbers = #tpu.dot_dimension_numbers<[1], [0], [0], [1], [0, 0, 1, 1], [], []>} : vector<72x4xbf16>, vector<4x8xbf16>, vector<72x8xf32> -> vector<72x8xf32>
    %74 = vector.extract_strided_slice %68 {offsets = [0, 1, 0], sizes = [4, 18, 4], strides = [1, 1, 1]} : vector<4x20x4xbf16> to vector<4x18x4xbf16>
    %75 = vector.shape_cast %74 : vector<4x18x4xbf16> to vector<72x4xbf16>
    %76 = vector.extract_strided_slice %4 {offsets = [1, 0, 0], sizes = [1, 4, 8], strides = [1, 1, 1]} : vector<9x4x8xbf16> to vector<1x4x8xbf16>
    %77 = vector.shape_cast %76 : vector<1x4x8xbf16> to vector<4x8xbf16>
    %cst_22 = arith.constant dense<0.000000e+00> : vector<72x8xf32>
    %78 = tpu.matmul %75, %77, %cst_22 {dimension_numbers = #tpu.dot_dimension_numbers<[1], [0], [0], [1], [0, 0, 1, 1], [], []>} : vector<72x4xbf16>, vector<4x8xbf16>, vector<72x8xf32> -> vector<72x8xf32>
    %79 = arith.addf %73, %78 : vector<72x8xf32>
    %80 = vector.extract_strided_slice %68 {offsets = [0, 2, 0], sizes = [4, 18, 4], strides = [1, 1, 1]} : vector<4x20x4xbf16> to vector<4x18x4xbf16>
    %81 = vector.shape_cast %80 : vector<4x18x4xbf16> to vector<72x4xbf16>
    %82 = vector.extract_strided_slice %4 {offsets = [2, 0, 0], sizes = [1, 4, 8], strides = [1, 1, 1]} : vector<9x4x8xbf16> to vector<1x4x8xbf16>
    %83 = vector.shape_cast %82 : vector<1x4x8xbf16> to vector<4x8xbf16>
    %cst_23 = arith.constant dense<0.000000e+00> : vector<72x8xf32>
    %84 = tpu.matmul %81, %83, %cst_23 {dimension_numbers = #tpu.dot_dimension_numbers<[1], [0], [0], [1], [0, 0, 1, 1], [], []>} : vector<72x4xbf16>, vector<4x8xbf16>, vector<72x8xf32> -> vector<72x8xf32>
    %85 = arith.addf %79, %84 : vector<72x8xf32>
    %86 = vector.extract_strided_slice %67 {offsets = [1, 0, 0], sizes = [4, 20, 4], strides = [1, 1, 1]} : vector<6x20x4xbf16> to vector<4x20x4xbf16>
    %87 = vector.extract_strided_slice %86 {offsets = [0, 0, 0], sizes = [4, 18, 4], strides = [1, 1, 1]} : vector<4x20x4xbf16> to vector<4x18x4xbf16>
    %88 = vector.shape_cast %87 : vector<4x18x4xbf16> to vector<72x4xbf16>
    %89 = vector.extract_strided_slice %4 {offsets = [3, 0, 0], sizes = [1, 4, 8], strides = [1, 1, 1]} : vector<9x4x8xbf16> to vector<1x4x8xbf16>
    %90 = vector.shape_cast %89 : vector<1x4x8xbf16> to vector<4x8xbf16>
    %cst_24 = arith.constant dense<0.000000e+00> : vector<72x8xf32>
    %91 = tpu.matmul %88, %90, %cst_24 {dimension_numbers = #tpu.dot_dimension_numbers<[1], [0], [0], [1], [0, 0, 1, 1], [], []>} : vector<72x4xbf16>, vector<4x8xbf16>, vector<72x8xf32> -> vector<72x8xf32>
    %92 = arith.addf %85, %91 : vector<72x8xf32>
    %93 = vector.extract_strided_slice %86 {offsets = [0, 1, 0], sizes = [4, 18, 4], strides = [1, 1, 1]} : vector<4x20x4xbf16> to vector<4x18x4xbf16>
    %94 = vector.shape_cast %93 : vector<4x18x4xbf16> to vector<72x4xbf16>
    %95 = vector.extract_strided_slice %4 {offsets = [4, 0, 0], sizes = [1, 4, 8], strides = [1, 1, 1]} : vector<9x4x8xbf16> to vector<1x4x8xbf16>
    %96 = vector.shape_cast %95 : vector<1x4x8xbf16> to vector<4x8xbf16>
    %cst_25 = arith.constant dense<0.000000e+00> : vector<72x8xf32>
    %97 = tpu.matmul %94, %96, %cst_25 {dimension_numbers = #tpu.dot_dimension_numbers<[1], [0], [0], [1], [0, 0, 1, 1], [], []>} : vector<72x4xbf16>, vector<4x8xbf16>, vector<72x8xf32> -> vector<72x8xf32>
    %98 = arith.addf %92, %97 : vector<72x8xf32>
    %99 = vector.extract_strided_slice %86 {offsets = [0, 2, 0], sizes = [4, 18, 4], strides = [1, 1, 1]} : vector<4x20x4xbf16> to vector<4x18x4xbf16>
    %100 = vector.shape_cast %99 : vector<4x18x4xbf16> to vector<72x4xbf16>
    %101 = vector.extract_strided_slice %4 {offsets = [5, 0, 0], sizes = [1, 4, 8], strides = [1, 1, 1]} : vector<9x4x8xbf16> to vector<1x4x8xbf16>
    %102 = vector.shape_cast %101 : vector<1x4x8xbf16> to vector<4x8xbf16>
    %cst_26 = arith.constant dense<0.000000e+00> : vector<72x8xf32>
    %103 = tpu.matmul %100, %102, %cst_26 {dimension_numbers = #tpu.dot_dimension_numbers<[1], [0], [0], [1], [0, 0, 1, 1], [], []>} : vector<72x4xbf16>, vector<4x8xbf16>, vector<72x8xf32> -> vector<72x8xf32>
    %104 = arith.addf %98, %103 : vector<72x8xf32>
    %105 = vector.extract_strided_slice %67 {offsets = [2, 0, 0], sizes = [4, 20, 4], strides = [1, 1, 1]} : vector<6x20x4xbf16> to vector<4x20x4xbf16>
    %106 = vector.extract_strided_slice %105 {offsets = [0, 0, 0], sizes = [4, 18, 4], strides = [1, 1, 1]} : vector<4x20x4xbf16> to vector<4x18x4xbf16>
    %107 = vector.shape_cast %106 : vector<4x18x4xbf16> to vector<72x4xbf16>
    %108 = vector.extract_strided_slice %4 {offsets = [6, 0, 0], sizes = [1, 4, 8], strides = [1, 1, 1]} : vector<9x4x8xbf16> to vector<1x4x8xbf16>
    %109 = vector.shape_cast %108 : vector<1x4x8xbf16> to vector<4x8xbf16>
    %cst_27 = arith.constant dense<0.000000e+00> : vector<72x8xf32>
    %110 = tpu.matmul %107, %109, %cst_27 {dimension_numbers = #tpu.dot_dimension_numbers<[1], [0], [0], [1], [0, 0, 1, 1], [], []>} : vector<72x4xbf16>, vector<4x8xbf16>, vector<72x8xf32> -> vector<72x8xf32>
    %111 = arith.addf %104, %110 : vector<72x8xf32>
    %112 = vector.extract_strided_slice %105 {offsets = [0, 1, 0], sizes = [4, 18, 4], strides = [1, 1, 1]} : vector<4x20x4xbf16> to vector<4x18x4xbf16>
    %113 = vector.shape_cast %112 : vector<4x18x4xbf16> to vector<72x4xbf16>
    %114 = vector.extract_strided_slice %4 {offsets = [7, 0, 0], sizes = [1, 4, 8], strides = [1, 1, 1]} : vector<9x4x8xbf16> to vector<1x4x8xbf16>
    %115 = vector.shape_cast %114 : vector<1x4x8xbf16> to vector<4x8xbf16>
    %cst_28 = arith.constant dense<0.000000e+00> : vector<72x8xf32>
    %116 = tpu.matmul %113, %115, %cst_28 {dimension_numbers = #tpu.dot_dimension_numbers<[1], [0], [0], [1], [0, 0, 1, 1], [], []>} : vector<72x4xbf16>, vector<4x8xbf16>, vector<72x8xf32> -> vector<72x8xf32>
    %117 = arith.addf %111, %116 : vector<72x8xf32>
    %118 = vector.extract_strided_slice %105 {offsets = [0, 2, 0], sizes = [4, 18, 4], strides = [1, 1, 1]} : vector<4x20x4xbf16> to vector<4x18x4xbf16>
    %119 = vector.shape_cast %118 : vector<4x18x4xbf16> to vector<72x4xbf16>
    %120 = vector.extract_strided_slice %4 {offsets = [8, 0, 0], sizes = [1, 4, 8], strides = [1, 1, 1]} : vector<9x4x8xbf16> to vector<1x4x8xbf16>
    %121 = vector.shape_cast %120 : vector<1x4x8xbf16> to vector<4x8xbf16>
    %cst_29 = arith.constant dense<0.000000e+00> : vector<72x8xf32>
    %122 = tpu.matmul %119, %121, %cst_29 {dimension_numbers = #tpu.dot_dimension_numbers<[1], [0], [0], [1], [0, 0, 1, 1], [], []>} : vector<72x4xbf16>, vector<4x8xbf16>, vector<72x8xf32> -> vector<72x8xf32>
    %123 = arith.addf %117, %122 : vector<72x8xf32>
    %124 = vector.broadcast %5 : vector<1x8xf32> to vector<72x8xf32>
    %125 = arith.addf %123, %124 : vector<72x8xf32>
    %cst_30 = arith.constant 0.000000e+00 : f32
    %126 = vector.broadcast %cst_30 : f32 to vector<72x8xf32>
    %127 = arith.maximumf %125, %126 : vector<72x8xf32>
    %128 = vector.shape_cast %65 : vector<252x8xf32> to vector<14x18x8xf32>
    %129 = arith.truncf %128 : vector<14x18x8xf32> to vector<14x18x8xbf16>
    %c0_31 = arith.constant 0 : index
    %c0_32 = arith.constant 0 : index
    %c0_33 = arith.constant 0 : index
    %130 = vector.load %arg9[%c0_31, %c0_32, %c0_33] : memref<18x18x8xbf16, #tpu.memory_space<vmem>>, vector<14x18x8xbf16>
    tpu.vector_store %arg9[%c0_31, %c0_32, %c0_33], %129 {strides = array<i32>} : memref<18x18x8xbf16, #tpu.memory_space<vmem>>, vector<14x18x8xbf16>,
    %131 = vector.shape_cast %127 : vector<72x8xf32> to vector<4x18x8xf32>
    %132 = arith.truncf %131 : vector<4x18x8xf32> to vector<4x18x8xbf16>
    %c14 = arith.constant 14 : index
    %c0_34 = arith.constant 0 : index
    %c0_35 = arith.constant 0 : index
    %133 = vector.load %arg9[%c14, %c0_34, %c0_35] : memref<18x18x8xbf16, #tpu.memory_space<vmem>>, vector<4x18x8xbf16>
    tpu.vector_store %arg9[%c14, %c0_34, %c0_35], %132 {strides = array<i32>} : memref<18x18x8xbf16, #tpu.memory_space<vmem>>, vector<4x18x8xbf16>,
    %c0_36 = arith.constant 0 : index
    %c2 = arith.constant 2 : index
    %c0_37 = arith.constant 0 : index
    %134 = vector.load %arg9[%c0_36, %c2, %c0_37] : memref<18x18x8xbf16, #tpu.memory_space<vmem>>, vector<18x1x8xbf16>
    %c0_38 = arith.constant 0 : index
    %c0_39 = arith.constant 0 : index
    %c0_40 = arith.constant 0 : index
    %135 = vector.load %arg9[%c0_38, %c0_39, %c0_40] : memref<18x18x8xbf16, #tpu.memory_space<vmem>>, vector<18x1x8xbf16>
    tpu.vector_store %arg9[%c0_38, %c0_39, %c0_40], %134 {strides = array<i32>} : memref<18x18x8xbf16, #tpu.memory_space<vmem>>, vector<18x1x8xbf16>,
    %c0_41 = arith.constant 0 : index
    %c15 = arith.constant 15 : index
    %c0_42 = arith.constant 0 : index
    %136 = vector.load %arg9[%c0_41, %c15, %c0_42] : memref<18x18x8xbf16, #tpu.memory_space<vmem>>, vector<18x1x8xbf16>
    %c0_43 = arith.constant 0 : index
    %c17 = arith.constant 17 : index
    %c0_44 = arith.constant 0 : index
    %137 = vector.load %arg9[%c0_43, %c17, %c0_44] : memref<18x18x8xbf16, #tpu.memory_space<vmem>>, vector<18x1x8xbf16>
    tpu.vector_store %arg9[%c0_43, %c17, %c0_44], %136 {strides = array<i32>} : memref<18x18x8xbf16, #tpu.memory_space<vmem>>, vector<18x1x8xbf16>,
    %c0_i32 = arith.constant 0 : i32
    %138 = arith.cmpi eq, %arg1, %c0_i32 : i32
    %139 = arith.extui %138 : i1 to i32
    %c0_i32_45 = arith.constant 0 : i32
    %140 = arith.cmpi ne, %139, %c0_i32_45 : i32
    scf.if %140 {
      %c2_70 = arith.constant 2 : index
      %c0_71 = arith.constant 0 : index
      %c0_72 = arith.constant 0 : index
      %211 = vector.load %arg9[%c2_70, %c0_71, %c0_72] : memref<18x18x8xbf16, #tpu.memory_space<vmem>>, vector<1x18x8xbf16>
      %c0_73 = arith.constant 0 : index
      %c0_74 = arith.constant 0 : index
      %c0_75 = arith.constant 0 : index
      %212 = vector.load %arg9[%c0_73, %c0_74, %c0_75] : memref<18x18x8xbf16, #tpu.memory_space<vmem>>, vector<1x18x8xbf16>
      tpu.vector_store %arg9[%c0_73, %c0_74, %c0_75], %211 {strides = array<i32>} : memref<18x18x8xbf16, #tpu.memory_space<vmem>>, vector<1x18x8xbf16>,
    } else {
    }
    %c0_i32_46 = arith.constant 0 : i32
    %141 = arith.cmpi eq, %arg1, %c0_i32_46 : i32
    %142 = arith.extui %141 : i1 to i32
    %c0_i32_47 = arith.constant 0 : i32
    %143 = arith.cmpi ne, %142, %c0_i32_47 : i32
    scf.if %143 {
      %c15_70 = arith.constant 15 : index
      %c0_71 = arith.constant 0 : index
      %c0_72 = arith.constant 0 : index
      %211 = vector.load %arg9[%c15_70, %c0_71, %c0_72] : memref<18x18x8xbf16, #tpu.memory_space<vmem>>, vector<1x18x8xbf16>
      %c17_73 = arith.constant 17 : index
      %c0_74 = arith.constant 0 : index
      %c0_75 = arith.constant 0 : index
      %212 = vector.load %arg9[%c17_73, %c0_74, %c0_75] : memref<18x18x8xbf16, #tpu.memory_space<vmem>>, vector<1x18x8xbf16>
      tpu.vector_store %arg9[%c17_73, %c0_74, %c0_75], %211 {strides = array<i32>} : memref<18x18x8xbf16, #tpu.memory_space<vmem>>, vector<1x18x8xbf16>,
    } else {
    }
    %c0_48 = arith.constant 0 : index
    %c0_49 = arith.constant 0 : index
    %c0_50 = arith.constant 0 : index
    %144 = vector.load %arg9[%c0_48, %c0_49, %c0_50] : memref<18x18x8xbf16, #tpu.memory_space<vmem>>, vector<18x18x8xbf16>
    %c0_51 = arith.constant 0 : index
    %c0_52 = arith.constant 0 : index
    %c0_53 = arith.constant 0 : index
    %145 = vector.load %arg6[%c0_51, %c0_52, %c0_53] : memref<9x8x8xbf16, #tpu.memory_space<vmem>>, vector<9x8x8xbf16>
    %c0_54 = arith.constant 0 : index
    %c0_55 = arith.constant 0 : index
    %146 = vector.load %arg7[%c0_54, %c0_55] : memref<1x8xf32, #tpu.memory_space<vmem>>, vector<1x8xf32>
    %147 = vector.extract_strided_slice %144 {offsets = [0, 0, 0], sizes = [16, 18, 8], strides = [1, 1, 1]} : vector<18x18x8xbf16> to vector<16x18x8xbf16>
    %148 = vector.extract_strided_slice %147 {offsets = [0, 0, 0], sizes = [16, 16, 8], strides = [1, 1, 1]} : vector<16x18x8xbf16> to vector<16x16x8xbf16>
    %149 = vector.shape_cast %148 : vector<16x16x8xbf16> to vector<256x8xbf16>
    %150 = vector.extract_strided_slice %145 {offsets = [0, 0, 0], sizes = [1, 8, 8], strides = [1, 1, 1]} : vector<9x8x8xbf16> to vector<1x8x8xbf16>
    %151 = vector.shape_cast %150 : vector<1x8x8xbf16> to vector<8x8xbf16>
    %cst_56 = arith.constant dense<0.000000e+00> : vector<256x8xf32>
    %152 = tpu.matmul %149, %151, %cst_56 {dimension_numbers = #tpu.dot_dimension_numbers<[1], [0], [0], [1], [0, 0, 1, 1], [], []>} : vector<256x8xbf16>, vector<8x8xbf16>, vector<256x8xf32> -> vector<256x8xf32>
    %153 = vector.extract_strided_slice %147 {offsets = [0, 1, 0], sizes = [16, 16, 8], strides = [1, 1, 1]} : vector<16x18x8xbf16> to vector<16x16x8xbf16>
    %154 = vector.shape_cast %153 : vector<16x16x8xbf16> to vector<256x8xbf16>
    %155 = vector.extract_strided_slice %145 {offsets = [1, 0, 0], sizes = [1, 8, 8], strides = [1, 1, 1]} : vector<9x8x8xbf16> to vector<1x8x8xbf16>
    %156 = vector.shape_cast %155 : vector<1x8x8xbf16> to vector<8x8xbf16>
    %cst_57 = arith.constant dense<0.000000e+00> : vector<256x8xf32>
    %157 = tpu.matmul %154, %156, %cst_57 {dimension_numbers = #tpu.dot_dimension_numbers<[1], [0], [0], [1], [0, 0, 1, 1], [], []>} : vector<256x8xbf16>, vector<8x8xbf16>, vector<256x8xf32> -> vector<256x8xf32>
    %158 = arith.addf %152, %157 : vector<256x8xf32>
    %159 = vector.extract_strided_slice %147 {offsets = [0, 2, 0], sizes = [16, 16, 8], strides = [1, 1, 1]} : vector<16x18x8xbf16> to vector<16x16x8xbf16>
    %160 = vector.shape_cast %159 : vector<16x16x8xbf16> to vector<256x8xbf16>
    %161 = vector.extract_strided_slice %145 {offsets = [2, 0, 0], sizes = [1, 8, 8], strides = [1, 1, 1]} : vector<9x8x8xbf16> to vector<1x8x8xbf16>
    %162 = vector.shape_cast %161 : vector<1x8x8xbf16> to vector<8x8xbf16>
    %cst_58 = arith.constant dense<0.000000e+00> : vector<256x8xf32>
    %163 = tpu.matmul %160, %162, %cst_58 {dimension_numbers = #tpu.dot_dimension_numbers<[1], [0], [0], [1], [0, 0, 1, 1], [], []>} : vector<256x8xbf16>, vector<8x8xbf16>, vector<256x8xf32> -> vector<256x8xf32>
    %164 = arith.addf %158, %163 : vector<256x8xf32>
    %165 = vector.extract_strided_slice %144 {offsets = [1, 0, 0], sizes = [16, 18, 8], strides = [1, 1, 1]} : vector<18x18x8xbf16> to vector<16x18x8xbf16>
    %166 = vector.extract_strided_slice %165 {offsets = [0, 0, 0], sizes = [16, 16, 8], strides = [1, 1, 1]} : vector<16x18x8xbf16> to vector<16x16x8xbf16>
    %167 = vector.shape_cast %166 : vector<16x16x8xbf16> to vector<256x8xbf16>
    %168 = vector.extract_strided_slice %145 {offsets = [3, 0, 0], sizes = [1, 8, 8], strides = [1, 1, 1]} : vector<9x8x8xbf16> to vector<1x8x8xbf16>
    %169 = vector.shape_cast %168 : vector<1x8x8xbf16> to vector<8x8xbf16>
    %cst_59 = arith.constant dense<0.000000e+00> : vector<256x8xf32>
    %170 = tpu.matmul %167, %169, %cst_59 {dimension_numbers = #tpu.dot_dimension_numbers<[1], [0], [0], [1], [0, 0, 1, 1], [], []>} : vector<256x8xbf16>, vector<8x8xbf16>, vector<256x8xf32> -> vector<256x8xf32>
    %171 = arith.addf %164, %170 : vector<256x8xf32>
    %172 = vector.extract_strided_slice %165 {offsets = [0, 1, 0], sizes = [16, 16, 8], strides = [1, 1, 1]} : vector<16x18x8xbf16> to vector<16x16x8xbf16>
    %173 = vector.shape_cast %172 : vector<16x16x8xbf16> to vector<256x8xbf16>
    %174 = vector.extract_strided_slice %145 {offsets = [4, 0, 0], sizes = [1, 8, 8], strides = [1, 1, 1]} : vector<9x8x8xbf16> to vector<1x8x8xbf16>
    %175 = vector.shape_cast %174 : vector<1x8x8xbf16> to vector<8x8xbf16>
    %cst_60 = arith.constant dense<0.000000e+00> : vector<256x8xf32>
    %176 = tpu.matmul %173, %175, %cst_60 {dimension_numbers = #tpu.dot_dimension_numbers<[1], [0], [0], [1], [0, 0, 1, 1], [], []>} : vector<256x8xbf16>, vector<8x8xbf16>, vector<256x8xf32> -> vector<256x8xf32>
    %177 = arith.addf %171, %176 : vector<256x8xf32>
    %178 = vector.extract_strided_slice %165 {offsets = [0, 2, 0], sizes = [16, 16, 8], strides = [1, 1, 1]} : vector<16x18x8xbf16> to vector<16x16x8xbf16>
    %179 = vector.shape_cast %178 : vector<16x16x8xbf16> to vector<256x8xbf16>
    %180 = vector.extract_strided_slice %145 {offsets = [5, 0, 0], sizes = [1, 8, 8], strides = [1, 1, 1]} : vector<9x8x8xbf16> to vector<1x8x8xbf16>
    %181 = vector.shape_cast %180 : vector<1x8x8xbf16> to vector<8x8xbf16>
    %cst_61 = arith.constant dense<0.000000e+00> : vector<256x8xf32>
    %182 = tpu.matmul %179, %181, %cst_61 {dimension_numbers = #tpu.dot_dimension_numbers<[1], [0], [0], [1], [0, 0, 1, 1], [], []>} : vector<256x8xbf16>, vector<8x8xbf16>, vector<256x8xf32> -> vector<256x8xf32>
    %183 = arith.addf %177, %182 : vector<256x8xf32>
    %184 = vector.extract_strided_slice %144 {offsets = [2, 0, 0], sizes = [16, 18, 8], strides = [1, 1, 1]} : vector<18x18x8xbf16> to vector<16x18x8xbf16>
    %185 = vector.extract_strided_slice %184 {offsets = [0, 0, 0], sizes = [16, 16, 8], strides = [1, 1, 1]} : vector<16x18x8xbf16> to vector<16x16x8xbf16>
    %186 = vector.shape_cast %185 : vector<16x16x8xbf16> to vector<256x8xbf16>
    %187 = vector.extract_strided_slice %145 {offsets = [6, 0, 0], sizes = [1, 8, 8], strides = [1, 1, 1]} : vector<9x8x8xbf16> to vector<1x8x8xbf16>
    %188 = vector.shape_cast %187 : vector<1x8x8xbf16> to vector<8x8xbf16>
    %cst_62 = arith.constant dense<0.000000e+00> : vector<256x8xf32>
    %189 = tpu.matmul %186, %188, %cst_62 {dimension_numbers = #tpu.dot_dimension_numbers<[1], [0], [0], [1], [0, 0, 1, 1], [], []>} : vector<256x8xbf16>, vector<8x8xbf16>, vector<256x8xf32> -> vector<256x8xf32>
    %190 = arith.addf %183, %189 : vector<256x8xf32>
    %191 = vector.extract_strided_slice %184 {offsets = [0, 1, 0], sizes = [16, 16, 8], strides = [1, 1, 1]} : vector<16x18x8xbf16> to vector<16x16x8xbf16>
    %192 = vector.shape_cast %191 : vector<16x16x8xbf16> to vector<256x8xbf16>
    %193 = vector.extract_strided_slice %145 {offsets = [7, 0, 0], sizes = [1, 8, 8], strides = [1, 1, 1]} : vector<9x8x8xbf16> to vector<1x8x8xbf16>
    %194 = vector.shape_cast %193 : vector<1x8x8xbf16> to vector<8x8xbf16>
    %cst_63 = arith.constant dense<0.000000e+00> : vector<256x8xf32>
    %195 = tpu.matmul %192, %194, %cst_63 {dimension_numbers = #tpu.dot_dimension_numbers<[1], [0], [0], [1], [0, 0, 1, 1], [], []>} : vector<256x8xbf16>, vector<8x8xbf16>, vector<256x8xf32> -> vector<256x8xf32>
    %196 = arith.addf %190, %195 : vector<256x8xf32>
    %197 = vector.extract_strided_slice %184 {offsets = [0, 2, 0], sizes = [16, 16, 8], strides = [1, 1, 1]} : vector<16x18x8xbf16> to vector<16x16x8xbf16>
    %198 = vector.shape_cast %197 : vector<16x16x8xbf16> to vector<256x8xbf16>
    %199 = vector.extract_strided_slice %145 {offsets = [8, 0, 0], sizes = [1, 8, 8], strides = [1, 1, 1]} : vector<9x8x8xbf16> to vector<1x8x8xbf16>
    %200 = vector.shape_cast %199 : vector<1x8x8xbf16> to vector<8x8xbf16>
    %cst_64 = arith.constant dense<0.000000e+00> : vector<256x8xf32>
    %201 = tpu.matmul %198, %200, %cst_64 {dimension_numbers = #tpu.dot_dimension_numbers<[1], [0], [0], [1], [0, 0, 1, 1], [], []>} : vector<256x8xbf16>, vector<8x8xbf16>, vector<256x8xf32> -> vector<256x8xf32>
    %202 = arith.addf %196, %201 : vector<256x8xf32>
    %203 = vector.broadcast %146 : vector<1x8xf32> to vector<256x8xf32>
    %204 = arith.addf %202, %203 : vector<256x8xf32>
    %cst_65 = arith.constant 0.000000e+00 : f32
    %205 = vector.broadcast %cst_65 : f32 to vector<256x8xf32>
    %206 = arith.maximumf %204, %205 : vector<256x8xf32>
    %207 = vector.shape_cast %206 : vector<256x8xf32> to vector<16x16x8xf32>
    %c0_66 = arith.constant 0 : index
    %c0_67 = arith.constant 0 : index
    %c0_68 = arith.constant 0 : index
    %c0_69 = arith.constant 0 : index
    %208 = vector.load %arg8[%c0_66, %c0_67, %c0_68, %c0_69] : memref<1x16x16x8xf32, #tpu.memory_space<vmem>>, vector<1x16x16x8xf32>
    %209 = vector.shape_cast %208 : vector<1x16x16x8xf32> to vector<16x16x8xf32>
    %210 = vector.shape_cast %207 : vector<16x16x8xf32> to vector<1x16x16x8xf32>
    tpu.vector_store %arg8[%c0_66, %c0_67, %c0_68, %c0_69], %210 {strides = array<i32>} : memref<1x16x16x8xf32, #tpu.memory_space<vmem>>, vector<1x16x16x8xf32>,
    return
  }
  func.func @transform_0(%arg0: i32, %arg1: i32) -> (i32, i32, i32, i32) {
    %c0_i32 = arith.constant 0 : i32
    %c0_i32_0 = arith.constant 0 : i32
    %c0_i32_1 = arith.constant 0 : i32
    return %arg0, %arg1, %c0_i32, %c0_i32_0 : i32, i32, i32, i32
  }
  func.func @transform_1(%arg0: i32, %arg1: i32) -> (i32, i32, i32, i32) {
    %c1_i32 = arith.constant 1 : i32
    %0 = arith.addi %arg1, %c1_i32 : i32
    %c4_i32 = arith.constant 4 : i32
    %1 = arith.muli %0, %c4_i32 : i32
    %c0_i32 = arith.constant 0 : i32
    %c0_i32_0 = arith.constant 0 : i32
    %c0_i32_1 = arith.constant 0 : i32
    return %arg0, %1, %c0_i32, %c0_i32_0 : i32, i32, i32, i32
  }
  func.func @transform_2(%arg0: i32, %arg1: i32) -> (i32, i32, i32) {
    %c0_i32 = arith.constant 0 : i32
    %c0_i32_0 = arith.constant 0 : i32
    %c0_i32_1 = arith.constant 0 : i32
    %c0_i32_2 = arith.constant 0 : i32
    return %c0_i32, %c0_i32_0, %c0_i32_1 : i32, i32, i32
  }
  func.func @transform_3(%arg0: i32, %arg1: i32) -> (i32, i32) {
    %c0_i32 = arith.constant 0 : i32
    %c0_i32_0 = arith.constant 0 : i32
    %c0_i32_1 = arith.constant 0 : i32
    return %c0_i32, %c0_i32_0 : i32, i32
  }
  func.func @transform_4(%arg0: i32, %arg1: i32) -> (i32, i32, i32) {
    %c0_i32 = arith.constant 0 : i32
    %c0_i32_0 = arith.constant 0 : i32
    %c0_i32_1 = arith.constant 0 : i32
    %c0_i32_2 = arith.constant 0 : i32
    return %c0_i32, %c0_i32_0, %c0_i32_1 : i32, i32, i32
  }
  func.func @transform_5(%arg0: i32, %arg1: i32) -> (i32, i32) {
    %c0_i32 = arith.constant 0 : i32
    %c0_i32_0 = arith.constant 0 : i32
    %c0_i32_1 = arith.constant 0 : i32
    return %c0_i32, %c0_i32_0 : i32, i32
  }
  func.func @transform_6(%arg0: i32, %arg1: i32) -> (i32, i32, i32, i32) {
    %c0_i32 = arith.constant 0 : i32
    %c0_i32_0 = arith.constant 0 : i32
    %c0_i32_1 = arith.constant 0 : i32
    return %arg0, %arg1, %c0_i32, %c0_i32_0 : i32, i32, i32, i32
  }
}

</mosaic_0001>

<llo_original>
// kernel: _lambda_.1
$region0: #{_lambda_.1}
  #allocation0 [shape = 'u32[]', space=smem, size = 0x4, offset = 0x4, fixed_abs, tag = 'smem constant byte address 0x4 - core index']
  #allocation1 [shape = 'u32[72,128]{1,0:T(1,128)}', space=vmem, size = 0x9000, scoped, tag = 'internal scratch']
  #allocation2 [shape = 'bf16[18,18,8]{2,1,0:T(8,128)(2,1)}', space=vmem, size = 0x1b000, scoped, tag = 'scratch operand']
  %s0 = inlined_call_operand.vmem [shape: bf16[2,20,20,4], index: 0, kind: input, shape index: {}, may-alias: {0,1}]
  %s1 = inlined_call_operand.vmem [shape: bf16[2,20,20,4], index: 1, kind: input, shape index: {}, may-alias: {0,1}]
  %s2 = inlined_call_operand.vmem [shape: bf16[9,4,8], index: 2, kind: input, shape index: {}]
  %s3 = inlined_call_operand.vmem [shape: f32[1,8], index: 3, kind: input, shape index: {}]
  %s4 = inlined_call_operand.vmem [shape: bf16[9,8,8], index: 4, kind: input, shape index: {}]
  %s5 = inlined_call_operand.vmem [shape: f32[1,8], index: 5, kind: input, shape index: {}]
  %s6 = inlined_call_operand.vmem [shape: f32[2,16,16,8], index: 6, kind: output, shape index: {}]
  %s7 = sld [smem:[#allocation0]]
  $region61: #{_lambda_.1} parent=0
    _
  %s9 = ssub.s32 1, %s7
  %s10 = scalar_select 0, %s9, %s7
  loop: start=0, step=1, limit=4
  $region2: #{_lambda_.1} parent=0 // loop_pre_header
    _
  $region3: #{_lambda_.1} parent=0 // loop_header
    %s12 = sphi 0, %s16
    %p13 = scmp.ge.s32.totalorder %s12, 4
    %s19 = sphi 0, %s31
    %s20 = sphi 0, %s27
    %s21 = sphi 0, %s19
    %s22 = sphi 0, %s20
    %s23 = sphi 0, %s21
    %s24 = sphi 0, %s22
    %s36 = sphi 0, %s38
    %s39 = sphi 0, %s36
    %s40 = sphi 0, %s39
    %s56 = sphi 0, %s40
    %s68 = sphi 0, %s70
    %s71 = sphi 0, %s68
    %s72 = sphi 0, %s71
    %s88 = sphi 0, %s72
    %s92 = sphi 0, %s92
    %s94 = sphi 0, %s92
    %s95 = sphi 0, %s94
    %s109 = sphi 0, %s95
    %s113 = sphi 0, %s113
    %s115 = sphi 0, %s113
    %s116 = sphi 0, %s115
    %s130 = sphi 0, %s116
    %s134 = sphi 0, %s134
    %s136 = sphi 0, %s134
    %s137 = sphi 0, %s136
    %s151 = sphi 0, %s137
    %s155 = sphi 0, %s155
    %s157 = sphi 0, %s155
    %s158 = sphi 0, %s157
    %s172 = sphi 0, %s158
    %s180 = sphi 0, %s182
    %s183 = sphi 0, %s180
    %s184 = sphi 0, %s183
    %s200 = sphi 0, %s184
  $region4: #{_lambda_.1} parent=0 // loop_header_branch
    %15 = sbr.rel (%p13) target = $region8
  $region5: #{_lambda_.1} parent=0 // loop_body
    %s17 = ssub.s32 %s12, 1
    %s18 = ssub.s32 %s12, 2
    %s25 = sadd.s32 1, %s20
    %p26 = scmp.ge.s32.totalorder %s25, 1
    %s27 = scalar_select %p26, 0, %s25
    %s28 = sadd.s32 1, %s19
    %s29 = scalar_select %p26, %s28, %s19
    %p30 = scmp.ge.s32.totalorder %s29, 2
    %s31 = scalar_select %p30, 0, %s29
    %s32 = ssub.s32 %s19, %s31
    %s33 = ssub.s32 %s20, %s27
    %s34 = sor.u32 %s32, %s33
    %p35 = scmp.eq.s32.totalorder %s34, 0
    %s37 = sadd.s32 %s36, 1
    %s38 = scalar_select %p35, %s36, %s37
    %p41 = pneg %p35
    %p42 = scmp.eq.s32.totalorder %s12, 1
    %p43 = por %p41, %p42
    %p44 = scmp.ne.s32.totalorder %s36, %s39
    %p45 = scmp.eq.s32.totalorder %s12, 0
    %p46 = por %p44, %p45
    %p47 = scmp.ne.s32.totalorder %s36, %s39
    %p48 = scmp.eq.s32.totalorder %s17, 1
    %p49 = por %p47, %p48
    %p50 = scmp.ne.s32.totalorder %s39, %s40
    %p51 = scmp.eq.s32.totalorder %s17, 0
    %p52 = por %p50, %p51
    %p53 = scmp.ne.s32.totalorder %s39, %s40
    %p54 = scmp.eq.s32.totalorder %s18, 1
    %p55 = por %p53, %p54
    %p57 = scmp.ne.s32.totalorder %s40, %s56
    %p58 = scmp.eq.s32.totalorder %s18, 0
    %p59 = por %p57, %p58
    %s60 = sadd.s32 %s20, 1
    %s61 = smul.u32 %s60, 4
    %s62 = sadd.s32 %s27, 1
    %s63 = smul.u32 %s62, 4
    %s64 = ssub.s32 %s19, %s31
    %s65 = ssub.s32 %s61, %s63
    %s66 = sor.u32 %s64, %s65
    %p67 = scmp.eq.s32.totalorder %s66, 0
    %s69 = sadd.s32 %s68, 1
    %s70 = scalar_select %p67, %s68, %s69
    %p73 = pneg %p67
    %p74 = scmp.eq.s32.totalorder %s12, 1
    %p75 = por %p73, %p74
    %p76 = scmp.ne.s32.totalorder %s68, %s71
    %p77 = scmp.eq.s32.totalorder %s12, 0
    %p78 = por %p76, %p77
    %p79 = scmp.ne.s32.totalorder %s68, %s71
    %p80 = scmp.eq.s32.totalorder %s17, 1
    %p81 = por %p79, %p80
    %p82 = scmp.ne.s32.totalorder %s71, %s72
    %p83 = scmp.eq.s32.totalorder %s17, 0
    %p84 = por %p82, %p83
    %p85 = scmp.ne.s32.totalorder %s71, %s72
    %p86 = scmp.eq.s32.totalorder %s18, 1
    %p87 = por %p85, %p86
    %p89 = scmp.ne.s32.totalorder %s72, %s88
    %p90 = scmp.eq.s32.totalorder %s18, 0
    %p91 = por %p89, %p90
    %s93 = sadd.s32 %s92, 1
    %p96 = scmp.eq.s32.totalorder %s12, 1
    %p97 = scmp.ne.s32.totalorder %s92, %s94
    %p98 = scmp.eq.s32.totalorder %s12, 0
    %p99 = por %p97, %p98
    %p100 = scmp.ne.s32.totalorder %s92, %s94
    %p101 = scmp.eq.s32.totalorder %s17, 1
    %p102 = por %p100, %p101
    %p103 = scmp.ne.s32.totalorder %s94, %s95
    %p104 = scmp.eq.s32.totalorder %s17, 0
    %p105 = por %p103, %p104
    %p106 = scmp.ne.s32.totalorder %s94, %s95
    %p107 = scmp.eq.s32.totalorder %s18, 1
    %p108 = por %p106, %p107
    %p110 = scmp.ne.s32.totalorder %s95, %s109
    %p111 = scmp.eq.s32.totalorder %s18, 0
    %p112 = por %p110, %p111
    %s114 = sadd.s32 %s113, 1
    %p117 = scmp.eq.s32.totalorder %s12, 1
    %p118 = scmp.ne.s32.totalorder %s113, %s115
    %p119 = scmp.eq.s32.totalorder %s12, 0
    %p120 = por %p118, %p119
    %p121 = scmp.ne.s32.totalorder %s113, %s115
    %p122 = scmp.eq.s32.totalorder %s17, 1
    %p123 = por %p121, %p122
    %p124 = scmp.ne.s32.totalorder %s115, %s116
    %p125 = scmp.eq.s32.totalorder %s17, 0
    %p126 = por %p124, %p125
    %p127 = scmp.ne.s32.totalorder %s115, %s116
    %p128 = scmp.eq.s32.totalorder %s18, 1
    %p129 = por %p127, %p128
    %p131 = scmp.ne.s32.totalorder %s116, %s130
    %p132 = scmp.eq.s32.totalorder %s18, 0
    %p133 = por %p131, %p132
    %s135 = sadd.s32 %s134, 1
    %p138 = scmp.eq.s32.totalorder %s12, 1
    %p139 = scmp.ne.s32.totalorder %s134, %s136
    %p140 = scmp.eq.s32.totalorder %s12, 0
    %p141 = por %p139, %p140
    %p142 = scmp.ne.s32.totalorder %s134, %s136
    %p143 = scmp.eq.s32.totalorder %s17, 1
    %p144 = por %p142, %p143
    %p145 = scmp.ne.s32.totalorder %s136, %s137
    %p146 = scmp.eq.s32.totalorder %s17, 0
    %p147 = por %p145, %p146
    %p148 = scmp.ne.s32.totalorder %s136, %s137
    %p149 = scmp.eq.s32.totalorder %s18, 1
    %p150 = por %p148, %p149
    %p152 = scmp.ne.s32.totalorder %s137, %s151
    %p153 = scmp.eq.s32.totalorder %s18, 0
    %p154 = por %p152, %p153
    %s156 = sadd.s32 %s155, 1
    %p159 = scmp.eq.s32.totalorder %s12, 1
    %p160 = scmp.ne.s32.totalorder %s155, %s157
    %p161 = scmp.eq.s32.totalorder %s12, 0
    %p162 = por %p160, %p161
    %p163 = scmp.ne.s32.totalorder %s155, %s157
    %p164 = scmp.eq.s32.totalorder %s17, 1
    %p165 = por %p163, %p164
    %p166 = scmp.ne.s32.totalorder %s157, %s158
    %p167 = scmp.eq.s32.totalorder %s17, 0
    %p168 = por %p166, %p167
    %p169 = scmp.ne.s32.totalorder %s157, %s158
    %p170 = scmp.eq.s32.totalorder %s18, 1
    %p171 = por %p169, %p170
    %p173 = scmp.ne.s32.totalorder %s158, %s172
    %p174 = scmp.eq.s32.totalorder %s18, 0
    %p175 = por %p173, %p174
    %s176 = ssub.s32 %s19, %s31
    %s177 = ssub.s32 %s20, %s27
    %s178 = sor.u32 %s176, %s177
    %p179 = scmp.eq.s32.totalorder %s178, 0
    %s181 = sadd.s32 %s180, 1
    %s182 = scalar_select %p179, %s180, %s181
    %p185 = pneg %p179
    %p186 = scmp.eq.s32.totalorder %s12, 1
    %p187 = por %p185, %p186
    %p188 = scmp.ne.s32.totalorder %s180, %s183
    %p189 = scmp.eq.s32.totalorder %s12, 0
    %p190 = por %p188, %p189
    %p191 = scmp.ne.s32.totalorder %s180, %s183
    %p192 = scmp.eq.s32.totalorder %s17, 1
    %p193 = por %p191, %p192
    %p194 = scmp.ne.s32.totalorder %s183, %s184
    %p195 = scmp.eq.s32.totalorder %s17, 0
    %p196 = por %p194, %p195
    %p197 = scmp.ne.s32.totalorder %s183, %s184
    %p198 = scmp.eq.s32.totalorder %s18, 1
    %p199 = por %p197, %p198
    %p201 = scmp.ne.s32.totalorder %s184, %s200
    %p202 = scmp.eq.s32.totalorder %s18, 0
    %p203 = por %p201, %p202
    %p204 = scmp.le.s32.totalorder 1, %s12
    %p205 = scmp.lt.s32.totalorder %s12, 3
    %p206 = pnand %p204, %p205
    %p207 = pneg %p206
    // Predicated region
    $region9: #{_lambda_.1} parent=5 // pred_check
      _
    $region10: #{_lambda_.1} parent=5 // pred_check_branch
      %209 = sbr.rel (%p206) target = $region12
    $region11: #{_lambda_.1} parent=5 // pred_region
      %s210 = ssub.s32 %s12, 1
      // Predicated region
      $region13: #{_lambda_.1} parent=11 // pred_check
        %p211 = pneg %p105
      $region14: #{_lambda_.1} parent=11 // pred_check_branch
        %213 = sbr.rel (%p211) target = $region16
      $region15: #{_lambda_.1} parent=11 // pred_region
        _
      $region16: #{_lambda_.1} parent=11 // pred_fallthru
        _
      // Predicated region
      $region17: #{_lambda_.1} parent=11 // pred_check
        %p214 = pneg %p126
      $region18: #{_lambda_.1} parent=11 // pred_check_branch
        %216 = sbr.rel (%p214) target = $region20
      $region19: #{_lambda_.1} parent=11 // pred_region
        _
      $region20: #{_lambda_.1} parent=11 // pred_fallthru
        _
      // Predicated region
      $region21: #{_lambda_.1} parent=11 // pred_check
        %p217 = pneg %p147
      $region22: #{_lambda_.1} parent=11 // pred_check_branch
        %219 = sbr.rel (%p217) target = $region24
      $region23: #{_lambda_.1} parent=11 // pred_region
        _
      $region24: #{_lambda_.1} parent=11 // pred_fallthru
        _
      // Predicated region
      $region25: #{_lambda_.1} parent=11 // pred_check
        %p220 = pneg %p168
      $region26: #{_lambda_.1} parent=11 // pred_check_branch
        %222 = sbr.rel (%p220) target = $region28
      $region27: #{_lambda_.1} parent=11 // pred_region
        _
      $region28: #{_lambda_.1} parent=11 // pred_fallthru
        _
    $region12: #{_lambda_.1} parent=5 // pred_fallthru
      _
    %p223 = scmp.lt.s32.totalorder %s12, 2
    // Predicated region
    $region29: #{_lambda_.1} parent=5 // pred_check
      %p224 = pneg %p223
    $region30: #{_lambda_.1} parent=5 // pred_check_branch
      %226 = sbr.rel (%p224) target = $region32
    $region31: #{_lambda_.1} parent=5 // pred_region
      // Predicated region
      $region33: #{_lambda_.1} parent=31 // pred_check
        %p227 = pneg %p46
      $region34: #{_lambda_.1} parent=31 // pred_check_branch
        %229 = sbr.rel (%p227) target = $region36
      $region35: #{_lambda_.1} parent=31 // pred_region
        %s230 = smul.u32 16, %s20
        %s231 = ssub.s32 20, %s230
        %p232 = scmp.lt.s32.totalorder %s231, 16
        %s233 = scalar_select %p232, %s231, 16
        %s234 = smul.u32 4, %s233
        %s235 = smul.u32 %s234, 3
        %p236 = scmp.lt.s32.totalorder %s19, 1
        %s237 = scalar_select %p236, %s19, 1
        %p238 = scmp.lt.s32.totalorder %s230, 19
        %s239 = scalar_select %p238, %s230, 19
        %s240 = smul.addr %s239, 3
        %s241 = smul.addr %s237, 60
        %s242 = sadd.s32 %s240, %s241
        %s243 = smul.addr %s242, 4
        %s244 = scalar_lea.vmem %s0, %s243
        %s245 = smul.u32 16, %s20
        %s246 = ssub.s32 20, %s245
        %p247 = scmp.lt.s32.totalorder %s246, 16
        %s248 = scalar_select %p247, %s246, 16
        %s249 = smul.u32 4, %s248
        %s250 = smul.u32 %s249, 3
      $region36: #{_lambda_.1} parent=31 // pred_fallthru
        _
      // Predicated region
      $region37: #{_lambda_.1} parent=31 // pred_check
        %p251 = pneg %p78
      $region38: #{_lambda_.1} parent=31 // pred_check_branch
        %253 = sbr.rel (%p251) target = $region40
      $region39: #{_lambda_.1} parent=31 // pred_region
        %s254 = sadd.s32 %s20, 1
        %s255 = smul.u32 %s254, 4
        %s256 = smul.u32 4, %s255
        %p257 = scmp.lt.s32.totalorder %s19, 1
        %s258 = scalar_select %p257, %s19, 1
        %p259 = scmp.lt.s32.totalorder %s256, 19
        %s260 = scalar_select %p259, %s256, 19
        %s261 = smul.addr %s260, 3
        %s262 = smul.addr %s258, 60
        %s263 = sadd.s32 %s261, %s262
        %s264 = smul.addr %s263, 4
        %s265 = scalar_lea.vmem %s1, %s264
        %s266 = sadd.s32 %s20, 1
        %s267 = smul.u32 %s266, 4
        %s268 = smul.u32 4, %s267
      $region40: #{_lambda_.1} parent=31 // pred_fallthru
        _
    $region32: #{_lambda_.1} parent=5 // pred_fallthru
      _
    %p269 = scmp.le.s32.totalorder 1, %s12
    %p270 = scmp.lt.s32.totalorder %s12, 3
    %p271 = pnand %p269, %p270
    %p272 = pneg %p271
    // Predicated region
    $region41: #{_lambda_.1} parent=5 // pred_check
      _
    $region42: #{_lambda_.1} parent=5 // pred_check_branch
      %274 = sbr.rel (%p271) target = $region44
    $region43: #{_lambda_.1} parent=5 // pred_region
      %s275 = ssub.s32 %s12, 1
      %s276 = smul.u32 16, %s22
      %s277 = ssub.s32 20, %s276
      %p278 = scmp.lt.s32.totalorder %s277, 16
      %s279 = scalar_select %p278, %s277, 16
      %s280 = smul.u32 4, %s279
      %s281 = smul.u32 %s280, 3
      %p282 = scmp.lt.s32.totalorder %s21, 1
      %s283 = scalar_select %p282, %s21, 1
      %p284 = scmp.lt.s32.totalorder %s276, 19
      %s285 = scalar_select %p284, %s276, 19
      %s286 = smul.addr %s285, 3
      %s287 = smul.addr %s283, 60
      %s288 = sadd.s32 %s286, %s287
      %s289 = smul.addr %s288, 4
      %s290 = scalar_lea.vmem %s0, %s289
      %p291 = pneg %p52
      %p292 = pneg %p49
      %s293 = sadd.s32 %s22, 1
      %s294 = smul.u32 %s293, 4
      %s295 = smul.u32 4, %s294
      %p296 = scmp.lt.s32.totalorder %s21, 1
      %s297 = scalar_select %p296, %s21, 1
      %p298 = scmp.lt.s32.totalorder %s295, 19
      %s299 = scalar_select %p298, %s295, 19
      %s300 = smul.addr %s299, 3
      %s301 = smul.addr %s297, 60
      %s302 = sadd.s32 %s300, %s301
      %s303 = smul.addr %s302, 4
      %s304 = scalar_lea.vmem %s1, %s303
      %p305 = pneg %p84
      %p306 = pneg %p81
      %p307 = pneg %p105
      %p308 = pneg %p102
      %p309 = pneg %p126
      %p310 = pneg %p123
      %p311 = pneg %p147
      %p312 = pneg %p144
      %p313 = pneg %p168
      %p314 = pneg %p165
      %p315 = pneg %p196
      %p316 = pneg %p193
      %s317 = smul.u32 16, %s22
      %p318 = scmp.lt.s32.totalorder %s21, 1
      %s319 = scalar_select %p318, %s21, 1
      %p320 = scmp.lt.s32.totalorder %s317, 15
      %s321 = scalar_select %p320, %s317, 15
      %s322 = smul.addr %s321, 2
      %s323 = smul.addr %s319, 32
      %s324 = sadd.s32 %s322, %s323
      %s325 = smul.addr %s324, 8
      %s326 = scalar_lea.vmem %s6, %s325
      %s327 = smul.u32 16, %s22
      %s328 = ssub.s32 20, %s327
      %p329 = scmp.lt.s32.totalorder %s328, 16
      %s330 = scalar_select %p329, %s328, 16
      %s331 = smul.u32 4, %s330
      %s332 = smul.u32 %s331, 3
      %p333 = scmp.lt.s32.totalorder %s21, 1
      %s334 = scalar_select %p333, %s21, 1
      %p335 = scmp.lt.s32.totalorder %s327, 19
      %s336 = scalar_select %p335, %s327, 19
      %s337 = smul.addr %s336, 3
      %s338 = smul.addr %s334, 60
      %s339 = sadd.s32 %s337, %s338
      %s340 = smul.addr %s339, 4
      %s341 = scalar_lea.vmem %s0, %s340
      %s342 = smul.u32 16, %s22
      %s343 = ssub.s32 20, %s342
      %p344 = scmp.lt.s32.totalorder %s343, 16
      %s345 = scalar_select %p344, %s343, 16
      %s346 = smul.u32 4, %s345
      %s347 = smul.u32 %s346, 3
      %s348 = sadd.s32 %s22, 1
      %s349 = smul.u32 %s348, 4
      %s350 = smul.u32 4, %s349
      %p351 = scmp.lt.s32.totalorder %s21, 1
      %s352 = scalar_select %p351, %s21, 1
      %p353 = scmp.lt.s32.totalorder %s350, 19
      %s354 = scalar_select %p353, %s350, 19
      %s355 = smul.addr %s354, 3
      %s356 = smul.addr %s352, 60
      %s357 = sadd.s32 %s355, %s356
      %s358 = smul.addr %s357, 4
      %s359 = scalar_lea.vmem %s1, %s358
      %s360 = sadd.s32 %s22, 1
      %s361 = smul.u32 %s360, 4
      %s362 = smul.u32 4, %s361
      %s363 = smul.u32 16, %s22
      %p364 = scmp.lt.s32.totalorder %s21, 1
      %s365 = scalar_select %p364, %s21, 1
      %p366 = scmp.lt.s32.totalorder %s363, 15
      %s367 = scalar_select %p366, %s363, 15
      %s368 = smul.addr %s367, 2
      %s369 = smul.addr %s365, 32
      %s370 = sadd.s32 %s368, %s369
      %s371 = smul.addr %s370, 8
      %s372 = scalar_lea.vmem %s6, %s371
      %s373 = smul.u32 16, %s22
      %v375 = vld [vmem:[%s341] sm:$0xf]
      %v376 = vld [vmem:[%s341 + $0x4] sm:$0xf]
      %v377 = vld [vmem:[%s341 + $0x8] sm:$0x3]
      %v378 = vld [vmem:[%s341 + $0xc] sm:$0xf]
      %v379 = vld [vmem:[%s341 + $0x10] sm:$0xf]
      %v380 = vld [vmem:[%s341 + $0x14] sm:$0x3]
      %v381 = vld [vmem:[%s341 + $0x18] sm:$0xf]
      %v382 = vld [vmem:[%s341 + $0x1c] sm:$0xf]
      %v383 = vld [vmem:[%s341 + $0x20] sm:$0x3]
      %v384 = vld [vmem:[%s341 + $0x24] sm:$0xf]
      %v385 = vld [vmem:[%s341 + $0x28] sm:$0xf]
      %v386 = vld [vmem:[%s341 + $0x2c] sm:$0x3]
      %v387 = vld [vmem:[%s341 + $0x30] sm:$0xf]
      %v388 = vld [vmem:[%s341 + $0x34] sm:$0xf]
      %v389 = vld [vmem:[%s341 + $0x38] sm:$0x3]
      %v390 = vld [vmem:[%s341 + $0x3c] sm:$0xf]
      %v391 = vld [vmem:[%s341 + $0x40] sm:$0xf]
      %v392 = vld [vmem:[%s341 + $0x44] sm:$0x3]
      %v393 = vld [vmem:[%s341 + $0x48] sm:$0xf]
      %v394 = vld [vmem:[%s341 + $0x4c] sm:$0xf]
      %v395 = vld [vmem:[%s341 + $0x50] sm:$0x3]
      %v396 = vld [vmem:[%s341 + $0x54] sm:$0xf]
      %v397 = vld [vmem:[%s341 + $0x58] sm:$0xf]
      %v398 = vld [vmem:[%s341 + $0x5c] sm:$0x3]
      %v399 = vld [vmem:[%s341 + $0x60] sm:$0xf]
      %v400 = vld [vmem:[%s341 + $0x64] sm:$0xf]
      %v401 = vld [vmem:[%s341 + $0x68] sm:$0x3]
      %v402 = vld [vmem:[%s341 + $0x6c] sm:$0xf]
      %v403 = vld [vmem:[%s341 + $0x70] sm:$0xf]
      %v404 = vld [vmem:[%s341 + $0x74] sm:$0x3]
      %v405 = vld [vmem:[%s341 + $0x78] sm:$0xf]
      %v406 = vld [vmem:[%s341 + $0x7c] sm:$0xf]
      %v407 = vld [vmem:[%s341 + $0x80] sm:$0x3]
      %v408 = vld [vmem:[%s341 + $0x84] sm:$0xf]
      %v409 = vld [vmem:[%s341 + $0x88] sm:$0xf]
      %v410 = vld [vmem:[%s341 + $0x8c] sm:$0x3]
      %v411 = vld [vmem:[%s341 + $0x90] sm:$0xf]
      %v412 = vld [vmem:[%s341 + $0x94] sm:$0xf]
      %v413 = vld [vmem:[%s341 + $0x98] sm:$0x3]
      %v414 = vld [vmem:[%s341 + $0x9c] sm:$0xf]
      %v415 = vld [vmem:[%s341 + $0xa0] sm:$0xf]
      %v416 = vld [vmem:[%s341 + $0xa4] sm:$0x3]
      %v417 = vld [vmem:[%s341 + $0xa8] sm:$0xf]
      %v418 = vld [vmem:[%s341 + $0xac] sm:$0xf]
      %v419 = vld [vmem:[%s341 + $0xb0] sm:$0x3]
      %v420 = vld [vmem:[%s341 + $0xb4] sm:$0xf]
      %v421 = vld [vmem:[%s341 + $0xb8] sm:$0xf]
      %v422 = vld [vmem:[%s341 + $0xbc] sm:$0x3]
      %v423 = vld [vmem:[%s359] sm:$0xf]
      %v424 = vld [vmem:[%s359 + $0x4] sm:$0xf]
      %v425 = vld [vmem:[%s359 + $0x8] sm:$0x3]
      %v426 = vld [vmem:[%s359 + $0xc] sm:$0xf]
      %v427 = vld [vmem:[%s359 + $0x10] sm:$0xf]
      %v428 = vld [vmem:[%s359 + $0x14] sm:$0x3]
      %v429 = vld [vmem:[%s359 + $0x18] sm:$0xf]
      %v430 = vld [vmem:[%s359 + $0x1c] sm:$0xf]
      %v431 = vld [vmem:[%s359 + $0x20] sm:$0x3]
      %v432 = vld [vmem:[%s359 + $0x24] sm:$0xf]
      %v433 = vld [vmem:[%s359 + $0x28] sm:$0xf]
      %v434 = vld [vmem:[%s359 + $0x2c] sm:$0x3]
      %v435 = vld [vmem:[%s2] sm:$0x3]
      %v436 = vld [vmem:[%s2 + $0x2] sm:$0x3]
      %v437 = vld [vmem:[%s2 + $0x4] sm:$0x3]
      %v438 = vld [vmem:[%s2 + $0x6] sm:$0x3]
      %v439 = vld [vmem:[%s2 + $0x8] sm:$0x3]
      %v440 = vld [vmem:[%s2 + $0xa] sm:$0x3]
      %v441 = vld [vmem:[%s2 + $0xc] sm:$0x3]
      %v442 = vld [vmem:[%s2 + $0xe] sm:$0x3]
      %v443 = vld [vmem:[%s2 + $0x10] sm:$0x3]
      %v444 = vld [vmem:[%s3] sm:$0x1]
      %v487 = vrot.slane %v375, 3
      %v488 = vrot.slane %v376, 3
      %v489 = vrot.slane %v377, 3
      %v490 = vrot.slane %v378, 3
      %v491 = vrot.slane %v379, 3
      %v492 = vrot.slane %v380, 3
      %v493 = vrot.slane %v381, 3
      %v494 = vrot.slane %v382, 3
      %v495 = vrot.slane %v383, 3
      %v496 = vrot.slane %v384, 3
      %v497 = vrot.slane %v385, 3
      %v498 = vrot.slane %v386, 3
      %v499 = vrot.slane %v387, 3
      %v500 = vrot.slane %v388, 3
      %v501 = vrot.slane %v389, 3
      %v502 = vrot.slane %v390, 3
      %v503 = vrot.slane %v391, 3
      %v504 = vrot.slane %v392, 3
      %v505 = vrot.slane %v393, 3
      %v506 = vrot.slane %v394, 3
      %v507 = vrot.slane %v395, 3
      %v508 = vrot.slane %v396, 3
      %v509 = vrot.slane %v397, 3
      %v510 = vrot.slane %v398, 3
      %v511 = vrot.slane %v399, 3
      %v512 = vrot.slane %v400, 3
      %v513 = vrot.slane %v401, 3
      %v514 = vrot.slane %v402, 3
      %v515 = vrot.slane %v403, 3
      %v516 = vrot.slane %v404, 3
      %v517 = vrot.slane %v405, 3
      %v518 = vrot.slane %v406, 3
      %v519 = vrot.slane %v407, 3
      %v520 = vrot.slane %v408, 3
      %v521 = vrot.slane %v409, 3
      %v522 = vrot.slane %v410, 3
      %v523 = vrot.slane %v411, 3
      %v524 = vrot.slane %v412, 3
      %v525 = vrot.slane %v413, 3
      %v526 = vrot.slane %v414, 3
      %v527 = vrot.slane %v415, 3
      %v528 = vrot.slane %v416, 3
      %vm529 = vcmask 1040384
      %v532 = vsel %vm529, %v375, %v487
      %vm533 = vcmask 1041409
      %v534 = vsel %vm533, %v375, %v487
      %v536 = vrot.slane %v534, 1
      %vm537 = vcmask 1042434
      %v538 = vsel %vm537, %v375, %v487
      %v540 = vrot.slane %v538, 2
      %vm541 = vcmask 1043459
      %v542 = vsel %vm541, %v375, %v487
      %v544 = vrot.slane %v542, 3
      %v547 = vsel %vm529, %v376, %v488
      %v548 = vsel %vm533, %v376, %v488
      %v550 = vrot.slane %v548, 1
      %v551 = vsel %vm537, %v376, %v488
      %v553 = vrot.slane %v551, 2
      %v554 = vsel %vm541, %v376, %v488
      %v556 = vrot.slane %v554, 3
      %v559 = vsel %vm529, %v377, %v489
      %v562 = vsel %vm529, %v378, %v490
      %v563 = vsel %vm533, %v378, %v490
      %v565 = vrot.slane %v563, 1
      %v566 = vsel %vm537, %v378, %v490
      %v568 = vrot.slane %v566, 2
      %v569 = vsel %vm541, %v378, %v490
      %v571 = vrot.slane %v569, 3
      %v574 = vsel %vm529, %v379, %v491
      %v575 = vsel %vm533, %v379, %v491
      %v577 = vrot.slane %v575, 1
      %v578 = vsel %vm537, %v379, %v491
      %v580 = vrot.slane %v578, 2
      %v581 = vsel %vm541, %v379, %v491
      %v583 = vrot.slane %v581, 3
      %v586 = vsel %vm529, %v380, %v492
      %v589 = vsel %vm529, %v381, %v493
      %v590 = vsel %vm533, %v381, %v493
      %v592 = vrot.slane %v590, 1
      %v593 = vsel %vm537, %v381, %v493
      %v595 = vrot.slane %v593, 2
      %v596 = vsel %vm541, %v381, %v493
      %v598 = vrot.slane %v596, 3
      %v601 = vsel %vm529, %v382, %v494
      %v602 = vsel %vm533, %v382, %v494
      %v604 = vrot.slane %v602, 1
      %v605 = vsel %vm537, %v382, %v494
      %v607 = vrot.slane %v605, 2
      %v608 = vsel %vm541, %v382, %v494
      %v610 = vrot.slane %v608, 3
      %v613 = vsel %vm529, %v383, %v495
      %v616 = vsel %vm529, %v384, %v496
      %v617 = vsel %vm533, %v384, %v496
      %v619 = vrot.slane %v617, 1
      %v620 = vsel %vm537, %v384, %v496
      %v622 = vrot.slane %v620, 2
      %v623 = vsel %vm541, %v384, %v496
      %v625 = vrot.slane %v623, 3
      %v628 = vsel %vm529, %v385, %v497
      %v629 = vsel %vm533, %v385, %v497
      %v631 = vrot.slane %v629, 1
      %v632 = vsel %vm537, %v385, %v497
      %v634 = vrot.slane %v632, 2
      %v635 = vsel %vm541, %v385, %v497
      %v637 = vrot.slane %v635, 3
      %v640 = vsel %vm529, %v386, %v498
      %v643 = vsel %vm529, %v387, %v499
      %v644 = vsel %vm533, %v387, %v499
      %v646 = vrot.slane %v644, 1
      %v647 = vsel %vm537, %v387, %v499
      %v649 = vrot.slane %v647, 2
      %v650 = vsel %vm541, %v387, %v499
      %v652 = vrot.slane %v650, 3
      %v655 = vsel %vm529, %v388, %v500
      %v656 = vsel %vm533, %v388, %v500
      %v658 = vrot.slane %v656, 1
      %v659 = vsel %vm537, %v388, %v500
      %v661 = vrot.slane %v659, 2
      %v662 = vsel %vm541, %v388, %v500
      %v664 = vrot.slane %v662, 3
      %v667 = vsel %vm529, %v389, %v501
      %v670 = vsel %vm529, %v390, %v502
      %v671 = vsel %vm533, %v390, %v502
      %v673 = vrot.slane %v671, 1
      %v674 = vsel %vm537, %v390, %v502
      %v676 = vrot.slane %v674, 2
      %v677 = vsel %vm541, %v390, %v502
      %v679 = vrot.slane %v677, 3
      %v682 = vsel %vm529, %v391, %v503
      %v683 = vsel %vm533, %v391, %v503
      %v685 = vrot.slane %v683, 1
      %v686 = vsel %vm537, %v391, %v503
      %v688 = vrot.slane %v686, 2
      %v689 = vsel %vm541, %v391, %v503
      %v691 = vrot.slane %v689, 3
      %v694 = vsel %vm529, %v392, %v504
      %v697 = vsel %vm529, %v393, %v505
      %v698 = vsel %vm533, %v393, %v505
      %v700 = vrot.slane %v698, 1
      %v701 = vsel %vm537, %v393, %v505
      %v703 = vrot.slane %v701, 2
      %v704 = vsel %vm541, %v393, %v505
      %v706 = vrot.slane %v704, 3
      %v709 = vsel %vm529, %v394, %v506
      %v710 = vsel %vm533, %v394, %v506
      %v712 = vrot.slane %v710, 1
      %v713 = vsel %vm537, %v394, %v506
      %v715 = vrot.slane %v713, 2
      %v716 = vsel %vm541, %v394, %v506
      %v718 = vrot.slane %v716, 3
      %v721 = vsel %vm529, %v395, %v507
      %v724 = vsel %vm529, %v396, %v508
      %v725 = vsel %vm533, %v396, %v508
      %v727 = vrot.slane %v725, 1
      %v728 = vsel %vm537, %v396, %v508
      %v730 = vrot.slane %v728, 2
      %v731 = vsel %vm541, %v396, %v508
      %v733 = vrot.slane %v731, 3
      %v736 = vsel %vm529, %v397, %v509
      %v737 = vsel %vm533, %v397, %v509
      %v739 = vrot.slane %v737, 1
      %v740 = vsel %vm537, %v397, %v509
      %v742 = vrot.slane %v740, 2
      %v743 = vsel %vm541, %v397, %v509
      %v745 = vrot.slane %v743, 3
      %v748 = vsel %vm529, %v398, %v510
      %v751 = vsel %vm529, %v399, %v511
      %v752 = vsel %vm533, %v399, %v511
      %v754 = vrot.slane %v752, 1
      %v755 = vsel %vm537, %v399, %v511
      %v757 = vrot.slane %v755, 2
      %v758 = vsel %vm541, %v399, %v511
      %v760 = vrot.slane %v758, 3
      %v763 = vsel %vm529, %v400, %v512
      %v764 = vsel %vm533, %v400, %v512
      %v766 = vrot.slane %v764, 1
      %v767 = vsel %vm537, %v400, %v512
      %v769 = vrot.slane %v767, 2
      %v770 = vsel %vm541, %v400, %v512
      %v772 = vrot.slane %v770, 3
      %v775 = vsel %vm529, %v401, %v513
      %v778 = vsel %vm529, %v402, %v514
      %v779 = vsel %vm533, %v402, %v514
      %v781 = vrot.slane %v779, 1
      %v782 = vsel %vm537, %v402, %v514
      %v784 = vrot.slane %v782, 2
      %v785 = vsel %vm541, %v402, %v514
      %v787 = vrot.slane %v785, 3
      %v790 = vsel %vm529, %v403, %v515
      %v791 = vsel %vm533, %v403, %v515
      %v793 = vrot.slane %v791, 1
      %v794 = vsel %vm537, %v403, %v515
      %v796 = vrot.slane %v794, 2
      %v797 = vsel %vm541, %v403, %v515
      %v799 = vrot.slane %v797, 3
      %v802 = vsel %vm529, %v404, %v516
      %v805 = vsel %vm529, %v405, %v517
      %v806 = vsel %vm533, %v405, %v517
      %v808 = vrot.slane %v806, 1
      %v809 = vsel %vm537, %v405, %v517
      %v811 = vrot.slane %v809, 2
      %v812 = vsel %vm541, %v405, %v517
      %v814 = vrot.slane %v812, 3
      %v817 = vsel %vm529, %v406, %v518
      %v818 = vsel %vm533, %v406, %v518
      %v820 = vrot.slane %v818, 1
      %v821 = vsel %vm537, %v406, %v518
      %v823 = vrot.slane %v821, 2
      %v824 = vsel %vm541, %v406, %v518
      %v826 = vrot.slane %v824, 3
      %v829 = vsel %vm529, %v407, %v519
      %v832 = vsel %vm529, %v408, %v520
      %v833 = vsel %vm533, %v408, %v520
      %v835 = vrot.slane %v833, 1
      %v836 = vsel %vm537, %v408, %v520
      %v838 = vrot.slane %v836, 2
      %v839 = vsel %vm541, %v408, %v520
      %v841 = vrot.slane %v839, 3
      %v844 = vsel %vm529, %v409, %v521
      %v845 = vsel %vm533, %v409, %v521
      %v847 = vrot.slane %v845, 1
      %v848 = vsel %vm537, %v409, %v521
      %v850 = vrot.slane %v848, 2
      %v851 = vsel %vm541, %v409, %v521
      %v853 = vrot.slane %v851, 3
      %v856 = vsel %vm529, %v410, %v522
      %v859 = vsel %vm529, %v411, %v523
      %v860 = vsel %vm533, %v411, %v523
      %v862 = vrot.slane %v860, 1
      %v863 = vsel %vm537, %v411, %v523
      %v865 = vrot.slane %v863, 2
      %v866 = vsel %vm541, %v411, %v523
      %v868 = vrot.slane %v866, 3
      %v871 = vsel %vm529, %v412, %v524
      %v872 = vsel %vm533, %v412, %v524
      %v874 = vrot.slane %v872, 1
      %v875 = vsel %vm537, %v412, %v524
      %v877 = vrot.slane %v875, 2
      %v878 = vsel %vm541, %v412, %v524
      %v880 = vrot.slane %v878, 3
      %v883 = vsel %vm529, %v413, %v525
      %v886 = vsel %vm529, %v414, %v526
      %v887 = vsel %vm533, %v414, %v526
      %v889 = vrot.slane %v887, 1
      %v890 = vsel %vm537, %v414, %v526
      %v892 = vrot.slane %v890, 2
      %v893 = vsel %vm541, %v414, %v526
      %v895 = vrot.slane %v893, 3
      %v898 = vsel %vm529, %v415, %v527
      %v899 = vsel %vm533, %v415, %v527
      %v901 = vrot.slane %v899, 1
      %v902 = vsel %vm537, %v415, %v527
      %v904 = vrot.slane %v902, 2
      %v905 = vsel %vm541, %v415, %v527
      %v907 = vrot.slane %v905, 3
      %v910 = vsel %vm529, %v416, %v528
      %v911 = vsel %vm533, %v377, %v489
      %v913 = vrot.slane %v911, 1
      %v914 = vsel %vm533, %v380, %v492
      %v916 = vrot.slane %v914, 1
      %v917 = vsel %vm533, %v383, %v495
      %v919 = vrot.slane %v917, 1
      %v920 = vsel %vm533, %v386, %v498
      %v922 = vrot.slane %v920, 1
      %v923 = vsel %vm533, %v389, %v501
      %v925 = vrot.slane %v923, 1
      %v926 = vsel %vm533, %v392, %v504
      %v928 = vrot.slane %v926, 1
      %v929 = vsel %vm533, %v395, %v507
      %v931 = vrot.slane %v929, 1
      %v932 = vsel %vm533, %v398, %v510
      %v934 = vrot.slane %v932, 1
      %v935 = vsel %vm533, %v401, %v513
      %v937 = vrot.slane %v935, 1
      %v938 = vsel %vm533, %v404, %v516
      %v940 = vrot.slane %v938, 1
      %v941 = vsel %vm533, %v407, %v519
      %v943 = vrot.slane %v941, 1
      %v944 = vsel %vm533, %v410, %v522
      %v946 = vrot.slane %v944, 1
      %v947 = vsel %vm533, %v413, %v525
      %v949 = vrot.slane %v947, 1
      %v950 = vsel %vm533, %v416, %v528
      %v952 = vrot.slane %v950, 1
      %vm953 = vsmask.f32 256
      %vm954 = vsmask.f32 1284
      %vm955 = vmor %vm953, %vm954
      %vm956 = vsmask.f32 2312
      %vm957 = vmor %vm955, %vm956
      %vm958 = vsmask.f32 3340
      %vm959 = vmor %vm957, %vm958
      %vm960 = vsmask.f32 4368
      %vm961 = vmor %vm959, %vm960
      %vm962 = vsmask.f32 5396
      %vm963 = vmor %vm961, %vm962
      %vm964 = vsmask.f32 6424
      %vm965 = vmor %vm963, %vm964
      %vm966 = vsmask.f32 7452
      %vm967 = vmor %vm965, %vm966
      %v968 = vshrl.u32 %v532, 16
      %v970 = vrot.slane %v968, 7
      %v971 = vrot.slane %v970, 1
      %v973 = vshll.u32 %v536, 16
      %v975 = vsel %vm967, %v971, %v973
      %v976 = vshrl.u32 %v536, 16
      %v978 = vrot.slane %v976, 7
      %v979 = vrot.slane %v978, 1
      %v981 = vshll.u32 %v540, 16
      %v983 = vsel %vm967, %v979, %v981
      %v984 = vshrl.u32 %v540, 16
      %v986 = vrot.slane %v984, 7
      %v987 = vrot.slane %v986, 1
      %v989 = vshll.u32 %v544, 16
      %v991 = vsel %vm967, %v987, %v989
      %v992 = vshrl.u32 %v544, 16
      %v994 = vrot.slane %v992, 7
      %v995 = vrot.slane %v994, 1
      %v996 = vshll.u32 %v547, 16
      %v998 = vsel %vm967, %v995, %v996
      %v999 = vshrl.u32 %v547, 16
      %v1001 = vrot.slane %v999, 7
      %v1002 = vrot.slane %v1001, 1
      %v1004 = vshll.u32 %v550, 16
      %v1006 = vsel %vm967, %v1002, %v1004
      %v1007 = vshrl.u32 %v550, 16
      %v1009 = vrot.slane %v1007, 7
      %v1010 = vrot.slane %v1009, 1
      %v1012 = vshll.u32 %v553, 16
      %v1014 = vsel %vm967, %v1010, %v1012
      %v1015 = vshrl.u32 %v553, 16
      %v1017 = vrot.slane %v1015, 7
      %v1018 = vrot.slane %v1017, 1
      %v1020 = vshll.u32 %v556, 16
      %v1022 = vsel %vm967, %v1018, %v1020
      %v1023 = vshrl.u32 %v556, 16
      %v1025 = vrot.slane %v1023, 7
      %v1026 = vrot.slane %v1025, 1
      %v1027 = vshll.u32 %v559, 16
      %v1029 = vsel %vm967, %v1026, %v1027
      %v1030 = vshrl.u32 %v559, 16
      %v1032 = vrot.slane %v1030, 7
      %v1033 = vrot.slane %v1032, 1
      %v1035 = vshll.u32 %v913, 16
      %v1037 = vsel %vm967, %v1033, %v1035
      %v1038 = vshrl.u32 %v562, 16
      %v1040 = vrot.slane %v1038, 7
      %v1041 = vrot.slane %v1040, 1
      %v1043 = vshll.u32 %v565, 16
      %v1045 = vsel %vm967, %v1041, %v1043
      %v1046 = vshrl.u32 %v565, 16
      %v1048 = vrot.slane %v1046, 7
      %v1049 = vrot.slane %v1048, 1
      %v1051 = vshll.u32 %v568, 16
      %v1053 = vsel %vm967, %v1049, %v1051
      %v1054 = vshrl.u32 %v568, 16
      %v1056 = vrot.slane %v1054, 7
      %v1057 = vrot.slane %v1056, 1
      %v1059 = vshll.u32 %v571, 16
      %v1061 = vsel %vm967, %v1057, %v1059
      %v1062 = vshrl.u32 %v571, 16
      %v1064 = vrot.slane %v1062, 7
      %v1065 = vrot.slane %v1064, 1
      %v1066 = vshll.u32 %v574, 16
      %v1068 = vsel %vm967, %v1065, %v1066
      %v1069 = vshrl.u32 %v574, 16
      %v1071 = vrot.slane %v1069, 7
      %v1072 = vrot.slane %v1071, 1
      %v1074 = vshll.u32 %v577, 16
      %v1076 = vsel %vm967, %v1072, %v1074
      %v1077 = vshrl.u32 %v577, 16
      %v1079 = vrot.slane %v1077, 7
      %v1080 = vrot.slane %v1079, 1
      %v1082 = vshll.u32 %v580, 16
      %v1084 = vsel %vm967, %v1080, %v1082
      %v1085 = vshrl.u32 %v580, 16
      %v1087 = vrot.slane %v1085, 7
      %v1088 = vrot.slane %v1087, 1
      %v1090 = vshll.u32 %v583, 16
      %v1092 = vsel %vm967, %v1088, %v1090
      %v1093 = vshrl.u32 %v583, 16
      %v1095 = vrot.slane %v1093, 7
      %v1096 = vrot.slane %v1095, 1
      %v1097 = vshll.u32 %v586, 16
      %v1099 = vsel %vm967, %v1096, %v1097
      %v1100 = vshrl.u32 %v586, 16
      %v1102 = vrot.slane %v1100, 7
      %v1103 = vrot.slane %v1102, 1
      %v1105 = vshll.u32 %v916, 16
      %v1107 = vsel %vm967, %v1103, %v1105
      %v1108 = vshrl.u32 %v589, 16
      %v1110 = vrot.slane %v1108, 7
      %v1111 = vrot.slane %v1110, 1
      %v1113 = vshll.u32 %v592, 16
      %v1115 = vsel %vm967, %v1111, %v1113
      %v1116 = vshrl.u32 %v592, 16
      %v1118 = vrot.slane %v1116, 7
      %v1119 = vrot.slane %v1118, 1
      %v1121 = vshll.u32 %v595, 16
      %v1123 = vsel %vm967, %v1119, %v1121
      %v1124 = vshrl.u32 %v595, 16
      %v1126 = vrot.slane %v1124, 7
      %v1127 = vrot.slane %v1126, 1
      %v1129 = vshll.u32 %v598, 16
      %v1131 = vsel %vm967, %v1127, %v1129
      %v1132 = vshrl.u32 %v598, 16
      %v1134 = vrot.slane %v1132, 7
      %v1135 = vrot.slane %v1134, 1
      %v1136 = vshll.u32 %v601, 16
      %v1138 = vsel %vm967, %v1135, %v1136
      %v1139 = vshrl.u32 %v601, 16
      %v1141 = vrot.slane %v1139, 7
      %v1142 = vrot.slane %v1141, 1
      %v1144 = vshll.u32 %v604, 16
      %v1146 = vsel %vm967, %v1142, %v1144
      %v1147 = vshrl.u32 %v604, 16
      %v1149 = vrot.slane %v1147, 7
      %v1150 = vrot.slane %v1149, 1
      %v1152 = vshll.u32 %v607, 16
      %v1154 = vsel %vm967, %v1150, %v1152
      %v1155 = vshrl.u32 %v607, 16
      %v1157 = vrot.slane %v1155, 7
      %v1158 = vrot.slane %v1157, 1
      %v1160 = vshll.u32 %v610, 16
      %v1162 = vsel %vm967, %v1158, %v1160
      %v1163 = vshrl.u32 %v610, 16
      %v1165 = vrot.slane %v1163, 7
      %v1166 = vrot.slane %v1165, 1
      %v1167 = vshll.u32 %v613, 16
      %v1169 = vsel %vm967, %v1166, %v1167
      %v1170 = vshrl.u32 %v613, 16
      %v1172 = vrot.slane %v1170, 7
      %v1173 = vrot.slane %v1172, 1
      %v1175 = vshll.u32 %v919, 16
      %v1177 = vsel %vm967, %v1173, %v1175
      %v1178 = vshrl.u32 %v616, 16
      %v1180 = vrot.slane %v1178, 7
      %v1181 = vrot.slane %v1180, 1
      %v1183 = vshll.u32 %v619, 16
      %v1185 = vsel %vm967, %v1181, %v1183
      %v1186 = vshrl.u32 %v619, 16
      %v1188 = vrot.slane %v1186, 7
      %v1189 = vrot.slane %v1188, 1
      %v1191 = vshll.u32 %v622, 16
      %v1193 = vsel %vm967, %v1189, %v1191
      %v1194 = vshrl.u32 %v622, 16
      %v1196 = vrot.slane %v1194, 7
      %v1197 = vrot.slane %v1196, 1
      %v1199 = vshll.u32 %v625, 16
      %v1201 = vsel %vm967, %v1197, %v1199
      %v1202 = vshrl.u32 %v625, 16
      %v1204 = vrot.slane %v1202, 7
      %v1205 = vrot.slane %v1204, 1
      %v1206 = vshll.u32 %v628, 16
      %v1208 = vsel %vm967, %v1205, %v1206
      %v1209 = vshrl.u32 %v628, 16
      %v1211 = vrot.slane %v1209, 7
      %v1212 = vrot.slane %v1211, 1
      %v1214 = vshll.u32 %v631, 16
      %v1216 = vsel %vm967, %v1212, %v1214
      %v1217 = vshrl.u32 %v631, 16
      %v1219 = vrot.slane %v1217, 7
      %v1220 = vrot.slane %v1219, 1
      %v1222 = vshll.u32 %v634, 16
      %v1224 = vsel %vm967, %v1220, %v1222
      %v1225 = vshrl.u32 %v634, 16
      %v1227 = vrot.slane %v1225, 7
      %v1228 = vrot.slane %v1227, 1
      %v1230 = vshll.u32 %v637, 16
      %v1232 = vsel %vm967, %v1228, %v1230
      %v1233 = vshrl.u32 %v637, 16
      %v1235 = vrot.slane %v1233, 7
      %v1236 = vrot.slane %v1235, 1
      %v1237 = vshll.u32 %v640, 16
      %v1239 = vsel %vm967, %v1236, %v1237
      %v1240 = vshrl.u32 %v640, 16
      %v1242 = vrot.slane %v1240, 7
      %v1243 = vrot.slane %v1242, 1
      %v1245 = vshll.u32 %v922, 16
      %v1247 = vsel %vm967, %v1243, %v1245
      %v1248 = vshrl.u32 %v643, 16
      %v1250 = vrot.slane %v1248, 7
      %v1251 = vrot.slane %v1250, 1
      %v1253 = vshll.u32 %v646, 16
      %v1255 = vsel %vm967, %v1251, %v1253
      %v1256 = vshrl.u32 %v646, 16
      %v1258 = vrot.slane %v1256, 7
      %v1259 = vrot.slane %v1258, 1
      %v1261 = vshll.u32 %v649, 16
      %v1263 = vsel %vm967, %v1259, %v1261
      %v1264 = vshrl.u32 %v649, 16
      %v1266 = vrot.slane %v1264, 7
      %v1267 = vrot.slane %v1266, 1
      %v1269 = vshll.u32 %v652, 16
      %v1271 = vsel %vm967, %v1267, %v1269
      %v1272 = vshrl.u32 %v652, 16
      %v1274 = vrot.slane %v1272, 7
      %v1275 = vrot.slane %v1274, 1
      %v1276 = vshll.u32 %v655, 16
      %v1278 = vsel %vm967, %v1275, %v1276
      %v1279 = vshrl.u32 %v655, 16
      %v1281 = vrot.slane %v1279, 7
      %v1282 = vrot.slane %v1281, 1
      %v1284 = vshll.u32 %v658, 16
      %v1286 = vsel %vm967, %v1282, %v1284
      %v1287 = vshrl.u32 %v658, 16
      %v1289 = vrot.slane %v1287, 7
      %v1290 = vrot.slane %v1289, 1
      %v1292 = vshll.u32 %v661, 16
      %v1294 = vsel %vm967, %v1290, %v1292
      %v1295 = vshrl.u32 %v661, 16
      %v1297 = vrot.slane %v1295, 7
      %v1298 = vrot.slane %v1297, 1
      %v1300 = vshll.u32 %v664, 16
      %v1302 = vsel %vm967, %v1298, %v1300
      %v1303 = vshrl.u32 %v664, 16
      %v1305 = vrot.slane %v1303, 7
      %v1306 = vrot.slane %v1305, 1
      %v1307 = vshll.u32 %v667, 16
      %v1309 = vsel %vm967, %v1306, %v1307
      %v1310 = vshrl.u32 %v667, 16
      %v1312 = vrot.slane %v1310, 7
      %v1313 = vrot.slane %v1312, 1
      %v1315 = vshll.u32 %v925, 16
      %v1317 = vsel %vm967, %v1313, %v1315
      %v1318 = vshrl.u32 %v670, 16
      %v1320 = vrot.slane %v1318, 7
      %v1321 = vrot.slane %v1320, 1
      %v1323 = vshll.u32 %v673, 16
      %v1325 = vsel %vm967, %v1321, %v1323
      %v1326 = vshrl.u32 %v673, 16
      %v1328 = vrot.slane %v1326, 7
      %v1329 = vrot.slane %v1328, 1
      %v1331 = vshll.u32 %v676, 16
      %v1333 = vsel %vm967, %v1329, %v1331
      %v1334 = vshrl.u32 %v676, 16
      %v1336 = vrot.slane %v1334, 7
      %v1337 = vrot.slane %v1336, 1
      %v1339 = vshll.u32 %v679, 16
      %v1341 = vsel %vm967, %v1337, %v1339
      %v1342 = vshrl.u32 %v679, 16
      %v1344 = vrot.slane %v1342, 7
      %v1345 = vrot.slane %v1344, 1
      %v1346 = vshll.u32 %v682, 16
      %v1348 = vsel %vm967, %v1345, %v1346
      %v1349 = vshrl.u32 %v682, 16
      %v1351 = vrot.slane %v1349, 7
      %v1352 = vrot.slane %v1351, 1
      %v1354 = vshll.u32 %v685, 16
      %v1356 = vsel %vm967, %v1352, %v1354
      %v1357 = vshrl.u32 %v685, 16
      %v1359 = vrot.slane %v1357, 7
      %v1360 = vrot.slane %v1359, 1
      %v1362 = vshll.u32 %v688, 16
      %v1364 = vsel %vm967, %v1360, %v1362
      %v1365 = vshrl.u32 %v688, 16
      %v1367 = vrot.slane %v1365, 7
      %v1368 = vrot.slane %v1367, 1
      %v1370 = vshll.u32 %v691, 16
      %v1372 = vsel %vm967, %v1368, %v1370
      %v1373 = vshrl.u32 %v691, 16
      %v1375 = vrot.slane %v1373, 7
      %v1376 = vrot.slane %v1375, 1
      %v1377 = vshll.u32 %v694, 16
      %v1379 = vsel %vm967, %v1376, %v1377
      %v1380 = vshrl.u32 %v694, 16
      %v1382 = vrot.slane %v1380, 7
      %v1383 = vrot.slane %v1382, 1
      %v1385 = vshll.u32 %v928, 16
      %v1387 = vsel %vm967, %v1383, %v1385
      %v1388 = vshrl.u32 %v697, 16
      %v1390 = vrot.slane %v1388, 7
      %v1391 = vrot.slane %v1390, 1
      %v1393 = vshll.u32 %v700, 16
      %v1395 = vsel %vm967, %v1391, %v1393
      %v1396 = vshrl.u32 %v700, 16
      %v1398 = vrot.slane %v1396, 7
      %v1399 = vrot.slane %v1398, 1
      %v1401 = vshll.u32 %v703, 16
      %v1403 = vsel %vm967, %v1399, %v1401
      %v1404 = vshrl.u32 %v703, 16
      %v1406 = vrot.slane %v1404, 7
      %v1407 = vrot.slane %v1406, 1
      %v1409 = vshll.u32 %v706, 16
      %v1411 = vsel %vm967, %v1407, %v1409
      %v1412 = vshrl.u32 %v706, 16
      %v1414 = vrot.slane %v1412, 7
      %v1415 = vrot.slane %v1414, 1
      %v1416 = vshll.u32 %v709, 16
      %v1418 = vsel %vm967, %v1415, %v1416
      %v1419 = vshrl.u32 %v709, 16
      %v1421 = vrot.slane %v1419, 7
      %v1422 = vrot.slane %v1421, 1
      %v1424 = vshll.u32 %v712, 16
      %v1426 = vsel %vm967, %v1422, %v1424
      %v1427 = vshrl.u32 %v712, 16
      %v1429 = vrot.slane %v1427, 7
      %v1430 = vrot.slane %v1429, 1
      %v1432 = vshll.u32 %v715, 16
      %v1434 = vsel %vm967, %v1430, %v1432
      %v1435 = vshrl.u32 %v715, 16
      %v1437 = vrot.slane %v1435, 7
      %v1438 = vrot.slane %v1437, 1
      %v1440 = vshll.u32 %v718, 16
      %v1442 = vsel %vm967, %v1438, %v1440
      %v1443 = vshrl.u32 %v718, 16
      %v1445 = vrot.slane %v1443, 7
      %v1446 = vrot.slane %v1445, 1
      %v1447 = vshll.u32 %v721, 16
      %v1449 = vsel %vm967, %v1446, %v1447
      %v1450 = vshrl.u32 %v721, 16
      %v1452 = vrot.slane %v1450, 7
      %v1453 = vrot.slane %v1452, 1
      %v1455 = vshll.u32 %v931, 16
      %v1457 = vsel %vm967, %v1453, %v1455
      %v1458 = vshrl.u32 %v724, 16
      %v1460 = vrot.slane %v1458, 7
      %v1461 = vrot.slane %v1460, 1
      %v1463 = vshll.u32 %v727, 16
      %v1465 = vsel %vm967, %v1461, %v1463
      %v1466 = vshrl.u32 %v727, 16
      %v1468 = vrot.slane %v1466, 7
      %v1469 = vrot.slane %v1468, 1
      %v1471 = vshll.u32 %v730, 16
      %v1473 = vsel %vm967, %v1469, %v1471
      %v1474 = vshrl.u32 %v730, 16
      %v1476 = vrot.slane %v1474, 7
      %v1477 = vrot.slane %v1476, 1
      %v1479 = vshll.u32 %v733, 16
      %v1481 = vsel %vm967, %v1477, %v1479
      %v1482 = vshrl.u32 %v733, 16
      %v1484 = vrot.slane %v1482, 7
      %v1485 = vrot.slane %v1484, 1
      %v1486 = vshll.u32 %v736, 16
      %v1488 = vsel %vm967, %v1485, %v1486
      %v1489 = vshrl.u32 %v736, 16
      %v1491 = vrot.slane %v1489, 7
      %v1492 = vrot.slane %v1491, 1
      %v1494 = vshll.u32 %v739, 16
      %v1496 = vsel %vm967, %v1492, %v1494
      %v1497 = vshrl.u32 %v739, 16
      %v1499 = vrot.slane %v1497, 7
      %v1500 = vrot.slane %v1499, 1
      %v1502 = vshll.u32 %v742, 16
      %v1504 = vsel %vm967, %v1500, %v1502
      %v1505 = vshrl.u32 %v742, 16
      %v1507 = vrot.slane %v1505, 7
      %v1508 = vrot.slane %v1507, 1
      %v1510 = vshll.u32 %v745, 16
      %v1512 = vsel %vm967, %v1508, %v1510
      %v1513 = vshrl.u32 %v745, 16
      %v1515 = vrot.slane %v1513, 7
      %v1516 = vrot.slane %v1515, 1
      %v1517 = vshll.u32 %v748, 16
      %v1519 = vsel %vm967, %v1516, %v1517
      %v1520 = vshrl.u32 %v748, 16
      %v1522 = vrot.slane %v1520, 7
      %v1523 = vrot.slane %v1522, 1
      %v1525 = vshll.u32 %v934, 16
      %v1527 = vsel %vm967, %v1523, %v1525
      %v1528 = vshrl.u32 %v751, 16
      %v1530 = vrot.slane %v1528, 7
      %v1531 = vrot.slane %v1530, 1
      %v1533 = vshll.u32 %v754, 16
      %v1535 = vsel %vm967, %v1531, %v1533
      %v1536 = vshrl.u32 %v754, 16
      %v1538 = vrot.slane %v1536, 7
      %v1539 = vrot.slane %v1538, 1
      %v1541 = vshll.u32 %v757, 16
      %v1543 = vsel %vm967, %v1539, %v1541
      %v1544 = vshrl.u32 %v757, 16
      %v1546 = vrot.slane %v1544, 7
      %v1547 = vrot.slane %v1546, 1
      %v1549 = vshll.u32 %v760, 16
      %v1551 = vsel %vm967, %v1547, %v1549
      %v1552 = vshrl.u32 %v760, 16
      %v1554 = vrot.slane %v1552, 7
      %v1555 = vrot.slane %v1554, 1
      %v1556 = vshll.u32 %v763, 16
      %v1558 = vsel %vm967, %v1555, %v1556
      %v1559 = vshrl.u32 %v763, 16
      %v1561 = vrot.slane %v1559, 7
      %v1562 = vrot.slane %v1561, 1
      %v1564 = vshll.u32 %v766, 16
      %v1566 = vsel %vm967, %v1562, %v1564
      %v1567 = vshrl.u32 %v766, 16
      %v1569 = vrot.slane %v1567, 7
      %v1570 = vrot.slane %v1569, 1
      %v1572 = vshll.u32 %v769, 16
      %v1574 = vsel %vm967, %v1570, %v1572
      %v1575 = vshrl.u32 %v769, 16
      %v1577 = vrot.slane %v1575, 7
      %v1578 = vrot.slane %v1577, 1
      %v1580 = vshll.u32 %v772, 16
      %v1582 = vsel %vm967, %v1578, %v1580
      %v1583 = vshrl.u32 %v772, 16
      %v1585 = vrot.slane %v1583, 7
      %v1586 = vrot.slane %v1585, 1
      %v1587 = vshll.u32 %v775, 16
      %v1589 = vsel %vm967, %v1586, %v1587
      %v1590 = vshrl.u32 %v775, 16
      %v1592 = vrot.slane %v1590, 7
      %v1593 = vrot.slane %v1592, 1
      %v1595 = vshll.u32 %v937, 16
      %v1597 = vsel %vm967, %v1593, %v1595
      %v1598 = vshrl.u32 %v778, 16
      %v1600 = vrot.slane %v1598, 7
      %v1601 = vrot.slane %v1600, 1
      %v1603 = vshll.u32 %v781, 16
      %v1605 = vsel %vm967, %v1601, %v1603
      %v1606 = vshrl.u32 %v781, 16
      %v1608 = vrot.slane %v1606, 7
      %v1609 = vrot.slane %v1608, 1
      %v1611 = vshll.u32 %v784, 16
      %v1613 = vsel %vm967, %v1609, %v1611
      %v1614 = vshrl.u32 %v784, 16
      %v1616 = vrot.slane %v1614, 7
      %v1617 = vrot.slane %v1616, 1
      %v1619 = vshll.u32 %v787, 16
      %v1621 = vsel %vm967, %v1617, %v1619
      %v1622 = vshrl.u32 %v787, 16
      %v1624 = vrot.slane %v1622, 7
      %v1625 = vrot.slane %v1624, 1
      %v1626 = vshll.u32 %v790, 16
      %v1628 = vsel %vm967, %v1625, %v1626
      %v1629 = vshrl.u32 %v790, 16
      %v1631 = vrot.slane %v1629, 7
      %v1632 = vrot.slane %v1631, 1
      %v1634 = vshll.u32 %v793, 16
      %v1636 = vsel %vm967, %v1632, %v1634
      %v1637 = vshrl.u32 %v793, 16
      %v1639 = vrot.slane %v1637, 7
      %v1640 = vrot.slane %v1639, 1
      %v1642 = vshll.u32 %v796, 16
      %v1644 = vsel %vm967, %v1640, %v1642
      %v1645 = vshrl.u32 %v796, 16
      %v1647 = vrot.slane %v1645, 7
      %v1648 = vrot.slane %v1647, 1
      %v1650 = vshll.u32 %v799, 16
      %v1652 = vsel %vm967, %v1648, %v1650
      %v1653 = vshrl.u32 %v799, 16
      %v1655 = vrot.slane %v1653, 7
      %v1656 = vrot.slane %v1655, 1
      %v1657 = vshll.u32 %v802, 16
      %v1659 = vsel %vm967, %v1656, %v1657
      %v1660 = vshrl.u32 %v802, 16
      %v1662 = vrot.slane %v1660, 7
      %v1663 = vrot.slane %v1662, 1
      %v1665 = vshll.u32 %v940, 16
      %v1667 = vsel %vm967, %v1663, %v1665
      %v1668 = vshrl.u32 %v805, 16
      %v1670 = vrot.slane %v1668, 7
      %v1671 = vrot.slane %v1670, 1
      %v1673 = vshll.u32 %v808, 16
      %v1675 = vsel %vm967, %v1671, %v1673
      %v1676 = vshrl.u32 %v808, 16
      %v1678 = vrot.slane %v1676, 7
      %v1679 = vrot.slane %v1678, 1
      %v1681 = vshll.u32 %v811, 16
      %v1683 = vsel %vm967, %v1679, %v1681
      %v1684 = vshrl.u32 %v811, 16
      %v1686 = vrot.slane %v1684, 7
      %v1687 = vrot.slane %v1686, 1
      %v1689 = vshll.u32 %v814, 16
      %v1691 = vsel %vm967, %v1687, %v1689
      %v1692 = vshrl.u32 %v814, 16
      %v1694 = vrot.slane %v1692, 7
      %v1695 = vrot.slane %v1694, 1
      %v1696 = vshll.u32 %v817, 16
      %v1698 = vsel %vm967, %v1695, %v1696
      %v1699 = vshrl.u32 %v817, 16
      %v1701 = vrot.slane %v1699, 7
      %v1702 = vrot.slane %v1701, 1
      %v1704 = vshll.u32 %v820, 16
      %v1706 = vsel %vm967, %v1702, %v1704
      %v1707 = vshrl.u32 %v820, 16
      %v1709 = vrot.slane %v1707, 7
      %v1710 = vrot.slane %v1709, 1
      %v1712 = vshll.u32 %v823, 16
      %v1714 = vsel %vm967, %v1710, %v1712
      %v1715 = vshrl.u32 %v823, 16
      %v1717 = vrot.slane %v1715, 7
      %v1718 = vrot.slane %v1717, 1
      %v1720 = vshll.u32 %v826, 16
      %v1722 = vsel %vm967, %v1718, %v1720
      %v1723 = vshrl.u32 %v826, 16
      %v1725 = vrot.slane %v1723, 7
      %v1726 = vrot.slane %v1725, 1
      %v1727 = vshll.u32 %v829, 16
      %v1729 = vsel %vm967, %v1726, %v1727
      %v1730 = vshrl.u32 %v829, 16
      %v1732 = vrot.slane %v1730, 7
      %v1733 = vrot.slane %v1732, 1
      %v1735 = vshll.u32 %v943, 16
      %v1737 = vsel %vm967, %v1733, %v1735
      %v1738 = vshrl.u32 %v832, 16
      %v1740 = vrot.slane %v1738, 7
      %v1741 = vrot.slane %v1740, 1
      %v1743 = vshll.u32 %v835, 16
      %v1745 = vsel %vm967, %v1741, %v1743
      %v1746 = vshrl.u32 %v835, 16
      %v1748 = vrot.slane %v1746, 7
      %v1749 = vrot.slane %v1748, 1
      %v1751 = vshll.u32 %v838, 16
      %v1753 = vsel %vm967, %v1749, %v1751
      %v1754 = vshrl.u32 %v838, 16
      %v1756 = vrot.slane %v1754, 7
      %v1757 = vrot.slane %v1756, 1
      %v1759 = vshll.u32 %v841, 16
      %v1761 = vsel %vm967, %v1757, %v1759
      %v1762 = vshrl.u32 %v841, 16
      %v1764 = vrot.slane %v1762, 7
      %v1765 = vrot.slane %v1764, 1
      %v1766 = vshll.u32 %v844, 16
      %v1768 = vsel %vm967, %v1765, %v1766
      %v1769 = vshrl.u32 %v844, 16
      %v1771 = vrot.slane %v1769, 7
      %v1772 = vrot.slane %v1771, 1
      %v1774 = vshll.u32 %v847, 16
      %v1776 = vsel %vm967, %v1772, %v1774
      %v1777 = vshrl.u32 %v847, 16
      %v1779 = vrot.slane %v1777, 7
      %v1780 = vrot.slane %v1779, 1
      %v1782 = vshll.u32 %v850, 16
      %v1784 = vsel %vm967, %v1780, %v1782
      %v1785 = vshrl.u32 %v850, 16
      %v1787 = vrot.slane %v1785, 7
      %v1788 = vrot.slane %v1787, 1
      %v1790 = vshll.u32 %v853, 16
      %v1792 = vsel %vm967, %v1788, %v1790
      %v1793 = vshrl.u32 %v853, 16
      %v1795 = vrot.slane %v1793, 7
      %v1796 = vrot.slane %v1795, 1
      %v1797 = vshll.u32 %v856, 16
      %v1799 = vsel %vm967, %v1796, %v1797
      %v1800 = vshrl.u32 %v856, 16
      %v1802 = vrot.slane %v1800, 7
      %v1803 = vrot.slane %v1802, 1
      %v1805 = vshll.u32 %v946, 16
      %v1807 = vsel %vm967, %v1803, %v1805
      %v1808 = vshrl.u32 %v859, 16
      %v1810 = vrot.slane %v1808, 7
      %v1811 = vrot.slane %v1810, 1
      %v1813 = vshll.u32 %v862, 16
      %v1815 = vsel %vm967, %v1811, %v1813
      %v1816 = vshrl.u32 %v862, 16
      %v1818 = vrot.slane %v1816, 7
      %v1819 = vrot.slane %v1818, 1
      %v1821 = vshll.u32 %v865, 16
      %v1823 = vsel %vm967, %v1819, %v1821
      %v1824 = vshrl.u32 %v865, 16
      %v1826 = vrot.slane %v1824, 7
      %v1827 = vrot.slane %v1826, 1
      %v1829 = vshll.u32 %v868, 16
      %v1831 = vsel %vm967, %v1827, %v1829
      %v1832 = vshrl.u32 %v868, 16
      %v1834 = vrot.slane %v1832, 7
      %v1835 = vrot.slane %v1834, 1
      %v1836 = vshll.u32 %v871, 16
      %v1838 = vsel %vm967, %v1835, %v1836
      %v1839 = vshrl.u32 %v871, 16
      %v1841 = vrot.slane %v1839, 7
      %v1842 = vrot.slane %v1841, 1
      %v1844 = vshll.u32 %v874, 16
      %v1846 = vsel %vm967, %v1842, %v1844
      %v1847 = vshrl.u32 %v874, 16
      %v1849 = vrot.slane %v1847, 7
      %v1850 = vrot.slane %v1849, 1
      %v1852 = vshll.u32 %v877, 16
      %v1854 = vsel %vm967, %v1850, %v1852
      %v1855 = vshrl.u32 %v877, 16
      %v1857 = vrot.slane %v1855, 7
      %v1858 = vrot.slane %v1857, 1
      %v1860 = vshll.u32 %v880, 16
      %v1862 = vsel %vm967, %v1858, %v1860
      %v1863 = vshrl.u32 %v880, 16
      %v1865 = vrot.slane %v1863, 7
      %v1866 = vrot.slane %v1865, 1
      %v1867 = vshll.u32 %v883, 16
      %v1869 = vsel %vm967, %v1866, %v1867
      %v1870 = vshrl.u32 %v883, 16
      %v1872 = vrot.slane %v1870, 7
      %v1873 = vrot.slane %v1872, 1
      %v1875 = vshll.u32 %v949, 16
      %v1877 = vsel %vm967, %v1873, %v1875
      %v1878 = vshrl.u32 %v886, 16
      %v1880 = vrot.slane %v1878, 7
      %v1881 = vrot.slane %v1880, 1
      %v1883 = vshll.u32 %v889, 16
      %v1885 = vsel %vm967, %v1881, %v1883
      %v1886 = vshrl.u32 %v889, 16
      %v1888 = vrot.slane %v1886, 7
      %v1889 = vrot.slane %v1888, 1
      %v1891 = vshll.u32 %v892, 16
      %v1893 = vsel %vm967, %v1889, %v1891
      %v1894 = vshrl.u32 %v892, 16
      %v1896 = vrot.slane %v1894, 7
      %v1897 = vrot.slane %v1896, 1
      %v1899 = vshll.u32 %v895, 16
      %v1901 = vsel %vm967, %v1897, %v1899
      %v1902 = vshrl.u32 %v895, 16
      %v1904 = vrot.slane %v1902, 7
      %v1905 = vrot.slane %v1904, 1
      %v1906 = vshll.u32 %v898, 16
      %v1908 = vsel %vm967, %v1905, %v1906
      %v1909 = vshrl.u32 %v898, 16
      %v1911 = vrot.slane %v1909, 7
      %v1912 = vrot.slane %v1911, 1
      %v1914 = vshll.u32 %v901, 16
      %v1916 = vsel %vm967, %v1912, %v1914
      %v1917 = vshrl.u32 %v901, 16
      %v1919 = vrot.slane %v1917, 7
      %v1920 = vrot.slane %v1919, 1
      %v1922 = vshll.u32 %v904, 16
      %v1924 = vsel %vm967, %v1920, %v1922
      %v1925 = vshrl.u32 %v904, 16
      %v1927 = vrot.slane %v1925, 7
      %v1928 = vrot.slane %v1927, 1
      %v1930 = vshll.u32 %v907, 16
      %v1932 = vsel %vm967, %v1928, %v1930
      %v1933 = vshrl.u32 %v907, 16
      %v1935 = vrot.slane %v1933, 7
      %v1936 = vrot.slane %v1935, 1
      %v1937 = vshll.u32 %v910, 16
      %v1939 = vsel %vm967, %v1936, %v1937
      %v1940 = vshrl.u32 %v910, 16
      %v1942 = vrot.slane %v1940, 7
      %v1943 = vrot.slane %v1942, 1
      %v1945 = vshll.u32 %v952, 16
      %v1947 = vsel %vm967, %v1943, %v1945
      %1949 = vst [vmem:[#allocation1] ss:$9 sm:$0xff] %v975
      %s1951 = scalar_lea.vmem [#allocation1], 1
      %1952 = vst [vmem:[%s1951] ss:$9 sm:$0xff] %v983
      %s1954 = scalar_lea.vmem [#allocation1], 2
      %1955 = vst [vmem:[%s1954] ss:$9 sm:$0xff] %v991
      %s1957 = scalar_lea.vmem [#allocation1], 3
      %1958 = vst [vmem:[%s1957] ss:$9 sm:$0xff] %v998
      %s1960 = scalar_lea.vmem [#allocation1], 4
      %1961 = vst [vmem:[%s1960] ss:$9 sm:$0xff] %v1006
      %s1963 = scalar_lea.vmem [#allocation1], 5
      %1964 = vst [vmem:[%s1963] ss:$9 sm:$0xff] %v1014
      %s1966 = scalar_lea.vmem [#allocation1], 6
      %1967 = vst [vmem:[%s1966] ss:$9 sm:$0xff] %v1022
      %s1969 = scalar_lea.vmem [#allocation1], 7
      %1970 = vst [vmem:[%s1969] ss:$9 sm:$0xff] %v1029
      %v1971 = vld [vmem:[#allocation1] sm:$0xff]
      %1973 = vst [vmem:[#allocation1] ss:$9 sm:$0xff] %v1037
      %1975 = vst [vmem:[%s1951] ss:$9 sm:$0xff] %v1045
      %1977 = vst [vmem:[%s1954] ss:$9 sm:$0xff] %v1053
      %1979 = vst [vmem:[%s1957] ss:$9 sm:$0xff] %v1061
      %1981 = vst [vmem:[%s1960] ss:$9 sm:$0xff] %v1068
      %1983 = vst [vmem:[%s1963] ss:$9 sm:$0xff] %v1076
      %1985 = vst [vmem:[%s1966] ss:$9 sm:$0xff] %v1084
      %1987 = vst [vmem:[%s1969] ss:$9 sm:$0xff] %v1092
      %v1988 = vld [vmem:[#allocation1] sm:$0xff]
      %1990 = vst [vmem:[#allocation1] ss:$9 sm:$0xff] %v1099
      %1992 = vst [vmem:[%s1951] ss:$9 sm:$0xff] %v1107
      %1994 = vst [vmem:[%s1954] ss:$9 sm:$0xff] %v1115
      %1996 = vst [vmem:[%s1957] ss:$9 sm:$0xff] %v1123
      %1998 = vst [vmem:[%s1960] ss:$9 sm:$0xff] %v1131
      %2000 = vst [vmem:[%s1963] ss:$9 sm:$0xff] %v1138
      %2002 = vst [vmem:[%s1966] ss:$9 sm:$0xff] %v1146
      %2004 = vst [vmem:[%s1969] ss:$9 sm:$0xff] %v1154
      %v2005 = vld [vmem:[#allocation1] sm:$0xff]
      %2007 = vst [vmem:[#allocation1] ss:$9 sm:$0xff] %v1162
      %2009 = vst [vmem:[%s1951] ss:$9 sm:$0xff] %v1169
      %2011 = vst [vmem:[%s1954] ss:$9 sm:$0xff] %v1177
      %2013 = vst [vmem:[%s1957] ss:$9 sm:$0xff] %v1185
      %2015 = vst [vmem:[%s1960] ss:$9 sm:$0xff] %v1193
      %2017 = vst [vmem:[%s1963] ss:$9 sm:$0xff] %v1201
      %2019 = vst [vmem:[%s1966] ss:$9 sm:$0xff] %v1208
      %2021 = vst [vmem:[%s1969] ss:$9 sm:$0xff] %v1216
      %v2022 = vld [vmem:[#allocation1] sm:$0xff]
      %2024 = vst [vmem:[#allocation1] ss:$9 sm:$0xff] %v1224
      %2026 = vst [vmem:[%s1951] ss:$9 sm:$0xff] %v1232
      %2028 = vst [vmem:[%s1954] ss:$9 sm:$0xff] %v1239
      %2030 = vst [vmem:[%s1957] ss:$9 sm:$0xff] %v1247
      %2032 = vst [vmem:[%s1960] ss:$9 sm:$0xff] %v1255
      %2034 = vst [vmem:[%s1963] ss:$9 sm:$0xff] %v1263
      %2036 = vst [vmem:[%s1966] ss:$9 sm:$0xff] %v1271
      %2038 = vst [vmem:[%s1969] ss:$9 sm:$0xff] %v1278
      %v2039 = vld [vmem:[#allocation1] sm:$0xff]
      %2041 = vst [vmem:[#allocation1] ss:$9 sm:$0xff] %v1286
      %2043 = vst [vmem:[%s1951] ss:$9 sm:$0xff] %v1294
      %2045 = vst [vmem:[%s1954] ss:$9 sm:$0xff] %v1302
      %2047 = vst [vmem:[%s1957] ss:$9 sm:$0xff] %v1309
      %2049 = vst [vmem:[%s1960] ss:$9 sm:$0xff] %v1317
      %2051 = vst [vmem:[%s1963] ss:$9 sm:$0xff] %v1325
      %2053 = vst [vmem:[%s1966] ss:$9 sm:$0xff] %v1333
      %2055 = vst [vmem:[%s1969] ss:$9 sm:$0xff] %v1341
      %v2056 = vld [vmem:[#allocation1] sm:$0xff]
      %2058 = vst [vmem:[#allocation1] ss:$9 sm:$0xff] %v1348
      %2060 = vst [vmem:[%s1951] ss:$9 sm:$0xff] %v1356
      %2062 = vst [vmem:[%s1954] ss:$9 sm:$0xff] %v1364
      %2064 = vst [vmem:[%s1957] ss:$9 sm:$0xff] %v1372
      %2066 = vst [vmem:[%s1960] ss:$9 sm:$0xff] %v1379
      %2068 = vst [vmem:[%s1963] ss:$9 sm:$0xff] %v1387
      %2070 = vst [vmem:[%s1966] ss:$9 sm:$0xff] %v1395
      %2072 = vst [vmem:[%s1969] ss:$9 sm:$0xff] %v1403
      %v2073 = vld [vmem:[#allocation1] sm:$0xff]
      %2075 = vst [vmem:[#allocation1] ss:$9 sm:$0xff] %v1411
      %2077 = vst [vmem:[%s1951] ss:$9 sm:$0xff] %v1418
      %2079 = vst [vmem:[%s1954] ss:$9 sm:$0xff] %v1426
      %2081 = vst [vmem:[%s1957] ss:$9 sm:$0xff] %v1434
      %2083 = vst [vmem:[%s1960] ss:$9 sm:$0xff] %v1442
      %2085 = vst [vmem:[%s1963] ss:$9 sm:$0xff] %v1449
      %2087 = vst [vmem:[%s1966] ss:$9 sm:$0xff] %v1457
      %2089 = vst [vmem:[%s1969] ss:$9 sm:$0xff] %v1465
      %v2090 = vld [vmem:[#allocation1] sm:$0xff]
      %2092 = vst [vmem:[#allocation1] ss:$9 sm:$0xff] %v1473
      %2094 = vst [vmem:[%s1951] ss:$9 sm:$0xff] %v1481
      %2096 = vst [vmem:[%s1954] ss:$9 sm:$0xff] %v1488
      %2098 = vst [vmem:[%s1957] ss:$9 sm:$0xff] %v1496
      %2100 = vst [vmem:[%s1960] ss:$9 sm:$0xff] %v1504
      %2102 = vst [vmem:[%s1963] ss:$9 sm:$0xff] %v1512
      %2104 = vst [vmem:[%s1966] ss:$9 sm:$0xff] %v1519
      %2106 = vst [vmem:[%s1969] ss:$9 sm:$0xff] %v1527
      %v2107 = vld [vmem:[#allocation1] sm:$0xff]
      %2109 = vst [vmem:[#allocation1] ss:$9 sm:$0xff] %v1535
      %2111 = vst [vmem:[%s1951] ss:$9 sm:$0xff] %v1543
      %2113 = vst [vmem:[%s1954] ss:$9 sm:$0xff] %v1551
      %2115 = vst [vmem:[%s1957] ss:$9 sm:$0xff] %v1558
      %2117 = vst [vmem:[%s1960] ss:$9 sm:$0xff] %v1566
      %2119 = vst [vmem:[%s1963] ss:$9 sm:$0xff] %v1574
      %2121 = vst [vmem:[%s1966] ss:$9 sm:$0xff] %v1582
      %2123 = vst [vmem:[%s1969] ss:$9 sm:$0xff] %v1589
      %v2124 = vld [vmem:[#allocation1] sm:$0xff]
      %2126 = vst [vmem:[#allocation1] ss:$9 sm:$0xff] %v1597
      %2128 = vst [vmem:[%s1951] ss:$9 sm:$0xff] %v1605
      %2130 = vst [vmem:[%s1954] ss:$9 sm:$0xff] %v1613
      %2132 = vst [vmem:[%s1957] ss:$9 sm:$0xff] %v1621
      %2134 = vst [vmem:[%s1960] ss:$9 sm:$0xff] %v1628
      %2136 = vst [vmem:[%s1963] ss:$9 sm:$0xff] %v1636
      %2138 = vst [vmem:[%s1966] ss:$9 sm:$0xff] %v1644
      %2140 = vst [vmem:[%s1969] ss:$9 sm:$0xff] %v1652
      %v2141 = vld [vmem:[#allocation1] sm:$0xff]
      %2143 = vst [vmem:[#allocation1] ss:$9 sm:$0xff] %v1659
      %2145 = vst [vmem:[%s1951] ss:$9 sm:$0xff] %v1667
      %2147 = vst [vmem:[%s1954] ss:$9 sm:$0xff] %v1675
      %2149 = vst [vmem:[%s1957] ss:$9 sm:$0xff] %v1683
      %2151 = vst [vmem:[%s1960] ss:$9 sm:$0xff] %v1691
      %2153 = vst [vmem:[%s1963] ss:$9 sm:$0xff] %v1698
      %2155 = vst [vmem:[%s1966] ss:$9 sm:$0xff] %v1706
      %2157 = vst [vmem:[%s1969] ss:$9 sm:$0xff] %v1714
      %v2158 = vld [vmem:[#allocation1] sm:$0xff]
      %2160 = vst [vmem:[#allocation1] ss:$9 sm:$0xff] %v1722
      %2162 = vst [vmem:[%s1951] ss:$9 sm:$0xff] %v1729
      %2164 = vst [vmem:[%s1954] ss:$9 sm:$0xff] %v1737
      %2166 = vst [vmem:[%s1957] ss:$9 sm:$0xff] %v1745
      %2168 = vst [vmem:[%s1960] ss:$9 sm:$0xff] %v1753
      %2170 = vst [vmem:[%s1963] ss:$9 sm:$0xff] %v1761
      %2172 = vst [vmem:[%s1966] ss:$9 sm:$0xff] %v1768
      %2174 = vst [vmem:[%s1969] ss:$9 sm:$0xff] %v1776
      %v2175 = vld [vmem:[#allocation1] sm:$0xff]
      %2177 = vst [vmem:[#allocation1] ss:$9 sm:$0xff] %v1784
      %2179 = vst [vmem:[%s1951] ss:$9 sm:$0xff] %v1792
      %2181 = vst [vmem:[%s1954] ss:$9 sm:$0xff] %v1799
      %2183 = vst [vmem:[%s1957] ss:$9 sm:$0xff] %v1807
      %2185 = vst [vmem:[%s1960] ss:$9 sm:$0xff] %v1815
      %2187 = vst [vmem:[%s1963] ss:$9 sm:$0xff] %v1823
      %2189 = vst [vmem:[%s1966] ss:$9 sm:$0xff] %v1831
      %2191 = vst [vmem:[%s1969] ss:$9 sm:$0xff] %v1838
      %v2192 = vld [vmem:[#allocation1] sm:$0xff]
      %2194 = vst [vmem:[#allocation1] ss:$9 sm:$0xff] %v1846
      %2196 = vst [vmem:[%s1951] ss:$9 sm:$0xff] %v1854
      %2198 = vst [vmem:[%s1954] ss:$9 sm:$0xff] %v1862
      %2200 = vst [vmem:[%s1957] ss:$9 sm:$0xff] %v1869
      %2202 = vst [vmem:[%s1960] ss:$9 sm:$0xff] %v1877
      %2204 = vst [vmem:[%s1963] ss:$9 sm:$0xff] %v1885
      %2206 = vst [vmem:[%s1966] ss:$9 sm:$0xff] %v1893
      %2208 = vst [vmem:[%s1969] ss:$9 sm:$0xff] %v1901
      %v2209 = vld [vmem:[#allocation1] sm:$0xff]
      %2211 = vst [vmem:[#allocation1] ss:$9 sm:$0xff] %v1908
      %2213 = vst [vmem:[%s1951] ss:$9 sm:$0xff] %v1916
      %2215 = vst [vmem:[%s1954] ss:$9 sm:$0xff] %v1924
      %2217 = vst [vmem:[%s1957] ss:$9 sm:$0xff] %v1932
      %2219 = vst [vmem:[%s1960] ss:$9 sm:$0xff] %v1939
      %2221 = vst [vmem:[%s1963] ss:$9 sm:$0xff] %v1947
      %v2222 = vld [vmem:[#allocation1] sm:$0xff]
      %vm2223 = vcmask 31744
      %v2224 = vsel %vm2223, %v1971, 0
      %v2226 = vsel %vm2223, %v1988, 0
      %v2228 = vsel %vm2223, %v2005, 0
      %v2230 = vsel %vm2223, %v2022, 0
      %v2232 = vsel %vm2223, %v2039, 0
      %v2234 = vsel %vm2223, %v2056, 0
      %v2236 = vsel %vm2223, %v2073, 0
      %v2238 = vsel %vm2223, %v2090, 0
      %v2240 = vsel %vm2223, %v2107, 0
      %v2242 = vsel %vm2223, %v2124, 0
      %v2244 = vsel %vm2223, %v2141, 0
      %v2246 = vsel %vm2223, %v2158, 0
      %v2248 = vsel %vm2223, %v2175, 0
      %v2250 = vsel %vm2223, %v2192, 0
      %v2252 = vsel %vm2223, %v2209, 0
      %v2254 = vsel %vm2223, %v2222, 0
      %vm2256 = vcmask 1041408
      %v2258 = vsel %vm2256, %v436, 0
      %2260 = vmatpush.bf16.msra.mxu0 0
      %2261 = vmatpush.bf16.msra.mxu0 0
      %2262 = vmatpush.bf16.msra.mxu0 0
      %2263 = vmatpush.bf16.msra.mxu0 0
      %2264 = vmatpush.bf16.msra.mxu0 0
      %2265 = vmatpush.bf16.msra.mxu0 0
      %2266 = vmatpush.bf16.msra.mxu0 0
      %2267 = vmatpush.bf16.msra.mxu0 %v2258
      %2268 = vmatmul.bf16.gmra.mxu0 %v2224
      %v2269 = vpop.f32.mrf.mxu0
      %v2270 = vadd.f32 0.0, %v2269
      %v2271 = vpop.f32.mrf.mxu0
      %v2272 = vadd.f32 0.0, %v2271
      %2273 = vmatmul.bf16.gmra.mxu0 %v2226
      %v2274 = vpop.f32.mrf.mxu0
      %v2275 = vadd.f32 0.0, %v2274
      %v2276 = vpop.f32.mrf.mxu0
      %v2277 = vadd.f32 0.0, %v2276
      %2278 = vmatmul.bf16.gmra.mxu0 %v2228
      %v2279 = vpop.f32.mrf.mxu0
      %v2280 = vadd.f32 0.0, %v2279
      %v2281 = vpop.f32.mrf.mxu0
      %v2282 = vadd.f32 0.0, %v2281
      %2283 = vmatmul.bf16.gmra.mxu0 %v2230
      %v2284 = vpop.f32.mrf.mxu0
      %v2285 = vadd.f32 0.0, %v2284
      %v2286 = vpop.f32.mrf.mxu0
      %v2287 = vadd.f32 0.0, %v2286
      %2288 = vmatmul.bf16.gmra.mxu0 %v2232
      %v2289 = vpop.f32.mrf.mxu0
      %v2290 = vadd.f32 0.0, %v2289
      %v2291 = vpop.f32.mrf.mxu0
      %v2292 = vadd.f32 0.0, %v2291
      %2293 = vmatmul.bf16.gmra.mxu0 %v2234
      %v2294 = vpop.f32.mrf.mxu0
      %v2295 = vadd.f32 0.0, %v2294
      %v2296 = vpop.f32.mrf.mxu0
      %v2297 = vadd.f32 0.0, %v2296
      %2298 = vmatmul.bf16.gmra.mxu0 %v2236
      %v2299 = vpop.f32.mrf.mxu0
      %v2300 = vadd.f32 0.0, %v2299
      %v2301 = vpop.f32.mrf.mxu0
      %v2302 = vadd.f32 0.0, %v2301
      %2303 = vmatmul.bf16.gmra.mxu0 %v2238
      %v2304 = vpop.f32.mrf.mxu0
      %v2305 = vadd.f32 0.0, %v2304
      %v2306 = vpop.f32.mrf.mxu0
      %v2307 = vadd.f32 0.0, %v2306
      %2308 = vmatmul.bf16.gmra.mxu0 %v2240
      %v2309 = vpop.f32.mrf.mxu0
      %v2310 = vadd.f32 0.0, %v2309
      %v2311 = vpop.f32.mrf.mxu0
      %v2312 = vadd.f32 0.0, %v2311
      %2313 = vmatmul.bf16.gmra.mxu0 %v2242
      %v2314 = vpop.f32.mrf.mxu0
      %v2315 = vadd.f32 0.0, %v2314
      %v2316 = vpop.f32.mrf.mxu0
      %v2317 = vadd.f32 0.0, %v2316
      %2318 = vmatmul.bf16.gmra.mxu0 %v2244
      %v2319 = vpop.f32.mrf.mxu0
      %v2320 = vadd.f32 0.0, %v2319
      %v2321 = vpop.f32.mrf.mxu0
      %v2322 = vadd.f32 0.0, %v2321
      %2323 = vmatmul.bf16.gmra.mxu0 %v2246
      %v2324 = vpop.f32.mrf.mxu0
      %v2325 = vadd.f32 0.0, %v2324
      %v2326 = vpop.f32.mrf.mxu0
      %v2327 = vadd.f32 0.0, %v2326
      %2328 = vmatmul.bf16.gmra.mxu0 %v2248
      %v2329 = vpop.f32.mrf.mxu0
      %v2330 = vadd.f32 0.0, %v2329
      %v2331 = vpop.f32.mrf.mxu0
      %v2332 = vadd.f32 0.0, %v2331
      %2333 = vmatmul.bf16.gmra.mxu0 %v2250
      %v2334 = vpop.f32.mrf.mxu0
      %v2335 = vadd.f32 0.0, %v2334
      %v2336 = vpop.f32.mrf.mxu0
      %v2337 = vadd.f32 0.0, %v2336
      %2338 = vmatmul.bf16.gmra.mxu0 %v2252
      %v2339 = vpop.f32.mrf.mxu0
      %v2340 = vadd.f32 0.0, %v2339
      %v2341 = vpop.f32.mrf.mxu0
      %v2342 = vadd.f32 0.0, %v2341
      %2343 = vmatmul.bf16.gmra.mxu0 %v2254
      %v2344 = vpop.f32.mrf.mxu0
      %v2345 = vadd.f32 0.0, %v2344
      %v2346 = vpop.f32.mrf.mxu0
      %v2347 = vadd.f32 0.0, %v2346
      %2348 = vdwg.mxu0
      %2349 = vst [vmem:[#allocation1] ss:$9 sm:$0xff] %v532
      %s2350 = scalar_lea.vmem [#allocation1], 1
      %2351 = vst [vmem:[%s2350] ss:$9 sm:$0xff] %v536
      %s2352 = scalar_lea.vmem [#allocation1], 2
      %2353 = vst [vmem:[%s2352] ss:$9 sm:$0xff] %v540
      %s2354 = scalar_lea.vmem [#allocation1], 3
      %2355 = vst [vmem:[%s2354] ss:$9 sm:$0xff] %v544
      %s2356 = scalar_lea.vmem [#allocation1], 4
      %2357 = vst [vmem:[%s2356] ss:$9 sm:$0xff] %v547
      %s2358 = scalar_lea.vmem [#allocation1], 5
      %2359 = vst [vmem:[%s2358] ss:$9 sm:$0xff] %v550
      %s2360 = scalar_lea.vmem [#allocation1], 6
      %2361 = vst [vmem:[%s2360] ss:$9 sm:$0xff] %v553
      %s2362 = scalar_lea.vmem [#allocation1], 7
      %2363 = vst [vmem:[%s2362] ss:$9 sm:$0xff] %v556
      %v2364 = vld [vmem:[#allocation1] sm:$0xff]
      %2365 = vst [vmem:[#allocation1] ss:$9 sm:$0xff] %v559
      %2366 = vst [vmem:[%s2350] ss:$9 sm:$0xff] %v562
      %2367 = vst [vmem:[%s2352] ss:$9 sm:$0xff] %v565
      %2368 = vst [vmem:[%s2354] ss:$9 sm:$0xff] %v568
      %2369 = vst [vmem:[%s2356] ss:$9 sm:$0xff] %v571
      %2370 = vst [vmem:[%s2358] ss:$9 sm:$0xff] %v574
      %2371 = vst [vmem:[%s2360] ss:$9 sm:$0xff] %v577
      %2372 = vst [vmem:[%s2362] ss:$9 sm:$0xff] %v580
      %v2373 = vld [vmem:[#allocation1] sm:$0xff]
      %2374 = vst [vmem:[#allocation1] ss:$9 sm:$0xff] %v583
      %2375 = vst [vmem:[%s2350] ss:$9 sm:$0xff] %v586
      %2376 = vst [vmem:[%s2352] ss:$9 sm:$0xff] %v589
      %2377 = vst [vmem:[%s2354] ss:$9 sm:$0xff] %v592
      %2378 = vst [vmem:[%s2356] ss:$9 sm:$0xff] %v595
      %2379 = vst [vmem:[%s2358] ss:$9 sm:$0xff] %v598
      %2380 = vst [vmem:[%s2360] ss:$9 sm:$0xff] %v601
      %2381 = vst [vmem:[%s2362] ss:$9 sm:$0xff] %v604
      %v2382 = vld [vmem:[#allocation1] sm:$0xff]
      %2383 = vst [vmem:[#allocation1] ss:$9 sm:$0xff] %v607
      %2384 = vst [vmem:[%s2350] ss:$9 sm:$0xff] %v610
      %2385 = vst [vmem:[%s2352] ss:$9 sm:$0xff] %v613
      %2386 = vst [vmem:[%s2354] ss:$9 sm:$0xff] %v616
      %2387 = vst [vmem:[%s2356] ss:$9 sm:$0xff] %v619
      %2388 = vst [vmem:[%s2358] ss:$9 sm:$0xff] %v622
      %2389 = vst [vmem:[%s2360] ss:$9 sm:$0xff] %v625
      %2390 = vst [vmem:[%s2362] ss:$9 sm:$0xff] %v628
      %v2391 = vld [vmem:[#allocation1] sm:$0xff]
      %2392 = vst [vmem:[#allocation1] ss:$9 sm:$0xff] %v631
      %2393 = vst [vmem:[%s2350] ss:$9 sm:$0xff] %v634
      %2394 = vst [vmem:[%s2352] ss:$9 sm:$0xff] %v637
      %2395 = vst [vmem:[%s2354] ss:$9 sm:$0xff] %v640
      %2396 = vst [vmem:[%s2356] ss:$9 sm:$0xff] %v643
      %2397 = vst [vmem:[%s2358] ss:$9 sm:$0xff] %v646
      %2398 = vst [vmem:[%s2360] ss:$9 sm:$0xff] %v649
      %2399 = vst [vmem:[%s2362] ss:$9 sm:$0xff] %v652
      %v2400 = vld [vmem:[#allocation1] sm:$0xff]
      %2401 = vst [vmem:[#allocation1] ss:$9 sm:$0xff] %v655
      %2402 = vst [vmem:[%s2350] ss:$9 sm:$0xff] %v658
      %2403 = vst [vmem:[%s2352] ss:$9 sm:$0xff] %v661
      %2404 = vst [vmem:[%s2354] ss:$9 sm:$0xff] %v664
      %2405 = vst [vmem:[%s2356] ss:$9 sm:$0xff] %v667
      %2406 = vst [vmem:[%s2358] ss:$9 sm:$0xff] %v670
      %2407 = vst [vmem:[%s2360] ss:$9 sm:$0xff] %v673
      %2408 = vst [vmem:[%s2362] ss:$9 sm:$0xff] %v676
      %v2409 = vld [vmem:[#allocation1] sm:$0xff]
      %2410 = vst [vmem:[#allocation1] ss:$9 sm:$0xff] %v679
      %2411 = vst [vmem:[%s2350] ss:$9 sm:$0xff] %v682
      %2412 = vst [vmem:[%s2352] ss:$9 sm:$0xff] %v685
      %2413 = vst [vmem:[%s2354] ss:$9 sm:$0xff] %v688
      %2414 = vst [vmem:[%s2356] ss:$9 sm:$0xff] %v691
      %2415 = vst [vmem:[%s2358] ss:$9 sm:$0xff] %v694
      %2416 = vst [vmem:[%s2360] ss:$9 sm:$0xff] %v697
      %2417 = vst [vmem:[%s2362] ss:$9 sm:$0xff] %v700
      %v2418 = vld [vmem:[#allocation1] sm:$0xff]
      %2419 = vst [vmem:[#allocation1] ss:$9 sm:$0xff] %v703
      %2420 = vst [vmem:[%s2350] ss:$9 sm:$0xff] %v706
      %2421 = vst [vmem:[%s2352] ss:$9 sm:$0xff] %v709
      %2422 = vst [vmem:[%s2354] ss:$9 sm:$0xff] %v712
      %2423 = vst [vmem:[%s2356] ss:$9 sm:$0xff] %v715
      %2424 = vst [vmem:[%s2358] ss:$9 sm:$0xff] %v718
      %2425 = vst [vmem:[%s2360] ss:$9 sm:$0xff] %v721
      %2426 = vst [vmem:[%s2362] ss:$9 sm:$0xff] %v724
      %v2427 = vld [vmem:[#allocation1] sm:$0xff]
      %2428 = vst [vmem:[#allocation1] ss:$9 sm:$0xff] %v727
      %2429 = vst [vmem:[%s2350] ss:$9 sm:$0xff] %v730
      %2430 = vst [vmem:[%s2352] ss:$9 sm:$0xff] %v733
      %2431 = vst [vmem:[%s2354] ss:$9 sm:$0xff] %v736
      %2432 = vst [vmem:[%s2356] ss:$9 sm:$0xff] %v739
      %2433 = vst [vmem:[%s2358] ss:$9 sm:$0xff] %v742
      %2434 = vst [vmem:[%s2360] ss:$9 sm:$0xff] %v745
      %2435 = vst [vmem:[%s2362] ss:$9 sm:$0xff] %v748
      %v2436 = vld [vmem:[#allocation1] sm:$0xff]
      %2437 = vst [vmem:[#allocation1] ss:$9 sm:$0xff] %v751
      %2438 = vst [vmem:[%s2350] ss:$9 sm:$0xff] %v754
      %2439 = vst [vmem:[%s2352] ss:$9 sm:$0xff] %v757
      %2440 = vst [vmem:[%s2354] ss:$9 sm:$0xff] %v760
      %2441 = vst [vmem:[%s2356] ss:$9 sm:$0xff] %v763
      %2442 = vst [vmem:[%s2358] ss:$9 sm:$0xff] %v766
      %2443 = vst [vmem:[%s2360] ss:$9 sm:$0xff] %v769
      %2444 = vst [vmem:[%s2362] ss:$9 sm:$0xff] %v772
      %v2445 = vld [vmem:[#allocation1] sm:$0xff]
      %2446 = vst [vmem:[#allocation1] ss:$9 sm:$0xff] %v775
      %2447 = vst [vmem:[%s2350] ss:$9 sm:$0xff] %v778
      %2448 = vst [vmem:[%s2352] ss:$9 sm:$0xff] %v781
      %2449 = vst [vmem:[%s2354] ss:$9 sm:$0xff] %v784
      %2450 = vst [vmem:[%s2356] ss:$9 sm:$0xff] %v787
      %2451 = vst [vmem:[%s2358] ss:$9 sm:$0xff] %v790
      %2452 = vst [vmem:[%s2360] ss:$9 sm:$0xff] %v793
      %2453 = vst [vmem:[%s2362] ss:$9 sm:$0xff] %v796
      %v2454 = vld [vmem:[#allocation1] sm:$0xff]
      %2455 = vst [vmem:[#allocation1] ss:$9 sm:$0xff] %v799
      %2456 = vst [vmem:[%s2350] ss:$9 sm:$0xff] %v802
      %2457 = vst [vmem:[%s2352] ss:$9 sm:$0xff] %v805
      %2458 = vst [vmem:[%s2354] ss:$9 sm:$0xff] %v808
      %2459 = vst [vmem:[%s2356] ss:$9 sm:$0xff] %v811
      %2460 = vst [vmem:[%s2358] ss:$9 sm:$0xff] %v814
      %2461 = vst [vmem:[%s2360] ss:$9 sm:$0xff] %v817
      %2462 = vst [vmem:[%s2362] ss:$9 sm:$0xff] %v820
      %v2463 = vld [vmem:[#allocation1] sm:$0xff]
      %2464 = vst [vmem:[#allocation1] ss:$9 sm:$0xff] %v823
      %2465 = vst [vmem:[%s2350] ss:$9 sm:$0xff] %v826
      %2466 = vst [vmem:[%s2352] ss:$9 sm:$0xff] %v829
      %2467 = vst [vmem:[%s2354] ss:$9 sm:$0xff] %v832
      %2468 = vst [vmem:[%s2356] ss:$9 sm:$0xff] %v835
      %2469 = vst [vmem:[%s2358] ss:$9 sm:$0xff] %v838
      %2470 = vst [vmem:[%s2360] ss:$9 sm:$0xff] %v841
      %2471 = vst [vmem:[%s2362] ss:$9 sm:$0xff] %v844
      %v2472 = vld [vmem:[#allocation1] sm:$0xff]
      %2473 = vst [vmem:[#allocation1] ss:$9 sm:$0xff] %v847
      %2474 = vst [vmem:[%s2350] ss:$9 sm:$0xff] %v850
      %2475 = vst [vmem:[%s2352] ss:$9 sm:$0xff] %v853
      %2476 = vst [vmem:[%s2354] ss:$9 sm:$0xff] %v856
      %2477 = vst [vmem:[%s2356] ss:$9 sm:$0xff] %v859
      %2478 = vst [vmem:[%s2358] ss:$9 sm:$0xff] %v862
      %2479 = vst [vmem:[%s2360] ss:$9 sm:$0xff] %v865
      %2480 = vst [vmem:[%s2362] ss:$9 sm:$0xff] %v868
      %v2481 = vld [vmem:[#allocation1] sm:$0xff]
      %2482 = vst [vmem:[#allocation1] ss:$9 sm:$0xff] %v871
      %2483 = vst [vmem:[%s2350] ss:$9 sm:$0xff] %v874
      %2484 = vst [vmem:[%s2352] ss:$9 sm:$0xff] %v877
      %2485 = vst [vmem:[%s2354] ss:$9 sm:$0xff] %v880
      %2486 = vst [vmem:[%s2356] ss:$9 sm:$0xff] %v883
      %2487 = vst [vmem:[%s2358] ss:$9 sm:$0xff] %v886
      %2488 = vst [vmem:[%s2360] ss:$9 sm:$0xff] %v889
      %2489 = vst [vmem:[%s2362] ss:$9 sm:$0xff] %v892
      %v2490 = vld [vmem:[#allocation1] sm:$0xff]
      %2491 = vst [vmem:[#allocation1] ss:$9 sm:$0xff] %v895
      %2492 = vst [vmem:[%s2350] ss:$9 sm:$0xff] %v898
      %2493 = vst [vmem:[%s2352] ss:$9 sm:$0xff] %v901
      %2494 = vst [vmem:[%s2354] ss:$9 sm:$0xff] %v904
      %2495 = vst [vmem:[%s2356] ss:$9 sm:$0xff] %v907
      %2496 = vst [vmem:[%s2358] ss:$9 sm:$0xff] %v910
      %v2497 = vld [vmem:[#allocation1] sm:$0xff]
      %v2498 = vsel %vm2223, %v2364, 0
      %v2500 = vsel %vm2223, %v2373, 0
      %v2502 = vsel %vm2223, %v2382, 0
      %v2504 = vsel %vm2223, %v2391, 0
      %v2506 = vsel %vm2223, %v2400, 0
      %v2508 = vsel %vm2223, %v2409, 0
      %v2510 = vsel %vm2223, %v2418, 0
      %v2512 = vsel %vm2223, %v2427, 0
      %v2514 = vsel %vm2223, %v2436, 0
      %v2516 = vsel %vm2223, %v2445, 0
      %v2518 = vsel %vm2223, %v2454, 0
      %v2520 = vsel %vm2223, %v2463, 0
      %v2522 = vsel %vm2223, %v2472, 0
      %v2524 = vsel %vm2223, %v2481, 0
      %v2526 = vsel %vm2223, %v2490, 0
      %v2528 = vsel %vm2223, %v2497, 0
      %v2531 = vsel %vm2256, %v435, 0
      %2533 = vmatpush.bf16.msra.mxu0 0
      %2534 = vmatpush.bf16.msra.mxu0 0
      %2535 = vmatpush.bf16.msra.mxu0 0
      %2536 = vmatpush.bf16.msra.mxu0 0
      %2537 = vmatpush.bf16.msra.mxu0 0
      %2538 = vmatpush.bf16.msra.mxu0 0
      %2539 = vmatpush.bf16.msra.mxu0 0
      %2540 = vmatpush.bf16.msra.mxu0 %v2531
      %2541 = vmatmul.bf16.gmra.mxu0 %v2498
      %v2542 = vpop.f32.mrf.mxu0
      %v2543 = vadd.f32 %v2270, %v2542
      %v2544 = vpop.f32.mrf.mxu0
      %v2545 = vadd.f32 %v2272, %v2544
      %2546 = vmatmul.bf16.gmra.mxu0 %v2500
      %v2547 = vpop.f32.mrf.mxu0
      %v2548 = vadd.f32 %v2275, %v2547
      %v2549 = vpop.f32.mrf.mxu0
      %v2550 = vadd.f32 %v2277, %v2549
      %2551 = vmatmul.bf16.gmra.mxu0 %v2502
      %v2552 = vpop.f32.mrf.mxu0
      %v2553 = vadd.f32 %v2280, %v2552
      %v2554 = vpop.f32.mrf.mxu0
      %v2555 = vadd.f32 %v2282, %v2554
      %2556 = vmatmul.bf16.gmra.mxu0 %v2504
      %v2557 = vpop.f32.mrf.mxu0
      %v2558 = vadd.f32 %v2285, %v2557
      %v2559 = vpop.f32.mrf.mxu0
      %v2560 = vadd.f32 %v2287, %v2559
      %2561 = vmatmul.bf16.gmra.mxu0 %v2506
      %v2562 = vpop.f32.mrf.mxu0
      %v2563 = vadd.f32 %v2290, %v2562
      %v2564 = vpop.f32.mrf.mxu0
      %v2565 = vadd.f32 %v2292, %v2564
      %2566 = vmatmul.bf16.gmra.mxu0 %v2508
      %v2567 = vpop.f32.mrf.mxu0
      %v2568 = vadd.f32 %v2295, %v2567
      %v2569 = vpop.f32.mrf.mxu0
      %v2570 = vadd.f32 %v2297, %v2569
      %2571 = vmatmul.bf16.gmra.mxu0 %v2510
      %v2572 = vpop.f32.mrf.mxu0
      %v2573 = vadd.f32 %v2300, %v2572
      %v2574 = vpop.f32.mrf.mxu0
      %v2575 = vadd.f32 %v2302, %v2574
      %2576 = vmatmul.bf16.gmra.mxu0 %v2512
      %v2577 = vpop.f32.mrf.mxu0
      %v2578 = vadd.f32 %v2305, %v2577
      %v2579 = vpop.f32.mrf.mxu0
      %v2580 = vadd.f32 %v2307, %v2579
      %2581 = vmatmul.bf16.gmra.mxu0 %v2514
      %v2582 = vpop.f32.mrf.mxu0
      %v2583 = vadd.f32 %v2310, %v2582
      %v2584 = vpop.f32.mrf.mxu0
      %v2585 = vadd.f32 %v2312, %v2584
      %2586 = vmatmul.bf16.gmra.mxu0 %v2516
      %v2587 = vpop.f32.mrf.mxu0
      %v2588 = vadd.f32 %v2315, %v2587
      %v2589 = vpop.f32.mrf.mxu0
      %v2590 = vadd.f32 %v2317, %v2589
      %2591 = vmatmul.bf16.gmra.mxu0 %v2518
      %v2592 = vpop.f32.mrf.mxu0
      %v2593 = vadd.f32 %v2320, %v2592
      %v2594 = vpop.f32.mrf.mxu0
      %v2595 = vadd.f32 %v2322, %v2594
      %2596 = vmatmul.bf16.gmra.mxu0 %v2520
      %v2597 = vpop.f32.mrf.mxu0
      %v2598 = vadd.f32 %v2325, %v2597
      %v2599 = vpop.f32.mrf.mxu0
      %v2600 = vadd.f32 %v2327, %v2599
      %2601 = vmatmul.bf16.gmra.mxu0 %v2522
      %v2602 = vpop.f32.mrf.mxu0
      %v2603 = vadd.f32 %v2330, %v2602
      %v2604 = vpop.f32.mrf.mxu0
      %v2605 = vadd.f32 %v2332, %v2604
      %2606 = vmatmul.bf16.gmra.mxu0 %v2524
      %v2607 = vpop.f32.mrf.mxu0
      %v2608 = vadd.f32 %v2335, %v2607
      %v2609 = vpop.f32.mrf.mxu0
      %v2610 = vadd.f32 %v2337, %v2609
      %2611 = vmatmul.bf16.gmra.mxu0 %v2526
      %v2612 = vpop.f32.mrf.mxu0
      %v2613 = vadd.f32 %v2340, %v2612
      %v2614 = vpop.f32.mrf.mxu0
      %v2615 = vadd.f32 %v2342, %v2614
      %2616 = vmatmul.bf16.gmra.mxu0 %v2528
      %v2617 = vpop.f32.mrf.mxu0
      %v2618 = vadd.f32 %v2345, %v2617
      %v2619 = vpop.f32.mrf.mxu0
      %v2620 = vadd.f32 %v2347, %v2619
      %2621 = vdwg.mxu0
      %2622 = vst [vmem:[#allocation1] sm:$0xff] %v375
      %2623 = vst [vmem:[#allocation1 + $0x20] sm:$0xff] %v376
      %s2624 = scalar_lea.vmem [#allocation1], 1
      %v2625 = vld [vmem:[%s2624] ss:$4 sm:$0xff]
      %s2626 = scalar_lea.vmem [#allocation1], 2
      %v2627 = vld [vmem:[%s2626] ss:$4 sm:$0xff]
      %s2628 = scalar_lea.vmem [#allocation1], 3
      %v2629 = vld [vmem:[%s2628] ss:$4 sm:$0xff]
      %s2630 = scalar_lea.vmem [#allocation1], 32
      %v2631 = vld [vmem:[%s2630] ss:$4 sm:$0xff]
      %s2632 = scalar_lea.vmem [#allocation1], 33
      %v2633 = vld [vmem:[%s2632] ss:$4 sm:$0xff]
      %s2634 = scalar_lea.vmem [#allocation1], 34
      %v2635 = vld [vmem:[%s2634] ss:$4 sm:$0xff]
      %s2636 = scalar_lea.vmem [#allocation1], 35
      %v2637 = vld [vmem:[%s2636] ss:$4 sm:$0xff]
      %2638 = vst [vmem:[#allocation1] sm:$0xff] %v377
      %v2639 = vld [vmem:[#allocation1] ss:$4 sm:$0xff]
      %v2640 = vld [vmem:[%s2624] ss:$4 sm:$0xff]
      %2641 = vst [vmem:[#allocation1 + $0x20] sm:$0xff] %v378
      %v2642 = vld [vmem:[%s2632] ss:$4 sm:$0xff]
      %v2643 = vld [vmem:[%s2634] ss:$4 sm:$0xff]
      %v2644 = vld [vmem:[%s2636] ss:$4 sm:$0xff]
      %2645 = vst [vmem:[#allocation1] sm:$0xff] %v379
      %2646 = vst [vmem:[#allocation1 + $0x20] sm:$0xff] %v380
      %v2647 = vld [vmem:[#allocation1] ss:$4 sm:$0xff]
      %v2648 = vld [vmem:[%s2624] ss:$4 sm:$0xff]
      %v2649 = vld [vmem:[%s2626] ss:$4 sm:$0xff]
      %v2650 = vld [vmem:[%s2628] ss:$4 sm:$0xff]
      %v2651 = vld [vmem:[%s2630] ss:$4 sm:$0xff]
      %v2652 = vld [vmem:[%s2632] ss:$4 sm:$0xff]
      %2653 = vst [vmem:[#allocation1] sm:$0xff] %v381
      %2654 = vst [vmem:[#allocation1 + $0x20] sm:$0xff] %v382
      %v2655 = vld [vmem:[%s2624] ss:$4 sm:$0xff]
      %v2656 = vld [vmem:[%s2626] ss:$4 sm:$0xff]
      %v2657 = vld [vmem:[%s2628] ss:$4 sm:$0xff]
      %v2658 = vld [vmem:[%s2630] ss:$4 sm:$0xff]
      %v2659 = vld [vmem:[%s2632] ss:$4 sm:$0xff]
      %v2660 = vld [vmem:[%s2634] ss:$4 sm:$0xff]
      %v2661 = vld [vmem:[%s2636] ss:$4 sm:$0xff]
      %2662 = vst [vmem:[#allocation1] sm:$0xff] %v383
      %v2663 = vld [vmem:[#allocation1] ss:$4 sm:$0xff]
      %v2664 = vld [vmem:[%s2624] ss:$4 sm:$0xff]
      %2665 = vst [vmem:[#allocation1 + $0x20] sm:$0xff] %v384
      %v2666 = vld [vmem:[%s2632] ss:$4 sm:$0xff]
      %v2667 = vld [vmem:[%s2634] ss:$4 sm:$0xff]
      %v2668 = vld [vmem:[%s2636] ss:$4 sm:$0xff]
      %2669 = vst [vmem:[#allocation1] sm:$0xff] %v385
      %2670 = vst [vmem:[#allocation1 + $0x20] sm:$0xff] %v386
      %v2671 = vld [vmem:[#allocation1] ss:$4 sm:$0xff]
      %v2672 = vld [vmem:[%s2624] ss:$4 sm:$0xff]
      %v2673 = vld [vmem:[%s2626] ss:$4 sm:$0xff]
      %v2674 = vld [vmem:[%s2628] ss:$4 sm:$0xff]
      %v2675 = vld [vmem:[%s2630] ss:$4 sm:$0xff]
      %v2676 = vld [vmem:[%s2632] ss:$4 sm:$0xff]
      %2677 = vst [vmem:[#allocation1] sm:$0xff] %v387
      %2678 = vst [vmem:[#allocation1 + $0x20] sm:$0xff] %v388
      %v2679 = vld [vmem:[%s2624] ss:$4 sm:$0xff]
      %v2680 = vld [vmem:[%s2626] ss:$4 sm:$0xff]
      %v2681 = vld [vmem:[%s2628] ss:$4 sm:$0xff]
      %v2682 = vld [vmem:[%s2630] ss:$4 sm:$0xff]
      %v2683 = vld [vmem:[%s2632] ss:$4 sm:$0xff]
      %v2684 = vld [vmem:[%s2634] ss:$4 sm:$0xff]
      %v2685 = vld [vmem:[%s2636] ss:$4 sm:$0xff]
      %2686 = vst [vmem:[#allocation1] sm:$0xff] %v389
      %v2687 = vld [vmem:[#allocation1] ss:$4 sm:$0xff]
      %v2688 = vld [vmem:[%s2624] ss:$4 sm:$0xff]
      %2689 = vst [vmem:[#allocation1 + $0x20] sm:$0xff] %v390
      %v2690 = vld [vmem:[%s2632] ss:$4 sm:$0xff]
      %v2691 = vld [vmem:[%s2634] ss:$4 sm:$0xff]
      %v2692 = vld [vmem:[%s2636] ss:$4 sm:$0xff]
      %2693 = vst [vmem:[#allocation1] sm:$0xff] %v391
      %2694 = vst [vmem:[#allocation1 + $0x20] sm:$0xff] %v392
      %v2695 = vld [vmem:[#allocation1] ss:$4 sm:$0xff]
      %v2696 = vld [vmem:[%s2624] ss:$4 sm:$0xff]
      %v2697 = vld [vmem:[%s2626] ss:$4 sm:$0xff]
      %v2698 = vld [vmem:[%s2628] ss:$4 sm:$0xff]
      %v2699 = vld [vmem:[%s2630] ss:$4 sm:$0xff]
      %v2700 = vld [vmem:[%s2632] ss:$4 sm:$0xff]
      %2701 = vst [vmem:[#allocation1] sm:$0xff] %v393
      %2702 = vst [vmem:[#allocation1 + $0x20] sm:$0xff] %v394
      %v2703 = vld [vmem:[%s2624] ss:$4 sm:$0xff]
      %v2704 = vld [vmem:[%s2626] ss:$4 sm:$0xff]
      %v2705 = vld [vmem:[%s2628] ss:$4 sm:$0xff]
      %v2706 = vld [vmem:[%s2630] ss:$4 sm:$0xff]
      %v2707 = vld [vmem:[%s2632] ss:$4 sm:$0xff]
      %v2708 = vld [vmem:[%s2634] ss:$4 sm:$0xff]
      %v2709 = vld [vmem:[%s2636] ss:$4 sm:$0xff]
      %2710 = vst [vmem:[#allocation1] sm:$0xff] %v395
      %v2711 = vld [vmem:[#allocation1] ss:$4 sm:$0xff]
      %v2712 = vld [vmem:[%s2624] ss:$4 sm:$0xff]
      %2713 = vst [vmem:[#allocation1 + $0x20] sm:$0xff] %v396
      %v2714 = vld [vmem:[%s2632] ss:$4 sm:$0xff]
      %v2715 = vld [vmem:[%s2634] ss:$4 sm:$0xff]
      %v2716 = vld [vmem:[%s2636] ss:$4 sm:$0xff]
      %2717 = vst [vmem:[#allocation1] sm:$0xff] %v397
      %2718 = vst [vmem:[#allocation1 + $0x20] sm:$0xff] %v398
      %v2719 = vld [vmem:[#allocation1] ss:$4 sm:$0xff]
      %v2720 = vld [vmem:[%s2624] ss:$4 sm:$0xff]
      %v2721 = vld [vmem:[%s2626] ss:$4 sm:$0xff]
      %v2722 = vld [vmem:[%s2628] ss:$4 sm:$0xff]
      %v2723 = vld [vmem:[%s2630] ss:$4 sm:$0xff]
      %v2724 = vld [vmem:[%s2632] ss:$4 sm:$0xff]
      %2725 = vst [vmem:[#allocation1] sm:$0xff] %v399
      %2726 = vst [vmem:[#allocation1 + $0x20] sm:$0xff] %v400
      %v2727 = vld [vmem:[%s2624] ss:$4 sm:$0xff]
      %v2728 = vld [vmem:[%s2626] ss:$4 sm:$0xff]
      %v2729 = vld [vmem:[%s2628] ss:$4 sm:$0xff]
      %v2730 = vld [vmem:[%s2630] ss:$4 sm:$0xff]
      %v2731 = vld [vmem:[%s2632] ss:$4 sm:$0xff]
      %v2732 = vld [vmem:[%s2634] ss:$4 sm:$0xff]
      %v2733 = vld [vmem:[%s2636] ss:$4 sm:$0xff]
      %2734 = vst [vmem:[#allocation1] sm:$0xff] %v401
      %v2735 = vld [vmem:[#allocation1] ss:$4 sm:$0xff]
      %v2736 = vld [vmem:[%s2624] ss:$4 sm:$0xff]
      %2737 = vst [vmem:[#allocation1 + $0x20] sm:$0xff] %v402
      %v2738 = vld [vmem:[%s2632] ss:$4 sm:$0xff]
      %v2739 = vld [vmem:[%s2634] ss:$4 sm:$0xff]
      %v2740 = vld [vmem:[%s2636] ss:$4 sm:$0xff]
      %2741 = vst [vmem:[#allocation1] sm:$0xff] %v403
      %2742 = vst [vmem:[#allocation1 + $0x20] sm:$0xff] %v404
      %v2743 = vld [vmem:[#allocation1] ss:$4 sm:$0xff]
      %v2744 = vld [vmem:[%s2624] ss:$4 sm:$0xff]
      %v2745 = vld [vmem:[%s2626] ss:$4 sm:$0xff]
      %v2746 = vld [vmem:[%s2628] ss:$4 sm:$0xff]
      %v2747 = vld [vmem:[%s2630] ss:$4 sm:$0xff]
      %v2748 = vld [vmem:[%s2632] ss:$4 sm:$0xff]
      %2749 = vst [vmem:[#allocation1] sm:$0xff] %v405
      %2750 = vst [vmem:[#allocation1 + $0x20] sm:$0xff] %v406
      %v2751 = vld [vmem:[%s2624] ss:$4 sm:$0xff]
      %v2752 = vld [vmem:[%s2626] ss:$4 sm:$0xff]
      %v2753 = vld [vmem:[%s2628] ss:$4 sm:$0xff]
      %v2754 = vld [vmem:[%s2630] ss:$4 sm:$0xff]
      %v2755 = vld [vmem:[%s2632] ss:$4 sm:$0xff]
      %v2756 = vld [vmem:[%s2634] ss:$4 sm:$0xff]
      %v2757 = vld [vmem:[%s2636] ss:$4 sm:$0xff]
      %2758 = vst [vmem:[#allocation1] sm:$0xff] %v407
      %v2759 = vld [vmem:[#allocation1] ss:$4 sm:$0xff]
      %v2760 = vld [vmem:[%s2624] ss:$4 sm:$0xff]
      %2761 = vst [vmem:[#allocation1 + $0x20] sm:$0xff] %v408
      %v2762 = vld [vmem:[%s2632] ss:$4 sm:$0xff]
      %v2763 = vld [vmem:[%s2634] ss:$4 sm:$0xff]
      %v2764 = vld [vmem:[%s2636] ss:$4 sm:$0xff]
      %2765 = vst [vmem:[#allocation1] sm:$0xff] %v409
      %2766 = vst [vmem:[#allocation1 + $0x20] sm:$0xff] %v410
      %v2767 = vld [vmem:[#allocation1] ss:$4 sm:$0xff]
      %v2768 = vld [vmem:[%s2624] ss:$4 sm:$0xff]
      %v2769 = vld [vmem:[%s2626] ss:$4 sm:$0xff]
      %v2770 = vld [vmem:[%s2628] ss:$4 sm:$0xff]
      %v2771 = vld [vmem:[%s2630] ss:$4 sm:$0xff]
      %v2772 = vld [vmem:[%s2632] ss:$4 sm:$0xff]
      %2773 = vst [vmem:[#allocation1] sm:$0xff] %v411
      %2774 = vst [vmem:[#allocation1 + $0x20] sm:$0xff] %v412
      %v2775 = vld [vmem:[%s2624] ss:$4 sm:$0xff]
      %v2776 = vld [vmem:[%s2626] ss:$4 sm:$0xff]
      %v2777 = vld [vmem:[%s2628] ss:$4 sm:$0xff]
      %v2778 = vld [vmem:[%s2630] ss:$4 sm:$0xff]
      %v2779 = vld [vmem:[%s2632] ss:$4 sm:$0xff]
      %v2780 = vld [vmem:[%s2634] ss:$4 sm:$0xff]
      %v2781 = vld [vmem:[%s2636] ss:$4 sm:$0xff]
      %2782 = vst [vmem:[#allocation1] sm:$0xff] %v413
      %v2783 = vld [vmem:[#allocation1] ss:$4 sm:$0xff]
      %v2784 = vld [vmem:[%s2624] ss:$4 sm:$0xff]
      %2785 = vst [vmem:[#allocation1 + $0x20] sm:$0xff] %v414
      %v2786 = vld [vmem:[%s2632] ss:$4 sm:$0xff]
      %v2787 = vld [vmem:[%s2634] ss:$4 sm:$0xff]
      %v2788 = vld [vmem:[%s2636] ss:$4 sm:$0xff]
      %2789 = vst [vmem:[#allocation1] sm:$0xff] %v415
      %2790 = vst [vmem:[#allocation1 + $0x20] sm:$0xff] %v416
      %v2791 = vld [vmem:[#allocation1] ss:$4 sm:$0xff]
      %v2792 = vld [vmem:[%s2624] ss:$4 sm:$0xff]
      %v2793 = vld [vmem:[%s2626] ss:$4 sm:$0xff]
      %v2794 = vld [vmem:[%s2628] ss:$4 sm:$0xff]
      %v2795 = vld [vmem:[%s2630] ss:$4 sm:$0xff]
      %v2796 = vld [vmem:[%s2632] ss:$4 sm:$0xff]
      %2797 = vst [vmem:[#allocation1] ss:$9 sm:$0xff] %v2625
      %s2798 = scalar_lea.vmem [#allocation1], 1
      %2799 = vst [vmem:[%s2798] ss:$9 sm:$0xff] %v2627
      %s2800 = scalar_lea.vmem [#allocation1], 2
      %2801 = vst [vmem:[%s2800] ss:$9 sm:$0xff] %v2629
      %s2802 = scalar_lea.vmem [#allocation1], 3
      %2803 = vst [vmem:[%s2802] ss:$9 sm:$0xff] %v2631
      %s2804 = scalar_lea.vmem [#allocation1], 4
      %2805 = vst [vmem:[%s2804] ss:$9 sm:$0xff] %v2633
      %s2806 = scalar_lea.vmem [#allocation1], 5
      %2807 = vst [vmem:[%s2806] ss:$9 sm:$0xff] %v2635
      %s2808 = scalar_lea.vmem [#allocation1], 6
      %2809 = vst [vmem:[%s2808] ss:$9 sm:$0xff] %v2637
      %s2810 = scalar_lea.vmem [#allocation1], 7
      %2811 = vst [vmem:[%s2810] ss:$9 sm:$0xff] %v2639
      %v2812 = vld [vmem:[#allocation1] sm:$0xff]
      %2813 = vst [vmem:[#allocation1] ss:$9 sm:$0xff] %v2640
      %2814 = vst [vmem:[%s2798] ss:$9 sm:$0xff] %v2642
      %2815 = vst [vmem:[%s2800] ss:$9 sm:$0xff] %v2643
      %2816 = vst [vmem:[%s2802] ss:$9 sm:$0xff] %v2644
      %2817 = vst [vmem:[%s2804] ss:$9 sm:$0xff] %v2647
      %2818 = vst [vmem:[%s2806] ss:$9 sm:$0xff] %v2648
      %2819 = vst [vmem:[%s2808] ss:$9 sm:$0xff] %v2649
      %2820 = vst [vmem:[%s2810] ss:$9 sm:$0xff] %v2650
      %v2821 = vld [vmem:[#allocation1] sm:$0xff]
      %2822 = vst [vmem:[#allocation1] ss:$9 sm:$0xff] %v2651
      %2823 = vst [vmem:[%s2798] ss:$9 sm:$0xff] %v2652
      %2824 = vst [vmem:[%s2800] ss:$9 sm:$0xff] %v2655
      %2825 = vst [vmem:[%s2802] ss:$9 sm:$0xff] %v2656
      %2826 = vst [vmem:[%s2804] ss:$9 sm:$0xff] %v2657
      %2827 = vst [vmem:[%s2806] ss:$9 sm:$0xff] %v2658
      %2828 = vst [vmem:[%s2808] ss:$9 sm:$0xff] %v2659
      %2829 = vst [vmem:[%s2810] ss:$9 sm:$0xff] %v2660
      %v2830 = vld [vmem:[#allocation1] sm:$0xff]
      %2831 = vst [vmem:[#allocation1] ss:$9 sm:$0xff] %v2661
      %2832 = vst [vmem:[%s2798] ss:$9 sm:$0xff] %v2663
      %2833 = vst [vmem:[%s2800] ss:$9 sm:$0xff] %v2664
      %2834 = vst [vmem:[%s2802] ss:$9 sm:$0xff] %v2666
      %2835 = vst [vmem:[%s2804] ss:$9 sm:$0xff] %v2667
      %2836 = vst [vmem:[%s2806] ss:$9 sm:$0xff] %v2668
      %2837 = vst [vmem:[%s2808] ss:$9 sm:$0xff] %v2671
      %2838 = vst [vmem:[%s2810] ss:$9 sm:$0xff] %v2672
      %v2839 = vld [vmem:[#allocation1] sm:$0xff]
      %2840 = vst [vmem:[#allocation1] ss:$9 sm:$0xff] %v2673
      %2841 = vst [vmem:[%s2798] ss:$9 sm:$0xff] %v2674
      %2842 = vst [vmem:[%s2800] ss:$9 sm:$0xff] %v2675
      %2843 = vst [vmem:[%s2802] ss:$9 sm:$0xff] %v2676
      %2844 = vst [vmem:[%s2804] ss:$9 sm:$0xff] %v2679
      %2845 = vst [vmem:[%s2806] ss:$9 sm:$0xff] %v2680
      %2846 = vst [vmem:[%s2808] ss:$9 sm:$0xff] %v2681
      %2847 = vst [vmem:[%s2810] ss:$9 sm:$0xff] %v2682
      %v2848 = vld [vmem:[#allocation1] sm:$0xff]
      %2849 = vst [vmem:[#allocation1] ss:$9 sm:$0xff] %v2683
      %2850 = vst [vmem:[%s2798] ss:$9 sm:$0xff] %v2684
      %2851 = vst [vmem:[%s2800] ss:$9 sm:$0xff] %v2685
      %2852 = vst [vmem:[%s2802] ss:$9 sm:$0xff] %v2687
      %2853 = vst [vmem:[%s2804] ss:$9 sm:$0xff] %v2688
      %2854 = vst [vmem:[%s2806] ss:$9 sm:$0xff] %v2690
      %2855 = vst [vmem:[%s2808] ss:$9 sm:$0xff] %v2691
      %2856 = vst [vmem:[%s2810] ss:$9 sm:$0xff] %v2692
      %v2857 = vld [vmem:[#allocation1] sm:$0xff]
      %2858 = vst [vmem:[#allocation1] ss:$9 sm:$0xff] %v2695
      %2859 = vst [vmem:[%s2798] ss:$9 sm:$0xff] %v2696
      %2860 = vst [vmem:[%s2800] ss:$9 sm:$0xff] %v2697
      %2861 = vst [vmem:[%s2802] ss:$9 sm:$0xff] %v2698
      %2862 = vst [vmem:[%s2804] ss:$9 sm:$0xff] %v2699
      %2863 = vst [vmem:[%s2806] ss:$9 sm:$0xff] %v2700
      %2864 = vst [vmem:[%s2808] ss:$9 sm:$0xff] %v2703
      %2865 = vst [vmem:[%s2810] ss:$9 sm:$0xff] %v2704
      %v2866 = vld [vmem:[#allocation1] sm:$0xff]
      %2867 = vst [vmem:[#allocation1] ss:$9 sm:$0xff] %v2705
      %2868 = vst [vmem:[%s2798] ss:$9 sm:$0xff] %v2706
      %2869 = vst [vmem:[%s2800] ss:$9 sm:$0xff] %v2707
      %2870 = vst [vmem:[%s2802] ss:$9 sm:$0xff] %v2708
      %2871 = vst [vmem:[%s2804] ss:$9 sm:$0xff] %v2709
      %2872 = vst [vmem:[%s2806] ss:$9 sm:$0xff] %v2711
      %2873 = vst [vmem:[%s2808] ss:$9 sm:$0xff] %v2712
      %2874 = vst [vmem:[%s2810] ss:$9 sm:$0xff] %v2714
      %v2875 = vld [vmem:[#allocation1] sm:$0xff]
      %2876 = vst [vmem:[#allocation1] ss:$9 sm:$0xff] %v2715
      %2877 = vst [vmem:[%s2798] ss:$9 sm:$0xff] %v2716
      %2878 = vst [vmem:[%s2800] ss:$9 sm:$0xff] %v2719
      %2879 = vst [vmem:[%s2802] ss:$9 sm:$0xff] %v2720
      %2880 = vst [vmem:[%s2804] ss:$9 sm:$0xff] %v2721
      %2881 = vst [vmem:[%s2806] ss:$9 sm:$0xff] %v2722
      %2882 = vst [vmem:[%s2808] ss:$9 sm:$0xff] %v2723
      %2883 = vst [vmem:[%s2810] ss:$9 sm:$0xff] %v2724
      %v2884 = vld [vmem:[#allocation1] sm:$0xff]
      %2885 = vst [vmem:[#allocation1] ss:$9 sm:$0xff] %v2727
      %2886 = vst [vmem:[%s2798] ss:$9 sm:$0xff] %v2728
      %2887 = vst [vmem:[%s2800] ss:$9 sm:$0xff] %v2729
      %2888 = vst [vmem:[%s2802] ss:$9 sm:$0xff] %v2730
      %2889 = vst [vmem:[%s2804] ss:$9 sm:$0xff] %v2731
      %2890 = vst [vmem:[%s2806] ss:$9 sm:$0xff] %v2732
      %2891 = vst [vmem:[%s2808] ss:$9 sm:$0xff] %v2733
      %2892 = vst [vmem:[%s2810] ss:$9 sm:$0xff] %v2735
      %v2893 = vld [vmem:[#allocation1] sm:$0xff]
      %2894 = vst [vmem:[#allocation1] ss:$9 sm:$0xff] %v2736
      %2895 = vst [vmem:[%s2798] ss:$9 sm:$0xff] %v2738
      %2896 = vst [vmem:[%s2800] ss:$9 sm:$0xff] %v2739
      %2897 = vst [vmem:[%s2802] ss:$9 sm:$0xff] %v2740
      %2898 = vst [vmem:[%s2804] ss:$9 sm:$0xff] %v2743
      %2899 = vst [vmem:[%s2806] ss:$9 sm:$0xff] %v2744
      %2900 = vst [vmem:[%s2808] ss:$9 sm:$0xff] %v2745
      %2901 = vst [vmem:[%s2810] ss:$9 sm:$0xff] %v2746
      %v2902 = vld [vmem:[#allocation1] sm:$0xff]
      %2903 = vst [vmem:[#allocation1] ss:$9 sm:$0xff] %v2747
      %2904 = vst [vmem:[%s2798] ss:$9 sm:$0xff] %v2748
      %2905 = vst [vmem:[%s2800] ss:$9 sm:$0xff] %v2751
      %2906 = vst [vmem:[%s2802] ss:$9 sm:$0xff] %v2752
      %2907 = vst [vmem:[%s2804] ss:$9 sm:$0xff] %v2753
      %2908 = vst [vmem:[%s2806] ss:$9 sm:$0xff] %v2754
      %2909 = vst [vmem:[%s2808] ss:$9 sm:$0xff] %v2755
      %2910 = vst [vmem:[%s2810] ss:$9 sm:$0xff] %v2756
      %v2911 = vld [vmem:[#allocation1] sm:$0xff]
      %2912 = vst [vmem:[#allocation1] ss:$9 sm:$0xff] %v2757
      %2913 = vst [vmem:[%s2798] ss:$9 sm:$0xff] %v2759
      %2914 = vst [vmem:[%s2800] ss:$9 sm:$0xff] %v2760
      %2915 = vst [vmem:[%s2802] ss:$9 sm:$0xff] %v2762
      %2916 = vst [vmem:[%s2804] ss:$9 sm:$0xff] %v2763
      %2917 = vst [vmem:[%s2806] ss:$9 sm:$0xff] %v2764
      %2918 = vst [vmem:[%s2808] ss:$9 sm:$0xff] %v2767
      %2919 = vst [vmem:[%s2810] ss:$9 sm:$0xff] %v2768
      %v2920 = vld [vmem:[#allocation1] sm:$0xff]
      %2921 = vst [vmem:[#allocation1] ss:$9 sm:$0xff] %v2769
      %2922 = vst [vmem:[%s2798] ss:$9 sm:$0xff] %v2770
      %2923 = vst [vmem:[%s2800] ss:$9 sm:$0xff] %v2771
      %2924 = vst [vmem:[%s2802] ss:$9 sm:$0xff] %v2772
      %2925 = vst [vmem:[%s2804] ss:$9 sm:$0xff] %v2775
      %2926 = vst [vmem:[%s2806] ss:$9 sm:$0xff] %v2776
      %2927 = vst [vmem:[%s2808] ss:$9 sm:$0xff] %v2777
      %2928 = vst [vmem:[%s2810] ss:$9 sm:$0xff] %v2778
      %v2929 = vld [vmem:[#allocation1] sm:$0xff]
      %2930 = vst [vmem:[#allocation1] ss:$9 sm:$0xff] %v2779
      %2931 = vst [vmem:[%s2798] ss:$9 sm:$0xff] %v2780
      %2932 = vst [vmem:[%s2800] ss:$9 sm:$0xff] %v2781
      %2933 = vst [vmem:[%s2802] ss:$9 sm:$0xff] %v2783
      %2934 = vst [vmem:[%s2804] ss:$9 sm:$0xff] %v2784
      %2935 = vst [vmem:[%s2806] ss:$9 sm:$0xff] %v2786
      %2936 = vst [vmem:[%s2808] ss:$9 sm:$0xff] %v2787
      %2937 = vst [vmem:[%s2810] ss:$9 sm:$0xff] %v2788
      %v2938 = vld [vmem:[#allocation1] sm:$0xff]
      %2939 = vst [vmem:[#allocation1] ss:$9 sm:$0xff] %v2791
      %2940 = vst [vmem:[%s2798] ss:$9 sm:$0xff] %v2792
      %2941 = vst [vmem:[%s2800] ss:$9 sm:$0xff] %v2793
      %2942 = vst [vmem:[%s2802] ss:$9 sm:$0xff] %v2794
      %2943 = vst [vmem:[%s2804] ss:$9 sm:$0xff] %v2795
      %2944 = vst [vmem:[%s2806] ss:$9 sm:$0xff] %v2796
      %v2945 = vld [vmem:[#allocation1] sm:$0xff]
      %v2946 = vsel %vm2223, %v2812, 0
      %v2948 = vsel %vm2223, %v2821, 0
      %v2950 = vsel %vm2223, %v2830, 0
      %v2952 = vsel %vm2223, %v2839, 0
      %v2954 = vsel %vm2223, %v2848, 0
      %v2956 = vsel %vm2223, %v2857, 0
      %v2958 = vsel %vm2223, %v2866, 0
      %v2960 = vsel %vm2223, %v2875, 0
      %v2962 = vsel %vm2223, %v2884, 0
      %v2964 = vsel %vm2223, %v2893, 0
      %v2966 = vsel %vm2223, %v2902, 0
      %v2968 = vsel %vm2223, %v2911, 0
      %v2970 = vsel %vm2223, %v2920, 0
      %v2972 = vsel %vm2223, %v2929, 0
      %v2974 = vsel %vm2223, %v2938, 0
      %v2976 = vsel %vm2223, %v2945, 0
      %v2979 = vsel %vm2256, %v437, 0
      %2981 = vmatpush.bf16.msra.mxu0 0
      %2982 = vmatpush.bf16.msra.mxu0 0
      %2983 = vmatpush.bf16.msra.mxu0 0
      %2984 = vmatpush.bf16.msra.mxu0 0
      %2985 = vmatpush.bf16.msra.mxu0 0
      %2986 = vmatpush.bf16.msra.mxu0 0
      %2987 = vmatpush.bf16.msra.mxu0 0
      %2988 = vmatpush.bf16.msra.mxu0 %v2979
      %2989 = vmatmul.bf16.gmra.mxu0 %v2946
      %v2990 = vpop.f32.mrf.mxu0
      %v2991 = vadd.f32 0.0, %v2990
      %v2992 = vpop.f32.mrf.mxu0
      %v2993 = vadd.f32 0.0, %v2992
      %2994 = vmatmul.bf16.gmra.mxu0 %v2948
      %v2995 = vpop.f32.mrf.mxu0
      %v2996 = vadd.f32 0.0, %v2995
      %v2997 = vpop.f32.mrf.mxu0
      %v2998 = vadd.f32 0.0, %v2997
      %2999 = vmatmul.bf16.gmra.mxu0 %v2950
      %v3000 = vpop.f32.mrf.mxu0
      %v3001 = vadd.f32 0.0, %v3000
      %v3002 = vpop.f32.mrf.mxu0
      %v3003 = vadd.f32 0.0, %v3002
      %3004 = vmatmul.bf16.gmra.mxu0 %v2952
      %v3005 = vpop.f32.mrf.mxu0
      %v3006 = vadd.f32 0.0, %v3005
      %v3007 = vpop.f32.mrf.mxu0
      %v3008 = vadd.f32 0.0, %v3007
      %3009 = vmatmul.bf16.gmra.mxu0 %v2954
      %v3010 = vpop.f32.mrf.mxu0
      %v3011 = vadd.f32 0.0, %v3010
      %v3012 = vpop.f32.mrf.mxu0
      %v3013 = vadd.f32 0.0, %v3012
      %3014 = vmatmul.bf16.gmra.mxu0 %v2956
      %v3015 = vpop.f32.mrf.mxu0
      %v3016 = vadd.f32 0.0, %v3015
      %v3017 = vpop.f32.mrf.mxu0
      %v3018 = vadd.f32 0.0, %v3017
      %3019 = vmatmul.bf16.gmra.mxu0 %v2958
      %v3020 = vpop.f32.mrf.mxu0
      %v3021 = vadd.f32 0.0, %v3020
      %v3022 = vpop.f32.mrf.mxu0
      %v3023 = vadd.f32 0.0, %v3022
      %3024 = vmatmul.bf16.gmra.mxu0 %v2960
      %v3025 = vpop.f32.mrf.mxu0
      %v3026 = vadd.f32 0.0, %v3025
      %v3027 = vpop.f32.mrf.mxu0
      %v3028 = vadd.f32 0.0, %v3027
      %3029 = vmatmul.bf16.gmra.mxu0 %v2962
      %v3030 = vpop.f32.mrf.mxu0
      %v3031 = vadd.f32 0.0, %v3030
      %v3032 = vpop.f32.mrf.mxu0
      %v3033 = vadd.f32 0.0, %v3032
      %3034 = vmatmul.bf16.gmra.mxu0 %v2964
      %v3035 = vpop.f32.mrf.mxu0
      %v3036 = vadd.f32 0.0, %v3035
      %v3037 = vpop.f32.mrf.mxu0
      %v3038 = vadd.f32 0.0, %v3037
      %3039 = vmatmul.bf16.gmra.mxu0 %v2966
      %v3040 = vpop.f32.mrf.mxu0
      %v3041 = vadd.f32 0.0, %v3040
      %v3042 = vpop.f32.mrf.mxu0
      %v3043 = vadd.f32 0.0, %v3042
      %3044 = vmatmul.bf16.gmra.mxu0 %v2968
      %v3045 = vpop.f32.mrf.mxu0
      %v3046 = vadd.f32 0.0, %v3045
      %v3047 = vpop.f32.mrf.mxu0
      %v3048 = vadd.f32 0.0, %v3047
      %3049 = vmatmul.bf16.gmra.mxu0 %v2970
      %v3050 = vpop.f32.mrf.mxu0
      %v3051 = vadd.f32 0.0, %v3050
      %v3052 = vpop.f32.mrf.mxu0
      %v3053 = vadd.f32 0.0, %v3052
      %3054 = vmatmul.bf16.gmra.mxu0 %v2972
      %v3055 = vpop.f32.mrf.mxu0
      %v3056 = vadd.f32 0.0, %v3055
      %v3057 = vpop.f32.mrf.mxu0
      %v3058 = vadd.f32 0.0, %v3057
      %3059 = vmatmul.bf16.gmra.mxu0 %v2974
      %v3060 = vpop.f32.mrf.mxu0
      %v3061 = vadd.f32 0.0, %v3060
      %v3062 = vpop.f32.mrf.mxu0
      %v3063 = vadd.f32 0.0, %v3062
      %3064 = vmatmul.bf16.gmra.mxu0 %v2976
      %v3065 = vpop.f32.mrf.mxu0
      %v3066 = vadd.f32 0.0, %v3065
      %v3067 = vpop.f32.mrf.mxu0
      %v3068 = vadd.f32 0.0, %v3067
      %3069 = vdwg.mxu0
      %v3070 = vadd.f32 %v2543, %v2991
      %v3071 = vadd.f32 %v2545, %v2993
      %v3072 = vadd.f32 %v2548, %v2996
      %v3073 = vadd.f32 %v2550, %v2998
      %v3074 = vadd.f32 %v2553, %v3001
      %v3075 = vadd.f32 %v2555, %v3003
      %v3076 = vadd.f32 %v2558, %v3006
      %v3077 = vadd.f32 %v2560, %v3008
      %v3078 = vadd.f32 %v2563, %v3011
      %v3079 = vadd.f32 %v2565, %v3013
      %v3080 = vadd.f32 %v2568, %v3016
      %v3081 = vadd.f32 %v2570, %v3018
      %v3082 = vadd.f32 %v2573, %v3021
      %v3083 = vadd.f32 %v2575, %v3023
      %v3084 = vadd.f32 %v2578, %v3026
      %v3085 = vadd.f32 %v2580, %v3028
      %v3086 = vadd.f32 %v2583, %v3031
      %v3087 = vadd.f32 %v2585, %v3033
      %v3088 = vadd.f32 %v2588, %v3036
      %v3089 = vadd.f32 %v2590, %v3038
      %v3090 = vadd.f32 %v2593, %v3041
      %v3091 = vadd.f32 %v2595, %v3043
      %v3092 = vadd.f32 %v2598, %v3046
      %v3093 = vadd.f32 %v2600, %v3048
      %v3094 = vadd.f32 %v2603, %v3051
      %v3095 = vadd.f32 %v2605, %v3053
      %v3096 = vadd.f32 %v2608, %v3056
      %v3097 = vadd.f32 %v2610, %v3058
      %v3098 = vadd.f32 %v2613, %v3061
      %v3099 = vadd.f32 %v2615, %v3063
      %v3100 = vadd.f32 %v2618, %v3066
      %v3101 = vadd.f32 %v2620, %v3068
      %v3105 = vrot.slane %v417, 3
      %v3106 = vrot.slane %v418, 3
      %v3107 = vrot.slane %v419, 3
      %v3110 = vsel %vm529, %v417, %v3105
      %v3111 = vsel %vm533, %v417, %v3105
      %v3113 = vrot.slane %v3111, 1
      %v3114 = vsel %vm537, %v417, %v3105
      %v3116 = vrot.slane %v3114, 2
      %v3117 = vsel %vm541, %v417, %v3105
      %v3119 = vrot.slane %v3117, 3
      %v3122 = vsel %vm529, %v418, %v3106
      %v3123 = vsel %vm533, %v418, %v3106
      %v3125 = vrot.slane %v3123, 1
      %v3126 = vsel %vm537, %v418, %v3106
      %v3128 = vrot.slane %v3126, 2
      %v3129 = vsel %vm541, %v418, %v3106
      %v3131 = vrot.slane %v3129, 3
      %v3134 = vsel %vm529, %v419, %v3107
      %3135 = vst [vmem:[#allocation1] ss:$9 sm:$0xff] %v562
      %s3136 = scalar_lea.vmem [#allocation1], 1
      %3137 = vst [vmem:[%s3136] ss:$9 sm:$0xff] %v565
      %s3138 = scalar_lea.vmem [#allocation1], 2
      %3139 = vst [vmem:[%s3138] ss:$9 sm:$0xff] %v568
      %s3140 = scalar_lea.vmem [#allocation1], 3
      %3141 = vst [vmem:[%s3140] ss:$9 sm:$0xff] %v571
      %s3142 = scalar_lea.vmem [#allocation1], 4
      %3143 = vst [vmem:[%s3142] ss:$9 sm:$0xff] %v574
      %s3144 = scalar_lea.vmem [#allocation1], 5
      %3145 = vst [vmem:[%s3144] ss:$9 sm:$0xff] %v577
      %s3146 = scalar_lea.vmem [#allocation1], 6
      %3147 = vst [vmem:[%s3146] ss:$9 sm:$0xff] %v580
      %s3148 = scalar_lea.vmem [#allocation1], 7
      %3149 = vst [vmem:[%s3148] ss:$9 sm:$0xff] %v583
      %v3150 = vld [vmem:[#allocation1] sm:$0xff]
      %3151 = vst [vmem:[#allocation1] ss:$9 sm:$0xff] %v586
      %3152 = vst [vmem:[%s3136] ss:$9 sm:$0xff] %v589
      %3153 = vst [vmem:[%s3138] ss:$9 sm:$0xff] %v592
      %3154 = vst [vmem:[%s3140] ss:$9 sm:$0xff] %v595
      %3155 = vst [vmem:[%s3142] ss:$9 sm:$0xff] %v598
      %3156 = vst [vmem:[%s3144] ss:$9 sm:$0xff] %v601
      %3157 = vst [vmem:[%s3146] ss:$9 sm:$0xff] %v604
      %3158 = vst [vmem:[%s3148] ss:$9 sm:$0xff] %v607
      %v3159 = vld [vmem:[#allocation1] sm:$0xff]
      %3160 = vst [vmem:[#allocation1] ss:$9 sm:$0xff] %v610
      %3161 = vst [vmem:[%s3136] ss:$9 sm:$0xff] %v613
      %3162 = vst [vmem:[%s3138] ss:$9 sm:$0xff] %v616
      %3163 = vst [vmem:[%s3140] ss:$9 sm:$0xff] %v619
      %3164 = vst [vmem:[%s3142] ss:$9 sm:$0xff] %v622
      %3165 = vst [vmem:[%s3144] ss:$9 sm:$0xff] %v625
      %3166 = vst [vmem:[%s3146] ss:$9 sm:$0xff] %v628
      %3167 = vst [vmem:[%s3148] ss:$9 sm:$0xff] %v631
      %v3168 = vld [vmem:[#allocation1] sm:$0xff]
      %3169 = vst [vmem:[#allocation1] ss:$9 sm:$0xff] %v634
      %3170 = vst [vmem:[%s3136] ss:$9 sm:$0xff] %v637
      %3171 = vst [vmem:[%s3138] ss:$9 sm:$0xff] %v640
      %3172 = vst [vmem:[%s3140] ss:$9 sm:$0xff] %v643
      %3173 = vst [vmem:[%s3142] ss:$9 sm:$0xff] %v646
      %3174 = vst [vmem:[%s3144] ss:$9 sm:$0xff] %v649
      %3175 = vst [vmem:[%s3146] ss:$9 sm:$0xff] %v652
      %3176 = vst [vmem:[%s3148] ss:$9 sm:$0xff] %v655
      %v3177 = vld [vmem:[#allocation1] sm:$0xff]
      %3178 = vst [vmem:[#allocation1] ss:$9 sm:$0xff] %v658
      %3179 = vst [vmem:[%s3136] ss:$9 sm:$0xff] %v661
      %3180 = vst [vmem:[%s3138] ss:$9 sm:$0xff] %v664
      %3181 = vst [vmem:[%s3140] ss:$9 sm:$0xff] %v667
      %3182 = vst [vmem:[%s3142] ss:$9 sm:$0xff] %v670
      %3183 = vst [vmem:[%s3144] ss:$9 sm:$0xff] %v673
      %3184 = vst [vmem:[%s3146] ss:$9 sm:$0xff] %v676
      %3185 = vst [vmem:[%s3148] ss:$9 sm:$0xff] %v679
      %v3186 = vld [vmem:[#allocation1] sm:$0xff]
      %3187 = vst [vmem:[#allocation1] ss:$9 sm:$0xff] %v682
      %3188 = vst [vmem:[%s3136] ss:$9 sm:$0xff] %v685
      %3189 = vst [vmem:[%s3138] ss:$9 sm:$0xff] %v688
      %3190 = vst [vmem:[%s3140] ss:$9 sm:$0xff] %v691
      %3191 = vst [vmem:[%s3142] ss:$9 sm:$0xff] %v694
      %3192 = vst [vmem:[%s3144] ss:$9 sm:$0xff] %v697
      %3193 = vst [vmem:[%s3146] ss:$9 sm:$0xff] %v700
      %3194 = vst [vmem:[%s3148] ss:$9 sm:$0xff] %v703
      %v3195 = vld [vmem:[#allocation1] sm:$0xff]
      %3196 = vst [vmem:[#allocation1] ss:$9 sm:$0xff] %v706
      %3197 = vst [vmem:[%s3136] ss:$9 sm:$0xff] %v709
      %3198 = vst [vmem:[%s3138] ss:$9 sm:$0xff] %v712
      %3199 = vst [vmem:[%s3140] ss:$9 sm:$0xff] %v715
      %3200 = vst [vmem:[%s3142] ss:$9 sm:$0xff] %v718
      %3201 = vst [vmem:[%s3144] ss:$9 sm:$0xff] %v721
      %3202 = vst [vmem:[%s3146] ss:$9 sm:$0xff] %v724
      %3203 = vst [vmem:[%s3148] ss:$9 sm:$0xff] %v727
      %v3204 = vld [vmem:[#allocation1] sm:$0xff]
      %3205 = vst [vmem:[#allocation1] ss:$9 sm:$0xff] %v730
      %3206 = vst [vmem:[%s3136] ss:$9 sm:$0xff] %v733
      %3207 = vst [vmem:[%s3138] ss:$9 sm:$0xff] %v736
      %3208 = vst [vmem:[%s3140] ss:$9 sm:$0xff] %v739
      %3209 = vst [vmem:[%s3142] ss:$9 sm:$0xff] %v742
      %3210 = vst [vmem:[%s3144] ss:$9 sm:$0xff] %v745
      %3211 = vst [vmem:[%s3146] ss:$9 sm:$0xff] %v748
      %3212 = vst [vmem:[%s3148] ss:$9 sm:$0xff] %v751
      %v3213 = vld [vmem:[#allocation1] sm:$0xff]
      %3214 = vst [vmem:[#allocation1] ss:$9 sm:$0xff] %v754
      %3215 = vst [vmem:[%s3136] ss:$9 sm:$0xff] %v757
      %3216 = vst [vmem:[%s3138] ss:$9 sm:$0xff] %v760
      %3217 = vst [vmem:[%s3140] ss:$9 sm:$0xff] %v763
      %3218 = vst [vmem:[%s3142] ss:$9 sm:$0xff] %v766
      %3219 = vst [vmem:[%s3144] ss:$9 sm:$0xff] %v769
      %3220 = vst [vmem:[%s3146] ss:$9 sm:$0xff] %v772
      %3221 = vst [vmem:[%s3148] ss:$9 sm:$0xff] %v775
      %v3222 = vld [vmem:[#allocation1] sm:$0xff]
      %3223 = vst [vmem:[#allocation1] ss:$9 sm:$0xff] %v778
      %3224 = vst [vmem:[%s3136] ss:$9 sm:$0xff] %v781
      %3225 = vst [vmem:[%s3138] ss:$9 sm:$0xff] %v784
      %3226 = vst [vmem:[%s3140] ss:$9 sm:$0xff] %v787
      %3227 = vst [vmem:[%s3142] ss:$9 sm:$0xff] %v790
      %3228 = vst [vmem:[%s3144] ss:$9 sm:$0xff] %v793
      %3229 = vst [vmem:[%s3146] ss:$9 sm:$0xff] %v796
      %3230 = vst [vmem:[%s3148] ss:$9 sm:$0xff] %v799
      %v3231 = vld [vmem:[#allocation1] sm:$0xff]
      %3232 = vst [vmem:[#allocation1] ss:$9 sm:$0xff] %v802
      %3233 = vst [vmem:[%s3136] ss:$9 sm:$0xff] %v805
      %3234 = vst [vmem:[%s3138] ss:$9 sm:$0xff] %v808
      %3235 = vst [vmem:[%s3140] ss:$9 sm:$0xff] %v811
      %3236 = vst [vmem:[%s3142] ss:$9 sm:$0xff] %v814
      %3237 = vst [vmem:[%s3144] ss:$9 sm:$0xff] %v817
      %3238 = vst [vmem:[%s3146] ss:$9 sm:$0xff] %v820
      %3239 = vst [vmem:[%s3148] ss:$9 sm:$0xff] %v823
      %v3240 = vld [vmem:[#allocation1] sm:$0xff]
      %3241 = vst [vmem:[#allocation1] ss:$9 sm:$0xff] %v826
      %3242 = vst [vmem:[%s3136] ss:$9 sm:$0xff] %v829
      %3243 = vst [vmem:[%s3138] ss:$9 sm:$0xff] %v832
      %3244 = vst [vmem:[%s3140] ss:$9 sm:$0xff] %v835
      %3245 = vst [vmem:[%s3142] ss:$9 sm:$0xff] %v838
      %3246 = vst [vmem:[%s3144] ss:$9 sm:$0xff] %v841
      %3247 = vst [vmem:[%s3146] ss:$9 sm:$0xff] %v844
      %3248 = vst [vmem:[%s3148] ss:$9 sm:$0xff] %v847
      %v3249 = vld [vmem:[#allocation1] sm:$0xff]
      %3250 = vst [vmem:[#allocation1] ss:$9 sm:$0xff] %v850
      %3251 = vst [vmem:[%s3136] ss:$9 sm:$0xff] %v853
      %3252 = vst [vmem:[%s3138] ss:$9 sm:$0xff] %v856
      %3253 = vst [vmem:[%s3140] ss:$9 sm:$0xff] %v859
      %3254 = vst [vmem:[%s3142] ss:$9 sm:$0xff] %v862
      %3255 = vst [vmem:[%s3144] ss:$9 sm:$0xff] %v865
      %3256 = vst [vmem:[%s3146] ss:$9 sm:$0xff] %v868
      %3257 = vst [vmem:[%s3148] ss:$9 sm:$0xff] %v871
      %v3258 = vld [vmem:[#allocation1] sm:$0xff]
      %3259 = vst [vmem:[#allocation1] ss:$9 sm:$0xff] %v874
      %3260 = vst [vmem:[%s3136] ss:$9 sm:$0xff] %v877
      %3261 = vst [vmem:[%s3138] ss:$9 sm:$0xff] %v880
      %3262 = vst [vmem:[%s3140] ss:$9 sm:$0xff] %v883
      %3263 = vst [vmem:[%s3142] ss:$9 sm:$0xff] %v886
      %3264 = vst [vmem:[%s3144] ss:$9 sm:$0xff] %v889
      %3265 = vst [vmem:[%s3146] ss:$9 sm:$0xff] %v892
      %3266 = vst [vmem:[%s3148] ss:$9 sm:$0xff] %v895
      %v3267 = vld [vmem:[#allocation1] sm:$0xff]
      %3268 = vst [vmem:[#allocation1] ss:$9 sm:$0xff] %v898
      %3269 = vst [vmem:[%s3136] ss:$9 sm:$0xff] %v901
      %3270 = vst [vmem:[%s3138] ss:$9 sm:$0xff] %v904
      %3271 = vst [vmem:[%s3140] ss:$9 sm:$0xff] %v907
      %3272 = vst [vmem:[%s3142] ss:$9 sm:$0xff] %v910
      %3273 = vst [vmem:[%s3144] ss:$9 sm:$0xff] %v3110
      %3275 = vst [vmem:[%s3146] ss:$9 sm:$0xff] %v3113
      %3277 = vst [vmem:[%s3148] ss:$9 sm:$0xff] %v3116
      %v3278 = vld [vmem:[#allocation1] sm:$0xff]
      %3280 = vst [vmem:[#allocation1] ss:$9 sm:$0xff] %v3119
      %3281 = vst [vmem:[%s3136] ss:$9 sm:$0xff] %v3122
      %3283 = vst [vmem:[%s3138] ss:$9 sm:$0xff] %v3125
      %3285 = vst [vmem:[%s3140] ss:$9 sm:$0xff] %v3128
      %3287 = vst [vmem:[%s3142] ss:$9 sm:$0xff] %v3131
      %3288 = vst [vmem:[%s3144] ss:$9 sm:$0xff] %v3134
      %v3289 = vld [vmem:[#allocation1] sm:$0xff]
      %v3290 = vsel %vm2223, %v3150, 0
      %v3292 = vsel %vm2223, %v3159, 0
      %v3294 = vsel %vm2223, %v3168, 0
      %v3296 = vsel %vm2223, %v3177, 0
      %v3298 = vsel %vm2223, %v3186, 0
      %v3300 = vsel %vm2223, %v3195, 0
      %v3302 = vsel %vm2223, %v3204, 0
      %v3304 = vsel %vm2223, %v3213, 0
      %v3306 = vsel %vm2223, %v3222, 0
      %v3308 = vsel %vm2223, %v3231, 0
      %v3310 = vsel %vm2223, %v3240, 0
      %v3312 = vsel %vm2223, %v3249, 0
      %v3314 = vsel %vm2223, %v3258, 0
      %v3316 = vsel %vm2223, %v3267, 0
      %v3318 = vsel %vm2223, %v3278, 0
      %v3320 = vsel %vm2223, %v3289, 0
      %v3323 = vsel %vm2256, %v438, 0
      %3325 = vmatpush.bf16.msra.mxu0 0
      %3326 = vmatpush.bf16.msra.mxu0 0
      %3327 = vmatpush.bf16.msra.mxu0 0
      %3328 = vmatpush.bf16.msra.mxu0 0
      %3329 = vmatpush.bf16.msra.mxu0 0
      %3330 = vmatpush.bf16.msra.mxu0 0
      %3331 = vmatpush.bf16.msra.mxu0 0
      %3332 = vmatpush.bf16.msra.mxu0 %v3323
      %3333 = vmatmul.bf16.gmra.mxu0 %v3290
      %v3334 = vpop.f32.mrf.mxu0
      %v3335 = vadd.f32 0.0, %v3334
      %v3336 = vpop.f32.mrf.mxu0
      %v3337 = vadd.f32 0.0, %v3336
      %3338 = vmatmul.bf16.gmra.mxu0 %v3292
      %v3339 = vpop.f32.mrf.mxu0
      %v3340 = vadd.f32 0.0, %v3339
      %v3341 = vpop.f32.mrf.mxu0
      %v3342 = vadd.f32 0.0, %v3341
      %3343 = vmatmul.bf16.gmra.mxu0 %v3294
      %v3344 = vpop.f32.mrf.mxu0
      %v3345 = vadd.f32 0.0, %v3344
      %v3346 = vpop.f32.mrf.mxu0
      %v3347 = vadd.f32 0.0, %v3346
      %3348 = vmatmul.bf16.gmra.mxu0 %v3296
      %v3349 = vpop.f32.mrf.mxu0
      %v3350 = vadd.f32 0.0, %v3349
      %v3351 = vpop.f32.mrf.mxu0
      %v3352 = vadd.f32 0.0, %v3351
      %3353 = vmatmul.bf16.gmra.mxu0 %v3298
      %v3354 = vpop.f32.mrf.mxu0
      %v3355 = vadd.f32 0.0, %v3354
      %v3356 = vpop.f32.mrf.mxu0
      %v3357 = vadd.f32 0.0, %v3356
      %3358 = vmatmul.bf16.gmra.mxu0 %v3300
      %v3359 = vpop.f32.mrf.mxu0
      %v3360 = vadd.f32 0.0, %v3359
      %v3361 = vpop.f32.mrf.mxu0
      %v3362 = vadd.f32 0.0, %v3361
      %3363 = vmatmul.bf16.gmra.mxu0 %v3302
      %v3364 = vpop.f32.mrf.mxu0
      %v3365 = vadd.f32 0.0, %v3364
      %v3366 = vpop.f32.mrf.mxu0
      %v3367 = vadd.f32 0.0, %v3366
      %3368 = vmatmul.bf16.gmra.mxu0 %v3304
      %v3369 = vpop.f32.mrf.mxu0
      %v3370 = vadd.f32 0.0, %v3369
      %v3371 = vpop.f32.mrf.mxu0
      %v3372 = vadd.f32 0.0, %v3371
      %3373 = vmatmul.bf16.gmra.mxu0 %v3306
      %v3374 = vpop.f32.mrf.mxu0
      %v3375 = vadd.f32 0.0, %v3374
      %v3376 = vpop.f32.mrf.mxu0
      %v3377 = vadd.f32 0.0, %v3376
      %3378 = vmatmul.bf16.gmra.mxu0 %v3308
      %v3379 = vpop.f32.mrf.mxu0
      %v3380 = vadd.f32 0.0, %v3379
      %v3381 = vpop.f32.mrf.mxu0
      %v3382 = vadd.f32 0.0, %v3381
      %3383 = vmatmul.bf16.gmra.mxu0 %v3310
      %v3384 = vpop.f32.mrf.mxu0
      %v3385 = vadd.f32 0.0, %v3384
      %v3386 = vpop.f32.mrf.mxu0
      %v3387 = vadd.f32 0.0, %v3386
      %3388 = vmatmul.bf16.gmra.mxu0 %v3312
      %v3389 = vpop.f32.mrf.mxu0
      %v3390 = vadd.f32 0.0, %v3389
      %v3391 = vpop.f32.mrf.mxu0
      %v3392 = vadd.f32 0.0, %v3391
      %3393 = vmatmul.bf16.gmra.mxu0 %v3314
      %v3394 = vpop.f32.mrf.mxu0
      %v3395 = vadd.f32 0.0, %v3394
      %v3396 = vpop.f32.mrf.mxu0
      %v3397 = vadd.f32 0.0, %v3396
      %3398 = vmatmul.bf16.gmra.mxu0 %v3316
      %v3399 = vpop.f32.mrf.mxu0
      %v3400 = vadd.f32 0.0, %v3399
      %v3401 = vpop.f32.mrf.mxu0
      %v3402 = vadd.f32 0.0, %v3401
      %3403 = vmatmul.bf16.gmra.mxu0 %v3318
      %v3404 = vpop.f32.mrf.mxu0
      %v3405 = vadd.f32 0.0, %v3404
      %v3406 = vpop.f32.mrf.mxu0
      %v3407 = vadd.f32 0.0, %v3406
      %3408 = vmatmul.bf16.gmra.mxu0 %v3320
      %v3409 = vpop.f32.mrf.mxu0
      %v3410 = vadd.f32 0.0, %v3409
      %v3411 = vpop.f32.mrf.mxu0
      %v3412 = vadd.f32 0.0, %v3411
      %3413 = vdwg.mxu0
      %v3414 = vadd.f32 %v3070, %v3335
      %v3415 = vadd.f32 %v3071, %v3337
      %v3416 = vadd.f32 %v3072, %v3340
      %v3417 = vadd.f32 %v3073, %v3342
      %v3418 = vadd.f32 %v3074, %v3345
      %v3419 = vadd.f32 %v3075, %v3347
      %v3420 = vadd.f32 %v3076, %v3350
      %v3421 = vadd.f32 %v3077, %v3352
      %v3422 = vadd.f32 %v3078, %v3355
      %v3423 = vadd.f32 %v3079, %v3357
      %v3424 = vadd.f32 %v3080, %v3360
      %v3425 = vadd.f32 %v3081, %v3362
      %v3426 = vadd.f32 %v3082, %v3365
      %v3427 = vadd.f32 %v3083, %v3367
      %v3428 = vadd.f32 %v3084, %v3370
      %v3429 = vadd.f32 %v3085, %v3372
      %v3430 = vadd.f32 %v3086, %v3375
      %v3431 = vadd.f32 %v3087, %v3377
      %v3432 = vadd.f32 %v3088, %v3380
      %v3433 = vadd.f32 %v3089, %v3382
      %v3434 = vadd.f32 %v3090, %v3385
      %v3435 = vadd.f32 %v3091, %v3387
      %v3436 = vadd.f32 %v3092, %v3390
      %v3437 = vadd.f32 %v3093, %v3392
      %v3438 = vadd.f32 %v3094, %v3395
      %v3439 = vadd.f32 %v3095, %v3397
      %v3440 = vadd.f32 %v3096, %v3400
      %v3441 = vadd.f32 %v3097, %v3402
      %v3442 = vadd.f32 %v3098, %v3405
      %v3443 = vadd.f32 %v3099, %v3407
      %v3444 = vadd.f32 %v3100, %v3410
      %v3445 = vadd.f32 %v3101, %v3412
      %v3446 = vsel %vm533, %v419, %v3107
      %v3448 = vrot.slane %v3446, 1
      %v3449 = vshrl.u32 %v3110, 16
      %v3451 = vrot.slane %v3449, 7
      %v3452 = vrot.slane %v3451, 1
      %v3453 = vshll.u32 %v3113, 16
      %v3455 = vsel %vm967, %v3452, %v3453
      %v3456 = vshrl.u32 %v3113, 16
      %v3458 = vrot.slane %v3456, 7
      %v3459 = vrot.slane %v3458, 1
      %v3460 = vshll.u32 %v3116, 16
      %v3462 = vsel %vm967, %v3459, %v3460
      %v3463 = vshrl.u32 %v3116, 16
      %v3465 = vrot.slane %v3463, 7
      %v3466 = vrot.slane %v3465, 1
      %v3467 = vshll.u32 %v3119, 16
      %v3469 = vsel %vm967, %v3466, %v3467
      %v3470 = vshrl.u32 %v3119, 16
      %v3472 = vrot.slane %v3470, 7
      %v3473 = vrot.slane %v3472, 1
      %v3474 = vshll.u32 %v3122, 16
      %v3476 = vsel %vm967, %v3473, %v3474
      %v3477 = vshrl.u32 %v3122, 16
      %v3479 = vrot.slane %v3477, 7
      %v3480 = vrot.slane %v3479, 1
      %v3481 = vshll.u32 %v3125, 16
      %v3483 = vsel %vm967, %v3480, %v3481
      %v3484 = vshrl.u32 %v3125, 16
      %v3486 = vrot.slane %v3484, 7
      %v3487 = vrot.slane %v3486, 1
      %v3488 = vshll.u32 %v3128, 16
      %v3490 = vsel %vm967, %v3487, %v3488
      %v3491 = vshrl.u32 %v3128, 16
      %v3493 = vrot.slane %v3491, 7
      %v3494 = vrot.slane %v3493, 1
      %v3495 = vshll.u32 %v3131, 16
      %v3497 = vsel %vm967, %v3494, %v3495
      %v3498 = vshrl.u32 %v3131, 16
      %v3500 = vrot.slane %v3498, 7
      %v3501 = vrot.slane %v3500, 1
      %v3502 = vshll.u32 %v3134, 16
      %v3504 = vsel %vm967, %v3501, %v3502
      %v3505 = vshrl.u32 %v3134, 16
      %v3507 = vrot.slane %v3505, 7
      %v3508 = vrot.slane %v3507, 1
      %v3510 = vshll.u32 %v3448, 16
      %v3512 = vsel %vm967, %v3508, %v3510
      %3513 = vst [vmem:[#allocation1] ss:$9 sm:$0xff] %v1045
      %s3514 = scalar_lea.vmem [#allocation1], 1
      %3515 = vst [vmem:[%s3514] ss:$9 sm:$0xff] %v1053
      %s3516 = scalar_lea.vmem [#allocation1], 2
      %3517 = vst [vmem:[%s3516] ss:$9 sm:$0xff] %v1061
      %s3518 = scalar_lea.vmem [#allocation1], 3
      %3519 = vst [vmem:[%s3518] ss:$9 sm:$0xff] %v1068
      %s3520 = scalar_lea.vmem [#allocation1], 4
      %3521 = vst [vmem:[%s3520] ss:$9 sm:$0xff] %v1076
      %s3522 = scalar_lea.vmem [#allocation1], 5
      %3523 = vst [vmem:[%s3522] ss:$9 sm:$0xff] %v1084
      %s3524 = scalar_lea.vmem [#allocation1], 6
      %3525 = vst [vmem:[%s3524] ss:$9 sm:$0xff] %v1092
      %s3526 = scalar_lea.vmem [#allocation1], 7
      %3527 = vst [vmem:[%s3526] ss:$9 sm:$0xff] %v1099
      %v3528 = vld [vmem:[#allocation1] sm:$0xff]
      %3529 = vst [vmem:[#allocation1] ss:$9 sm:$0xff] %v1107
      %3530 = vst [vmem:[%s3514] ss:$9 sm:$0xff] %v1115
      %3531 = vst [vmem:[%s3516] ss:$9 sm:$0xff] %v1123
      %3532 = vst [vmem:[%s3518] ss:$9 sm:$0xff] %v1131
      %3533 = vst [vmem:[%s3520] ss:$9 sm:$0xff] %v1138
      %3534 = vst [vmem:[%s3522] ss:$9 sm:$0xff] %v1146
      %3535 = vst [vmem:[%s3524] ss:$9 sm:$0xff] %v1154
      %3536 = vst [vmem:[%s3526] ss:$9 sm:$0xff] %v1162
      %v3537 = vld [vmem:[#allocation1] sm:$0xff]
      %3538 = vst [vmem:[#allocation1] ss:$9 sm:$0xff] %v1169
      %3539 = vst [vmem:[%s3514] ss:$9 sm:$0xff] %v1177
      %3540 = vst [vmem:[%s3516] ss:$9 sm:$0xff] %v1185
      %3541 = vst [vmem:[%s3518] ss:$9 sm:$0xff] %v1193
      %3542 = vst [vmem:[%s3520] ss:$9 sm:$0xff] %v1201
      %3543 = vst [vmem:[%s3522] ss:$9 sm:$0xff] %v1208
      %3544 = vst [vmem:[%s3524] ss:$9 sm:$0xff] %v1216
      %3545 = vst [vmem:[%s3526] ss:$9 sm:$0xff] %v1224
      %v3546 = vld [vmem:[#allocation1] sm:$0xff]
      %3547 = vst [vmem:[#allocation1] ss:$9 sm:$0xff] %v1232
      %3548 = vst [vmem:[%s3514] ss:$9 sm:$0xff] %v1239
      %3549 = vst [vmem:[%s3516] ss:$9 sm:$0xff] %v1247
      %3550 = vst [vmem:[%s3518] ss:$9 sm:$0xff] %v1255
      %3551 = vst [vmem:[%s3520] ss:$9 sm:$0xff] %v1263
      %3552 = vst [vmem:[%s3522] ss:$9 sm:$0xff] %v1271
      %3553 = vst [vmem:[%s3524] ss:$9 sm:$0xff] %v1278
      %3554 = vst [vmem:[%s3526] ss:$9 sm:$0xff] %v1286
      %v3555 = vld [vmem:[#allocation1] sm:$0xff]
      %3556 = vst [vmem:[#allocation1] ss:$9 sm:$0xff] %v1294
      %3557 = vst [vmem:[%s3514] ss:$9 sm:$0xff] %v1302
      %3558 = vst [vmem:[%s3516] ss:$9 sm:$0xff] %v1309
      %3559 = vst [vmem:[%s3518] ss:$9 sm:$0xff] %v1317
      %3560 = vst [vmem:[%s3520] ss:$9 sm:$0xff] %v1325
      %3561 = vst [vmem:[%s3522] ss:$9 sm:$0xff] %v1333
      %3562 = vst [vmem:[%s3524] ss:$9 sm:$0xff] %v1341
      %3563 = vst [vmem:[%s3526] ss:$9 sm:$0xff] %v1348
      %v3564 = vld [vmem:[#allocation1] sm:$0xff]
      %3565 = vst [vmem:[#allocation1] ss:$9 sm:$0xff] %v1356
      %3566 = vst [vmem:[%s3514] ss:$9 sm:$0xff] %v1364
      %3567 = vst [vmem:[%s3516] ss:$9 sm:$0xff] %v1372
      %3568 = vst [vmem:[%s3518] ss:$9 sm:$0xff] %v1379
      %3569 = vst [vmem:[%s3520] ss:$9 sm:$0xff] %v1387
      %3570 = vst [vmem:[%s3522] ss:$9 sm:$0xff] %v1395
      %3571 = vst [vmem:[%s3524] ss:$9 sm:$0xff] %v1403
      %3572 = vst [vmem:[%s3526] ss:$9 sm:$0xff] %v1411
      %v3573 = vld [vmem:[#allocation1] sm:$0xff]
      %3574 = vst [vmem:[#allocation1] ss:$9 sm:$0xff] %v1418
      %3575 = vst [vmem:[%s3514] ss:$9 sm:$0xff] %v1426
      %3576 = vst [vmem:[%s3516] ss:$9 sm:$0xff] %v1434
      %3577 = vst [vmem:[%s3518] ss:$9 sm:$0xff] %v1442
      %3578 = vst [vmem:[%s3520] ss:$9 sm:$0xff] %v1449
      %3579 = vst [vmem:[%s3522] ss:$9 sm:$0xff] %v1457
      %3580 = vst [vmem:[%s3524] ss:$9 sm:$0xff] %v1465
      %3581 = vst [vmem:[%s3526] ss:$9 sm:$0xff] %v1473
      %v3582 = vld [vmem:[#allocation1] sm:$0xff]
      %3583 = vst [vmem:[#allocation1] ss:$9 sm:$0xff] %v1481
      %3584 = vst [vmem:[%s3514] ss:$9 sm:$0xff] %v1488
      %3585 = vst [vmem:[%s3516] ss:$9 sm:$0xff] %v1496
      %3586 = vst [vmem:[%s3518] ss:$9 sm:$0xff] %v1504
      %3587 = vst [vmem:[%s3520] ss:$9 sm:$0xff] %v1512
      %3588 = vst [vmem:[%s3522] ss:$9 sm:$0xff] %v1519
      %3589 = vst [vmem:[%s3524] ss:$9 sm:$0xff] %v1527
      %3590 = vst [vmem:[%s3526] ss:$9 sm:$0xff] %v1535
      %v3591 = vld [vmem:[#allocation1] sm:$0xff]
      %3592 = vst [vmem:[#allocation1] ss:$9 sm:$0xff] %v1543
      %3593 = vst [vmem:[%s3514] ss:$9 sm:$0xff] %v1551
      %3594 = vst [vmem:[%s3516] ss:$9 sm:$0xff] %v1558
      %3595 = vst [vmem:[%s3518] ss:$9 sm:$0xff] %v1566
      %3596 = vst [vmem:[%s3520] ss:$9 sm:$0xff] %v1574
      %3597 = vst [vmem:[%s3522] ss:$9 sm:$0xff] %v1582
      %3598 = vst [vmem:[%s3524] ss:$9 sm:$0xff] %v1589
      %3599 = vst [vmem:[%s3526] ss:$9 sm:$0xff] %v1597
      %v3600 = vld [vmem:[#allocation1] sm:$0xff]
      %3601 = vst [vmem:[#allocation1] ss:$9 sm:$0xff] %v1605
      %3602 = vst [vmem:[%s3514] ss:$9 sm:$0xff] %v1613
      %3603 = vst [vmem:[%s3516] ss:$9 sm:$0xff] %v1621
      %3604 = vst [vmem:[%s3518] ss:$9 sm:$0xff] %v1628
      %3605 = vst [vmem:[%s3520] ss:$9 sm:$0xff] %v1636
      %3606 = vst [vmem:[%s3522] ss:$9 sm:$0xff] %v1644
      %3607 = vst [vmem:[%s3524] ss:$9 sm:$0xff] %v1652
      %3608 = vst [vmem:[%s3526] ss:$9 sm:$0xff] %v1659
      %v3609 = vld [vmem:[#allocation1] sm:$0xff]
      %3610 = vst [vmem:[#allocation1] ss:$9 sm:$0xff] %v1667
      %3611 = vst [vmem:[%s3514] ss:$9 sm:$0xff] %v1675
      %3612 = vst [vmem:[%s3516] ss:$9 sm:$0xff] %v1683
      %3613 = vst [vmem:[%s3518] ss:$9 sm:$0xff] %v1691
      %3614 = vst [vmem:[%s3520] ss:$9 sm:$0xff] %v1698
      %3615 = vst [vmem:[%s3522] ss:$9 sm:$0xff] %v1706
      %3616 = vst [vmem:[%s3524] ss:$9 sm:$0xff] %v1714
      %3617 = vst [vmem:[%s3526] ss:$9 sm:$0xff] %v1722
      %v3618 = vld [vmem:[#allocation1] sm:$0xff]
      %3619 = vst [vmem:[#allocation1] ss:$9 sm:$0xff] %v1729
      %3620 = vst [vmem:[%s3514] ss:$9 sm:$0xff] %v1737
      %3621 = vst [vmem:[%s3516] ss:$9 sm:$0xff] %v1745
      %3622 = vst [vmem:[%s3518] ss:$9 sm:$0xff] %v1753
      %3623 = vst [vmem:[%s3520] ss:$9 sm:$0xff] %v1761
      %3624 = vst [vmem:[%s3522] ss:$9 sm:$0xff] %v1768
      %3625 = vst [vmem:[%s3524] ss:$9 sm:$0xff] %v1776
      %3626 = vst [vmem:[%s3526] ss:$9 sm:$0xff] %v1784
      %v3627 = vld [vmem:[#allocation1] sm:$0xff]
      %3628 = vst [vmem:[#allocation1] ss:$9 sm:$0xff] %v1792
      %3629 = vst [vmem:[%s3514] ss:$9 sm:$0xff] %v1799
      %3630 = vst [vmem:[%s3516] ss:$9 sm:$0xff] %v1807
      %3631 = vst [vmem:[%s3518] ss:$9 sm:$0xff] %v1815
      %3632 = vst [vmem:[%s3520] ss:$9 sm:$0xff] %v1823
      %3633 = vst [vmem:[%s3522] ss:$9 sm:$0xff] %v1831
      %3634 = vst [vmem:[%s3524] ss:$9 sm:$0xff] %v1838
      %3635 = vst [vmem:[%s3526] ss:$9 sm:$0xff] %v1846
      %v3636 = vld [vmem:[#allocation1] sm:$0xff]
      %3637 = vst [vmem:[#allocation1] ss:$9 sm:$0xff] %v1854
      %3638 = vst [vmem:[%s3514] ss:$9 sm:$0xff] %v1862
      %3639 = vst [vmem:[%s3516] ss:$9 sm:$0xff] %v1869
      %3640 = vst [vmem:[%s3518] ss:$9 sm:$0xff] %v1877
      %3641 = vst [vmem:[%s3520] ss:$9 sm:$0xff] %v1885
      %3642 = vst [vmem:[%s3522] ss:$9 sm:$0xff] %v1893
      %3643 = vst [vmem:[%s3524] ss:$9 sm:$0xff] %v1901
      %3644 = vst [vmem:[%s3526] ss:$9 sm:$0xff] %v1908
      %v3645 = vld [vmem:[#allocation1] sm:$0xff]
      %3646 = vst [vmem:[#allocation1] ss:$9 sm:$0xff] %v1916
      %3647 = vst [vmem:[%s3514] ss:$9 sm:$0xff] %v1924
      %3648 = vst [vmem:[%s3516] ss:$9 sm:$0xff] %v1932
      %3649 = vst [vmem:[%s3518] ss:$9 sm:$0xff] %v1939
      %3650 = vst [vmem:[%s3520] ss:$9 sm:$0xff] %v1947
      %3652 = vst [vmem:[%s3522] ss:$9 sm:$0xff] %v3455
      %3654 = vst [vmem:[%s3524] ss:$9 sm:$0xff] %v3462
      %3656 = vst [vmem:[%s3526] ss:$9 sm:$0xff] %v3469
      %v3657 = vld [vmem:[#allocation1] sm:$0xff]
      %3659 = vst [vmem:[#allocation1] ss:$9 sm:$0xff] %v3476
      %3661 = vst [vmem:[%s3514] ss:$9 sm:$0xff] %v3483
      %3663 = vst [vmem:[%s3516] ss:$9 sm:$0xff] %v3490
      %3665 = vst [vmem:[%s3518] ss:$9 sm:$0xff] %v3497
      %3667 = vst [vmem:[%s3520] ss:$9 sm:$0xff] %v3504
      %3669 = vst [vmem:[%s3522] ss:$9 sm:$0xff] %v3512
      %v3670 = vld [vmem:[#allocation1] sm:$0xff]
      %v3671 = vsel %vm2223, %v3528, 0
      %v3673 = vsel %vm2223, %v3537, 0
      %v3675 = vsel %vm2223, %v3546, 0
      %v3677 = vsel %vm2223, %v3555, 0
      %v3679 = vsel %vm2223, %v3564, 0
      %v3681 = vsel %vm2223, %v3573, 0
      %v3683 = vsel %vm2223, %v3582, 0
      %v3685 = vsel %vm2223, %v3591, 0
      %v3687 = vsel %vm2223, %v3600, 0
      %v3689 = vsel %vm2223, %v3609, 0
      %v3691 = vsel %vm2223, %v3618, 0
      %v3693 = vsel %vm2223, %v3627, 0
      %v3695 = vsel %vm2223, %v3636, 0
      %v3697 = vsel %vm2223, %v3645, 0
      %v3699 = vsel %vm2223, %v3657, 0
      %v3701 = vsel %vm2223, %v3670, 0
      %v3704 = vsel %vm2256, %v439, 0
      %3706 = vmatpush.bf16.msra.mxu0 0
      %3707 = vmatpush.bf16.msra.mxu0 0
      %3708 = vmatpush.bf16.msra.mxu0 0
      %3709 = vmatpush.bf16.msra.mxu0 0
      %3710 = vmatpush.bf16.msra.mxu0 0
      %3711 = vmatpush.bf16.msra.mxu0 0
      %3712 = vmatpush.bf16.msra.mxu0 0
      %3713 = vmatpush.bf16.msra.mxu0 %v3704
      %3714 = vmatmul.bf16.gmra.mxu0 %v3671
      %v3715 = vpop.f32.mrf.mxu0
      %v3716 = vadd.f32 0.0, %v3715
      %v3717 = vpop.f32.mrf.mxu0
      %v3718 = vadd.f32 0.0, %v3717
      %3719 = vmatmul.bf16.gmra.mxu0 %v3673
      %v3720 = vpop.f32.mrf.mxu0
      %v3721 = vadd.f32 0.0, %v3720
      %v3722 = vpop.f32.mrf.mxu0
      %v3723 = vadd.f32 0.0, %v3722
      %3724 = vmatmul.bf16.gmra.mxu0 %v3675
      %v3725 = vpop.f32.mrf.mxu0
      %v3726 = vadd.f32 0.0, %v3725
      %v3727 = vpop.f32.mrf.mxu0
      %v3728 = vadd.f32 0.0, %v3727
      %3729 = vmatmul.bf16.gmra.mxu0 %v3677
      %v3730 = vpop.f32.mrf.mxu0
      %v3731 = vadd.f32 0.0, %v3730
      %v3732 = vpop.f32.mrf.mxu0
      %v3733 = vadd.f32 0.0, %v3732
      %3734 = vmatmul.bf16.gmra.mxu0 %v3679
      %v3735 = vpop.f32.mrf.mxu0
      %v3736 = vadd.f32 0.0, %v3735
      %v3737 = vpop.f32.mrf.mxu0
      %v3738 = vadd.f32 0.0, %v3737
      %3739 = vmatmul.bf16.gmra.mxu0 %v3681
      %v3740 = vpop.f32.mrf.mxu0
      %v3741 = vadd.f32 0.0, %v3740
      %v3742 = vpop.f32.mrf.mxu0
      %v3743 = vadd.f32 0.0, %v3742
      %3744 = vmatmul.bf16.gmra.mxu0 %v3683
      %v3745 = vpop.f32.mrf.mxu0
      %v3746 = vadd.f32 0.0, %v3745
      %v3747 = vpop.f32.mrf.mxu0
      %v3748 = vadd.f32 0.0, %v3747
      %3749 = vmatmul.bf16.gmra.mxu0 %v3685
      %v3750 = vpop.f32.mrf.mxu0
      %v3751 = vadd.f32 0.0, %v3750
      %v3752 = vpop.f32.mrf.mxu0
      %v3753 = vadd.f32 0.0, %v3752
      %3754 = vmatmul.bf16.gmra.mxu0 %v3687
      %v3755 = vpop.f32.mrf.mxu0
      %v3756 = vadd.f32 0.0, %v3755
      %v3757 = vpop.f32.mrf.mxu0
      %v3758 = vadd.f32 0.0, %v3757
      %3759 = vmatmul.bf16.gmra.mxu0 %v3689
      %v3760 = vpop.f32.mrf.mxu0
      %v3761 = vadd.f32 0.0, %v3760
      %v3762 = vpop.f32.mrf.mxu0
      %v3763 = vadd.f32 0.0, %v3762
      %3764 = vmatmul.bf16.gmra.mxu0 %v3691
      %v3765 = vpop.f32.mrf.mxu0
      %v3766 = vadd.f32 0.0, %v3765
      %v3767 = vpop.f32.mrf.mxu0
      %v3768 = vadd.f32 0.0, %v3767
      %3769 = vmatmul.bf16.gmra.mxu0 %v3693
      %v3770 = vpop.f32.mrf.mxu0
      %v3771 = vadd.f32 0.0, %v3770
      %v3772 = vpop.f32.mrf.mxu0
      %v3773 = vadd.f32 0.0, %v3772
      %3774 = vmatmul.bf16.gmra.mxu0 %v3695
      %v3775 = vpop.f32.mrf.mxu0
      %v3776 = vadd.f32 0.0, %v3775
      %v3777 = vpop.f32.mrf.mxu0
      %v3778 = vadd.f32 0.0, %v3777
      %3779 = vmatmul.bf16.gmra.mxu0 %v3697
      %v3780 = vpop.f32.mrf.mxu0
      %v3781 = vadd.f32 0.0, %v3780
      %v3782 = vpop.f32.mrf.mxu0
      %v3783 = vadd.f32 0.0, %v3782
      %3784 = vmatmul.bf16.gmra.mxu0 %v3699
      %v3785 = vpop.f32.mrf.mxu0
      %v3786 = vadd.f32 0.0, %v3785
      %v3787 = vpop.f32.mrf.mxu0
      %v3788 = vadd.f32 0.0, %v3787
      %3789 = vmatmul.bf16.gmra.mxu0 %v3701
      %v3790 = vpop.f32.mrf.mxu0
      %v3791 = vadd.f32 0.0, %v3790
      %v3792 = vpop.f32.mrf.mxu0
      %v3793 = vadd.f32 0.0, %v3792
      %3794 = vdwg.mxu0
      %v3795 = vadd.f32 %v3414, %v3716
      %v3796 = vadd.f32 %v3415, %v3718
      %v3797 = vadd.f32 %v3416, %v3721
      %v3798 = vadd.f32 %v3417, %v3723
      %v3799 = vadd.f32 %v3418, %v3726
      %v3800 = vadd.f32 %v3419, %v3728
      %v3801 = vadd.f32 %v3420, %v3731
      %v3802 = vadd.f32 %v3421, %v3733
      %v3803 = vadd.f32 %v3422, %v3736
      %v3804 = vadd.f32 %v3423, %v3738
      %v3805 = vadd.f32 %v3424, %v3741
      %v3806 = vadd.f32 %v3425, %v3743
      %v3807 = vadd.f32 %v3426, %v3746
      %v3808 = vadd.f32 %v3427, %v3748
      %v3809 = vadd.f32 %v3428, %v3751
      %v3810 = vadd.f32 %v3429, %v3753
      %v3811 = vadd.f32 %v3430, %v3756
      %v3812 = vadd.f32 %v3431, %v3758
      %v3813 = vadd.f32 %v3432, %v3761
      %v3814 = vadd.f32 %v3433, %v3763
      %v3815 = vadd.f32 %v3434, %v3766
      %v3816 = vadd.f32 %v3435, %v3768
      %v3817 = vadd.f32 %v3436, %v3771
      %v3818 = vadd.f32 %v3437, %v3773
      %v3819 = vadd.f32 %v3438, %v3776
      %v3820 = vadd.f32 %v3439, %v3778
      %v3821 = vadd.f32 %v3440, %v3781
      %v3822 = vadd.f32 %v3441, %v3783
      %v3823 = vadd.f32 %v3442, %v3786
      %v3824 = vadd.f32 %v3443, %v3788
      %v3825 = vadd.f32 %v3444, %v3791
      %v3826 = vadd.f32 %v3445, %v3793
      %3827 = vst [vmem:[#allocation1] sm:$0xff] %v378
      %3828 = vst [vmem:[#allocation1 + $0x20] sm:$0xff] %v379
      %s3829 = scalar_lea.vmem [#allocation1], 1
      %v3830 = vld [vmem:[%s3829] ss:$4 sm:$0xff]
      %s3831 = scalar_lea.vmem [#allocation1], 2
      %v3832 = vld [vmem:[%s3831] ss:$4 sm:$0xff]
      %s3833 = scalar_lea.vmem [#allocation1], 3
      %v3834 = vld [vmem:[%s3833] ss:$4 sm:$0xff]
      %s3835 = scalar_lea.vmem [#allocation1], 32
      %v3836 = vld [vmem:[%s3835] ss:$4 sm:$0xff]
      %s3837 = scalar_lea.vmem [#allocation1], 33
      %v3838 = vld [vmem:[%s3837] ss:$4 sm:$0xff]
      %s3839 = scalar_lea.vmem [#allocation1], 34
      %v3840 = vld [vmem:[%s3839] ss:$4 sm:$0xff]
      %s3841 = scalar_lea.vmem [#allocation1], 35
      %v3842 = vld [vmem:[%s3841] ss:$4 sm:$0xff]
      %3843 = vst [vmem:[#allocation1] sm:$0xff] %v380
      %v3844 = vld [vmem:[#allocation1] ss:$4 sm:$0xff]
      %v3845 = vld [vmem:[%s3829] ss:$4 sm:$0xff]
      %3846 = vst [vmem:[#allocation1 + $0x20] sm:$0xff] %v381
      %v3847 = vld [vmem:[%s3837] ss:$4 sm:$0xff]
      %v3848 = vld [vmem:[%s3839] ss:$4 sm:$0xff]
      %v3849 = vld [vmem:[%s3841] ss:$4 sm:$0xff]
      %3850 = vst [vmem:[#allocation1] sm:$0xff] %v382
      %3851 = vst [vmem:[#allocation1 + $0x20] sm:$0xff] %v383
      %v3852 = vld [vmem:[#allocation1] ss:$4 sm:$0xff]
      %v3853 = vld [vmem:[%s3829] ss:$4 sm:$0xff]
      %v3854 = vld [vmem:[%s3831] ss:$4 sm:$0xff]
      %v3855 = vld [vmem:[%s3833] ss:$4 sm:$0xff]
      %v3856 = vld [vmem:[%s3835] ss:$4 sm:$0xff]
      %v3857 = vld [vmem:[%s3837] ss:$4 sm:$0xff]
      %3858 = vst [vmem:[#allocation1] sm:$0xff] %v384
      %3859 = vst [vmem:[#allocation1 + $0x20] sm:$0xff] %v385
      %v3860 = vld [vmem:[%s3829] ss:$4 sm:$0xff]
      %v3861 = vld [vmem:[%s3831] ss:$4 sm:$0xff]
      %v3862 = vld [vmem:[%s3833] ss:$4 sm:$0xff]
      %v3863 = vld [vmem:[%s3835] ss:$4 sm:$0xff]
      %v3864 = vld [vmem:[%s3837] ss:$4 sm:$0xff]
      %v3865 = vld [vmem:[%s3839] ss:$4 sm:$0xff]
      %v3866 = vld [vmem:[%s3841] ss:$4 sm:$0xff]
      %3867 = vst [vmem:[#allocation1] sm:$0xff] %v386
      %v3868 = vld [vmem:[#allocation1] ss:$4 sm:$0xff]
      %v3869 = vld [vmem:[%s3829] ss:$4 sm:$0xff]
      %3870 = vst [vmem:[#allocation1 + $0x20] sm:$0xff] %v387
      %v3871 = vld [vmem:[%s3837] ss:$4 sm:$0xff]
      %v3872 = vld [vmem:[%s3839] ss:$4 sm:$0xff]
      %v3873 = vld [vmem:[%s3841] ss:$4 sm:$0xff]
      %3874 = vst [vmem:[#allocation1] sm:$0xff] %v388
      %3875 = vst [vmem:[#allocation1 + $0x20] sm:$0xff] %v389
      %v3876 = vld [vmem:[#allocation1] ss:$4 sm:$0xff]
      %v3877 = vld [vmem:[%s3829] ss:$4 sm:$0xff]
      %v3878 = vld [vmem:[%s3831] ss:$4 sm:$0xff]
      %v3879 = vld [vmem:[%s3833] ss:$4 sm:$0xff]
      %v3880 = vld [vmem:[%s3835] ss:$4 sm:$0xff]
      %v3881 = vld [vmem:[%s3837] ss:$4 sm:$0xff]
      %3882 = vst [vmem:[#allocation1] sm:$0xff] %v390
      %3883 = vst [vmem:[#allocation1 + $0x20] sm:$0xff] %v391
      %v3884 = vld [vmem:[%s3829] ss:$4 sm:$0xff]
      %v3885 = vld [vmem:[%s3831] ss:$4 sm:$0xff]
      %v3886 = vld [vmem:[%s3833] ss:$4 sm:$0xff]
      %v3887 = vld [vmem:[%s3835] ss:$4 sm:$0xff]
      %v3888 = vld [vmem:[%s3837] ss:$4 sm:$0xff]
      %v3889 = vld [vmem:[%s3839] ss:$4 sm:$0xff]
      %v3890 = vld [vmem:[%s3841] ss:$4 sm:$0xff]
      %3891 = vst [vmem:[#allocation1] sm:$0xff] %v392
      %v3892 = vld [vmem:[#allocation1] ss:$4 sm:$0xff]
      %v3893 = vld [vmem:[%s3829] ss:$4 sm:$0xff]
      %3894 = vst [vmem:[#allocation1 + $0x20] sm:$0xff] %v393
      %v3895 = vld [vmem:[%s3837] ss:$4 sm:$0xff]
      %v3896 = vld [vmem:[%s3839] ss:$4 sm:$0xff]
      %v3897 = vld [vmem:[%s3841] ss:$4 sm:$0xff]
      %3898 = vst [vmem:[#allocation1] sm:$0xff] %v394
      %3899 = vst [vmem:[#allocation1 + $0x20] sm:$0xff] %v395
      %v3900 = vld [vmem:[#allocation1] ss:$4 sm:$0xff]
      %v3901 = vld [vmem:[%s3829] ss:$4 sm:$0xff]
      %v3902 = vld [vmem:[%s3831] ss:$4 sm:$0xff]
      %v3903 = vld [vmem:[%s3833] ss:$4 sm:$0xff]
      %v3904 = vld [vmem:[%s3835] ss:$4 sm:$0xff]
      %v3905 = vld [vmem:[%s3837] ss:$4 sm:$0xff]
      %3906 = vst [vmem:[#allocation1] sm:$0xff] %v396
      %3907 = vst [vmem:[#allocation1 + $0x20] sm:$0xff] %v397
      %v3908 = vld [vmem:[%s3829] ss:$4 sm:$0xff]
      %v3909 = vld [vmem:[%s3831] ss:$4 sm:$0xff]
      %v3910 = vld [vmem:[%s3833] ss:$4 sm:$0xff]
      %v3911 = vld [vmem:[%s3835] ss:$4 sm:$0xff]
      %v3912 = vld [vmem:[%s3837] ss:$4 sm:$0xff]
      %v3913 = vld [vmem:[%s3839] ss:$4 sm:$0xff]
      %v3914 = vld [vmem:[%s3841] ss:$4 sm:$0xff]
      %3915 = vst [vmem:[#allocation1] sm:$0xff] %v398
      %v3916 = vld [vmem:[#allocation1] ss:$4 sm:$0xff]
      %v3917 = vld [vmem:[%s3829] ss:$4 sm:$0xff]
      %3918 = vst [vmem:[#allocation1 + $0x20] sm:$0xff] %v399
      %v3919 = vld [vmem:[%s3837] ss:$4 sm:$0xff]
      %v3920 = vld [vmem:[%s3839] ss:$4 sm:$0xff]
      %v3921 = vld [vmem:[%s3841] ss:$4 sm:$0xff]
      %3922 = vst [vmem:[#allocation1] sm:$0xff] %v400
      %3923 = vst [vmem:[#allocation1 + $0x20] sm:$0xff] %v401
      %v3924 = vld [vmem:[#allocation1] ss:$4 sm:$0xff]
      %v3925 = vld [vmem:[%s3829] ss:$4 sm:$0xff]
      %v3926 = vld [vmem:[%s3831] ss:$4 sm:$0xff]
      %v3927 = vld [vmem:[%s3833] ss:$4 sm:$0xff]
      %v3928 = vld [vmem:[%s3835] ss:$4 sm:$0xff]
      %v3929 = vld [vmem:[%s3837] ss:$4 sm:$0xff]
      %3930 = vst [vmem:[#allocation1] sm:$0xff] %v402
      %3931 = vst [vmem:[#allocation1 + $0x20] sm:$0xff] %v403
      %v3932 = vld [vmem:[%s3829] ss:$4 sm:$0xff]
      %v3933 = vld [vmem:[%s3831] ss:$4 sm:$0xff]
      %v3934 = vld [vmem:[%s3833] ss:$4 sm:$0xff]
      %v3935 = vld [vmem:[%s3835] ss:$4 sm:$0xff]
      %v3936 = vld [vmem:[%s3837] ss:$4 sm:$0xff]
      %v3937 = vld [vmem:[%s3839] ss:$4 sm:$0xff]
      %v3938 = vld [vmem:[%s3841] ss:$4 sm:$0xff]
      %3939 = vst [vmem:[#allocation1] sm:$0xff] %v404
      %v3940 = vld [vmem:[#allocation1] ss:$4 sm:$0xff]
      %v3941 = vld [vmem:[%s3829] ss:$4 sm:$0xff]
      %3942 = vst [vmem:[#allocation1 + $0x20] sm:$0xff] %v405
      %v3943 = vld [vmem:[%s3837] ss:$4 sm:$0xff]
      %v3944 = vld [vmem:[%s3839] ss:$4 sm:$0xff]
      %v3945 = vld [vmem:[%s3841] ss:$4 sm:$0xff]
      %3946 = vst [vmem:[#allocation1] sm:$0xff] %v406
      %3947 = vst [vmem:[#allocation1 + $0x20] sm:$0xff] %v407
      %v3948 = vld [vmem:[#allocation1] ss:$4 sm:$0xff]
      %v3949 = vld [vmem:[%s3829] ss:$4 sm:$0xff]
      %v3950 = vld [vmem:[%s3831] ss:$4 sm:$0xff]
      %v3951 = vld [vmem:[%s3833] ss:$4 sm:$0xff]
      %v3952 = vld [vmem:[%s3835] ss:$4 sm:$0xff]
      %v3953 = vld [vmem:[%s3837] ss:$4 sm:$0xff]
      %3954 = vst [vmem:[#allocation1] sm:$0xff] %v408
      %3955 = vst [vmem:[#allocation1 + $0x20] sm:$0xff] %v409
      %v3956 = vld [vmem:[%s3829] ss:$4 sm:$0xff]
      %v3957 = vld [vmem:[%s3831] ss:$4 sm:$0xff]
      %v3958 = vld [vmem:[%s3833] ss:$4 sm:$0xff]
      %v3959 = vld [vmem:[%s3835] ss:$4 sm:$0xff]
      %v3960 = vld [vmem:[%s3837] ss:$4 sm:$0xff]
      %v3961 = vld [vmem:[%s3839] ss:$4 sm:$0xff]
      %v3962 = vld [vmem:[%s3841] ss:$4 sm:$0xff]
      %3963 = vst [vmem:[#allocation1] sm:$0xff] %v410
      %v3964 = vld [vmem:[#allocation1] ss:$4 sm:$0xff]
      %v3965 = vld [vmem:[%s3829] ss:$4 sm:$0xff]
      %3966 = vst [vmem:[#allocation1 + $0x20] sm:$0xff] %v411
      %v3967 = vld [vmem:[%s3837] ss:$4 sm:$0xff]
      %v3968 = vld [vmem:[%s3839] ss:$4 sm:$0xff]
      %v3969 = vld [vmem:[%s3841] ss:$4 sm:$0xff]
      %3970 = vst [vmem:[#allocation1] sm:$0xff] %v412
      %3971 = vst [vmem:[#allocation1 + $0x20] sm:$0xff] %v413
      %v3972 = vld [vmem:[#allocation1] ss:$4 sm:$0xff]
      %v3973 = vld [vmem:[%s3829] ss:$4 sm:$0xff]
      %v3974 = vld [vmem:[%s3831] ss:$4 sm:$0xff]
      %v3975 = vld [vmem:[%s3833] ss:$4 sm:$0xff]
      %v3976 = vld [vmem:[%s3835] ss:$4 sm:$0xff]
      %v3977 = vld [vmem:[%s3837] ss:$4 sm:$0xff]
      %3978 = vst [vmem:[#allocation1] sm:$0xff] %v414
      %3979 = vst [vmem:[#allocation1 + $0x20] sm:$0xff] %v415
      %v3980 = vld [vmem:[%s3829] ss:$4 sm:$0xff]
      %v3981 = vld [vmem:[%s3831] ss:$4 sm:$0xff]
      %v3982 = vld [vmem:[%s3833] ss:$4 sm:$0xff]
      %v3983 = vld [vmem:[%s3835] ss:$4 sm:$0xff]
      %v3984 = vld [vmem:[%s3837] ss:$4 sm:$0xff]
      %v3985 = vld [vmem:[%s3839] ss:$4 sm:$0xff]
      %v3986 = vld [vmem:[%s3841] ss:$4 sm:$0xff]
      %3987 = vst [vmem:[#allocation1] sm:$0xff] %v416
      %v3988 = vld [vmem:[#allocation1] ss:$4 sm:$0xff]
      %v3989 = vld [vmem:[%s3829] ss:$4 sm:$0xff]
      %3990 = vst [vmem:[#allocation1 + $0x20] sm:$0xff] %v417
      %v3991 = vld [vmem:[%s3837] ss:$4 sm:$0xff]
      %v3992 = vld [vmem:[%s3839] ss:$4 sm:$0xff]
      %v3993 = vld [vmem:[%s3841] ss:$4 sm:$0xff]
      %3994 = vst [vmem:[#allocation1] sm:$0xff] %v418
      %3995 = vst [vmem:[#allocation1 + $0x20] sm:$0xff] %v419
      %v3996 = vld [vmem:[#allocation1] ss:$4 sm:$0xff]
      %v3997 = vld [vmem:[%s3829] ss:$4 sm:$0xff]
      %v3998 = vld [vmem:[%s3831] ss:$4 sm:$0xff]
      %v3999 = vld [vmem:[%s3833] ss:$4 sm:$0xff]
      %v4000 = vld [vmem:[%s3835] ss:$4 sm:$0xff]
      %v4001 = vld [vmem:[%s3837] ss:$4 sm:$0xff]
      %4002 = vst [vmem:[#allocation1] ss:$9 sm:$0xff] %v3830
      %s4003 = scalar_lea.vmem [#allocation1], 1
      %4004 = vst [vmem:[%s4003] ss:$9 sm:$0xff] %v3832
      %s4005 = scalar_lea.vmem [#allocation1], 2
      %4006 = vst [vmem:[%s4005] ss:$9 sm:$0xff] %v3834
      %s4007 = scalar_lea.vmem [#allocation1], 3
      %4008 = vst [vmem:[%s4007] ss:$9 sm:$0xff] %v3836
      %s4009 = scalar_lea.vmem [#allocation1], 4
      %4010 = vst [vmem:[%s4009] ss:$9 sm:$0xff] %v3838
      %s4011 = scalar_lea.vmem [#allocation1], 5
      %4012 = vst [vmem:[%s4011] ss:$9 sm:$0xff] %v3840
      %s4013 = scalar_lea.vmem [#allocation1], 6
      %4014 = vst [vmem:[%s4013] ss:$9 sm:$0xff] %v3842
      %s4015 = scalar_lea.vmem [#allocation1], 7
      %4016 = vst [vmem:[%s4015] ss:$9 sm:$0xff] %v3844
      %v4017 = vld [vmem:[#allocation1] sm:$0xff]
      %4018 = vst [vmem:[#allocation1] ss:$9 sm:$0xff] %v3845
      %4019 = vst [vmem:[%s4003] ss:$9 sm:$0xff] %v3847
      %4020 = vst [vmem:[%s4005] ss:$9 sm:$0xff] %v3848
      %4021 = vst [vmem:[%s4007] ss:$9 sm:$0xff] %v3849
      %4022 = vst [vmem:[%s4009] ss:$9 sm:$0xff] %v3852
      %4023 = vst [vmem:[%s4011] ss:$9 sm:$0xff] %v3853
      %4024 = vst [vmem:[%s4013] ss:$9 sm:$0xff] %v3854
      %4025 = vst [vmem:[%s4015] ss:$9 sm:$0xff] %v3855
      %v4026 = vld [vmem:[#allocation1] sm:$0xff]
      %4027 = vst [vmem:[#allocation1] ss:$9 sm:$0xff] %v3856
      %4028 = vst [vmem:[%s4003] ss:$9 sm:$0xff] %v3857
      %4029 = vst [vmem:[%s4005] ss:$9 sm:$0xff] %v3860
      %4030 = vst [vmem:[%s4007] ss:$9 sm:$0xff] %v3861
      %4031 = vst [vmem:[%s4009] ss:$9 sm:$0xff] %v3862
      %4032 = vst [vmem:[%s4011] ss:$9 sm:$0xff] %v3863
      %4033 = vst [vmem:[%s4013] ss:$9 sm:$0xff] %v3864
      %4034 = vst [vmem:[%s4015] ss:$9 sm:$0xff] %v3865
      %v4035 = vld [vmem:[#allocation1] sm:$0xff]
      %4036 = vst [vmem:[#allocation1] ss:$9 sm:$0xff] %v3866
      %4037 = vst [vmem:[%s4003] ss:$9 sm:$0xff] %v3868
      %4038 = vst [vmem:[%s4005] ss:$9 sm:$0xff] %v3869
      %4039 = vst [vmem:[%s4007] ss:$9 sm:$0xff] %v3871
      %4040 = vst [vmem:[%s4009] ss:$9 sm:$0xff] %v3872
      %4041 = vst [vmem:[%s4011] ss:$9 sm:$0xff] %v3873
      %4042 = vst [vmem:[%s4013] ss:$9 sm:$0xff] %v3876
      %4043 = vst [vmem:[%s4015] ss:$9 sm:$0xff] %v3877
      %v4044 = vld [vmem:[#allocation1] sm:$0xff]
      %4045 = vst [vmem:[#allocation1] ss:$9 sm:$0xff] %v3878
      %4046 = vst [vmem:[%s4003] ss:$9 sm:$0xff] %v3879
      %4047 = vst [vmem:[%s4005] ss:$9 sm:$0xff] %v3880
      %4048 = vst [vmem:[%s4007] ss:$9 sm:$0xff] %v3881
      %4049 = vst [vmem:[%s4009] ss:$9 sm:$0xff] %v3884
      %4050 = vst [vmem:[%s4011] ss:$9 sm:$0xff] %v3885
      %4051 = vst [vmem:[%s4013] ss:$9 sm:$0xff] %v3886
      %4052 = vst [vmem:[%s4015] ss:$9 sm:$0xff] %v3887
      %v4053 = vld [vmem:[#allocation1] sm:$0xff]
      %4054 = vst [vmem:[#allocation1] ss:$9 sm:$0xff] %v3888
      %4055 = vst [vmem:[%s4003] ss:$9 sm:$0xff] %v3889
      %4056 = vst [vmem:[%s4005] ss:$9 sm:$0xff] %v3890
      %4057 = vst [vmem:[%s4007] ss:$9 sm:$0xff] %v3892
      %4058 = vst [vmem:[%s4009] ss:$9 sm:$0xff] %v3893
      %4059 = vst [vmem:[%s4011] ss:$9 sm:$0xff] %v3895
      %4060 = vst [vmem:[%s4013] ss:$9 sm:$0xff] %v3896
      %4061 = vst [vmem:[%s4015] ss:$9 sm:$0xff] %v3897
      %v4062 = vld [vmem:[#allocation1] sm:$0xff]
      %4063 = vst [vmem:[#allocation1] ss:$9 sm:$0xff] %v3900
      %4064 = vst [vmem:[%s4003] ss:$9 sm:$0xff] %v3901
      %4065 = vst [vmem:[%s4005] ss:$9 sm:$0xff] %v3902
      %4066 = vst [vmem:[%s4007] ss:$9 sm:$0xff] %v3903
      %4067 = vst [vmem:[%s4009] ss:$9 sm:$0xff] %v3904
      %4068 = vst [vmem:[%s4011] ss:$9 sm:$0xff] %v3905
      %4069 = vst [vmem:[%s4013] ss:$9 sm:$0xff] %v3908
      %4070 = vst [vmem:[%s4015] ss:$9 sm:$0xff] %v3909
      %v4071 = vld [vmem:[#allocation1] sm:$0xff]
      %4072 = vst [vmem:[#allocation1] ss:$9 sm:$0xff] %v3910
      %4073 = vst [vmem:[%s4003] ss:$9 sm:$0xff] %v3911
      %4074 = vst [vmem:[%s4005] ss:$9 sm:$0xff] %v3912
      %4075 = vst [vmem:[%s4007] ss:$9 sm:$0xff] %v3913
      %4076 = vst [vmem:[%s4009] ss:$9 sm:$0xff] %v3914
      %4077 = vst [vmem:[%s4011] ss:$9 sm:$0xff] %v3916
      %4078 = vst [vmem:[%s4013] ss:$9 sm:$0xff] %v3917
      %4079 = vst [vmem:[%s4015] ss:$9 sm:$0xff] %v3919
      %v4080 = vld [vmem:[#allocation1] sm:$0xff]
      %4081 = vst [vmem:[#allocation1] ss:$9 sm:$0xff] %v3920
      %4082 = vst [vmem:[%s4003] ss:$9 sm:$0xff] %v3921
      %4083 = vst [vmem:[%s4005] ss:$9 sm:$0xff] %v3924
      %4084 = vst [vmem:[%s4007] ss:$9 sm:$0xff] %v3925
      %4085 = vst [vmem:[%s4009] ss:$9 sm:$0xff] %v3926
      %4086 = vst [vmem:[%s4011] ss:$9 sm:$0xff] %v3927
      %4087 = vst [vmem:[%s4013] ss:$9 sm:$0xff] %v3928
      %4088 = vst [vmem:[%s4015] ss:$9 sm:$0xff] %v3929
      %v4089 = vld [vmem:[#allocation1] sm:$0xff]
      %4090 = vst [vmem:[#allocation1] ss:$9 sm:$0xff] %v3932
      %4091 = vst [vmem:[%s4003] ss:$9 sm:$0xff] %v3933
      %4092 = vst [vmem:[%s4005] ss:$9 sm:$0xff] %v3934
      %4093 = vst [vmem:[%s4007] ss:$9 sm:$0xff] %v3935
      %4094 = vst [vmem:[%s4009] ss:$9 sm:$0xff] %v3936
      %4095 = vst [vmem:[%s4011] ss:$9 sm:$0xff] %v3937
      %4096 = vst [vmem:[%s4013] ss:$9 sm:$0xff] %v3938
      %4097 = vst [vmem:[%s4015] ss:$9 sm:$0xff] %v3940
      %v4098 = vld [vmem:[#allocation1] sm:$0xff]
      %4099 = vst [vmem:[#allocation1] ss:$9 sm:$0xff] %v3941
      %4100 = vst [vmem:[%s4003] ss:$9 sm:$0xff] %v3943
      %4101 = vst [vmem:[%s4005] ss:$9 sm:$0xff] %v3944
      %4102 = vst [vmem:[%s4007] ss:$9 sm:$0xff] %v3945
      %4103 = vst [vmem:[%s4009] ss:$9 sm:$0xff] %v3948
      %4104 = vst [vmem:[%s4011] ss:$9 sm:$0xff] %v3949
      %4105 = vst [vmem:[%s4013] ss:$9 sm:$0xff] %v3950
      %4106 = vst [vmem:[%s4015] ss:$9 sm:$0xff] %v3951
      %v4107 = vld [vmem:[#allocation1] sm:$0xff]
      %4108 = vst [vmem:[#allocation1] ss:$9 sm:$0xff] %v3952
      %4109 = vst [vmem:[%s4003] ss:$9 sm:$0xff] %v3953
      %4110 = vst [vmem:[%s4005] ss:$9 sm:$0xff] %v3956
      %4111 = vst [vmem:[%s4007] ss:$9 sm:$0xff] %v3957
      %4112 = vst [vmem:[%s4009] ss:$9 sm:$0xff] %v3958
      %4113 = vst [vmem:[%s4011] ss:$9 sm:$0xff] %v3959
      %4114 = vst [vmem:[%s4013] ss:$9 sm:$0xff] %v3960
      %4115 = vst [vmem:[%s4015] ss:$9 sm:$0xff] %v3961
      %v4116 = vld [vmem:[#allocation1] sm:$0xff]
      %4117 = vst [vmem:[#allocation1] ss:$9 sm:$0xff] %v3962
      %4118 = vst [vmem:[%s4003] ss:$9 sm:$0xff] %v3964
      %4119 = vst [vmem:[%s4005] ss:$9 sm:$0xff] %v3965
      %4120 = vst [vmem:[%s4007] ss:$9 sm:$0xff] %v3967
      %4121 = vst [vmem:[%s4009] ss:$9 sm:$0xff] %v3968
      %4122 = vst [vmem:[%s4011] ss:$9 sm:$0xff] %v3969
      %4123 = vst [vmem:[%s4013] ss:$9 sm:$0xff] %v3972
      %4124 = vst [vmem:[%s4015] ss:$9 sm:$0xff] %v3973
      %v4125 = vld [vmem:[#allocation1] sm:$0xff]
      %4126 = vst [vmem:[#allocation1] ss:$9 sm:$0xff] %v3974
      %4127 = vst [vmem:[%s4003] ss:$9 sm:$0xff] %v3975
      %4128 = vst [vmem:[%s4005] ss:$9 sm:$0xff] %v3976
      %4129 = vst [vmem:[%s4007] ss:$9 sm:$0xff] %v3977
      %4130 = vst [vmem:[%s4009] ss:$9 sm:$0xff] %v3980
      %4131 = vst [vmem:[%s4011] ss:$9 sm:$0xff] %v3981
      %4132 = vst [vmem:[%s4013] ss:$9 sm:$0xff] %v3982
      %4133 = vst [vmem:[%s4015] ss:$9 sm:$0xff] %v3983
      %v4134 = vld [vmem:[#allocation1] sm:$0xff]
      %4135 = vst [vmem:[#allocation1] ss:$9 sm:$0xff] %v3984
      %4136 = vst [vmem:[%s4003] ss:$9 sm:$0xff] %v3985
      %4137 = vst [vmem:[%s4005] ss:$9 sm:$0xff] %v3986
      %4138 = vst [vmem:[%s4007] ss:$9 sm:$0xff] %v3988
      %4139 = vst [vmem:[%s4009] ss:$9 sm:$0xff] %v3989
      %4140 = vst [vmem:[%s4011] ss:$9 sm:$0xff] %v3991
      %4141 = vst [vmem:[%s4013] ss:$9 sm:$0xff] %v3992
      %4142 = vst [vmem:[%s4015] ss:$9 sm:$0xff] %v3993
      %v4143 = vld [vmem:[#allocation1] sm:$0xff]
      %4144 = vst [vmem:[#allocation1] ss:$9 sm:$0xff] %v3996
      %4145 = vst [vmem:[%s4003] ss:$9 sm:$0xff] %v3997
      %4146 = vst [vmem:[%s4005] ss:$9 sm:$0xff] %v3998
      %4147 = vst [vmem:[%s4007] ss:$9 sm:$0xff] %v3999
      %4148 = vst [vmem:[%s4009] ss:$9 sm:$0xff] %v4000
      %4149 = vst [vmem:[%s4011] ss:$9 sm:$0xff] %v4001
      %v4150 = vld [vmem:[#allocation1] sm:$0xff]
      %v4151 = vsel %vm2223, %v4017, 0
      %v4153 = vsel %vm2223, %v4026, 0
      %v4155 = vsel %vm2223, %v4035, 0
      %v4157 = vsel %vm2223, %v4044, 0
      %v4159 = vsel %vm2223, %v4053, 0
      %v4161 = vsel %vm2223, %v4062, 0
      %v4163 = vsel %vm2223, %v4071, 0
      %v4165 = vsel %vm2223, %v4080, 0
      %v4167 = vsel %vm2223, %v4089, 0
      %v4169 = vsel %vm2223, %v4098, 0
      %v4171 = vsel %vm2223, %v4107, 0
      %v4173 = vsel %vm2223, %v4116, 0
      %v4175 = vsel %vm2223, %v4125, 0
      %v4177 = vsel %vm2223, %v4134, 0
      %v4179 = vsel %vm2223, %v4143, 0
      %v4181 = vsel %vm2223, %v4150, 0
      %v4184 = vsel %vm2256, %v440, 0
      %4186 = vmatpush.bf16.msra.mxu0 0
      %4187 = vmatpush.bf16.msra.mxu0 0
      %4188 = vmatpush.bf16.msra.mxu0 0
      %4189 = vmatpush.bf16.msra.mxu0 0
      %4190 = vmatpush.bf16.msra.mxu0 0
      %4191 = vmatpush.bf16.msra.mxu0 0
      %4192 = vmatpush.bf16.msra.mxu0 0
      %4193 = vmatpush.bf16.msra.mxu0 %v4184
      %4194 = vmatmul.bf16.gmra.mxu0 %v4151
      %v4195 = vpop.f32.mrf.mxu0
      %v4196 = vadd.f32 0.0, %v4195
      %v4197 = vpop.f32.mrf.mxu0
      %v4198 = vadd.f32 0.0, %v4197
      %4199 = vmatmul.bf16.gmra.mxu0 %v4153
      %v4200 = vpop.f32.mrf.mxu0
      %v4201 = vadd.f32 0.0, %v4200
      %v4202 = vpop.f32.mrf.mxu0
      %v4203 = vadd.f32 0.0, %v4202
      %4204 = vmatmul.bf16.gmra.mxu0 %v4155
      %v4205 = vpop.f32.mrf.mxu0
      %v4206 = vadd.f32 0.0, %v4205
      %v4207 = vpop.f32.mrf.mxu0
      %v4208 = vadd.f32 0.0, %v4207
      %4209 = vmatmul.bf16.gmra.mxu0 %v4157
      %v4210 = vpop.f32.mrf.mxu0
      %v4211 = vadd.f32 0.0, %v4210
      %v4212 = vpop.f32.mrf.mxu0
      %v4213 = vadd.f32 0.0, %v4212
      %4214 = vmatmul.bf16.gmra.mxu0 %v4159
      %v4215 = vpop.f32.mrf.mxu0
      %v4216 = vadd.f32 0.0, %v4215
      %v4217 = vpop.f32.mrf.mxu0
      %v4218 = vadd.f32 0.0, %v4217
      %4219 = vmatmul.bf16.gmra.mxu0 %v4161
      %v4220 = vpop.f32.mrf.mxu0
      %v4221 = vadd.f32 0.0, %v4220
      %v4222 = vpop.f32.mrf.mxu0
      %v4223 = vadd.f32 0.0, %v4222
      %4224 = vmatmul.bf16.gmra.mxu0 %v4163
      %v4225 = vpop.f32.mrf.mxu0
      %v4226 = vadd.f32 0.0, %v4225
      %v4227 = vpop.f32.mrf.mxu0
      %v4228 = vadd.f32 0.0, %v4227
      %4229 = vmatmul.bf16.gmra.mxu0 %v4165
      %v4230 = vpop.f32.mrf.mxu0
      %v4231 = vadd.f32 0.0, %v4230
      %v4232 = vpop.f32.mrf.mxu0
      %v4233 = vadd.f32 0.0, %v4232
      %4234 = vmatmul.bf16.gmra.mxu0 %v4167
      %v4235 = vpop.f32.mrf.mxu0
      %v4236 = vadd.f32 0.0, %v4235
      %v4237 = vpop.f32.mrf.mxu0
      %v4238 = vadd.f32 0.0, %v4237
      %4239 = vmatmul.bf16.gmra.mxu0 %v4169
      %v4240 = vpop.f32.mrf.mxu0
      %v4241 = vadd.f32 0.0, %v4240
      %v4242 = vpop.f32.mrf.mxu0
      %v4243 = vadd.f32 0.0, %v4242
      %4244 = vmatmul.bf16.gmra.mxu0 %v4171
      %v4245 = vpop.f32.mrf.mxu0
      %v4246 = vadd.f32 0.0, %v4245
      %v4247 = vpop.f32.mrf.mxu0
      %v4248 = vadd.f32 0.0, %v4247
      %4249 = vmatmul.bf16.gmra.mxu0 %v4173
      %v4250 = vpop.f32.mrf.mxu0
      %v4251 = vadd.f32 0.0, %v4250
      %v4252 = vpop.f32.mrf.mxu0
      %v4253 = vadd.f32 0.0, %v4252
      %4254 = vmatmul.bf16.gmra.mxu0 %v4175
      %v4255 = vpop.f32.mrf.mxu0
      %v4256 = vadd.f32 0.0, %v4255
      %v4257 = vpop.f32.mrf.mxu0
      %v4258 = vadd.f32 0.0, %v4257
      %4259 = vmatmul.bf16.gmra.mxu0 %v4177
      %v4260 = vpop.f32.mrf.mxu0
      %v4261 = vadd.f32 0.0, %v4260
      %v4262 = vpop.f32.mrf.mxu0
      %v4263 = vadd.f32 0.0, %v4262
      %4264 = vmatmul.bf16.gmra.mxu0 %v4179
      %v4265 = vpop.f32.mrf.mxu0
      %v4266 = vadd.f32 0.0, %v4265
      %v4267 = vpop.f32.mrf.mxu0
      %v4268 = vadd.f32 0.0, %v4267
      %4269 = vmatmul.bf16.gmra.mxu0 %v4181
      %v4270 = vpop.f32.mrf.mxu0
      %v4271 = vadd.f32 0.0, %v4270
      %v4272 = vpop.f32.mrf.mxu0
      %v4273 = vadd.f32 0.0, %v4272
      %4274 = vdwg.mxu0
      %v4275 = vadd.f32 %v3795, %v4196
      %v4276 = vadd.f32 %v3796, %v4198
      %v4277 = vadd.f32 %v3797, %v4201
      %v4278 = vadd.f32 %v3798, %v4203
      %v4279 = vadd.f32 %v3799, %v4206
      %v4280 = vadd.f32 %v3800, %v4208
      %v4281 = vadd.f32 %v3801, %v4211
      %v4282 = vadd.f32 %v3802, %v4213
      %v4283 = vadd.f32 %v3803, %v4216
      %v4284 = vadd.f32 %v3804, %v4218
      %v4285 = vadd.f32 %v3805, %v4221
      %v4286 = vadd.f32 %v3806, %v4223
      %v4287 = vadd.f32 %v3807, %v4226
      %v4288 = vadd.f32 %v3808, %v4228
      %v4289 = vadd.f32 %v3809, %v4231
      %v4290 = vadd.f32 %v3810, %v4233
      %v4291 = vadd.f32 %v3811, %v4236
      %v4292 = vadd.f32 %v3812, %v4238
      %v4293 = vadd.f32 %v3813, %v4241
      %v4294 = vadd.f32 %v3814, %v4243
      %v4295 = vadd.f32 %v3815, %v4246
      %v4296 = vadd.f32 %v3816, %v4248
      %v4297 = vadd.f32 %v3817, %v4251
      %v4298 = vadd.f32 %v3818, %v4253
      %v4299 = vadd.f32 %v3819, %v4256
      %v4300 = vadd.f32 %v3820, %v4258
      %v4301 = vadd.f32 %v3821, %v4261
      %v4302 = vadd.f32 %v3822, %v4263
      %v4303 = vadd.f32 %v3823, %v4266
      %v4304 = vadd.f32 %v3824, %v4268
      %v4305 = vadd.f32 %v3825, %v4271
      %v4306 = vadd.f32 %v3826, %v4273
      %v4310 = vrot.slane %v420, 3
      %v4311 = vrot.slane %v421, 3
      %v4312 = vrot.slane %v422, 3
      %v4315 = vsel %vm529, %v420, %v4310
      %v4316 = vsel %vm533, %v420, %v4310
      %v4318 = vrot.slane %v4316, 1
      %v4319 = vsel %vm537, %v420, %v4310
      %v4321 = vrot.slane %v4319, 2
      %v4322 = vsel %vm541, %v420, %v4310
      %v4324 = vrot.slane %v4322, 3
      %v4327 = vsel %vm529, %v421, %v4311
      %v4328 = vsel %vm533, %v421, %v4311
      %v4330 = vrot.slane %v4328, 1
      %v4331 = vsel %vm537, %v421, %v4311
      %v4333 = vrot.slane %v4331, 2
      %v4334 = vsel %vm541, %v421, %v4311
      %v4336 = vrot.slane %v4334, 3
      %v4339 = vsel %vm529, %v422, %v4312
      %4340 = vst [vmem:[#allocation1] ss:$9 sm:$0xff] %v589
      %s4341 = scalar_lea.vmem [#allocation1], 1
      %4342 = vst [vmem:[%s4341] ss:$9 sm:$0xff] %v592
      %s4343 = scalar_lea.vmem [#allocation1], 2
      %4344 = vst [vmem:[%s4343] ss:$9 sm:$0xff] %v595
      %s4345 = scalar_lea.vmem [#allocation1], 3
      %4346 = vst [vmem:[%s4345] ss:$9 sm:$0xff] %v598
      %s4347 = scalar_lea.vmem [#allocation1], 4
      %4348 = vst [vmem:[%s4347] ss:$9 sm:$0xff] %v601
      %s4349 = scalar_lea.vmem [#allocation1], 5
      %4350 = vst [vmem:[%s4349] ss:$9 sm:$0xff] %v604
      %s4351 = scalar_lea.vmem [#allocation1], 6
      %4352 = vst [vmem:[%s4351] ss:$9 sm:$0xff] %v607
      %s4353 = scalar_lea.vmem [#allocation1], 7
      %4354 = vst [vmem:[%s4353] ss:$9 sm:$0xff] %v610
      %v4355 = vld [vmem:[#allocation1] sm:$0xff]
      %4356 = vst [vmem:[#allocation1] ss:$9 sm:$0xff] %v613
      %4357 = vst [vmem:[%s4341] ss:$9 sm:$0xff] %v616
      %4358 = vst [vmem:[%s4343] ss:$9 sm:$0xff] %v619
      %4359 = vst [vmem:[%s4345] ss:$9 sm:$0xff] %v622
      %4360 = vst [vmem:[%s4347] ss:$9 sm:$0xff] %v625
      %4361 = vst [vmem:[%s4349] ss:$9 sm:$0xff] %v628
      %4362 = vst [vmem:[%s4351] ss:$9 sm:$0xff] %v631
      %4363 = vst [vmem:[%s4353] ss:$9 sm:$0xff] %v634
      %v4364 = vld [vmem:[#allocation1] sm:$0xff]
      %4365 = vst [vmem:[#allocation1] ss:$9 sm:$0xff] %v637
      %4366 = vst [vmem:[%s4341] ss:$9 sm:$0xff] %v640
      %4367 = vst [vmem:[%s4343] ss:$9 sm:$0xff] %v643
      %4368 = vst [vmem:[%s4345] ss:$9 sm:$0xff] %v646
      %4369 = vst [vmem:[%s4347] ss:$9 sm:$0xff] %v649
      %4370 = vst [vmem:[%s4349] ss:$9 sm:$0xff] %v652
      %4371 = vst [vmem:[%s4351] ss:$9 sm:$0xff] %v655
      %4372 = vst [vmem:[%s4353] ss:$9 sm:$0xff] %v658
      %v4373 = vld [vmem:[#allocation1] sm:$0xff]
      %4374 = vst [vmem:[#allocation1] ss:$9 sm:$0xff] %v661
      %4375 = vst [vmem:[%s4341] ss:$9 sm:$0xff] %v664
      %4376 = vst [vmem:[%s4343] ss:$9 sm:$0xff] %v667
      %4377 = vst [vmem:[%s4345] ss:$9 sm:$0xff] %v670
      %4378 = vst [vmem:[%s4347] ss:$9 sm:$0xff] %v673
      %4379 = vst [vmem:[%s4349] ss:$9 sm:$0xff] %v676
      %4380 = vst [vmem:[%s4351] ss:$9 sm:$0xff] %v679
      %4381 = vst [vmem:[%s4353] ss:$9 sm:$0xff] %v682
      %v4382 = vld [vmem:[#allocation1] sm:$0xff]
      %4383 = vst [vmem:[#allocation1] ss:$9 sm:$0xff] %v685
      %4384 = vst [vmem:[%s4341] ss:$9 sm:$0xff] %v688
      %4385 = vst [vmem:[%s4343] ss:$9 sm:$0xff] %v691
      %4386 = vst [vmem:[%s4345] ss:$9 sm:$0xff] %v694
      %4387 = vst [vmem:[%s4347] ss:$9 sm:$0xff] %v697
      %4388 = vst [vmem:[%s4349] ss:$9 sm:$0xff] %v700
      %4389 = vst [vmem:[%s4351] ss:$9 sm:$0xff] %v703
      %4390 = vst [vmem:[%s4353] ss:$9 sm:$0xff] %v706
      %v4391 = vld [vmem:[#allocation1] sm:$0xff]
      %4392 = vst [vmem:[#allocation1] ss:$9 sm:$0xff] %v709
      %4393 = vst [vmem:[%s4341] ss:$9 sm:$0xff] %v712
      %4394 = vst [vmem:[%s4343] ss:$9 sm:$0xff] %v715
      %4395 = vst [vmem:[%s4345] ss:$9 sm:$0xff] %v718
      %4396 = vst [vmem:[%s4347] ss:$9 sm:$0xff] %v721
      %4397 = vst [vmem:[%s4349] ss:$9 sm:$0xff] %v724
      %4398 = vst [vmem:[%s4351] ss:$9 sm:$0xff] %v727
      %4399 = vst [vmem:[%s4353] ss:$9 sm:$0xff] %v730
      %v4400 = vld [vmem:[#allocation1] sm:$0xff]
      %4401 = vst [vmem:[#allocation1] ss:$9 sm:$0xff] %v733
      %4402 = vst [vmem:[%s4341] ss:$9 sm:$0xff] %v736
      %4403 = vst [vmem:[%s4343] ss:$9 sm:$0xff] %v739
      %4404 = vst [vmem:[%s4345] ss:$9 sm:$0xff] %v742
      %4405 = vst [vmem:[%s4347] ss:$9 sm:$0xff] %v745
      %4406 = vst [vmem:[%s4349] ss:$9 sm:$0xff] %v748
      %4407 = vst [vmem:[%s4351] ss:$9 sm:$0xff] %v751
      %4408 = vst [vmem:[%s4353] ss:$9 sm:$0xff] %v754
      %v4409 = vld [vmem:[#allocation1] sm:$0xff]
      %4410 = vst [vmem:[#allocation1] ss:$9 sm:$0xff] %v757
      %4411 = vst [vmem:[%s4341] ss:$9 sm:$0xff] %v760
      %4412 = vst [vmem:[%s4343] ss:$9 sm:$0xff] %v763
      %4413 = vst [vmem:[%s4345] ss:$9 sm:$0xff] %v766
      %4414 = vst [vmem:[%s4347] ss:$9 sm:$0xff] %v769
      %4415 = vst [vmem:[%s4349] ss:$9 sm:$0xff] %v772
      %4416 = vst [vmem:[%s4351] ss:$9 sm:$0xff] %v775
      %4417 = vst [vmem:[%s4353] ss:$9 sm:$0xff] %v778
      %v4418 = vld [vmem:[#allocation1] sm:$0xff]
      %4419 = vst [vmem:[#allocation1] ss:$9 sm:$0xff] %v781
      %4420 = vst [vmem:[%s4341] ss:$9 sm:$0xff] %v784
      %4421 = vst [vmem:[%s4343] ss:$9 sm:$0xff] %v787
      %4422 = vst [vmem:[%s4345] ss:$9 sm:$0xff] %v790
      %4423 = vst [vmem:[%s4347] ss:$9 sm:$0xff] %v793
      %4424 = vst [vmem:[%s4349] ss:$9 sm:$0xff] %v796
      %4425 = vst [vmem:[%s4351] ss:$9 sm:$0xff] %v799
      %4426 = vst [vmem:[%s4353] ss:$9 sm:$0xff] %v802
      %v4427 = vld [vmem:[#allocation1] sm:$0xff]
      %4428 = vst [vmem:[#allocation1] ss:$9 sm:$0xff] %v805
      %4429 = vst [vmem:[%s4341] ss:$9 sm:$0xff] %v808
      %4430 = vst [vmem:[%s4343] ss:$9 sm:$0xff] %v811
      %4431 = vst [vmem:[%s4345] ss:$9 sm:$0xff] %v814
      %4432 = vst [vmem:[%s4347] ss:$9 sm:$0xff] %v817
      %4433 = vst [vmem:[%s4349] ss:$9 sm:$0xff] %v820
      %4434 = vst [vmem:[%s4351] ss:$9 sm:$0xff] %v823
      %4435 = vst [vmem:[%s4353] ss:$9 sm:$0xff] %v826
      %v4436 = vld [vmem:[#allocation1] sm:$0xff]
      %4437 = vst [vmem:[#allocation1] ss:$9 sm:$0xff] %v829
      %4438 = vst [vmem:[%s4341] ss:$9 sm:$0xff] %v832
      %4439 = vst [vmem:[%s4343] ss:$9 sm:$0xff] %v835
      %4440 = vst [vmem:[%s4345] ss:$9 sm:$0xff] %v838
      %4441 = vst [vmem:[%s4347] ss:$9 sm:$0xff] %v841
      %4442 = vst [vmem:[%s4349] ss:$9 sm:$0xff] %v844
      %4443 = vst [vmem:[%s4351] ss:$9 sm:$0xff] %v847
      %4444 = vst [vmem:[%s4353] ss:$9 sm:$0xff] %v850
      %v4445 = vld [vmem:[#allocation1] sm:$0xff]
      %4446 = vst [vmem:[#allocation1] ss:$9 sm:$0xff] %v853
      %4447 = vst [vmem:[%s4341] ss:$9 sm:$0xff] %v856
      %4448 = vst [vmem:[%s4343] ss:$9 sm:$0xff] %v859
      %4449 = vst [vmem:[%s4345] ss:$9 sm:$0xff] %v862
      %4450 = vst [vmem:[%s4347] ss:$9 sm:$0xff] %v865
      %4451 = vst [vmem:[%s4349] ss:$9 sm:$0xff] %v868
      %4452 = vst [vmem:[%s4351] ss:$9 sm:$0xff] %v871
      %4453 = vst [vmem:[%s4353] ss:$9 sm:$0xff] %v874
      %v4454 = vld [vmem:[#allocation1] sm:$0xff]
      %4455 = vst [vmem:[#allocation1] ss:$9 sm:$0xff] %v877
      %4456 = vst [vmem:[%s4341] ss:$9 sm:$0xff] %v880
      %4457 = vst [vmem:[%s4343] ss:$9 sm:$0xff] %v883
      %4458 = vst [vmem:[%s4345] ss:$9 sm:$0xff] %v886
      %4459 = vst [vmem:[%s4347] ss:$9 sm:$0xff] %v889
      %4460 = vst [vmem:[%s4349] ss:$9 sm:$0xff] %v892
      %4461 = vst [vmem:[%s4351] ss:$9 sm:$0xff] %v895
      %4462 = vst [vmem:[%s4353] ss:$9 sm:$0xff] %v898
      %v4463 = vld [vmem:[#allocation1] sm:$0xff]
      %4464 = vst [vmem:[#allocation1] ss:$9 sm:$0xff] %v901
      %4465 = vst [vmem:[%s4341] ss:$9 sm:$0xff] %v904
      %4466 = vst [vmem:[%s4343] ss:$9 sm:$0xff] %v907
      %4467 = vst [vmem:[%s4345] ss:$9 sm:$0xff] %v910
      %4468 = vst [vmem:[%s4347] ss:$9 sm:$0xff] %v3110
      %4469 = vst [vmem:[%s4349] ss:$9 sm:$0xff] %v3113
      %4470 = vst [vmem:[%s4351] ss:$9 sm:$0xff] %v3116
      %4471 = vst [vmem:[%s4353] ss:$9 sm:$0xff] %v3119
      %v4472 = vld [vmem:[#allocation1] sm:$0xff]
      %4473 = vst [vmem:[#allocation1] ss:$9 sm:$0xff] %v3122
      %4474 = vst [vmem:[%s4341] ss:$9 sm:$0xff] %v3125
      %4475 = vst [vmem:[%s4343] ss:$9 sm:$0xff] %v3128
      %4476 = vst [vmem:[%s4345] ss:$9 sm:$0xff] %v3131
      %4477 = vst [vmem:[%s4347] ss:$9 sm:$0xff] %v3134
      %4478 = vst [vmem:[%s4349] ss:$9 sm:$0xff] %v4315
      %4480 = vst [vmem:[%s4351] ss:$9 sm:$0xff] %v4318
      %4482 = vst [vmem:[%s4353] ss:$9 sm:$0xff] %v4321
      %v4483 = vld [vmem:[#allocation1] sm:$0xff]
      %4485 = vst [vmem:[#allocation1] ss:$9 sm:$0xff] %v4324
      %4486 = vst [vmem:[%s4341] ss:$9 sm:$0xff] %v4327
      %4488 = vst [vmem:[%s4343] ss:$9 sm:$0xff] %v4330
      %4490 = vst [vmem:[%s4345] ss:$9 sm:$0xff] %v4333
      %4492 = vst [vmem:[%s4347] ss:$9 sm:$0xff] %v4336
      %4493 = vst [vmem:[%s4349] ss:$9 sm:$0xff] %v4339
      %v4494 = vld [vmem:[#allocation1] sm:$0xff]
      %v4495 = vsel %vm2223, %v4355, 0
      %v4497 = vsel %vm2223, %v4364, 0
      %v4499 = vsel %vm2223, %v4373, 0
      %v4501 = vsel %vm2223, %v4382, 0
      %v4503 = vsel %vm2223, %v4391, 0
      %v4505 = vsel %vm2223, %v4400, 0
      %v4507 = vsel %vm2223, %v4409, 0
      %v4509 = vsel %vm2223, %v4418, 0
      %v4511 = vsel %vm2223, %v4427, 0
      %v4513 = vsel %vm2223, %v4436, 0
      %v4515 = vsel %vm2223, %v4445, 0
      %v4517 = vsel %vm2223, %v4454, 0
      %v4519 = vsel %vm2223, %v4463, 0
      %v4521 = vsel %vm2223, %v4472, 0
      %v4523 = vsel %vm2223, %v4483, 0
      %v4525 = vsel %vm2223, %v4494, 0
      %v4528 = vsel %vm2256, %v441, 0
      %4530 = vmatpush.bf16.msra.mxu0 0
      %4531 = vmatpush.bf16.msra.mxu0 0
      %4532 = vmatpush.bf16.msra.mxu0 0
      %4533 = vmatpush.bf16.msra.mxu0 0
      %4534 = vmatpush.bf16.msra.mxu0 0
      %4535 = vmatpush.bf16.msra.mxu0 0
      %4536 = vmatpush.bf16.msra.mxu0 0
      %4537 = vmatpush.bf16.msra.mxu0 %v4528
      %4538 = vmatmul.bf16.gmra.mxu0 %v4495
      %v4539 = vpop.f32.mrf.mxu0
      %v4540 = vadd.f32 0.0, %v4539
      %v4541 = vpop.f32.mrf.mxu0
      %v4542 = vadd.f32 0.0, %v4541
      %4543 = vmatmul.bf16.gmra.mxu0 %v4497
      %v4544 = vpop.f32.mrf.mxu0
      %v4545 = vadd.f32 0.0, %v4544
      %v4546 = vpop.f32.mrf.mxu0
      %v4547 = vadd.f32 0.0, %v4546
      %4548 = vmatmul.bf16.gmra.mxu0 %v4499
      %v4549 = vpop.f32.mrf.mxu0
      %v4550 = vadd.f32 0.0, %v4549
      %v4551 = vpop.f32.mrf.mxu0
      %v4552 = vadd.f32 0.0, %v4551
      %4553 = vmatmul.bf16.gmra.mxu0 %v4501
      %v4554 = vpop.f32.mrf.mxu0
      %v4555 = vadd.f32 0.0, %v4554
      %v4556 = vpop.f32.mrf.mxu0
      %v4557 = vadd.f32 0.0, %v4556
      %4558 = vmatmul.bf16.gmra.mxu0 %v4503
      %v4559 = vpop.f32.mrf.mxu0
      %v4560 = vadd.f32 0.0, %v4559
      %v4561 = vpop.f32.mrf.mxu0
      %v4562 = vadd.f32 0.0, %v4561
      %4563 = vmatmul.bf16.gmra.mxu0 %v4505
      %v4564 = vpop.f32.mrf.mxu0
      %v4565 = vadd.f32 0.0, %v4564
      %v4566 = vpop.f32.mrf.mxu0
      %v4567 = vadd.f32 0.0, %v4566
      %4568 = vmatmul.bf16.gmra.mxu0 %v4507
      %v4569 = vpop.f32.mrf.mxu0
      %v4570 = vadd.f32 0.0, %v4569
      %v4571 = vpop.f32.mrf.mxu0
      %v4572 = vadd.f32 0.0, %v4571
      %4573 = vmatmul.bf16.gmra.mxu0 %v4509
      %v4574 = vpop.f32.mrf.mxu0
      %v4575 = vadd.f32 0.0, %v4574
      %v4576 = vpop.f32.mrf.mxu0
      %v4577 = vadd.f32 0.0, %v4576
      %4578 = vmatmul.bf16.gmra.mxu0 %v4511
      %v4579 = vpop.f32.mrf.mxu0
      %v4580 = vadd.f32 0.0, %v4579
      %v4581 = vpop.f32.mrf.mxu0
      %v4582 = vadd.f32 0.0, %v4581
      %4583 = vmatmul.bf16.gmra.mxu0 %v4513
      %v4584 = vpop.f32.mrf.mxu0
      %v4585 = vadd.f32 0.0, %v4584
      %v4586 = vpop.f32.mrf.mxu0
      %v4587 = vadd.f32 0.0, %v4586
      %4588 = vmatmul.bf16.gmra.mxu0 %v4515
      %v4589 = vpop.f32.mrf.mxu0
      %v4590 = vadd.f32 0.0, %v4589
      %v4591 = vpop.f32.mrf.mxu0
      %v4592 = vadd.f32 0.0, %v4591
      %4593 = vmatmul.bf16.gmra.mxu0 %v4517
      %v4594 = vpop.f32.mrf.mxu0
      %v4595 = vadd.f32 0.0, %v4594
      %v4596 = vpop.f32.mrf.mxu0
      %v4597 = vadd.f32 0.0, %v4596
      %4598 = vmatmul.bf16.gmra.mxu0 %v4519
      %v4599 = vpop.f32.mrf.mxu0
      %v4600 = vadd.f32 0.0, %v4599
      %v4601 = vpop.f32.mrf.mxu0
      %v4602 = vadd.f32 0.0, %v4601
      %4603 = vmatmul.bf16.gmra.mxu0 %v4521
      %v4604 = vpop.f32.mrf.mxu0
      %v4605 = vadd.f32 0.0, %v4604
      %v4606 = vpop.f32.mrf.mxu0
      %v4607 = vadd.f32 0.0, %v4606
      %4608 = vmatmul.bf16.gmra.mxu0 %v4523
      %v4609 = vpop.f32.mrf.mxu0
      %v4610 = vadd.f32 0.0, %v4609
      %v4611 = vpop.f32.mrf.mxu0
      %v4612 = vadd.f32 0.0, %v4611
      %4613 = vmatmul.bf16.gmra.mxu0 %v4525
      %v4614 = vpop.f32.mrf.mxu0
      %v4615 = vadd.f32 0.0, %v4614
      %v4616 = vpop.f32.mrf.mxu0
      %v4617 = vadd.f32 0.0, %v4616
      %4618 = vdwg.mxu0
      %v4619 = vadd.f32 %v4275, %v4540
      %v4620 = vadd.f32 %v4276, %v4542
      %v4621 = vadd.f32 %v4277, %v4545
      %v4622 = vadd.f32 %v4278, %v4547
      %v4623 = vadd.f32 %v4279, %v4550
      %v4624 = vadd.f32 %v4280, %v4552
      %v4625 = vadd.f32 %v4281, %v4555
      %v4626 = vadd.f32 %v4282, %v4557
      %v4627 = vadd.f32 %v4283, %v4560
      %v4628 = vadd.f32 %v4284, %v4562
      %v4629 = vadd.f32 %v4285, %v4565
      %v4630 = vadd.f32 %v4286, %v4567
      %v4631 = vadd.f32 %v4287, %v4570
      %v4632 = vadd.f32 %v4288, %v4572
      %v4633 = vadd.f32 %v4289, %v4575
      %v4634 = vadd.f32 %v4290, %v4577
      %v4635 = vadd.f32 %v4291, %v4580
      %v4636 = vadd.f32 %v4292, %v4582
      %v4637 = vadd.f32 %v4293, %v4585
      %v4638 = vadd.f32 %v4294, %v4587
      %v4639 = vadd.f32 %v4295, %v4590
      %v4640 = vadd.f32 %v4296, %v4592
      %v4641 = vadd.f32 %v4297, %v4595
      %v4642 = vadd.f32 %v4298, %v4597
      %v4643 = vadd.f32 %v4299, %v4600
      %v4644 = vadd.f32 %v4300, %v4602
      %v4645 = vadd.f32 %v4301, %v4605
      %v4646 = vadd.f32 %v4302, %v4607
      %v4647 = vadd.f32 %v4303, %v4610
      %v4648 = vadd.f32 %v4304, %v4612
      %v4649 = vadd.f32 %v4305, %v4615
      %v4650 = vadd.f32 %v4306, %v4617
      %v4651 = vsel %vm533, %v422, %v4312
      %v4653 = vrot.slane %v4651, 1
      %v4654 = vshrl.u32 %v4315, 16
      %v4656 = vrot.slane %v4654, 7
      %v4657 = vrot.slane %v4656, 1
      %v4658 = vshll.u32 %v4318, 16
      %v4660 = vsel %vm967, %v4657, %v4658
      %v4661 = vshrl.u32 %v4318, 16
      %v4663 = vrot.slane %v4661, 7
      %v4664 = vrot.slane %v4663, 1
      %v4665 = vshll.u32 %v4321, 16
      %v4667 = vsel %vm967, %v4664, %v4665
      %v4668 = vshrl.u32 %v4321, 16
      %v4670 = vrot.slane %v4668, 7
      %v4671 = vrot.slane %v4670, 1
      %v4672 = vshll.u32 %v4324, 16
      %v4674 = vsel %vm967, %v4671, %v4672
      %v4675 = vshrl.u32 %v4324, 16
      %v4677 = vrot.slane %v4675, 7
      %v4678 = vrot.slane %v4677, 1
      %v4679 = vshll.u32 %v4327, 16
      %v4681 = vsel %vm967, %v4678, %v4679
      %v4682 = vshrl.u32 %v4327, 16
      %v4684 = vrot.slane %v4682, 7
      %v4685 = vrot.slane %v4684, 1
      %v4686 = vshll.u32 %v4330, 16
      %v4688 = vsel %vm967, %v4685, %v4686
      %v4689 = vshrl.u32 %v4330, 16
      %v4691 = vrot.slane %v4689, 7
      %v4692 = vrot.slane %v4691, 1
      %v4693 = vshll.u32 %v4333, 16
      %v4695 = vsel %vm967, %v4692, %v4693
      %v4696 = vshrl.u32 %v4333, 16
      %v4698 = vrot.slane %v4696, 7
      %v4699 = vrot.slane %v4698, 1
      %v4700 = vshll.u32 %v4336, 16
      %v4702 = vsel %vm967, %v4699, %v4700
      %v4703 = vshrl.u32 %v4336, 16
      %v4705 = vrot.slane %v4703, 7
      %v4706 = vrot.slane %v4705, 1
      %v4707 = vshll.u32 %v4339, 16
      %v4709 = vsel %vm967, %v4706, %v4707
      %v4710 = vshrl.u32 %v4339, 16
      %v4712 = vrot.slane %v4710, 7
      %v4713 = vrot.slane %v4712, 1
      %v4715 = vshll.u32 %v4653, 16
      %v4717 = vsel %vm967, %v4713, %v4715
      %4718 = vst [vmem:[#allocation1] ss:$9 sm:$0xff] %v1115
      %s4719 = scalar_lea.vmem [#allocation1], 1
      %4720 = vst [vmem:[%s4719] ss:$9 sm:$0xff] %v1123
      %s4721 = scalar_lea.vmem [#allocation1], 2
      %4722 = vst [vmem:[%s4721] ss:$9 sm:$0xff] %v1131
      %s4723 = scalar_lea.vmem [#allocation1], 3
      %4724 = vst [vmem:[%s4723] ss:$9 sm:$0xff] %v1138
      %s4725 = scalar_lea.vmem [#allocation1], 4
      %4726 = vst [vmem:[%s4725] ss:$9 sm:$0xff] %v1146
      %s4727 = scalar_lea.vmem [#allocation1], 5
      %4728 = vst [vmem:[%s4727] ss:$9 sm:$0xff] %v1154
      %s4729 = scalar_lea.vmem [#allocation1], 6
      %4730 = vst [vmem:[%s4729] ss:$9 sm:$0xff] %v1162
      %s4731 = scalar_lea.vmem [#allocation1], 7
      %4732 = vst [vmem:[%s4731] ss:$9 sm:$0xff] %v1169
      %v4733 = vld [vmem:[#allocation1] sm:$0xff]
      %4734 = vst [vmem:[#allocation1] ss:$9 sm:$0xff] %v1177
      %4735 = vst [vmem:[%s4719] ss:$9 sm:$0xff] %v1185
      %4736 = vst [vmem:[%s4721] ss:$9 sm:$0xff] %v1193
      %4737 = vst [vmem:[%s4723] ss:$9 sm:$0xff] %v1201
      %4738 = vst [vmem:[%s4725] ss:$9 sm:$0xff] %v1208
      %4739 = vst [vmem:[%s4727] ss:$9 sm:$0xff] %v1216
      %4740 = vst [vmem:[%s4729] ss:$9 sm:$0xff] %v1224
      %4741 = vst [vmem:[%s4731] ss:$9 sm:$0xff] %v1232
      %v4742 = vld [vmem:[#allocation1] sm:$0xff]
      %4743 = vst [vmem:[#allocation1] ss:$9 sm:$0xff] %v1239
      %4744 = vst [vmem:[%s4719] ss:$9 sm:$0xff] %v1247
      %4745 = vst [vmem:[%s4721] ss:$9 sm:$0xff] %v1255
      %4746 = vst [vmem:[%s4723] ss:$9 sm:$0xff] %v1263
      %4747 = vst [vmem:[%s4725] ss:$9 sm:$0xff] %v1271
      %4748 = vst [vmem:[%s4727] ss:$9 sm:$0xff] %v1278
      %4749 = vst [vmem:[%s4729] ss:$9 sm:$0xff] %v1286
      %4750 = vst [vmem:[%s4731] ss:$9 sm:$0xff] %v1294
      %v4751 = vld [vmem:[#allocation1] sm:$0xff]
      %4752 = vst [vmem:[#allocation1] ss:$9 sm:$0xff] %v1302
      %4753 = vst [vmem:[%s4719] ss:$9 sm:$0xff] %v1309
      %4754 = vst [vmem:[%s4721] ss:$9 sm:$0xff] %v1317
      %4755 = vst [vmem:[%s4723] ss:$9 sm:$0xff] %v1325
      %4756 = vst [vmem:[%s4725] ss:$9 sm:$0xff] %v1333
      %4757 = vst [vmem:[%s4727] ss:$9 sm:$0xff] %v1341
      %4758 = vst [vmem:[%s4729] ss:$9 sm:$0xff] %v1348
      %4759 = vst [vmem:[%s4731] ss:$9 sm:$0xff] %v1356
      %v4760 = vld [vmem:[#allocation1] sm:$0xff]
      %4761 = vst [vmem:[#allocation1] ss:$9 sm:$0xff] %v1364
      %4762 = vst [vmem:[%s4719] ss:$9 sm:$0xff] %v1372
      %4763 = vst [vmem:[%s4721] ss:$9 sm:$0xff] %v1379
      %4764 = vst [vmem:[%s4723] ss:$9 sm:$0xff] %v1387
      %4765 = vst [vmem:[%s4725] ss:$9 sm:$0xff] %v1395
      %4766 = vst [vmem:[%s4727] ss:$9 sm:$0xff] %v1403
      %4767 = vst [vmem:[%s4729] ss:$9 sm:$0xff] %v1411
      %4768 = vst [vmem:[%s4731] ss:$9 sm:$0xff] %v1418
      %v4769 = vld [vmem:[#allocation1] sm:$0xff]
      %4770 = vst [vmem:[#allocation1] ss:$9 sm:$0xff] %v1426
      %4771 = vst [vmem:[%s4719] ss:$9 sm:$0xff] %v1434
      %4772 = vst [vmem:[%s4721] ss:$9 sm:$0xff] %v1442
      %4773 = vst [vmem:[%s4723] ss:$9 sm:$0xff] %v1449
      %4774 = vst [vmem:[%s4725] ss:$9 sm:$0xff] %v1457
      %4775 = vst [vmem:[%s4727] ss:$9 sm:$0xff] %v1465
      %4776 = vst [vmem:[%s4729] ss:$9 sm:$0xff] %v1473
      %4777 = vst [vmem:[%s4731] ss:$9 sm:$0xff] %v1481
      %v4778 = vld [vmem:[#allocation1] sm:$0xff]
      %4779 = vst [vmem:[#allocation1] ss:$9 sm:$0xff] %v1488
      %4780 = vst [vmem:[%s4719] ss:$9 sm:$0xff] %v1496
      %4781 = vst [vmem:[%s4721] ss:$9 sm:$0xff] %v1504
      %4782 = vst [vmem:[%s4723] ss:$9 sm:$0xff] %v1512
      %4783 = vst [vmem:[%s4725] ss:$9 sm:$0xff] %v1519
      %4784 = vst [vmem:[%s4727] ss:$9 sm:$0xff] %v1527
      %4785 = vst [vmem:[%s4729] ss:$9 sm:$0xff] %v1535
      %4786 = vst [vmem:[%s4731] ss:$9 sm:$0xff] %v1543
      %v4787 = vld [vmem:[#allocation1] sm:$0xff]
      %4788 = vst [vmem:[#allocation1] ss:$9 sm:$0xff] %v1551
      %4789 = vst [vmem:[%s4719] ss:$9 sm:$0xff] %v1558
      %4790 = vst [vmem:[%s4721] ss:$9 sm:$0xff] %v1566
      %4791 = vst [vmem:[%s4723] ss:$9 sm:$0xff] %v1574
      %4792 = vst [vmem:[%s4725] ss:$9 sm:$0xff] %v1582
      %4793 = vst [vmem:[%s4727] ss:$9 sm:$0xff] %v1589
      %4794 = vst [vmem:[%s4729] ss:$9 sm:$0xff] %v1597
      %4795 = vst [vmem:[%s4731] ss:$9 sm:$0xff] %v1605
      %v4796 = vld [vmem:[#allocation1] sm:$0xff]
      %4797 = vst [vmem:[#allocation1] ss:$9 sm:$0xff] %v1613
      %4798 = vst [vmem:[%s4719] ss:$9 sm:$0xff] %v1621
      %4799 = vst [vmem:[%s4721] ss:$9 sm:$0xff] %v1628
      %4800 = vst [vmem:[%s4723] ss:$9 sm:$0xff] %v1636
      %4801 = vst [vmem:[%s4725] ss:$9 sm:$0xff] %v1644
      %4802 = vst [vmem:[%s4727] ss:$9 sm:$0xff] %v1652
      %4803 = vst [vmem:[%s4729] ss:$9 sm:$0xff] %v1659
      %4804 = vst [vmem:[%s4731] ss:$9 sm:$0xff] %v1667
      %v4805 = vld [vmem:[#allocation1] sm:$0xff]
      %4806 = vst [vmem:[#allocation1] ss:$9 sm:$0xff] %v1675
      %4807 = vst [vmem:[%s4719] ss:$9 sm:$0xff] %v1683
      %4808 = vst [vmem:[%s4721] ss:$9 sm:$0xff] %v1691
      %4809 = vst [vmem:[%s4723] ss:$9 sm:$0xff] %v1698
      %4810 = vst [vmem:[%s4725] ss:$9 sm:$0xff] %v1706
      %4811 = vst [vmem:[%s4727] ss:$9 sm:$0xff] %v1714
      %4812 = vst [vmem:[%s4729] ss:$9 sm:$0xff] %v1722
      %4813 = vst [vmem:[%s4731] ss:$9 sm:$0xff] %v1729
      %v4814 = vld [vmem:[#allocation1] sm:$0xff]
      %4815 = vst [vmem:[#allocation1] ss:$9 sm:$0xff] %v1737
      %4816 = vst [vmem:[%s4719] ss:$9 sm:$0xff] %v1745
      %4817 = vst [vmem:[%s4721] ss:$9 sm:$0xff] %v1753
      %4818 = vst [vmem:[%s4723] ss:$9 sm:$0xff] %v1761
      %4819 = vst [vmem:[%s4725] ss:$9 sm:$0xff] %v1768
      %4820 = vst [vmem:[%s4727] ss:$9 sm:$0xff] %v1776
      %4821 = vst [vmem:[%s4729] ss:$9 sm:$0xff] %v1784
      %4822 = vst [vmem:[%s4731] ss:$9 sm:$0xff] %v1792
      %v4823 = vld [vmem:[#allocation1] sm:$0xff]
      %4824 = vst [vmem:[#allocation1] ss:$9 sm:$0xff] %v1799
      %4825 = vst [vmem:[%s4719] ss:$9 sm:$0xff] %v1807
      %4826 = vst [vmem:[%s4721] ss:$9 sm:$0xff] %v1815
      %4827 = vst [vmem:[%s4723] ss:$9 sm:$0xff] %v1823
      %4828 = vst [vmem:[%s4725] ss:$9 sm:$0xff] %v1831
      %4829 = vst [vmem:[%s4727] ss:$9 sm:$0xff] %v1838
      %4830 = vst [vmem:[%s4729] ss:$9 sm:$0xff] %v1846
      %4831 = vst [vmem:[%s4731] ss:$9 sm:$0xff] %v1854
      %v4832 = vld [vmem:[#allocation1] sm:$0xff]
      %4833 = vst [vmem:[#allocation1] ss:$9 sm:$0xff] %v1862
      %4834 = vst [vmem:[%s4719] ss:$9 sm:$0xff] %v1869
      %4835 = vst [vmem:[%s4721] ss:$9 sm:$0xff] %v1877
      %4836 = vst [vmem:[%s4723] ss:$9 sm:$0xff] %v1885
      %4837 = vst [vmem:[%s4725] ss:$9 sm:$0xff] %v1893
      %4838 = vst [vmem:[%s4727] ss:$9 sm:$0xff] %v1901
      %4839 = vst [vmem:[%s4729] ss:$9 sm:$0xff] %v1908
      %4840 = vst [vmem:[%s4731] ss:$9 sm:$0xff] %v1916
      %v4841 = vld [vmem:[#allocation1] sm:$0xff]
      %4842 = vst [vmem:[#allocation1] ss:$9 sm:$0xff] %v1924
      %4843 = vst [vmem:[%s4719] ss:$9 sm:$0xff] %v1932
      %4844 = vst [vmem:[%s4721] ss:$9 sm:$0xff] %v1939
      %4845 = vst [vmem:[%s4723] ss:$9 sm:$0xff] %v1947
      %4846 = vst [vmem:[%s4725] ss:$9 sm:$0xff] %v3455
      %4847 = vst [vmem:[%s4727] ss:$9 sm:$0xff] %v3462
      %4848 = vst [vmem:[%s4729] ss:$9 sm:$0xff] %v3469
      %4849 = vst [vmem:[%s4731] ss:$9 sm:$0xff] %v3476
      %v4850 = vld [vmem:[#allocation1] sm:$0xff]
      %4851 = vst [vmem:[#allocation1] ss:$9 sm:$0xff] %v3483
      %4852 = vst [vmem:[%s4719] ss:$9 sm:$0xff] %v3490
      %4853 = vst [vmem:[%s4721] ss:$9 sm:$0xff] %v3497
      %4854 = vst [vmem:[%s4723] ss:$9 sm:$0xff] %v3504
      %4855 = vst [vmem:[%s4725] ss:$9 sm:$0xff] %v3512
      %4857 = vst [vmem:[%s4727] ss:$9 sm:$0xff] %v4660
      %4859 = vst [vmem:[%s4729] ss:$9 sm:$0xff] %v4667
      %4861 = vst [vmem:[%s4731] ss:$9 sm:$0xff] %v4674
      %v4862 = vld [vmem:[#allocation1] sm:$0xff]
      %4864 = vst [vmem:[#allocation1] ss:$9 sm:$0xff] %v4681
      %4866 = vst [vmem:[%s4719] ss:$9 sm:$0xff] %v4688
      %4868 = vst [vmem:[%s4721] ss:$9 sm:$0xff] %v4695
      %4870 = vst [vmem:[%s4723] ss:$9 sm:$0xff] %v4702
      %4872 = vst [vmem:[%s4725] ss:$9 sm:$0xff] %v4709
      %4874 = vst [vmem:[%s4727] ss:$9 sm:$0xff] %v4717
      %v4875 = vld [vmem:[#allocation1] sm:$0xff]
      %v4876 = vsel %vm2223, %v4733, 0
      %v4878 = vsel %vm2223, %v4742, 0
      %v4880 = vsel %vm2223, %v4751, 0
      %v4882 = vsel %vm2223, %v4760, 0
      %v4884 = vsel %vm2223, %v4769, 0
      %v4886 = vsel %vm2223, %v4778, 0
      %v4888 = vsel %vm2223, %v4787, 0
      %v4890 = vsel %vm2223, %v4796, 0
      %v4892 = vsel %vm2223, %v4805, 0
      %v4894 = vsel %vm2223, %v4814, 0
      %v4896 = vsel %vm2223, %v4823, 0
      %v4898 = vsel %vm2223, %v4832, 0
      %v4900 = vsel %vm2223, %v4841, 0
      %v4902 = vsel %vm2223, %v4850, 0
      %v4904 = vsel %vm2223, %v4862, 0
      %v4906 = vsel %vm2223, %v4875, 0
      %v4909 = vsel %vm2256, %v442, 0
      %4911 = vmatpush.bf16.msra.mxu0 0
      %4912 = vmatpush.bf16.msra.mxu0 0
      %4913 = vmatpush.bf16.msra.mxu0 0
      %4914 = vmatpush.bf16.msra.mxu0 0
      %4915 = vmatpush.bf16.msra.mxu0 0
      %4916 = vmatpush.bf16.msra.mxu0 0
      %4917 = vmatpush.bf16.msra.mxu0 0
      %4918 = vmatpush.bf16.msra.mxu0 %v4909
      %4919 = vmatmul.bf16.gmra.mxu0 %v4876
      %v4920 = vpop.f32.mrf.mxu0
      %v4921 = vadd.f32 0.0, %v4920
      %v4922 = vpop.f32.mrf.mxu0
      %v4923 = vadd.f32 0.0, %v4922
      %4924 = vmatmul.bf16.gmra.mxu0 %v4878
      %v4925 = vpop.f32.mrf.mxu0
      %v4926 = vadd.f32 0.0, %v4925
      %v4927 = vpop.f32.mrf.mxu0
      %v4928 = vadd.f32 0.0, %v4927
      %4929 = vmatmul.bf16.gmra.mxu0 %v4880
      %v4930 = vpop.f32.mrf.mxu0
      %v4931 = vadd.f32 0.0, %v4930
      %v4932 = vpop.f32.mrf.mxu0
      %v4933 = vadd.f32 0.0, %v4932
      %4934 = vmatmul.bf16.gmra.mxu0 %v4882
      %v4935 = vpop.f32.mrf.mxu0
      %v4936 = vadd.f32 0.0, %v4935
      %v4937 = vpop.f32.mrf.mxu0
      %v4938 = vadd.f32 0.0, %v4937
      %4939 = vmatmul.bf16.gmra.mxu0 %v4884
      %v4940 = vpop.f32.mrf.mxu0
      %v4941 = vadd.f32 0.0, %v4940
      %v4942 = vpop.f32.mrf.mxu0
      %v4943 = vadd.f32 0.0, %v4942
      %4944 = vmatmul.bf16.gmra.mxu0 %v4886
      %v4945 = vpop.f32.mrf.mxu0
      %v4946 = vadd.f32 0.0, %v4945
      %v4947 = vpop.f32.mrf.mxu0
      %v4948 = vadd.f32 0.0, %v4947
      %4949 = vmatmul.bf16.gmra.mxu0 %v4888
      %v4950 = vpop.f32.mrf.mxu0
      %v4951 = vadd.f32 0.0, %v4950
      %v4952 = vpop.f32.mrf.mxu0
      %v4953 = vadd.f32 0.0, %v4952
      %4954 = vmatmul.bf16.gmra.mxu0 %v4890
      %v4955 = vpop.f32.mrf.mxu0
      %v4956 = vadd.f32 0.0, %v4955
      %v4957 = vpop.f32.mrf.mxu0
      %v4958 = vadd.f32 0.0, %v4957
      %4959 = vmatmul.bf16.gmra.mxu0 %v4892
      %v4960 = vpop.f32.mrf.mxu0
      %v4961 = vadd.f32 0.0, %v4960
      %v4962 = vpop.f32.mrf.mxu0
      %v4963 = vadd.f32 0.0, %v4962
      %4964 = vmatmul.bf16.gmra.mxu0 %v4894
      %v4965 = vpop.f32.mrf.mxu0
      %v4966 = vadd.f32 0.0, %v4965
      %v4967 = vpop.f32.mrf.mxu0
      %v4968 = vadd.f32 0.0, %v4967
      %4969 = vmatmul.bf16.gmra.mxu0 %v4896
      %v4970 = vpop.f32.mrf.mxu0
      %v4971 = vadd.f32 0.0, %v4970
      %v4972 = vpop.f32.mrf.mxu0
      %v4973 = vadd.f32 0.0, %v4972
      %4974 = vmatmul.bf16.gmra.mxu0 %v4898
      %v4975 = vpop.f32.mrf.mxu0
      %v4976 = vadd.f32 0.0, %v4975
      %v4977 = vpop.f32.mrf.mxu0
      %v4978 = vadd.f32 0.0, %v4977
      %4979 = vmatmul.bf16.gmra.mxu0 %v4900
      %v4980 = vpop.f32.mrf.mxu0
      %v4981 = vadd.f32 0.0, %v4980
      %v4982 = vpop.f32.mrf.mxu0
      %v4983 = vadd.f32 0.0, %v4982
      %4984 = vmatmul.bf16.gmra.mxu0 %v4902
      %v4985 = vpop.f32.mrf.mxu0
      %v4986 = vadd.f32 0.0, %v4985
      %v4987 = vpop.f32.mrf.mxu0
      %v4988 = vadd.f32 0.0, %v4987
      %4989 = vmatmul.bf16.gmra.mxu0 %v4904
      %v4990 = vpop.f32.mrf.mxu0
      %v4991 = vadd.f32 0.0, %v4990
      %v4992 = vpop.f32.mrf.mxu0
      %v4993 = vadd.f32 0.0, %v4992
      %4994 = vmatmul.bf16.gmra.mxu0 %v4906
      %v4995 = vpop.f32.mrf.mxu0
      %v4996 = vadd.f32 0.0, %v4995
      %v4997 = vpop.f32.mrf.mxu0
      %v4998 = vadd.f32 0.0, %v4997
      %4999 = vdwg.mxu0
      %v5000 = vadd.f32 %v4619, %v4921
      %v5001 = vadd.f32 %v4620, %v4923
      %v5002 = vadd.f32 %v4621, %v4926
      %v5003 = vadd.f32 %v4622, %v4928
      %v5004 = vadd.f32 %v4623, %v4931
      %v5005 = vadd.f32 %v4624, %v4933
      %v5006 = vadd.f32 %v4625, %v4936
      %v5007 = vadd.f32 %v4626, %v4938
      %v5008 = vadd.f32 %v4627, %v4941
      %v5009 = vadd.f32 %v4628, %v4943
      %v5010 = vadd.f32 %v4629, %v4946
      %v5011 = vadd.f32 %v4630, %v4948
      %v5012 = vadd.f32 %v4631, %v4951
      %v5013 = vadd.f32 %v4632, %v4953
      %v5014 = vadd.f32 %v4633, %v4956
      %v5015 = vadd.f32 %v4634, %v4958
      %v5016 = vadd.f32 %v4635, %v4961
      %v5017 = vadd.f32 %v4636, %v4963
      %v5018 = vadd.f32 %v4637, %v4966
      %v5019 = vadd.f32 %v4638, %v4968
      %v5020 = vadd.f32 %v4639, %v4971
      %v5021 = vadd.f32 %v4640, %v4973
      %v5022 = vadd.f32 %v4641, %v4976
      %v5023 = vadd.f32 %v4642, %v4978
      %v5024 = vadd.f32 %v4643, %v4981
      %v5025 = vadd.f32 %v4644, %v4983
      %v5026 = vadd.f32 %v4645, %v4986
      %v5027 = vadd.f32 %v4646, %v4988
      %v5028 = vadd.f32 %v4647, %v4991
      %v5029 = vadd.f32 %v4648, %v4993
      %v5030 = vadd.f32 %v4649, %v4996
      %v5031 = vadd.f32 %v4650, %v4998
      %5032 = vst [vmem:[#allocation1] sm:$0xff] %v381
      %5033 = vst [vmem:[#allocation1 + $0x20] sm:$0xff] %v382
      %s5034 = scalar_lea.vmem [#allocation1], 1
      %v5035 = vld [vmem:[%s5034] ss:$4 sm:$0xff]
      %s5036 = scalar_lea.vmem [#allocation1], 2
      %v5037 = vld [vmem:[%s5036] ss:$4 sm:$0xff]
      %s5038 = scalar_lea.vmem [#allocation1], 3
      %v5039 = vld [vmem:[%s5038] ss:$4 sm:$0xff]
      %s5040 = scalar_lea.vmem [#allocation1], 32
      %v5041 = vld [vmem:[%s5040] ss:$4 sm:$0xff]
      %s5042 = scalar_lea.vmem [#allocation1], 33
      %v5043 = vld [vmem:[%s5042] ss:$4 sm:$0xff]
      %s5044 = scalar_lea.vmem [#allocation1], 34
      %v5045 = vld [vmem:[%s5044] ss:$4 sm:$0xff]
      %s5046 = scalar_lea.vmem [#allocation1], 35
      %v5047 = vld [vmem:[%s5046] ss:$4 sm:$0xff]
      %5048 = vst [vmem:[#allocation1] sm:$0xff] %v383
      %v5049 = vld [vmem:[#allocation1] ss:$4 sm:$0xff]
      %v5050 = vld [vmem:[%s5034] ss:$4 sm:$0xff]
      %5051 = vst [vmem:[#allocation1 + $0x20] sm:$0xff] %v384
      %v5052 = vld [vmem:[%s5042] ss:$4 sm:$0xff]
      %v5053 = vld [vmem:[%s5044] ss:$4 sm:$0xff]
      %v5054 = vld [vmem:[%s5046] ss:$4 sm:$0xff]
      %5055 = vst [vmem:[#allocation1] sm:$0xff] %v385
      %5056 = vst [vmem:[#allocation1 + $0x20] sm:$0xff] %v386
      %v5057 = vld [vmem:[#allocation1] ss:$4 sm:$0xff]
      %v5058 = vld [vmem:[%s5034] ss:$4 sm:$0xff]
      %v5059 = vld [vmem:[%s5036] ss:$4 sm:$0xff]
      %v5060 = vld [vmem:[%s5038] ss:$4 sm:$0xff]
      %v5061 = vld [vmem:[%s5040] ss:$4 sm:$0xff]
      %v5062 = vld [vmem:[%s5042] ss:$4 sm:$0xff]
      %5063 = vst [vmem:[#allocation1] sm:$0xff] %v387
      %5064 = vst [vmem:[#allocation1 + $0x20] sm:$0xff] %v388
      %v5065 = vld [vmem:[%s5034] ss:$4 sm:$0xff]
      %v5066 = vld [vmem:[%s5036] ss:$4 sm:$0xff]
      %v5067 = vld [vmem:[%s5038] ss:$4 sm:$0xff]
      %v5068 = vld [vmem:[%s5040] ss:$4 sm:$0xff]
      %v5069 = vld [vmem:[%s5042] ss:$4 sm:$0xff]
      %v5070 = vld [vmem:[%s5044] ss:$4 sm:$0xff]
      %v5071 = vld [vmem:[%s5046] ss:$4 sm:$0xff]
      %5072 = vst [vmem:[#allocation1] sm:$0xff] %v389
      %v5073 = vld [vmem:[#allocation1] ss:$4 sm:$0xff]
      %v5074 = vld [vmem:[%s5034] ss:$4 sm:$0xff]
      %5075 = vst [vmem:[#allocation1 + $0x20] sm:$0xff] %v390
      %v5076 = vld [vmem:[%s5042] ss:$4 sm:$0xff]
      %v5077 = vld [vmem:[%s5044] ss:$4 sm:$0xff]
      %v5078 = vld [vmem:[%s5046] ss:$4 sm:$0xff]
      %5079 = vst [vmem:[#allocation1] sm:$0xff] %v391
      %5080 = vst [vmem:[#allocation1 + $0x20] sm:$0xff] %v392
      %v5081 = vld [vmem:[#allocation1] ss:$4 sm:$0xff]
      %v5082 = vld [vmem:[%s5034] ss:$4 sm:$0xff]
      %v5083 = vld [vmem:[%s5036] ss:$4 sm:$0xff]
      %v5084 = vld [vmem:[%s5038] ss:$4 sm:$0xff]
      %v5085 = vld [vmem:[%s5040] ss:$4 sm:$0xff]
      %v5086 = vld [vmem:[%s5042] ss:$4 sm:$0xff]
      %5087 = vst [vmem:[#allocation1] sm:$0xff] %v393
      %5088 = vst [vmem:[#allocation1 + $0x20] sm:$0xff] %v394
      %v5089 = vld [vmem:[%s5034] ss:$4 sm:$0xff]
      %v5090 = vld [vmem:[%s5036] ss:$4 sm:$0xff]
      %v5091 = vld [vmem:[%s5038] ss:$4 sm:$0xff]
      %v5092 = vld [vmem:[%s5040] ss:$4 sm:$0xff]
      %v5093 = vld [vmem:[%s5042] ss:$4 sm:$0xff]
      %v5094 = vld [vmem:[%s5044] ss:$4 sm:$0xff]
      %v5095 = vld [vmem:[%s5046] ss:$4 sm:$0xff]
      %5096 = vst [vmem:[#allocation1] sm:$0xff] %v395
      %v5097 = vld [vmem:[#allocation1] ss:$4 sm:$0xff]
      %v5098 = vld [vmem:[%s5034] ss:$4 sm:$0xff]
      %5099 = vst [vmem:[#allocation1 + $0x20] sm:$0xff] %v396
      %v5100 = vld [vmem:[%s5042] ss:$4 sm:$0xff]
      %v5101 = vld [vmem:[%s5044] ss:$4 sm:$0xff]
      %v5102 = vld [vmem:[%s5046] ss:$4 sm:$0xff]
      %5103 = vst [vmem:[#allocation1] sm:$0xff] %v397
      %5104 = vst [vmem:[#allocation1 + $0x20] sm:$0xff] %v398
      %v5105 = vld [vmem:[#allocation1] ss:$4 sm:$0xff]
      %v5106 = vld [vmem:[%s5034] ss:$4 sm:$0xff]
      %v5107 = vld [vmem:[%s5036] ss:$4 sm:$0xff]
      %v5108 = vld [vmem:[%s5038] ss:$4 sm:$0xff]
      %v5109 = vld [vmem:[%s5040] ss:$4 sm:$0xff]
      %v5110 = vld [vmem:[%s5042] ss:$4 sm:$0xff]
      %5111 = vst [vmem:[#allocation1] sm:$0xff] %v399
      %5112 = vst [vmem:[#allocation1 + $0x20] sm:$0xff] %v400
      %v5113 = vld [vmem:[%s5034] ss:$4 sm:$0xff]
      %v5114 = vld [vmem:[%s5036] ss:$4 sm:$0xff]
      %v5115 = vld [vmem:[%s5038] ss:$4 sm:$0xff]
      %v5116 = vld [vmem:[%s5040] ss:$4 sm:$0xff]
      %v5117 = vld [vmem:[%s5042] ss:$4 sm:$0xff]
      %v5118 = vld [vmem:[%s5044] ss:$4 sm:$0xff]
      %v5119 = vld [vmem:[%s5046] ss:$4 sm:$0xff]
      %5120 = vst [vmem:[#allocation1] sm:$0xff] %v401
      %v5121 = vld [vmem:[#allocation1] ss:$4 sm:$0xff]
      %v5122 = vld [vmem:[%s5034] ss:$4 sm:$0xff]
      %5123 = vst [vmem:[#allocation1 + $0x20] sm:$0xff] %v402
      %v5124 = vld [vmem:[%s5042] ss:$4 sm:$0xff]
      %v5125 = vld [vmem:[%s5044] ss:$4 sm:$0xff]
      %v5126 = vld [vmem:[%s5046] ss:$4 sm:$0xff]
      %5127 = vst [vmem:[#allocation1] sm:$0xff] %v403
      %5128 = vst [vmem:[#allocation1 + $0x20] sm:$0xff] %v404
      %v5129 = vld [vmem:[#allocation1] ss:$4 sm:$0xff]
      %v5130 = vld [vmem:[%s5034] ss:$4 sm:$0xff]
      %v5131 = vld [vmem:[%s5036] ss:$4 sm:$0xff]
      %v5132 = vld [vmem:[%s5038] ss:$4 sm:$0xff]
      %v5133 = vld [vmem:[%s5040] ss:$4 sm:$0xff]
      %v5134 = vld [vmem:[%s5042] ss:$4 sm:$0xff]
      %5135 = vst [vmem:[#allocation1] sm:$0xff] %v405
      %5136 = vst [vmem:[#allocation1 + $0x20] sm:$0xff] %v406
      %v5137 = vld [vmem:[%s5034] ss:$4 sm:$0xff]
      %v5138 = vld [vmem:[%s5036] ss:$4 sm:$0xff]
      %v5139 = vld [vmem:[%s5038] ss:$4 sm:$0xff]
      %v5140 = vld [vmem:[%s5040] ss:$4 sm:$0xff]
      %v5141 = vld [vmem:[%s5042] ss:$4 sm:$0xff]
      %v5142 = vld [vmem:[%s5044] ss:$4 sm:$0xff]
      %v5143 = vld [vmem:[%s5046] ss:$4 sm:$0xff]
      %5144 = vst [vmem:[#allocation1] sm:$0xff] %v407
      %v5145 = vld [vmem:[#allocation1] ss:$4 sm:$0xff]
      %v5146 = vld [vmem:[%s5034] ss:$4 sm:$0xff]
      %5147 = vst [vmem:[#allocation1 + $0x20] sm:$0xff] %v408
      %v5148 = vld [vmem:[%s5042] ss:$4 sm:$0xff]
      %v5149 = vld [vmem:[%s5044] ss:$4 sm:$0xff]
      %v5150 = vld [vmem:[%s5046] ss:$4 sm:$0xff]
      %5151 = vst [vmem:[#allocation1] sm:$0xff] %v409
      %5152 = vst [vmem:[#allocation1 + $0x20] sm:$0xff] %v410
      %v5153 = vld [vmem:[#allocation1] ss:$4 sm:$0xff]
      %v5154 = vld [vmem:[%s5034] ss:$4 sm:$0xff]
      %v5155 = vld [vmem:[%s5036] ss:$4 sm:$0xff]
      %v5156 = vld [vmem:[%s5038] ss:$4 sm:$0xff]
      %v5157 = vld [vmem:[%s5040] ss:$4 sm:$0xff]
      %v5158 = vld [vmem:[%s5042] ss:$4 sm:$0xff]
      %5159 = vst [vmem:[#allocation1] sm:$0xff] %v411
      %5160 = vst [vmem:[#allocation1 + $0x20] sm:$0xff] %v412
      %v5161 = vld [vmem:[%s5034] ss:$4 sm:$0xff]
      %v5162 = vld [vmem:[%s5036] ss:$4 sm:$0xff]
      %v5163 = vld [vmem:[%s5038] ss:$4 sm:$0xff]
      %v5164 = vld [vmem:[%s5040] ss:$4 sm:$0xff]
      %v5165 = vld [vmem:[%s5042] ss:$4 sm:$0xff]
      %v5166 = vld [vmem:[%s5044] ss:$4 sm:$0xff]
      %v5167 = vld [vmem:[%s5046] ss:$4 sm:$0xff]
      %5168 = vst [vmem:[#allocation1] sm:$0xff] %v413
      %v5169 = vld [vmem:[#allocation1] ss:$4 sm:$0xff]
      %v5170 = vld [vmem:[%s5034] ss:$4 sm:$0xff]
      %5171 = vst [vmem:[#allocation1 + $0x20] sm:$0xff] %v414
      %v5172 = vld [vmem:[%s5042] ss:$4 sm:$0xff]
      %v5173 = vld [vmem:[%s5044] ss:$4 sm:$0xff]
      %v5174 = vld [vmem:[%s5046] ss:$4 sm:$0xff]
      %5175 = vst [vmem:[#allocation1] sm:$0xff] %v415
      %5176 = vst [vmem:[#allocation1 + $0x20] sm:$0xff] %v416
      %v5177 = vld [vmem:[#allocation1] ss:$4 sm:$0xff]
      %v5178 = vld [vmem:[%s5034] ss:$4 sm:$0xff]
      %v5179 = vld [vmem:[%s5036] ss:$4 sm:$0xff]
      %v5180 = vld [vmem:[%s5038] ss:$4 sm:$0xff]
      %v5181 = vld [vmem:[%s5040] ss:$4 sm:$0xff]
      %v5182 = vld [vmem:[%s5042] ss:$4 sm:$0xff]
      %5183 = vst [vmem:[#allocation1] sm:$0xff] %v417
      %5184 = vst [vmem:[#allocation1 + $0x20] sm:$0xff] %v418
      %v5185 = vld [vmem:[%s5034] ss:$4 sm:$0xff]
      %v5186 = vld [vmem:[%s5036] ss:$4 sm:$0xff]
      %v5187 = vld [vmem:[%s5038] ss:$4 sm:$0xff]
      %v5188 = vld [vmem:[%s5040] ss:$4 sm:$0xff]
      %v5189 = vld [vmem:[%s5042] ss:$4 sm:$0xff]
      %v5190 = vld [vmem:[%s5044] ss:$4 sm:$0xff]
      %v5191 = vld [vmem:[%s5046] ss:$4 sm:$0xff]
      %5192 = vst [vmem:[#allocation1] sm:$0xff] %v419
      %v5193 = vld [vmem:[#allocation1] ss:$4 sm:$0xff]
      %v5194 = vld [vmem:[%s5034] ss:$4 sm:$0xff]
      %5195 = vst [vmem:[#allocation1 + $0x20] sm:$0xff] %v420
      %v5196 = vld [vmem:[%s5042] ss:$4 sm:$0xff]
      %v5197 = vld [vmem:[%s5044] ss:$4 sm:$0xff]
      %v5198 = vld [vmem:[%s5046] ss:$4 sm:$0xff]
      %5199 = vst [vmem:[#allocation1] sm:$0xff] %v421
      %5200 = vst [vmem:[#allocation1 + $0x20] sm:$0xff] %v422
      %v5201 = vld [vmem:[#allocation1] ss:$4 sm:$0xff]
      %v5202 = vld [vmem:[%s5034] ss:$4 sm:$0xff]
      %v5203 = vld [vmem:[%s5036] ss:$4 sm:$0xff]
      %v5204 = vld [vmem:[%s5038] ss:$4 sm:$0xff]
      %v5205 = vld [vmem:[%s5040] ss:$4 sm:$0xff]
      %v5206 = vld [vmem:[%s5042] ss:$4 sm:$0xff]
      %5207 = vst [vmem:[#allocation1] ss:$9 sm:$0xff] %v5035
      %s5208 = scalar_lea.vmem [#allocation1], 1
      %5209 = vst [vmem:[%s5208] ss:$9 sm:$0xff] %v5037
      %s5210 = scalar_lea.vmem [#allocation1], 2
      %5211 = vst [vmem:[%s5210] ss:$9 sm:$0xff] %v5039
      %s5212 = scalar_lea.vmem [#allocation1], 3
      %5213 = vst [vmem:[%s5212] ss:$9 sm:$0xff] %v5041
      %s5214 = scalar_lea.vmem [#allocation1], 4
      %5215 = vst [vmem:[%s5214] ss:$9 sm:$0xff] %v5043
      %s5216 = scalar_lea.vmem [#allocation1], 5
      %5217 = vst [vmem:[%s5216] ss:$9 sm:$0xff] %v5045
      %s5218 = scalar_lea.vmem [#allocation1], 6
      %5219 = vst [vmem:[%s5218] ss:$9 sm:$0xff] %v5047
      %s5220 = scalar_lea.vmem [#allocation1], 7
      %5221 = vst [vmem:[%s5220] ss:$9 sm:$0xff] %v5049
      %v5222 = vld [vmem:[#allocation1] sm:$0xff]
      %5223 = vst [vmem:[#allocation1] ss:$9 sm:$0xff] %v5050
      %5224 = vst [vmem:[%s5208] ss:$9 sm:$0xff] %v5052
      %5225 = vst [vmem:[%s5210] ss:$9 sm:$0xff] %v5053
      %5226 = vst [vmem:[%s5212] ss:$9 sm:$0xff] %v5054
      %5227 = vst [vmem:[%s5214] ss:$9 sm:$0xff] %v5057
      %5228 = vst [vmem:[%s5216] ss:$9 sm:$0xff] %v5058
      %5229 = vst [vmem:[%s5218] ss:$9 sm:$0xff] %v5059
      %5230 = vst [vmem:[%s5220] ss:$9 sm:$0xff] %v5060
      %v5231 = vld [vmem:[#allocation1] sm:$0xff]
      %5232 = vst [vmem:[#allocation1] ss:$9 sm:$0xff] %v5061
      %5233 = vst [vmem:[%s5208] ss:$9 sm:$0xff] %v5062
      %5234 = vst [vmem:[%s5210] ss:$9 sm:$0xff] %v5065
      %5235 = vst [vmem:[%s5212] ss:$9 sm:$0xff] %v5066
      %5236 = vst [vmem:[%s5214] ss:$9 sm:$0xff] %v5067
      %5237 = vst [vmem:[%s5216] ss:$9 sm:$0xff] %v5068
      %5238 = vst [vmem:[%s5218] ss:$9 sm:$0xff] %v5069
      %5239 = vst [vmem:[%s5220] ss:$9 sm:$0xff] %v5070
      %v5240 = vld [vmem:[#allocation1] sm:$0xff]
      %5241 = vst [vmem:[#allocation1] ss:$9 sm:$0xff] %v5071
      %5242 = vst [vmem:[%s5208] ss:$9 sm:$0xff] %v5073
      %5243 = vst [vmem:[%s5210] ss:$9 sm:$0xff] %v5074
      %5244 = vst [vmem:[%s5212] ss:$9 sm:$0xff] %v5076
      %5245 = vst [vmem:[%s5214] ss:$9 sm:$0xff] %v5077
      %5246 = vst [vmem:[%s5216] ss:$9 sm:$0xff] %v5078
      %5247 = vst [vmem:[%s5218] ss:$9 sm:$0xff] %v5081
      %5248 = vst [vmem:[%s5220] ss:$9 sm:$0xff] %v5082
      %v5249 = vld [vmem:[#allocation1] sm:$0xff]
      %5250 = vst [vmem:[#allocation1] ss:$9 sm:$0xff] %v5083
      %5251 = vst [vmem:[%s5208] ss:$9 sm:$0xff] %v5084
      %5252 = vst [vmem:[%s5210] ss:$9 sm:$0xff] %v5085
      %5253 = vst [vmem:[%s5212] ss:$9 sm:$0xff] %v5086
      %5254 = vst [vmem:[%s5214] ss:$9 sm:$0xff] %v5089
      %5255 = vst [vmem:[%s5216] ss:$9 sm:$0xff] %v5090
      %5256 = vst [vmem:[%s5218] ss:$9 sm:$0xff] %v5091
      %5257 = vst [vmem:[%s5220] ss:$9 sm:$0xff] %v5092
      %v5258 = vld [vmem:[#allocation1] sm:$0xff]
      %5259 = vst [vmem:[#allocation1] ss:$9 sm:$0xff] %v5093
      %5260 = vst [vmem:[%s5208] ss:$9 sm:$0xff] %v5094
      %5261 = vst [vmem:[%s5210] ss:$9 sm:$0xff] %v5095
      %5262 = vst [vmem:[%s5212] ss:$9 sm:$0xff] %v5097
      %5263 = vst [vmem:[%s5214] ss:$9 sm:$0xff] %v5098
      %5264 = vst [vmem:[%s5216] ss:$9 sm:$0xff] %v5100
      %5265 = vst [vmem:[%s5218] ss:$9 sm:$0xff] %v5101
      %5266 = vst [vmem:[%s5220] ss:$9 sm:$0xff] %v5102
      %v5267 = vld [vmem:[#allocation1] sm:$0xff]
      %5268 = vst [vmem:[#allocation1] ss:$9 sm:$0xff] %v5105
      %5269 = vst [vmem:[%s5208] ss:$9 sm:$0xff] %v5106
      %5270 = vst [vmem:[%s5210] ss:$9 sm:$0xff] %v5107
      %5271 = vst [vmem:[%s5212] ss:$9 sm:$0xff] %v5108
      %5272 = vst [vmem:[%s5214] ss:$9 sm:$0xff] %v5109
      %5273 = vst [vmem:[%s5216] ss:$9 sm:$0xff] %v5110
      %5274 = vst [vmem:[%s5218] ss:$9 sm:$0xff] %v5113
      %5275 = vst [vmem:[%s5220] ss:$9 sm:$0xff] %v5114
      %v5276 = vld [vmem:[#allocation1] sm:$0xff]
      %5277 = vst [vmem:[#allocation1] ss:$9 sm:$0xff] %v5115
      %5278 = vst [vmem:[%s5208] ss:$9 sm:$0xff] %v5116
      %5279 = vst [vmem:[%s5210] ss:$9 sm:$0xff] %v5117
      %5280 = vst [vmem:[%s5212] ss:$9 sm:$0xff] %v5118
      %5281 = vst [vmem:[%s5214] ss:$9 sm:$0xff] %v5119
      %5282 = vst [vmem:[%s5216] ss:$9 sm:$0xff] %v5121
      %5283 = vst [vmem:[%s5218] ss:$9 sm:$0xff] %v5122
      %5284 = vst [vmem:[%s5220] ss:$9 sm:$0xff] %v5124
      %v5285 = vld [vmem:[#allocation1] sm:$0xff]
      %5286 = vst [vmem:[#allocation1] ss:$9 sm:$0xff] %v5125
      %5287 = vst [vmem:[%s5208] ss:$9 sm:$0xff] %v5126
      %5288 = vst [vmem:[%s5210] ss:$9 sm:$0xff] %v5129
      %5289 = vst [vmem:[%s5212] ss:$9 sm:$0xff] %v5130
      %5290 = vst [vmem:[%s5214] ss:$9 sm:$0xff] %v5131
      %5291 = vst [vmem:[%s5216] ss:$9 sm:$0xff] %v5132
      %5292 = vst [vmem:[%s5218] ss:$9 sm:$0xff] %v5133
      %5293 = vst [vmem:[%s5220] ss:$9 sm:$0xff] %v5134
      %v5294 = vld [vmem:[#allocation1] sm:$0xff]
      %5295 = vst [vmem:[#allocation1] ss:$9 sm:$0xff] %v5137
      %5296 = vst [vmem:[%s5208] ss:$9 sm:$0xff] %v5138
      %5297 = vst [vmem:[%s5210] ss:$9 sm:$0xff] %v5139
      %5298 = vst [vmem:[%s5212] ss:$9 sm:$0xff] %v5140
      %5299 = vst [vmem:[%s5214] ss:$9 sm:$0xff] %v5141
      %5300 = vst [vmem:[%s5216] ss:$9 sm:$0xff] %v5142
      %5301 = vst [vmem:[%s5218] ss:$9 sm:$0xff] %v5143
      %5302 = vst [vmem:[%s5220] ss:$9 sm:$0xff] %v5145
      %v5303 = vld [vmem:[#allocation1] sm:$0xff]
      %5304 = vst [vmem:[#allocation1] ss:$9 sm:$0xff] %v5146
      %5305 = vst [vmem:[%s5208] ss:$9 sm:$0xff] %v5148
      %5306 = vst [vmem:[%s5210] ss:$9 sm:$0xff] %v5149
      %5307 = vst [vmem:[%s5212] ss:$9 sm:$0xff] %v5150
      %5308 = vst [vmem:[%s5214] ss:$9 sm:$0xff] %v5153
      %5309 = vst [vmem:[%s5216] ss:$9 sm:$0xff] %v5154
      %5310 = vst [vmem:[%s5218] ss:$9 sm:$0xff] %v5155
      %5311 = vst [vmem:[%s5220] ss:$9 sm:$0xff] %v5156
      %v5312 = vld [vmem:[#allocation1] sm:$0xff]
      %5313 = vst [vmem:[#allocation1] ss:$9 sm:$0xff] %v5157
      %5314 = vst [vmem:[%s5208] ss:$9 sm:$0xff] %v5158
      %5315 = vst [vmem:[%s5210] ss:$9 sm:$0xff] %v5161
      %5316 = vst [vmem:[%s5212] ss:$9 sm:$0xff] %v5162
      %5317 = vst [vmem:[%s5214] ss:$9 sm:$0xff] %v5163
      %5318 = vst [vmem:[%s5216] ss:$9 sm:$0xff] %v5164
      %5319 = vst [vmem:[%s5218] ss:$9 sm:$0xff] %v5165
      %5320 = vst [vmem:[%s5220] ss:$9 sm:$0xff] %v5166
      %v5321 = vld [vmem:[#allocation1] sm:$0xff]
      %5322 = vst [vmem:[#allocation1] ss:$9 sm:$0xff] %v5167
      %5323 = vst [vmem:[%s5208] ss:$9 sm:$0xff] %v5169
      %5324 = vst [vmem:[%s5210] ss:$9 sm:$0xff] %v5170
      %5325 = vst [vmem:[%s5212] ss:$9 sm:$0xff] %v5172
      %5326 = vst [vmem:[%s5214] ss:$9 sm:$0xff] %v5173
      %5327 = vst [vmem:[%s5216] ss:$9 sm:$0xff] %v5174
      %5328 = vst [vmem:[%s5218] ss:$9 sm:$0xff] %v5177
      %5329 = vst [vmem:[%s5220] ss:$9 sm:$0xff] %v5178
      %v5330 = vld [vmem:[#allocation1] sm:$0xff]
      %5331 = vst [vmem:[#allocation1] ss:$9 sm:$0xff] %v5179
      %5332 = vst [vmem:[%s5208] ss:$9 sm:$0xff] %v5180
      %5333 = vst [vmem:[%s5210] ss:$9 sm:$0xff] %v5181
      %5334 = vst [vmem:[%s5212] ss:$9 sm:$0xff] %v5182
      %5335 = vst [vmem:[%s5214] ss:$9 sm:$0xff] %v5185
      %5336 = vst [vmem:[%s5216] ss:$9 sm:$0xff] %v5186
      %5337 = vst [vmem:[%s5218] ss:$9 sm:$0xff] %v5187
      %5338 = vst [vmem:[%s5220] ss:$9 sm:$0xff] %v5188
      %v5339 = vld [vmem:[#allocation1] sm:$0xff]
      %5340 = vst [vmem:[#allocation1] ss:$9 sm:$0xff] %v5189
      %5341 = vst [vmem:[%s5208] ss:$9 sm:$0xff] %v5190
      %5342 = vst [vmem:[%s5210] ss:$9 sm:$0xff] %v5191
      %5343 = vst [vmem:[%s5212] ss:$9 sm:$0xff] %v5193
      %5344 = vst [vmem:[%s5214] ss:$9 sm:$0xff] %v5194
      %5345 = vst [vmem:[%s5216] ss:$9 sm:$0xff] %v5196
      %5346 = vst [vmem:[%s5218] ss:$9 sm:$0xff] %v5197
      %5347 = vst [vmem:[%s5220] ss:$9 sm:$0xff] %v5198
      %v5348 = vld [vmem:[#allocation1] sm:$0xff]
      %5349 = vst [vmem:[#allocation1] ss:$9 sm:$0xff] %v5201
      %5350 = vst [vmem:[%s5208] ss:$9 sm:$0xff] %v5202
      %5351 = vst [vmem:[%s5210] ss:$9 sm:$0xff] %v5203
      %5352 = vst [vmem:[%s5212] ss:$9 sm:$0xff] %v5204
      %5353 = vst [vmem:[%s5214] ss:$9 sm:$0xff] %v5205
      %5354 = vst [vmem:[%s5216] ss:$9 sm:$0xff] %v5206
      %v5355 = vld [vmem:[#allocation1] sm:$0xff]
      %v5356 = vsel %vm2223, %v5222, 0
      %v5358 = vsel %vm2223, %v5231, 0
      %v5360 = vsel %vm2223, %v5240, 0
      %v5362 = vsel %vm2223, %v5249, 0
      %v5364 = vsel %vm2223, %v5258, 0
      %v5366 = vsel %vm2223, %v5267, 0
      %v5368 = vsel %vm2223, %v5276, 0
      %v5370 = vsel %vm2223, %v5285, 0
      %v5372 = vsel %vm2223, %v5294, 0
      %v5374 = vsel %vm2223, %v5303, 0
      %v5376 = vsel %vm2223, %v5312, 0
      %v5378 = vsel %vm2223, %v5321, 0
      %v5380 = vsel %vm2223, %v5330, 0
      %v5382 = vsel %vm2223, %v5339, 0
      %v5384 = vsel %vm2223, %v5348, 0
      %v5386 = vsel %vm2223, %v5355, 0
      %v5389 = vsel %vm2256, %v443, 0
      %5391 = vmatpush.bf16.msra.mxu0 0
      %5392 = vmatpush.bf16.msra.mxu0 0
      %5393 = vmatpush.bf16.msra.mxu0 0
      %5394 = vmatpush.bf16.msra.mxu0 0
      %5395 = vmatpush.bf16.msra.mxu0 0
      %5396 = vmatpush.bf16.msra.mxu0 0
      %5397 = vmatpush.bf16.msra.mxu0 0
      %5398 = vmatpush.bf16.msra.mxu0 %v5389
      %5399 = vmatmul.bf16.gmra.mxu0 %v5356
      %v5400 = vpop.f32.mrf.mxu0
      %v5401 = vadd.f32 0.0, %v5400
      %v5402 = vpop.f32.mrf.mxu0
      %v5403 = vadd.f32 0.0, %v5402
      %5404 = vmatmul.bf16.gmra.mxu0 %v5358
      %v5405 = vpop.f32.mrf.mxu0
      %v5406 = vadd.f32 0.0, %v5405
      %v5407 = vpop.f32.mrf.mxu0
      %v5408 = vadd.f32 0.0, %v5407
      %5409 = vmatmul.bf16.gmra.mxu0 %v5360
      %v5410 = vpop.f32.mrf.mxu0
      %v5411 = vadd.f32 0.0, %v5410
      %v5412 = vpop.f32.mrf.mxu0
      %v5413 = vadd.f32 0.0, %v5412
      %5414 = vmatmul.bf16.gmra.mxu0 %v5362
      %v5415 = vpop.f32.mrf.mxu0
      %v5416 = vadd.f32 0.0, %v5415
      %v5417 = vpop.f32.mrf.mxu0
      %v5418 = vadd.f32 0.0, %v5417
      %5419 = vmatmul.bf16.gmra.mxu0 %v5364
      %v5420 = vpop.f32.mrf.mxu0
      %v5421 = vadd.f32 0.0, %v5420
      %v5422 = vpop.f32.mrf.mxu0
      %v5423 = vadd.f32 0.0, %v5422
      %5424 = vmatmul.bf16.gmra.mxu0 %v5366
      %v5425 = vpop.f32.mrf.mxu0
      %v5426 = vadd.f32 0.0, %v5425
      %v5427 = vpop.f32.mrf.mxu0
      %v5428 = vadd.f32 0.0, %v5427
      %5429 = vmatmul.bf16.gmra.mxu0 %v5368
      %v5430 = vpop.f32.mrf.mxu0
      %v5431 = vadd.f32 0.0, %v5430
      %v5432 = vpop.f32.mrf.mxu0
      %v5433 = vadd.f32 0.0, %v5432
      %5434 = vmatmul.bf16.gmra.mxu0 %v5370
      %v5435 = vpop.f32.mrf.mxu0
      %v5436 = vadd.f32 0.0, %v5435
      %v5437 = vpop.f32.mrf.mxu0
      %v5438 = vadd.f32 0.0, %v5437
      %5439 = vmatmul.bf16.gmra.mxu0 %v5372
      %v5440 = vpop.f32.mrf.mxu0
      %v5441 = vadd.f32 0.0, %v5440
      %v5442 = vpop.f32.mrf.mxu0
      %v5443 = vadd.f32 0.0, %v5442
      %5444 = vmatmul.bf16.gmra.mxu0 %v5374
      %v5445 = vpop.f32.mrf.mxu0
      %v5446 = vadd.f32 0.0, %v5445
      %v5447 = vpop.f32.mrf.mxu0
      %v5448 = vadd.f32 0.0, %v5447
      %5449 = vmatmul.bf16.gmra.mxu0 %v5376
      %v5450 = vpop.f32.mrf.mxu0
      %v5451 = vadd.f32 0.0, %v5450
      %v5452 = vpop.f32.mrf.mxu0
      %v5453 = vadd.f32 0.0, %v5452
      %5454 = vmatmul.bf16.gmra.mxu0 %v5378
      %v5455 = vpop.f32.mrf.mxu0
      %v5456 = vadd.f32 0.0, %v5455
      %v5457 = vpop.f32.mrf.mxu0
      %v5458 = vadd.f32 0.0, %v5457
      %5459 = vmatmul.bf16.gmra.mxu0 %v5380
      %v5460 = vpop.f32.mrf.mxu0
      %v5461 = vadd.f32 0.0, %v5460
      %v5462 = vpop.f32.mrf.mxu0
      %v5463 = vadd.f32 0.0, %v5462
      %5464 = vmatmul.bf16.gmra.mxu0 %v5382
      %v5465 = vpop.f32.mrf.mxu0
      %v5466 = vadd.f32 0.0, %v5465
      %v5467 = vpop.f32.mrf.mxu0
      %v5468 = vadd.f32 0.0, %v5467
      %5469 = vmatmul.bf16.gmra.mxu0 %v5384
      %v5470 = vpop.f32.mrf.mxu0
      %v5471 = vadd.f32 0.0, %v5470
      %v5472 = vpop.f32.mrf.mxu0
      %v5473 = vadd.f32 0.0, %v5472
      %5474 = vmatmul.bf16.gmra.mxu0 %v5386
      %v5475 = vpop.f32.mrf.mxu0
      %v5476 = vadd.f32 0.0, %v5475
      %v5477 = vpop.f32.mrf.mxu0
      %v5478 = vadd.f32 0.0, %v5477
      %5479 = vdwg.mxu0
      %v5480 = vadd.f32 %v5000, %v5401
      %v5481 = vadd.f32 %v5001, %v5403
      %v5482 = vadd.f32 %v5002, %v5406
      %v5483 = vadd.f32 %v5003, %v5408
      %v5484 = vadd.f32 %v5004, %v5411
      %v5485 = vadd.f32 %v5005, %v5413
      %v5486 = vadd.f32 %v5006, %v5416
      %v5487 = vadd.f32 %v5007, %v5418
      %v5488 = vadd.f32 %v5008, %v5421
      %v5489 = vadd.f32 %v5009, %v5423
      %v5490 = vadd.f32 %v5010, %v5426
      %v5491 = vadd.f32 %v5011, %v5428
      %v5492 = vadd.f32 %v5012, %v5431
      %v5493 = vadd.f32 %v5013, %v5433
      %v5494 = vadd.f32 %v5014, %v5436
      %v5495 = vadd.f32 %v5015, %v5438
      %v5496 = vadd.f32 %v5016, %v5441
      %v5497 = vadd.f32 %v5017, %v5443
      %v5498 = vadd.f32 %v5018, %v5446
      %v5499 = vadd.f32 %v5019, %v5448
      %v5500 = vadd.f32 %v5020, %v5451
      %v5501 = vadd.f32 %v5021, %v5453
      %v5502 = vadd.f32 %v5022, %v5456
      %v5503 = vadd.f32 %v5023, %v5458
      %v5504 = vadd.f32 %v5024, %v5461
      %v5505 = vadd.f32 %v5025, %v5463
      %v5506 = vadd.f32 %v5026, %v5466
      %v5507 = vadd.f32 %v5027, %v5468
      %v5508 = vadd.f32 %v5028, %v5471
      %v5509 = vadd.f32 %v5029, %v5473
      %v5510 = vadd.f32 %v5030, %v5476
      %v5511 = vadd.f32 %v5031, %v5478
      %v5513 = vperm.slane %v444, 0
      %v5515 = vadd.f32 %v5480, %v5513
      %v5516 = vadd.f32 %v5481, %v5513
      %v5517 = vadd.f32 %v5482, %v5513
      %v5518 = vadd.f32 %v5483, %v5513
      %v5519 = vadd.f32 %v5484, %v5513
      %v5520 = vadd.f32 %v5485, %v5513
      %v5521 = vadd.f32 %v5486, %v5513
      %v5522 = vadd.f32 %v5487, %v5513
      %v5523 = vadd.f32 %v5488, %v5513
      %v5524 = vadd.f32 %v5489, %v5513
      %v5525 = vadd.f32 %v5490, %v5513
      %v5526 = vadd.f32 %v5491, %v5513
      %v5527 = vadd.f32 %v5492, %v5513
      %v5528 = vadd.f32 %v5493, %v5513
      %v5529 = vadd.f32 %v5494, %v5513
      %v5530 = vadd.f32 %v5495, %v5513
      %v5531 = vadd.f32 %v5496, %v5513
      %v5532 = vadd.f32 %v5497, %v5513
      %v5533 = vadd.f32 %v5498, %v5513
      %v5534 = vadd.f32 %v5499, %v5513
      %v5535 = vadd.f32 %v5500, %v5513
      %v5536 = vadd.f32 %v5501, %v5513
      %v5537 = vadd.f32 %v5502, %v5513
      %v5538 = vadd.f32 %v5503, %v5513
      %v5539 = vadd.f32 %v5504, %v5513
      %v5540 = vadd.f32 %v5505, %v5513
      %v5541 = vadd.f32 %v5506, %v5513
      %v5542 = vadd.f32 %v5507, %v5513
      %v5543 = vadd.f32 %v5508, %v5513
      %v5544 = vadd.f32 %v5509, %v5513
      %v5545 = vadd.f32 %v5510, %v5513
      %v5546 = vadd.f32 %v5511, %v5513
      %v5547 = vmax.f32 %v5515, 0.0
      %v5548 = vmax.f32 %v5516, 0.0
      %v5549 = vmax.f32 %v5517, 0.0
      %v5550 = vmax.f32 %v5518, 0.0
      %v5551 = vmax.f32 %v5519, 0.0
      %v5552 = vmax.f32 %v5520, 0.0
      %v5553 = vmax.f32 %v5521, 0.0
      %v5554 = vmax.f32 %v5522, 0.0
      %v5555 = vmax.f32 %v5523, 0.0
      %v5556 = vmax.f32 %v5524, 0.0
      %v5557 = vmax.f32 %v5525, 0.0
      %v5558 = vmax.f32 %v5526, 0.0
      %v5559 = vmax.f32 %v5527, 0.0
      %v5560 = vmax.f32 %v5528, 0.0
      %v5561 = vmax.f32 %v5529, 0.0
      %v5562 = vmax.f32 %v5530, 0.0
      %v5563 = vmax.f32 %v5531, 0.0
      %v5564 = vmax.f32 %v5532, 0.0
      %v5565 = vmax.f32 %v5533, 0.0
      %v5566 = vmax.f32 %v5534, 0.0
      %v5567 = vmax.f32 %v5535, 0.0
      %v5568 = vmax.f32 %v5536, 0.0
      %v5569 = vmax.f32 %v5537, 0.0
      %v5570 = vmax.f32 %v5538, 0.0
      %v5571 = vmax.f32 %v5539, 0.0
      %v5572 = vmax.f32 %v5540, 0.0
      %v5573 = vmax.f32 %v5541, 0.0
      %v5574 = vmax.f32 %v5542, 0.0
      %v5575 = vmax.f32 %v5543, 0.0
      %v5576 = vmax.f32 %v5544, 0.0
      %v5577 = vmax.f32 %v5545, 0.0
      %v5578 = vmax.f32 %v5546, 0.0
      %v5585 = vrot.slane %v423, 3
      %v5586 = vrot.slane %v424, 3
      %v5587 = vrot.slane %v425, 3
      %v5588 = vrot.slane %v426, 3
      %v5589 = vrot.slane %v427, 3
      %v5590 = vrot.slane %v428, 3
      %v5593 = vsel %vm529, %v423, %v5585
      %v5594 = vsel %vm533, %v423, %v5585
      %v5596 = vrot.slane %v5594, 1
      %v5597 = vsel %vm537, %v423, %v5585
      %v5599 = vrot.slane %v5597, 2
      %v5600 = vsel %vm541, %v423, %v5585
      %v5602 = vrot.slane %v5600, 3
      %v5605 = vsel %vm529, %v424, %v5586
      %v5606 = vsel %vm533, %v424, %v5586
      %v5608 = vrot.slane %v5606, 1
      %v5609 = vsel %vm537, %v424, %v5586
      %v5611 = vrot.slane %v5609, 2
      %v5612 = vsel %vm541, %v424, %v5586
      %v5614 = vrot.slane %v5612, 3
      %v5617 = vsel %vm529, %v425, %v5587
      %v5620 = vsel %vm529, %v426, %v5588
      %v5621 = vsel %vm533, %v426, %v5588
      %v5623 = vrot.slane %v5621, 1
      %v5624 = vsel %vm537, %v426, %v5588
      %v5626 = vrot.slane %v5624, 2
      %v5627 = vsel %vm541, %v426, %v5588
      %v5629 = vrot.slane %v5627, 3
      %v5632 = vsel %vm529, %v427, %v5589
      %v5633 = vsel %vm533, %v427, %v5589
      %v5635 = vrot.slane %v5633, 1
      %v5636 = vsel %vm537, %v427, %v5589
      %v5638 = vrot.slane %v5636, 2
      %v5639 = vsel %vm541, %v427, %v5589
      %v5641 = vrot.slane %v5639, 3
      %v5644 = vsel %vm529, %v428, %v5590
      %v5645 = vsel %vm533, %v425, %v5587
      %v5647 = vrot.slane %v5645, 1
      %v5648 = vsel %vm533, %v428, %v5590
      %v5650 = vrot.slane %v5648, 1
      %v5651 = vshrl.u32 %v5593, 16
      %v5653 = vrot.slane %v5651, 7
      %v5654 = vrot.slane %v5653, 1
      %v5656 = vshll.u32 %v5596, 16
      %v5658 = vsel %vm967, %v5654, %v5656
      %v5659 = vshrl.u32 %v5596, 16
      %v5661 = vrot.slane %v5659, 7
      %v5662 = vrot.slane %v5661, 1
      %v5664 = vshll.u32 %v5599, 16
      %v5666 = vsel %vm967, %v5662, %v5664
      %v5667 = vshrl.u32 %v5599, 16
      %v5669 = vrot.slane %v5667, 7
      %v5670 = vrot.slane %v5669, 1
      %v5672 = vshll.u32 %v5602, 16
      %v5674 = vsel %vm967, %v5670, %v5672
      %v5675 = vshrl.u32 %v5602, 16
      %v5677 = vrot.slane %v5675, 7
      %v5678 = vrot.slane %v5677, 1
      %v5679 = vshll.u32 %v5605, 16
      %v5681 = vsel %vm967, %v5678, %v5679
      %v5682 = vshrl.u32 %v5605, 16
      %v5684 = vrot.slane %v5682, 7
      %v5685 = vrot.slane %v5684, 1
      %v5687 = vshll.u32 %v5608, 16
      %v5689 = vsel %vm967, %v5685, %v5687
      %v5690 = vshrl.u32 %v5608, 16
      %v5692 = vrot.slane %v5690, 7
      %v5693 = vrot.slane %v5692, 1
      %v5695 = vshll.u32 %v5611, 16
      %v5697 = vsel %vm967, %v5693, %v5695
      %v5698 = vshrl.u32 %v5611, 16
      %v5700 = vrot.slane %v5698, 7
      %v5701 = vrot.slane %v5700, 1
      %v5703 = vshll.u32 %v5614, 16
      %v5705 = vsel %vm967, %v5701, %v5703
      %v5706 = vshrl.u32 %v5614, 16
      %v5708 = vrot.slane %v5706, 7
      %v5709 = vrot.slane %v5708, 1
      %v5710 = vshll.u32 %v5617, 16
      %v5712 = vsel %vm967, %v5709, %v5710
      %v5713 = vshrl.u32 %v5617, 16
      %v5715 = vrot.slane %v5713, 7
      %v5716 = vrot.slane %v5715, 1
      %v5718 = vshll.u32 %v5647, 16
      %v5720 = vsel %vm967, %v5716, %v5718
      %v5721 = vshrl.u32 %v5620, 16
      %v5723 = vrot.slane %v5721, 7
      %v5724 = vrot.slane %v5723, 1
      %v5726 = vshll.u32 %v5623, 16
      %v5728 = vsel %vm967, %v5724, %v5726
      %v5729 = vshrl.u32 %v5623, 16
      %v5731 = vrot.slane %v5729, 7
      %v5732 = vrot.slane %v5731, 1
      %v5734 = vshll.u32 %v5626, 16
      %v5736 = vsel %vm967, %v5732, %v5734
      %v5737 = vshrl.u32 %v5626, 16
      %v5739 = vrot.slane %v5737, 7
      %v5740 = vrot.slane %v5739, 1
      %v5742 = vshll.u32 %v5629, 16
      %v5744 = vsel %vm967, %v5740, %v5742
      %v5745 = vshrl.u32 %v5629, 16
      %v5747 = vrot.slane %v5745, 7
      %v5748 = vrot.slane %v5747, 1
      %v5749 = vshll.u32 %v5632, 16
      %v5751 = vsel %vm967, %v5748, %v5749
      %v5752 = vshrl.u32 %v5632, 16
      %v5754 = vrot.slane %v5752, 7
      %v5755 = vrot.slane %v5754, 1
      %v5757 = vshll.u32 %v5635, 16
      %v5759 = vsel %vm967, %v5755, %v5757
      %v5760 = vshrl.u32 %v5635, 16
      %v5762 = vrot.slane %v5760, 7
      %v5763 = vrot.slane %v5762, 1
      %v5765 = vshll.u32 %v5638, 16
      %v5767 = vsel %vm967, %v5763, %v5765
      %v5768 = vshrl.u32 %v5638, 16
      %v5770 = vrot.slane %v5768, 7
      %v5771 = vrot.slane %v5770, 1
      %v5773 = vshll.u32 %v5641, 16
      %v5775 = vsel %vm967, %v5771, %v5773
      %v5776 = vshrl.u32 %v5641, 16
      %v5778 = vrot.slane %v5776, 7
      %v5779 = vrot.slane %v5778, 1
      %v5780 = vshll.u32 %v5644, 16
      %v5782 = vsel %vm967, %v5779, %v5780
      %v5783 = vshrl.u32 %v5644, 16
      %v5785 = vrot.slane %v5783, 7
      %v5786 = vrot.slane %v5785, 1
      %v5788 = vshll.u32 %v5650, 16
      %v5790 = vsel %vm967, %v5786, %v5788
      %5791 = vst [vmem:[#allocation1] ss:$9 sm:$0xff] %v3455
      %s5792 = scalar_lea.vmem [#allocation1], 1
      %5793 = vst [vmem:[%s5792] ss:$9 sm:$0xff] %v3462
      %s5794 = scalar_lea.vmem [#allocation1], 2
      %5795 = vst [vmem:[%s5794] ss:$9 sm:$0xff] %v3469
      %s5796 = scalar_lea.vmem [#allocation1], 3
      %5797 = vst [vmem:[%s5796] ss:$9 sm:$0xff] %v3476
      %s5798 = scalar_lea.vmem [#allocation1], 4
      %5799 = vst [vmem:[%s5798] ss:$9 sm:$0xff] %v3483
      %s5800 = scalar_lea.vmem [#allocation1], 5
      %5801 = vst [vmem:[%s5800] ss:$9 sm:$0xff] %v3490
      %s5802 = scalar_lea.vmem [#allocation1], 6
      %5803 = vst [vmem:[%s5802] ss:$9 sm:$0xff] %v3497
      %s5804 = scalar_lea.vmem [#allocation1], 7
      %5805 = vst [vmem:[%s5804] ss:$9 sm:$0xff] %v3504
      %v5806 = vld [vmem:[#allocation1] sm:$0xff]
      %5807 = vst [vmem:[#allocation1] ss:$9 sm:$0xff] %v3512
      %5808 = vst [vmem:[%s5792] ss:$9 sm:$0xff] %v4660
      %5809 = vst [vmem:[%s5794] ss:$9 sm:$0xff] %v4667
      %5810 = vst [vmem:[%s5796] ss:$9 sm:$0xff] %v4674
      %5811 = vst [vmem:[%s5798] ss:$9 sm:$0xff] %v4681
      %5812 = vst [vmem:[%s5800] ss:$9 sm:$0xff] %v4688
      %5813 = vst [vmem:[%s5802] ss:$9 sm:$0xff] %v4695
      %5814 = vst [vmem:[%s5804] ss:$9 sm:$0xff] %v4702
      %v5815 = vld [vmem:[#allocation1] sm:$0xff]
      %5816 = vst [vmem:[#allocation1] ss:$9 sm:$0xff] %v4709
      %5817 = vst [vmem:[%s5792] ss:$9 sm:$0xff] %v4717
      %5819 = vst [vmem:[%s5794] ss:$9 sm:$0xff] %v5658
      %5821 = vst [vmem:[%s5796] ss:$9 sm:$0xff] %v5666
      %5823 = vst [vmem:[%s5798] ss:$9 sm:$0xff] %v5674
      %5825 = vst [vmem:[%s5800] ss:$9 sm:$0xff] %v5681
      %5827 = vst [vmem:[%s5802] ss:$9 sm:$0xff] %v5689
      %5829 = vst [vmem:[%s5804] ss:$9 sm:$0xff] %v5697
      %v5830 = vld [vmem:[#allocation1] sm:$0xff]
      %5832 = vst [vmem:[#allocation1] ss:$9 sm:$0xff] %v5705
      %5834 = vst [vmem:[%s5792] ss:$9 sm:$0xff] %v5712
      %5836 = vst [vmem:[%s5794] ss:$9 sm:$0xff] %v5720
      %5838 = vst [vmem:[%s5796] ss:$9 sm:$0xff] %v5728
      %5840 = vst [vmem:[%s5798] ss:$9 sm:$0xff] %v5736
      %5842 = vst [vmem:[%s5800] ss:$9 sm:$0xff] %v5744
      %5844 = vst [vmem:[%s5802] ss:$9 sm:$0xff] %v5751
      %5846 = vst [vmem:[%s5804] ss:$9 sm:$0xff] %v5759
      %v5847 = vld [vmem:[#allocation1] sm:$0xff]
      %5849 = vst [vmem:[#allocation1] ss:$9 sm:$0xff] %v5767
      %5851 = vst [vmem:[%s5792] ss:$9 sm:$0xff] %v5775
      %5853 = vst [vmem:[%s5794] ss:$9 sm:$0xff] %v5782
      %5855 = vst [vmem:[%s5796] ss:$9 sm:$0xff] %v5790
      %v5856 = vld [vmem:[#allocation1] sm:$0xff]
      %v5857 = vsel %vm2223, %v5806, 0
      %v5859 = vsel %vm2223, %v5815, 0
      %v5861 = vsel %vm2223, %v5830, 0
      %v5863 = vsel %vm2223, %v5847, 0
      %v5865 = vsel %vm2223, %v5856, 0
      %5867 = vmatpush.bf16.msra.mxu0 0
      %5868 = vmatpush.bf16.msra.mxu0 0
      %5869 = vmatpush.bf16.msra.mxu0 0
      %5870 = vmatpush.bf16.msra.mxu0 0
      %5871 = vmatpush.bf16.msra.mxu0 0
      %5872 = vmatpush.bf16.msra.mxu0 0
      %5873 = vmatpush.bf16.msra.mxu0 0
      %5874 = vmatpush.bf16.msra.mxu0 %v2258
      %5875 = vmatmul.bf16.gmra.mxu0 %v5857
      %v5876 = vpop.f32.mrf.mxu0
      %v5877 = vadd.f32 0.0, %v5876
      %v5878 = vpop.f32.mrf.mxu0
      %v5879 = vadd.f32 0.0, %v5878
      %5880 = vmatmul.bf16.gmra.mxu0 %v5859
      %v5881 = vpop.f32.mrf.mxu0
      %v5882 = vadd.f32 0.0, %v5881
      %v5883 = vpop.f32.mrf.mxu0
      %v5884 = vadd.f32 0.0, %v5883
      %5885 = vmatmul.bf16.gmra.mxu0 %v5861
      %v5886 = vpop.f32.mrf.mxu0
      %v5887 = vadd.f32 0.0, %v5886
      %v5888 = vpop.f32.mrf.mxu0
      %v5889 = vadd.f32 0.0, %v5888
      %5890 = vmatmul.bf16.gmra.mxu0 %v5863
      %v5891 = vpop.f32.mrf.mxu0
      %v5892 = vadd.f32 0.0, %v5891
      %v5893 = vpop.f32.mrf.mxu0
      %v5894 = vadd.f32 0.0, %v5893
      %5895 = vmatmul.bf16.gmra.mxu0 %v5865
      %v5896 = vpop.f32.mrf.mxu0
      %v5897 = vadd.f32 0.0, %v5896
      %v5898 = vpop.f32.mrf.mxu0
      %5899 = vdwg.mxu0
      %5900 = vst [vmem:[#allocation1] ss:$9 sm:$0xff] %v3110
      %s5901 = scalar_lea.vmem [#allocation1], 1
      %5902 = vst [vmem:[%s5901] ss:$9 sm:$0xff] %v3113
      %s5903 = scalar_lea.vmem [#allocation1], 2
      %5904 = vst [vmem:[%s5903] ss:$9 sm:$0xff] %v3116
      %s5905 = scalar_lea.vmem [#allocation1], 3
      %5906 = vst [vmem:[%s5905] ss:$9 sm:$0xff] %v3119
      %s5907 = scalar_lea.vmem [#allocation1], 4
      %5908 = vst [vmem:[%s5907] ss:$9 sm:$0xff] %v3122
      %s5909 = scalar_lea.vmem [#allocation1], 5
      %5910 = vst [vmem:[%s5909] ss:$9 sm:$0xff] %v3125
      %s5911 = scalar_lea.vmem [#allocation1], 6
      %5912 = vst [vmem:[%s5911] ss:$9 sm:$0xff] %v3128
      %s5913 = scalar_lea.vmem [#allocation1], 7
      %5914 = vst [vmem:[%s5913] ss:$9 sm:$0xff] %v3131
      %v5915 = vld [vmem:[#allocation1] sm:$0xff]
      %5916 = vst [vmem:[#allocation1] ss:$9 sm:$0xff] %v3134
      %5917 = vst [vmem:[%s5901] ss:$9 sm:$0xff] %v4315
      %5918 = vst [vmem:[%s5903] ss:$9 sm:$0xff] %v4318
      %5919 = vst [vmem:[%s5905] ss:$9 sm:$0xff] %v4321
      %5920 = vst [vmem:[%s5907] ss:$9 sm:$0xff] %v4324
      %5921 = vst [vmem:[%s5909] ss:$9 sm:$0xff] %v4327
      %5922 = vst [vmem:[%s5911] ss:$9 sm:$0xff] %v4330
      %5923 = vst [vmem:[%s5913] ss:$9 sm:$0xff] %v4333
      %v5924 = vld [vmem:[#allocation1] sm:$0xff]
      %5925 = vst [vmem:[#allocation1] ss:$9 sm:$0xff] %v4336
      %5926 = vst [vmem:[%s5901] ss:$9 sm:$0xff] %v4339
      %5927 = vst [vmem:[%s5903] ss:$9 sm:$0xff] %v5593
      %5928 = vst [vmem:[%s5905] ss:$9 sm:$0xff] %v5596
      %5929 = vst [vmem:[%s5907] ss:$9 sm:$0xff] %v5599
      %5930 = vst [vmem:[%s5909] ss:$9 sm:$0xff] %v5602
      %5931 = vst [vmem:[%s5911] ss:$9 sm:$0xff] %v5605
      %5932 = vst [vmem:[%s5913] ss:$9 sm:$0xff] %v5608
      %v5933 = vld [vmem:[#allocation1] sm:$0xff]
      %5934 = vst [vmem:[#allocation1] ss:$9 sm:$0xff] %v5611
      %5935 = vst [vmem:[%s5901] ss:$9 sm:$0xff] %v5614
      %5936 = vst [vmem:[%s5903] ss:$9 sm:$0xff] %v5617
      %5937 = vst [vmem:[%s5905] ss:$9 sm:$0xff] %v5620
      %5938 = vst [vmem:[%s5907] ss:$9 sm:$0xff] %v5623
      %5939 = vst [vmem:[%s5909] ss:$9 sm:$0xff] %v5626
      %5940 = vst [vmem:[%s5911] ss:$9 sm:$0xff] %v5629
      %5941 = vst [vmem:[%s5913] ss:$9 sm:$0xff] %v5632
      %v5942 = vld [vmem:[#allocation1] sm:$0xff]
      %5943 = vst [vmem:[#allocation1] ss:$9 sm:$0xff] %v5635
      %5944 = vst [vmem:[%s5901] ss:$9 sm:$0xff] %v5638
      %5945 = vst [vmem:[%s5903] ss:$9 sm:$0xff] %v5641
      %5946 = vst [vmem:[%s5905] ss:$9 sm:$0xff] %v5644
      %v5947 = vld [vmem:[#allocation1] sm:$0xff]
      %v5948 = vsel %vm2223, %v5915, 0
      %v5950 = vsel %vm2223, %v5924, 0
      %v5952 = vsel %vm2223, %v5933, 0
      %v5954 = vsel %vm2223, %v5942, 0
      %v5956 = vsel %vm2223, %v5947, 0
      %5958 = vmatpush.bf16.msra.mxu0 0
      %5959 = vmatpush.bf16.msra.mxu0 0
      %5960 = vmatpush.bf16.msra.mxu0 0
      %5961 = vmatpush.bf16.msra.mxu0 0
      %5962 = vmatpush.bf16.msra.mxu0 0
      %5963 = vmatpush.bf16.msra.mxu0 0
      %5964 = vmatpush.bf16.msra.mxu0 0
      %5965 = vmatpush.bf16.msra.mxu0 %v2531
      %5966 = vmatmul.bf16.gmra.mxu0 %v5948
      %v5967 = vpop.f32.mrf.mxu0
      %v5968 = vadd.f32 %v5877, %v5967
      %v5969 = vpop.f32.mrf.mxu0
      %v5970 = vadd.f32 %v5879, %v5969
      %5971 = vmatmul.bf16.gmra.mxu0 %v5950
      %v5972 = vpop.f32.mrf.mxu0
      %v5973 = vadd.f32 %v5882, %v5972
      %v5974 = vpop.f32.mrf.mxu0
      %v5975 = vadd.f32 %v5884, %v5974
      %5976 = vmatmul.bf16.gmra.mxu0 %v5952
      %v5977 = vpop.f32.mrf.mxu0
      %v5978 = vadd.f32 %v5887, %v5977
      %v5979 = vpop.f32.mrf.mxu0
      %v5980 = vadd.f32 %v5889, %v5979
      %5981 = vmatmul.bf16.gmra.mxu0 %v5954
      %v5982 = vpop.f32.mrf.mxu0
      %v5983 = vadd.f32 %v5892, %v5982
      %v5984 = vpop.f32.mrf.mxu0
      %v5985 = vadd.f32 %v5894, %v5984
      %5986 = vmatmul.bf16.gmra.mxu0 %v5956
      %v5987 = vpop.f32.mrf.mxu0
      %v5988 = vadd.f32 %v5897, %v5987
      %v5989 = vpop.f32.mrf.mxu0
      %5990 = vdwg.mxu0
      %5991 = vst [vmem:[#allocation1] sm:$0xff] %v417
      %5992 = vst [vmem:[#allocation1 + $0x20] sm:$0xff] %v418
      %s5993 = scalar_lea.vmem [#allocation1], 1
      %v5994 = vld [vmem:[%s5993] ss:$4 sm:$0xff]
      %s5995 = scalar_lea.vmem [#allocation1], 2
      %v5996 = vld [vmem:[%s5995] ss:$4 sm:$0xff]
      %s5997 = scalar_lea.vmem [#allocation1], 3
      %v5998 = vld [vmem:[%s5997] ss:$4 sm:$0xff]
      %s5999 = scalar_lea.vmem [#allocation1], 32
      %v6000 = vld [vmem:[%s5999] ss:$4 sm:$0xff]
      %s6001 = scalar_lea.vmem [#allocation1], 33
      %v6002 = vld [vmem:[%s6001] ss:$4 sm:$0xff]
      %s6003 = scalar_lea.vmem [#allocation1], 34
      %v6004 = vld [vmem:[%s6003] ss:$4 sm:$0xff]
      %s6005 = scalar_lea.vmem [#allocation1], 35
      %v6006 = vld [vmem:[%s6005] ss:$4 sm:$0xff]
      %6007 = vst [vmem:[#allocation1] sm:$0xff] %v419
      %v6008 = vld [vmem:[#allocation1] ss:$4 sm:$0xff]
      %v6009 = vld [vmem:[%s5993] ss:$4 sm:$0xff]
      %6010 = vst [vmem:[#allocation1 + $0x20] sm:$0xff] %v420
      %v6011 = vld [vmem:[%s6001] ss:$4 sm:$0xff]
      %v6012 = vld [vmem:[%s6003] ss:$4 sm:$0xff]
      %v6013 = vld [vmem:[%s6005] ss:$4 sm:$0xff]
      %6014 = vst [vmem:[#allocation1] sm:$0xff] %v421
      %6015 = vst [vmem:[#allocation1 + $0x20] sm:$0xff] %v422
      %v6016 = vld [vmem:[#allocation1] ss:$4 sm:$0xff]
      %v6017 = vld [vmem:[%s5993] ss:$4 sm:$0xff]
      %v6018 = vld [vmem:[%s5995] ss:$4 sm:$0xff]
      %v6019 = vld [vmem:[%s5997] ss:$4 sm:$0xff]
      %v6020 = vld [vmem:[%s5999] ss:$4 sm:$0xff]
      %v6021 = vld [vmem:[%s6001] ss:$4 sm:$0xff]
      %6022 = vst [vmem:[#allocation1] sm:$0xff] %v423
      %6023 = vst [vmem:[#allocation1 + $0x20] sm:$0xff] %v424
      %v6024 = vld [vmem:[%s5993] ss:$4 sm:$0xff]
      %v6025 = vld [vmem:[%s5995] ss:$4 sm:$0xff]
      %v6026 = vld [vmem:[%s5997] ss:$4 sm:$0xff]
      %v6027 = vld [vmem:[%s5999] ss:$4 sm:$0xff]
      %v6028 = vld [vmem:[%s6001] ss:$4 sm:$0xff]
      %v6029 = vld [vmem:[%s6003] ss:$4 sm:$0xff]
      %v6030 = vld [vmem:[%s6005] ss:$4 sm:$0xff]
      %6031 = vst [vmem:[#allocation1] sm:$0xff] %v425
      %v6032 = vld [vmem:[#allocation1] ss:$4 sm:$0xff]
      %v6033 = vld [vmem:[%s5993] ss:$4 sm:$0xff]
      %6034 = vst [vmem:[#allocation1 + $0x20] sm:$0xff] %v426
      %v6035 = vld [vmem:[%s6001] ss:$4 sm:$0xff]
      %v6036 = vld [vmem:[%s6003] ss:$4 sm:$0xff]
      %v6037 = vld [vmem:[%s6005] ss:$4 sm:$0xff]
      %6038 = vst [vmem:[#allocation1] sm:$0xff] %v427
      %6039 = vst [vmem:[#allocation1 + $0x20] sm:$0xff] %v428
      %v6040 = vld [vmem:[#allocation1] ss:$4 sm:$0xff]
      %v6041 = vld [vmem:[%s5993] ss:$4 sm:$0xff]
      %v6042 = vld [vmem:[%s5995] ss:$4 sm:$0xff]
      %v6043 = vld [vmem:[%s5997] ss:$4 sm:$0xff]
      %v6044 = vld [vmem:[%s5999] ss:$4 sm:$0xff]
      %v6045 = vld [vmem:[%s6001] ss:$4 sm:$0xff]
      %6046 = vst [vmem:[#allocation1] ss:$9 sm:$0xff] %v5994
      %s6047 = scalar_lea.vmem [#allocation1], 1
      %6048 = vst [vmem:[%s6047] ss:$9 sm:$0xff] %v5996
      %s6049 = scalar_lea.vmem [#allocation1], 2
      %6050 = vst [vmem:[%s6049] ss:$9 sm:$0xff] %v5998
      %s6051 = scalar_lea.vmem [#allocation1], 3
      %6052 = vst [vmem:[%s6051] ss:$9 sm:$0xff] %v6000
      %s6053 = scalar_lea.vmem [#allocation1], 4
      %6054 = vst [vmem:[%s6053] ss:$9 sm:$0xff] %v6002
      %s6055 = scalar_lea.vmem [#allocation1], 5
      %6056 = vst [vmem:[%s6055] ss:$9 sm:$0xff] %v6004
      %s6057 = scalar_lea.vmem [#allocation1], 6
      %6058 = vst [vmem:[%s6057] ss:$9 sm:$0xff] %v6006
      %s6059 = scalar_lea.vmem [#allocation1], 7
      %6060 = vst [vmem:[%s6059] ss:$9 sm:$0xff] %v6008
      %v6061 = vld [vmem:[#allocation1] sm:$0xff]
      %6062 = vst [vmem:[#allocation1] ss:$9 sm:$0xff] %v6009
      %6063 = vst [vmem:[%s6047] ss:$9 sm:$0xff] %v6011
      %6064 = vst [vmem:[%s6049] ss:$9 sm:$0xff] %v6012
      %6065 = vst [vmem:[%s6051] ss:$9 sm:$0xff] %v6013
      %6066 = vst [vmem:[%s6053] ss:$9 sm:$0xff] %v6016
      %6067 = vst [vmem:[%s6055] ss:$9 sm:$0xff] %v6017
      %6068 = vst [vmem:[%s6057] ss:$9 sm:$0xff] %v6018
      %6069 = vst [vmem:[%s6059] ss:$9 sm:$0xff] %v6019
      %v6070 = vld [vmem:[#allocation1] sm:$0xff]
      %6071 = vst [vmem:[#allocation1] ss:$9 sm:$0xff] %v6020
      %6072 = vst [vmem:[%s6047] ss:$9 sm:$0xff] %v6021
      %6073 = vst [vmem:[%s6049] ss:$9 sm:$0xff] %v6024
      %6074 = vst [vmem:[%s6051] ss:$9 sm:$0xff] %v6025
      %6075 = vst [vmem:[%s6053] ss:$9 sm:$0xff] %v6026
      %6076 = vst [vmem:[%s6055] ss:$9 sm:$0xff] %v6027
      %6077 = vst [vmem:[%s6057] ss:$9 sm:$0xff] %v6028
      %6078 = vst [vmem:[%s6059] ss:$9 sm:$0xff] %v6029
      %v6079 = vld [vmem:[#allocation1] sm:$0xff]
      %6080 = vst [vmem:[#allocation1] ss:$9 sm:$0xff] %v6030
      %6081 = vst [vmem:[%s6047] ss:$9 sm:$0xff] %v6032
      %6082 = vst [vmem:[%s6049] ss:$9 sm:$0xff] %v6033
      %6083 = vst [vmem:[%s6051] ss:$9 sm:$0xff] %v6035
      %6084 = vst [vmem:[%s6053] ss:$9 sm:$0xff] %v6036
      %6085 = vst [vmem:[%s6055] ss:$9 sm:$0xff] %v6037
      %6086 = vst [vmem:[%s6057] ss:$9 sm:$0xff] %v6040
      %6087 = vst [vmem:[%s6059] ss:$9 sm:$0xff] %v6041
      %v6088 = vld [vmem:[#allocation1] sm:$0xff]
      %6089 = vst [vmem:[#allocation1] ss:$9 sm:$0xff] %v6042
      %6090 = vst [vmem:[%s6047] ss:$9 sm:$0xff] %v6043
      %6091 = vst [vmem:[%s6049] ss:$9 sm:$0xff] %v6044
      %6092 = vst [vmem:[%s6051] ss:$9 sm:$0xff] %v6045
      %v6093 = vld [vmem:[#allocation1] sm:$0xff]
      %v6094 = vsel %vm2223, %v6061, 0
      %v6096 = vsel %vm2223, %v6070, 0
      %v6098 = vsel %vm2223, %v6079, 0
      %v6100 = vsel %vm2223, %v6088, 0
      %v6102 = vsel %vm2223, %v6093, 0
      %6104 = vmatpush.bf16.msra.mxu0 0
      %6105 = vmatpush.bf16.msra.mxu0 0
      %6106 = vmatpush.bf16.msra.mxu0 0
      %6107 = vmatpush.bf16.msra.mxu0 0
      %6108 = vmatpush.bf16.msra.mxu0 0
      %6109 = vmatpush.bf16.msra.mxu0 0
      %6110 = vmatpush.bf16.msra.mxu0 0
      %6111 = vmatpush.bf16.msra.mxu0 %v2979
      %6112 = vmatmul.bf16.gmra.mxu0 %v6094
      %v6113 = vpop.f32.mrf.mxu0
      %v6114 = vadd.f32 0.0, %v6113
      %v6115 = vpop.f32.mrf.mxu0
      %v6116 = vadd.f32 0.0, %v6115
      %6117 = vmatmul.bf16.gmra.mxu0 %v6096
      %v6118 = vpop.f32.mrf.mxu0
      %v6119 = vadd.f32 0.0, %v6118
      %v6120 = vpop.f32.mrf.mxu0
      %v6121 = vadd.f32 0.0, %v6120
      %6122 = vmatmul.bf16.gmra.mxu0 %v6098
      %v6123 = vpop.f32.mrf.mxu0
      %v6124 = vadd.f32 0.0, %v6123
      %v6125 = vpop.f32.mrf.mxu0
      %v6126 = vadd.f32 0.0, %v6125
      %6127 = vmatmul.bf16.gmra.mxu0 %v6100
      %v6128 = vpop.f32.mrf.mxu0
      %v6129 = vadd.f32 0.0, %v6128
      %v6130 = vpop.f32.mrf.mxu0
      %v6131 = vadd.f32 0.0, %v6130
      %6132 = vmatmul.bf16.gmra.mxu0 %v6102
      %v6133 = vpop.f32.mrf.mxu0
      %v6134 = vadd.f32 0.0, %v6133
      %v6135 = vpop.f32.mrf.mxu0
      %6136 = vdwg.mxu0
      %v6137 = vadd.f32 %v5968, %v6114
      %v6138 = vadd.f32 %v5970, %v6116
      %v6139 = vadd.f32 %v5973, %v6119
      %v6140 = vadd.f32 %v5975, %v6121
      %v6141 = vadd.f32 %v5978, %v6124
      %v6142 = vadd.f32 %v5980, %v6126
      %v6143 = vadd.f32 %v5983, %v6129
      %v6144 = vadd.f32 %v5985, %v6131
      %v6145 = vadd.f32 %v5988, %v6134
      %v6149 = vrot.slane %v429, 3
      %v6150 = vrot.slane %v430, 3
      %v6151 = vrot.slane %v431, 3
      %v6154 = vsel %vm529, %v429, %v6149
      %v6155 = vsel %vm533, %v429, %v6149
      %v6157 = vrot.slane %v6155, 1
      %v6158 = vsel %vm537, %v429, %v6149
      %v6160 = vrot.slane %v6158, 2
      %v6161 = vsel %vm541, %v429, %v6149
      %v6163 = vrot.slane %v6161, 3
      %v6166 = vsel %vm529, %v430, %v6150
      %v6167 = vsel %vm533, %v430, %v6150
      %v6169 = vrot.slane %v6167, 1
      %v6170 = vsel %vm537, %v430, %v6150
      %v6172 = vrot.slane %v6170, 2
      %v6173 = vsel %vm541, %v430, %v6150
      %v6175 = vrot.slane %v6173, 3
      %v6178 = vsel %vm529, %v431, %v6151
      %6179 = vst [vmem:[#allocation1] ss:$9 sm:$0xff] %v4315
      %s6180 = scalar_lea.vmem [#allocation1], 1
      %6181 = vst [vmem:[%s6180] ss:$9 sm:$0xff] %v4318
      %s6182 = scalar_lea.vmem [#allocation1], 2
      %6183 = vst [vmem:[%s6182] ss:$9 sm:$0xff] %v4321
      %s6184 = scalar_lea.vmem [#allocation1], 3
      %6185 = vst [vmem:[%s6184] ss:$9 sm:$0xff] %v4324
      %s6186 = scalar_lea.vmem [#allocation1], 4
      %6187 = vst [vmem:[%s6186] ss:$9 sm:$0xff] %v4327
      %s6188 = scalar_lea.vmem [#allocation1], 5
      %6189 = vst [vmem:[%s6188] ss:$9 sm:$0xff] %v4330
      %s6190 = scalar_lea.vmem [#allocation1], 6
      %6191 = vst [vmem:[%s6190] ss:$9 sm:$0xff] %v4333
      %s6192 = scalar_lea.vmem [#allocation1], 7
      %6193 = vst [vmem:[%s6192] ss:$9 sm:$0xff] %v4336
      %v6194 = vld [vmem:[#allocation1] sm:$0xff]
      %6195 = vst [vmem:[#allocation1] ss:$9 sm:$0xff] %v4339
      %6196 = vst [vmem:[%s6180] ss:$9 sm:$0xff] %v5593
      %6197 = vst [vmem:[%s6182] ss:$9 sm:$0xff] %v5596
      %6198 = vst [vmem:[%s6184] ss:$9 sm:$0xff] %v5599
      %6199 = vst [vmem:[%s6186] ss:$9 sm:$0xff] %v5602
      %6200 = vst [vmem:[%s6188] ss:$9 sm:$0xff] %v5605
      %6201 = vst [vmem:[%s6190] ss:$9 sm:$0xff] %v5608
      %6202 = vst [vmem:[%s6192] ss:$9 sm:$0xff] %v5611
      %v6203 = vld [vmem:[#allocation1] sm:$0xff]
      %6204 = vst [vmem:[#allocation1] ss:$9 sm:$0xff] %v5614
      %6205 = vst [vmem:[%s6180] ss:$9 sm:$0xff] %v5617
      %6206 = vst [vmem:[%s6182] ss:$9 sm:$0xff] %v5620
      %6207 = vst [vmem:[%s6184] ss:$9 sm:$0xff] %v5623
      %6208 = vst [vmem:[%s6186] ss:$9 sm:$0xff] %v5626
      %6209 = vst [vmem:[%s6188] ss:$9 sm:$0xff] %v5629
      %6210 = vst [vmem:[%s6190] ss:$9 sm:$0xff] %v5632
      %6211 = vst [vmem:[%s6192] ss:$9 sm:$0xff] %v5635
      %v6212 = vld [vmem:[#allocation1] sm:$0xff]
      %6213 = vst [vmem:[#allocation1] ss:$9 sm:$0xff] %v5638
      %6214 = vst [vmem:[%s6180] ss:$9 sm:$0xff] %v5641
      %6215 = vst [vmem:[%s6182] ss:$9 sm:$0xff] %v5644
      %6216 = vst [vmem:[%s6184] ss:$9 sm:$0xff] %v6154
      %6218 = vst [vmem:[%s6186] ss:$9 sm:$0xff] %v6157
      %6220 = vst [vmem:[%s6188] ss:$9 sm:$0xff] %v6160
      %6222 = vst [vmem:[%s6190] ss:$9 sm:$0xff] %v6163
      %6223 = vst [vmem:[%s6192] ss:$9 sm:$0xff] %v6166
      %v6224 = vld [vmem:[#allocation1] sm:$0xff]
      %6226 = vst [vmem:[#allocation1] ss:$9 sm:$0xff] %v6169
      %6228 = vst [vmem:[%s6180] ss:$9 sm:$0xff] %v6172
      %6230 = vst [vmem:[%s6182] ss:$9 sm:$0xff] %v6175
      %6231 = vst [vmem:[%s6184] ss:$9 sm:$0xff] %v6178
      %v6232 = vld [vmem:[#allocation1] sm:$0xff]
      %v6233 = vsel %vm2223, %v6194, 0
      %v6235 = vsel %vm2223, %v6203, 0
      %v6237 = vsel %vm2223, %v6212, 0
      %v6239 = vsel %vm2223, %v6224, 0
      %v6241 = vsel %vm2223, %v6232, 0
      %6243 = vmatpush.bf16.msra.mxu0 0
      %6244 = vmatpush.bf16.msra.mxu0 0
      %6245 = vmatpush.bf16.msra.mxu0 0
      %6246 = vmatpush.bf16.msra.mxu0 0
      %6247 = vmatpush.bf16.msra.mxu0 0
      %6248 = vmatpush.bf16.msra.mxu0 0
      %6249 = vmatpush.bf16.msra.mxu0 0
      %6250 = vmatpush.bf16.msra.mxu0 %v3323
      %6251 = vmatmul.bf16.gmra.mxu0 %v6233
      %v6252 = vpop.f32.mrf.mxu0
      %v6253 = vadd.f32 0.0, %v6252
      %v6254 = vpop.f32.mrf.mxu0
      %v6255 = vadd.f32 0.0, %v6254
      %6256 = vmatmul.bf16.gmra.mxu0 %v6235
      %v6257 = vpop.f32.mrf.mxu0
      %v6258 = vadd.f32 0.0, %v6257
      %v6259 = vpop.f32.mrf.mxu0
      %v6260 = vadd.f32 0.0, %v6259
      %6261 = vmatmul.bf16.gmra.mxu0 %v6237
      %v6262 = vpop.f32.mrf.mxu0
      %v6263 = vadd.f32 0.0, %v6262
      %v6264 = vpop.f32.mrf.mxu0
      %v6265 = vadd.f32 0.0, %v6264
      %6266 = vmatmul.bf16.gmra.mxu0 %v6239
      %v6267 = vpop.f32.mrf.mxu0
      %v6268 = vadd.f32 0.0, %v6267
      %v6269 = vpop.f32.mrf.mxu0
      %v6270 = vadd.f32 0.0, %v6269
      %6271 = vmatmul.bf16.gmra.mxu0 %v6241
      %v6272 = vpop.f32.mrf.mxu0
      %v6273 = vadd.f32 0.0, %v6272
      %v6274 = vpop.f32.mrf.mxu0
      %6275 = vdwg.mxu0
      %v6276 = vadd.f32 %v6137, %v6253
      %v6277 = vadd.f32 %v6138, %v6255
      %v6278 = vadd.f32 %v6139, %v6258
      %v6279 = vadd.f32 %v6140, %v6260
      %v6280 = vadd.f32 %v6141, %v6263
      %v6281 = vadd.f32 %v6142, %v6265
      %v6282 = vadd.f32 %v6143, %v6268
      %v6283 = vadd.f32 %v6144, %v6270
      %v6284 = vadd.f32 %v6145, %v6273
      %v6285 = vsel %vm533, %v431, %v6151
      %v6287 = vrot.slane %v6285, 1
      %v6288 = vshrl.u32 %v6154, 16
      %v6290 = vrot.slane %v6288, 7
      %v6291 = vrot.slane %v6290, 1
      %v6292 = vshll.u32 %v6157, 16
      %v6294 = vsel %vm967, %v6291, %v6292
      %v6295 = vshrl.u32 %v6157, 16
      %v6297 = vrot.slane %v6295, 7
      %v6298 = vrot.slane %v6297, 1
      %v6299 = vshll.u32 %v6160, 16
      %v6301 = vsel %vm967, %v6298, %v6299
      %v6302 = vshrl.u32 %v6160, 16
      %v6304 = vrot.slane %v6302, 7
      %v6305 = vrot.slane %v6304, 1
      %v6306 = vshll.u32 %v6163, 16
      %v6308 = vsel %vm967, %v6305, %v6306
      %v6309 = vshrl.u32 %v6163, 16
      %v6311 = vrot.slane %v6309, 7
      %v6312 = vrot.slane %v6311, 1
      %v6313 = vshll.u32 %v6166, 16
      %v6315 = vsel %vm967, %v6312, %v6313
      %v6316 = vshrl.u32 %v6166, 16
      %v6318 = vrot.slane %v6316, 7
      %v6319 = vrot.slane %v6318, 1
      %v6320 = vshll.u32 %v6169, 16
      %v6322 = vsel %vm967, %v6319, %v6320
      %v6323 = vshrl.u32 %v6169, 16
      %v6325 = vrot.slane %v6323, 7
      %v6326 = vrot.slane %v6325, 1
      %v6327 = vshll.u32 %v6172, 16
      %v6329 = vsel %vm967, %v6326, %v6327
      %v6330 = vshrl.u32 %v6172, 16
      %v6332 = vrot.slane %v6330, 7
      %v6333 = vrot.slane %v6332, 1
      %v6334 = vshll.u32 %v6175, 16
      %v6336 = vsel %vm967, %v6333, %v6334
      %v6337 = vshrl.u32 %v6175, 16
      %v6339 = vrot.slane %v6337, 7
      %v6340 = vrot.slane %v6339, 1
      %v6341 = vshll.u32 %v6178, 16
      %v6343 = vsel %vm967, %v6340, %v6341
      %v6344 = vshrl.u32 %v6178, 16
      %v6346 = vrot.slane %v6344, 7
      %v6347 = vrot.slane %v6346, 1
      %v6349 = vshll.u32 %v6287, 16
      %v6351 = vsel %vm967, %v6347, %v6349
      %6352 = vst [vmem:[#allocation1] ss:$9 sm:$0xff] %v4660
      %s6353 = scalar_lea.vmem [#allocation1], 1
      %6354 = vst [vmem:[%s6353] ss:$9 sm:$0xff] %v4667
      %s6355 = scalar_lea.vmem [#allocation1], 2
      %6356 = vst [vmem:[%s6355] ss:$9 sm:$0xff] %v4674
      %s6357 = scalar_lea.vmem [#allocation1], 3
      %6358 = vst [vmem:[%s6357] ss:$9 sm:$0xff] %v4681
      %s6359 = scalar_lea.vmem [#allocation1], 4
      %6360 = vst [vmem:[%s6359] ss:$9 sm:$0xff] %v4688
      %s6361 = scalar_lea.vmem [#allocation1], 5
      %6362 = vst [vmem:[%s6361] ss:$9 sm:$0xff] %v4695
      %s6363 = scalar_lea.vmem [#allocation1], 6
      %6364 = vst [vmem:[%s6363] ss:$9 sm:$0xff] %v4702
      %s6365 = scalar_lea.vmem [#allocation1], 7
      %6366 = vst [vmem:[%s6365] ss:$9 sm:$0xff] %v4709
      %v6367 = vld [vmem:[#allocation1] sm:$0xff]
      %6368 = vst [vmem:[#allocation1] ss:$9 sm:$0xff] %v4717
      %6369 = vst [vmem:[%s6353] ss:$9 sm:$0xff] %v5658
      %6370 = vst [vmem:[%s6355] ss:$9 sm:$0xff] %v5666
      %6371 = vst [vmem:[%s6357] ss:$9 sm:$0xff] %v5674
      %6372 = vst [vmem:[%s6359] ss:$9 sm:$0xff] %v5681
      %6373 = vst [vmem:[%s6361] ss:$9 sm:$0xff] %v5689
      %6374 = vst [vmem:[%s6363] ss:$9 sm:$0xff] %v5697
      %6375 = vst [vmem:[%s6365] ss:$9 sm:$0xff] %v5705
      %v6376 = vld [vmem:[#allocation1] sm:$0xff]
      %6377 = vst [vmem:[#allocation1] ss:$9 sm:$0xff] %v5712
      %6378 = vst [vmem:[%s6353] ss:$9 sm:$0xff] %v5720
      %6379 = vst [vmem:[%s6355] ss:$9 sm:$0xff] %v5728
      %6380 = vst [vmem:[%s6357] ss:$9 sm:$0xff] %v5736
      %6381 = vst [vmem:[%s6359] ss:$9 sm:$0xff] %v5744
      %6382 = vst [vmem:[%s6361] ss:$9 sm:$0xff] %v5751
      %6383 = vst [vmem:[%s6363] ss:$9 sm:$0xff] %v5759
      %6384 = vst [vmem:[%s6365] ss:$9 sm:$0xff] %v5767
      %v6385 = vld [vmem:[#allocation1] sm:$0xff]
      %6386 = vst [vmem:[#allocation1] ss:$9 sm:$0xff] %v5775
      %6387 = vst [vmem:[%s6353] ss:$9 sm:$0xff] %v5782
      %6388 = vst [vmem:[%s6355] ss:$9 sm:$0xff] %v5790
      %6390 = vst [vmem:[%s6357] ss:$9 sm:$0xff] %v6294
      %6392 = vst [vmem:[%s6359] ss:$9 sm:$0xff] %v6301
      %6394 = vst [vmem:[%s6361] ss:$9 sm:$0xff] %v6308
      %6396 = vst [vmem:[%s6363] ss:$9 sm:$0xff] %v6315
      %6398 = vst [vmem:[%s6365] ss:$9 sm:$0xff] %v6322
      %v6399 = vld [vmem:[#allocation1] sm:$0xff]
      %6401 = vst [vmem:[#allocation1] ss:$9 sm:$0xff] %v6329
      %6403 = vst [vmem:[%s6353] ss:$9 sm:$0xff] %v6336
      %6405 = vst [vmem:[%s6355] ss:$9 sm:$0xff] %v6343
      %6407 = vst [vmem:[%s6357] ss:$9 sm:$0xff] %v6351
      %v6408 = vld [vmem:[#allocation1] sm:$0xff]
      %v6409 = vsel %vm2223, %v6367, 0
      %v6411 = vsel %vm2223, %v6376, 0
      %v6413 = vsel %vm2223, %v6385, 0
      %v6415 = vsel %vm2223, %v6399, 0
      %v6417 = vsel %vm2223, %v6408, 0
      %6419 = vmatpush.bf16.msra.mxu0 0
      %6420 = vmatpush.bf16.msra.mxu0 0
      %6421 = vmatpush.bf16.msra.mxu0 0
      %6422 = vmatpush.bf16.msra.mxu0 0
      %6423 = vmatpush.bf16.msra.mxu0 0
      %6424 = vmatpush.bf16.msra.mxu0 0
      %6425 = vmatpush.bf16.msra.mxu0 0
      %6426 = vmatpush.bf16.msra.mxu0 %v3704
      %6427 = vmatmul.bf16.gmra.mxu0 %v6409
      %v6428 = vpop.f32.mrf.mxu0
      %v6429 = vadd.f32 0.0, %v6428
      %v6430 = vpop.f32.mrf.mxu0
      %v6431 = vadd.f32 0.0, %v6430
      %6432 = vmatmul.bf16.gmra.mxu0 %v6411
      %v6433 = vpop.f32.mrf.mxu0
      %v6434 = vadd.f32 0.0, %v6433
      %v6435 = vpop.f32.mrf.mxu0
      %v6436 = vadd.f32 0.0, %v6435
      %6437 = vmatmul.bf16.gmra.mxu0 %v6413
      %v6438 = vpop.f32.mrf.mxu0
      %v6439 = vadd.f32 0.0, %v6438
      %v6440 = vpop.f32.mrf.mxu0
      %v6441 = vadd.f32 0.0, %v6440
      %6442 = vmatmul.bf16.gmra.mxu0 %v6415
      %v6443 = vpop.f32.mrf.mxu0
      %v6444 = vadd.f32 0.0, %v6443
      %v6445 = vpop.f32.mrf.mxu0
      %v6446 = vadd.f32 0.0, %v6445
      %6447 = vmatmul.bf16.gmra.mxu0 %v6417
      %v6448 = vpop.f32.mrf.mxu0
      %v6449 = vadd.f32 0.0, %v6448
      %v6450 = vpop.f32.mrf.mxu0
      %6451 = vdwg.mxu0
      %v6452 = vadd.f32 %v6276, %v6429
      %v6453 = vadd.f32 %v6277, %v6431
      %v6454 = vadd.f32 %v6278, %v6434
      %v6455 = vadd.f32 %v6279, %v6436
      %v6456 = vadd.f32 %v6280, %v6439
      %v6457 = vadd.f32 %v6281, %v6441
      %v6458 = vadd.f32 %v6282, %v6444
      %v6459 = vadd.f32 %v6283, %v6446
      %v6460 = vadd.f32 %v6284, %v6449
      %6461 = vst [vmem:[#allocation1] sm:$0xff] %v420
      %6462 = vst [vmem:[#allocation1 + $0x20] sm:$0xff] %v421
      %s6463 = scalar_lea.vmem [#allocation1], 1
      %v6464 = vld [vmem:[%s6463] ss:$4 sm:$0xff]
      %s6465 = scalar_lea.vmem [#allocation1], 2
      %v6466 = vld [vmem:[%s6465] ss:$4 sm:$0xff]
      %s6467 = scalar_lea.vmem [#allocation1], 3
      %v6468 = vld [vmem:[%s6467] ss:$4 sm:$0xff]
      %s6469 = scalar_lea.vmem [#allocation1], 32
      %v6470 = vld [vmem:[%s6469] ss:$4 sm:$0xff]
      %s6471 = scalar_lea.vmem [#allocation1], 33
      %v6472 = vld [vmem:[%s6471] ss:$4 sm:$0xff]
      %s6473 = scalar_lea.vmem [#allocation1], 34
      %v6474 = vld [vmem:[%s6473] ss:$4 sm:$0xff]
      %s6475 = scalar_lea.vmem [#allocation1], 35
      %v6476 = vld [vmem:[%s6475] ss:$4 sm:$0xff]
      %6477 = vst [vmem:[#allocation1] sm:$0xff] %v422
      %v6478 = vld [vmem:[#allocation1] ss:$4 sm:$0xff]
      %v6479 = vld [vmem:[%s6463] ss:$4 sm:$0xff]
      %6480 = vst [vmem:[#allocation1 + $0x20] sm:$0xff] %v423
      %v6481 = vld [vmem:[%s6471] ss:$4 sm:$0xff]
      %v6482 = vld [vmem:[%s6473] ss:$4 sm:$0xff]
      %v6483 = vld [vmem:[%s6475] ss:$4 sm:$0xff]
      %6484 = vst [vmem:[#allocation1] sm:$0xff] %v424
      %6485 = vst [vmem:[#allocation1 + $0x20] sm:$0xff] %v425
      %v6486 = vld [vmem:[#allocation1] ss:$4 sm:$0xff]
      %v6487 = vld [vmem:[%s6463] ss:$4 sm:$0xff]
      %v6488 = vld [vmem:[%s6465] ss:$4 sm:$0xff]
      %v6489 = vld [vmem:[%s6467] ss:$4 sm:$0xff]
      %v6490 = vld [vmem:[%s6469] ss:$4 sm:$0xff]
      %v6491 = vld [vmem:[%s6471] ss:$4 sm:$0xff]
      %6492 = vst [vmem:[#allocation1] sm:$0xff] %v426
      %6493 = vst [vmem:[#allocation1 + $0x20] sm:$0xff] %v427
      %v6494 = vld [vmem:[%s6463] ss:$4 sm:$0xff]
      %v6495 = vld [vmem:[%s6465] ss:$4 sm:$0xff]
      %v6496 = vld [vmem:[%s6467] ss:$4 sm:$0xff]
      %v6497 = vld [vmem:[%s6469] ss:$4 sm:$0xff]
      %v6498 = vld [vmem:[%s6471] ss:$4 sm:$0xff]
      %v6499 = vld [vmem:[%s6473] ss:$4 sm:$0xff]
      %v6500 = vld [vmem:[%s6475] ss:$4 sm:$0xff]
      %6501 = vst [vmem:[#allocation1] sm:$0xff] %v428
      %v6502 = vld [vmem:[#allocation1] ss:$4 sm:$0xff]
      %v6503 = vld [vmem:[%s6463] ss:$4 sm:$0xff]
      %6504 = vst [vmem:[#allocation1 + $0x20] sm:$0xff] %v429
      %v6505 = vld [vmem:[%s6471] ss:$4 sm:$0xff]
      %v6506 = vld [vmem:[%s6473] ss:$4 sm:$0xff]
      %v6507 = vld [vmem:[%s6475] ss:$4 sm:$0xff]
      %6508 = vst [vmem:[#allocation1] sm:$0xff] %v430
      %6509 = vst [vmem:[#allocation1 + $0x20] sm:$0xff] %v431
      %v6510 = vld [vmem:[#allocation1] ss:$4 sm:$0xff]
      %v6511 = vld [vmem:[%s6463] ss:$4 sm:$0xff]
      %v6512 = vld [vmem:[%s6465] ss:$4 sm:$0xff]
      %v6513 = vld [vmem:[%s6467] ss:$4 sm:$0xff]
      %v6514 = vld [vmem:[%s6469] ss:$4 sm:$0xff]
      %v6515 = vld [vmem:[%s6471] ss:$4 sm:$0xff]
      %6516 = vst [vmem:[#allocation1] ss:$9 sm:$0xff] %v6464
      %s6517 = scalar_lea.vmem [#allocation1], 1
      %6518 = vst [vmem:[%s6517] ss:$9 sm:$0xff] %v6466
      %s6519 = scalar_lea.vmem [#allocation1], 2
      %6520 = vst [vmem:[%s6519] ss:$9 sm:$0xff] %v6468
      %s6521 = scalar_lea.vmem [#allocation1], 3
      %6522 = vst [vmem:[%s6521] ss:$9 sm:$0xff] %v6470
      %s6523 = scalar_lea.vmem [#allocation1], 4
      %6524 = vst [vmem:[%s6523] ss:$9 sm:$0xff] %v6472
      %s6525 = scalar_lea.vmem [#allocation1], 5
      %6526 = vst [vmem:[%s6525] ss:$9 sm:$0xff] %v6474
      %s6527 = scalar_lea.vmem [#allocation1], 6
      %6528 = vst [vmem:[%s6527] ss:$9 sm:$0xff] %v6476
      %s6529 = scalar_lea.vmem [#allocation1], 7
      %6530 = vst [vmem:[%s6529] ss:$9 sm:$0xff] %v6478
      %v6531 = vld [vmem:[#allocation1] sm:$0xff]
      %6532 = vst [vmem:[#allocation1] ss:$9 sm:$0xff] %v6479
      %6533 = vst [vmem:[%s6517] ss:$9 sm:$0xff] %v6481
      %6534 = vst [vmem:[%s6519] ss:$9 sm:$0xff] %v6482
      %6535 = vst [vmem:[%s6521] ss:$9 sm:$0xff] %v6483
      %6536 = vst [vmem:[%s6523] ss:$9 sm:$0xff] %v6486
      %6537 = vst [vmem:[%s6525] ss:$9 sm:$0xff] %v6487
      %6538 = vst [vmem:[%s6527] ss:$9 sm:$0xff] %v6488
      %6539 = vst [vmem:[%s6529] ss:$9 sm:$0xff] %v6489
      %v6540 = vld [vmem:[#allocation1] sm:$0xff]
      %6541 = vst [vmem:[#allocation1] ss:$9 sm:$0xff] %v6490
      %6542 = vst [vmem:[%s6517] ss:$9 sm:$0xff] %v6491
      %6543 = vst [vmem:[%s6519] ss:$9 sm:$0xff] %v6494
      %6544 = vst [vmem:[%s6521] ss:$9 sm:$0xff] %v6495
      %6545 = vst [vmem:[%s6523] ss:$9 sm:$0xff] %v6496
      %6546 = vst [vmem:[%s6525] ss:$9 sm:$0xff] %v6497
      %6547 = vst [vmem:[%s6527] ss:$9 sm:$0xff] %v6498
      %6548 = vst [vmem:[%s6529] ss:$9 sm:$0xff] %v6499
      %v6549 = vld [vmem:[#allocation1] sm:$0xff]
      %6550 = vst [vmem:[#allocation1] ss:$9 sm:$0xff] %v6500
      %6551 = vst [vmem:[%s6517] ss:$9 sm:$0xff] %v6502
      %6552 = vst [vmem:[%s6519] ss:$9 sm:$0xff] %v6503
      %6553 = vst [vmem:[%s6521] ss:$9 sm:$0xff] %v6505
      %6554 = vst [vmem:[%s6523] ss:$9 sm:$0xff] %v6506
      %6555 = vst [vmem:[%s6525] ss:$9 sm:$0xff] %v6507
      %6556 = vst [vmem:[%s6527] ss:$9 sm:$0xff] %v6510
      %6557 = vst [vmem:[%s6529] ss:$9 sm:$0xff] %v6511
      %v6558 = vld [vmem:[#allocation1] sm:$0xff]
      %6559 = vst [vmem:[#allocation1] ss:$9 sm:$0xff] %v6512
      %6560 = vst [vmem:[%s6517] ss:$9 sm:$0xff] %v6513
      %6561 = vst [vmem:[%s6519] ss:$9 sm:$0xff] %v6514
      %6562 = vst [vmem:[%s6521] ss:$9 sm:$0xff] %v6515
      %v6563 = vld [vmem:[#allocation1] sm:$0xff]
      %v6564 = vsel %vm2223, %v6531, 0
      %v6566 = vsel %vm2223, %v6540, 0
      %v6568 = vsel %vm2223, %v6549, 0
      %v6570 = vsel %vm2223, %v6558, 0
      %v6572 = vsel %vm2223, %v6563, 0
      %6574 = vmatpush.bf16.msra.mxu0 0
      %6575 = vmatpush.bf16.msra.mxu0 0
      %6576 = vmatpush.bf16.msra.mxu0 0
      %6577 = vmatpush.bf16.msra.mxu0 0
      %6578 = vmatpush.bf16.msra.mxu0 0
      %6579 = vmatpush.bf16.msra.mxu0 0
      %6580 = vmatpush.bf16.msra.mxu0 0
      %6581 = vmatpush.bf16.msra.mxu0 %v4184
      %6582 = vmatmul.bf16.gmra.mxu0 %v6564
      %v6583 = vpop.f32.mrf.mxu0
      %v6584 = vadd.f32 0.0, %v6583
      %v6585 = vpop.f32.mrf.mxu0
      %v6586 = vadd.f32 0.0, %v6585
      %6587 = vmatmul.bf16.gmra.mxu0 %v6566
      %v6588 = vpop.f32.mrf.mxu0
      %v6589 = vadd.f32 0.0, %v6588
      %v6590 = vpop.f32.mrf.mxu0
      %v6591 = vadd.f32 0.0, %v6590
      %6592 = vmatmul.bf16.gmra.mxu0 %v6568
      %v6593 = vpop.f32.mrf.mxu0
      %v6594 = vadd.f32 0.0, %v6593
      %v6595 = vpop.f32.mrf.mxu0
      %v6596 = vadd.f32 0.0, %v6595
      %6597 = vmatmul.bf16.gmra.mxu0 %v6570
      %v6598 = vpop.f32.mrf.mxu0
      %v6599 = vadd.f32 0.0, %v6598
      %v6600 = vpop.f32.mrf.mxu0
      %v6601 = vadd.f32 0.0, %v6600
      %6602 = vmatmul.bf16.gmra.mxu0 %v6572
      %v6603 = vpop.f32.mrf.mxu0
      %v6604 = vadd.f32 0.0, %v6603
      %v6605 = vpop.f32.mrf.mxu0
      %6606 = vdwg.mxu0
      %v6607 = vadd.f32 %v6452, %v6584
      %v6608 = vadd.f32 %v6453, %v6586
      %v6609 = vadd.f32 %v6454, %v6589
      %v6610 = vadd.f32 %v6455, %v6591
      %v6611 = vadd.f32 %v6456, %v6594
      %v6612 = vadd.f32 %v6457, %v6596
      %v6613 = vadd.f32 %v6458, %v6599
      %v6614 = vadd.f32 %v6459, %v6601
      %v6615 = vadd.f32 %v6460, %v6604
      %v6619 = vrot.slane %v432, 3
      %v6620 = vrot.slane %v433, 3
      %v6621 = vrot.slane %v434, 3
      %v6624 = vsel %vm529, %v432, %v6619
      %v6625 = vsel %vm533, %v432, %v6619
      %v6627 = vrot.slane %v6625, 1
      %v6628 = vsel %vm537, %v432, %v6619
      %v6630 = vrot.slane %v6628, 2
      %v6631 = vsel %vm541, %v432, %v6619
      %v6633 = vrot.slane %v6631, 3
      %v6636 = vsel %vm529, %v433, %v6620
      %v6637 = vsel %vm533, %v433, %v6620
      %v6639 = vrot.slane %v6637, 1
      %v6640 = vsel %vm537, %v433, %v6620
      %v6642 = vrot.slane %v6640, 2
      %v6643 = vsel %vm541, %v433, %v6620
      %v6645 = vrot.slane %v6643, 3
      %v6648 = vsel %vm529, %v434, %v6621
      %6649 = vst [vmem:[#allocation1] ss:$9 sm:$0xff] %v5593
      %s6650 = scalar_lea.vmem [#allocation1], 1
      %6651 = vst [vmem:[%s6650] ss:$9 sm:$0xff] %v5596
      %s6652 = scalar_lea.vmem [#allocation1], 2
      %6653 = vst [vmem:[%s6652] ss:$9 sm:$0xff] %v5599
      %s6654 = scalar_lea.vmem [#allocation1], 3
      %6655 = vst [vmem:[%s6654] ss:$9 sm:$0xff] %v5602
      %s6656 = scalar_lea.vmem [#allocation1], 4
      %6657 = vst [vmem:[%s6656] ss:$9 sm:$0xff] %v5605
      %s6658 = scalar_lea.vmem [#allocation1], 5
      %6659 = vst [vmem:[%s6658] ss:$9 sm:$0xff] %v5608
      %s6660 = scalar_lea.vmem [#allocation1], 6
      %6661 = vst [vmem:[%s6660] ss:$9 sm:$0xff] %v5611
      %s6662 = scalar_lea.vmem [#allocation1], 7
      %6663 = vst [vmem:[%s6662] ss:$9 sm:$0xff] %v5614
      %v6664 = vld [vmem:[#allocation1] sm:$0xff]
      %6665 = vst [vmem:[#allocation1] ss:$9 sm:$0xff] %v5617
      %6666 = vst [vmem:[%s6650] ss:$9 sm:$0xff] %v5620
      %6667 = vst [vmem:[%s6652] ss:$9 sm:$0xff] %v5623
      %6668 = vst [vmem:[%s6654] ss:$9 sm:$0xff] %v5626
      %6669 = vst [vmem:[%s6656] ss:$9 sm:$0xff] %v5629
      %6670 = vst [vmem:[%s6658] ss:$9 sm:$0xff] %v5632
      %6671 = vst [vmem:[%s6660] ss:$9 sm:$0xff] %v5635
      %6672 = vst [vmem:[%s6662] ss:$9 sm:$0xff] %v5638
      %v6673 = vld [vmem:[#allocation1] sm:$0xff]
      %6674 = vst [vmem:[#allocation1] ss:$9 sm:$0xff] %v5641
      %6675 = vst [vmem:[%s6650] ss:$9 sm:$0xff] %v5644
      %6676 = vst [vmem:[%s6652] ss:$9 sm:$0xff] %v6154
      %6677 = vst [vmem:[%s6654] ss:$9 sm:$0xff] %v6157
      %6678 = vst [vmem:[%s6656] ss:$9 sm:$0xff] %v6160
      %6679 = vst [vmem:[%s6658] ss:$9 sm:$0xff] %v6163
      %6680 = vst [vmem:[%s6660] ss:$9 sm:$0xff] %v6166
      %6681 = vst [vmem:[%s6662] ss:$9 sm:$0xff] %v6169
      %v6682 = vld [vmem:[#allocation1] sm:$0xff]
      %6683 = vst [vmem:[#allocation1] ss:$9 sm:$0xff] %v6172
      %6684 = vst [vmem:[%s6650] ss:$9 sm:$0xff] %v6175
      %6685 = vst [vmem:[%s6652] ss:$9 sm:$0xff] %v6178
      %6686 = vst [vmem:[%s6654] ss:$9 sm:$0xff] %v6624
      %6688 = vst [vmem:[%s6656] ss:$9 sm:$0xff] %v6627
      %6690 = vst [vmem:[%s6658] ss:$9 sm:$0xff] %v6630
      %6692 = vst [vmem:[%s6660] ss:$9 sm:$0xff] %v6633
      %6693 = vst [vmem:[%s6662] ss:$9 sm:$0xff] %v6636
      %v6694 = vld [vmem:[#allocation1] sm:$0xff]
      %6696 = vst [vmem:[#allocation1] ss:$9 sm:$0xff] %v6639
      %6698 = vst [vmem:[%s6650] ss:$9 sm:$0xff] %v6642
      %6700 = vst [vmem:[%s6652] ss:$9 sm:$0xff] %v6645
      %6701 = vst [vmem:[%s6654] ss:$9 sm:$0xff] %v6648
      %v6702 = vld [vmem:[#allocation1] sm:$0xff]
      %v6703 = vsel %vm2223, %v6664, 0
      %v6705 = vsel %vm2223, %v6673, 0
      %v6707 = vsel %vm2223, %v6682, 0
      %v6709 = vsel %vm2223, %v6694, 0
      %v6711 = vsel %vm2223, %v6702, 0
      %6713 = vmatpush.bf16.msra.mxu0 0
      %6714 = vmatpush.bf16.msra.mxu0 0
      %6715 = vmatpush.bf16.msra.mxu0 0
      %6716 = vmatpush.bf16.msra.mxu0 0
      %6717 = vmatpush.bf16.msra.mxu0 0
      %6718 = vmatpush.bf16.msra.mxu0 0
      %6719 = vmatpush.bf16.msra.mxu0 0
      %6720 = vmatpush.bf16.msra.mxu0 %v4528
      %6721 = vmatmul.bf16.gmra.mxu0 %v6703
      %v6722 = vpop.f32.mrf.mxu0
      %v6723 = vadd.f32 0.0, %v6722
      %v6724 = vpop.f32.mrf.mxu0
      %v6725 = vadd.f32 0.0, %v6724
      %6726 = vmatmul.bf16.gmra.mxu0 %v6705
      %v6727 = vpop.f32.mrf.mxu0
      %v6728 = vadd.f32 0.0, %v6727
      %v6729 = vpop.f32.mrf.mxu0
      %v6730 = vadd.f32 0.0, %v6729
      %6731 = vmatmul.bf16.gmra.mxu0 %v6707
      %v6732 = vpop.f32.mrf.mxu0
      %v6733 = vadd.f32 0.0, %v6732
      %v6734 = vpop.f32.mrf.mxu0
      %v6735 = vadd.f32 0.0, %v6734
      %6736 = vmatmul.bf16.gmra.mxu0 %v6709
      %v6737 = vpop.f32.mrf.mxu0
      %v6738 = vadd.f32 0.0, %v6737
      %v6739 = vpop.f32.mrf.mxu0
      %v6740 = vadd.f32 0.0, %v6739
      %6741 = vmatmul.bf16.gmra.mxu0 %v6711
      %v6742 = vpop.f32.mrf.mxu0
      %v6743 = vadd.f32 0.0, %v6742
      %v6744 = vpop.f32.mrf.mxu0
      %6745 = vdwg.mxu0
      %v6746 = vadd.f32 %v6607, %v6723
      %v6747 = vadd.f32 %v6608, %v6725
      %v6748 = vadd.f32 %v6609, %v6728
      %v6749 = vadd.f32 %v6610, %v6730
      %v6750 = vadd.f32 %v6611, %v6733
      %v6751 = vadd.f32 %v6612, %v6735
      %v6752 = vadd.f32 %v6613, %v6738
      %v6753 = vadd.f32 %v6614, %v6740
      %v6754 = vadd.f32 %v6615, %v6743
      %v6755 = vsel %vm533, %v434, %v6621
      %v6757 = vrot.slane %v6755, 1
      %v6758 = vshrl.u32 %v6624, 16
      %v6760 = vrot.slane %v6758, 7
      %v6761 = vrot.slane %v6760, 1
      %v6762 = vshll.u32 %v6627, 16
      %v6764 = vsel %vm967, %v6761, %v6762
      %v6765 = vshrl.u32 %v6627, 16
      %v6767 = vrot.slane %v6765, 7
      %v6768 = vrot.slane %v6767, 1
      %v6769 = vshll.u32 %v6630, 16
      %v6771 = vsel %vm967, %v6768, %v6769
      %v6772 = vshrl.u32 %v6630, 16
      %v6774 = vrot.slane %v6772, 7
      %v6775 = vrot.slane %v6774, 1
      %v6776 = vshll.u32 %v6633, 16
      %v6778 = vsel %vm967, %v6775, %v6776
      %v6779 = vshrl.u32 %v6633, 16
      %v6781 = vrot.slane %v6779, 7
      %v6782 = vrot.slane %v6781, 1
      %v6783 = vshll.u32 %v6636, 16
      %v6785 = vsel %vm967, %v6782, %v6783
      %v6786 = vshrl.u32 %v6636, 16
      %v6788 = vrot.slane %v6786, 7
      %v6789 = vrot.slane %v6788, 1
      %v6790 = vshll.u32 %v6639, 16
      %v6792 = vsel %vm967, %v6789, %v6790
      %v6793 = vshrl.u32 %v6639, 16
      %v6795 = vrot.slane %v6793, 7
      %v6796 = vrot.slane %v6795, 1
      %v6797 = vshll.u32 %v6642, 16
      %v6799 = vsel %vm967, %v6796, %v6797
      %v6800 = vshrl.u32 %v6642, 16
      %v6802 = vrot.slane %v6800, 7
      %v6803 = vrot.slane %v6802, 1
      %v6804 = vshll.u32 %v6645, 16
      %v6806 = vsel %vm967, %v6803, %v6804
      %v6807 = vshrl.u32 %v6645, 16
      %v6809 = vrot.slane %v6807, 7
      %v6810 = vrot.slane %v6809, 1
      %v6811 = vshll.u32 %v6648, 16
      %v6813 = vsel %vm967, %v6810, %v6811
      %v6814 = vshrl.u32 %v6648, 16
      %v6816 = vrot.slane %v6814, 7
      %v6817 = vrot.slane %v6816, 1
      %v6819 = vshll.u32 %v6757, 16
      %v6821 = vsel %vm967, %v6817, %v6819
      %6822 = vst [vmem:[#allocation1] ss:$9 sm:$0xff] %v5658
      %s6823 = scalar_lea.vmem [#allocation1], 1
      %6824 = vst [vmem:[%s6823] ss:$9 sm:$0xff] %v5666
      %s6825 = scalar_lea.vmem [#allocation1], 2
      %6826 = vst [vmem:[%s6825] ss:$9 sm:$0xff] %v5674
      %s6827 = scalar_lea.vmem [#allocation1], 3
      %6828 = vst [vmem:[%s6827] ss:$9 sm:$0xff] %v5681
      %s6829 = scalar_lea.vmem [#allocation1], 4
      %6830 = vst [vmem:[%s6829] ss:$9 sm:$0xff] %v5689
      %s6831 = scalar_lea.vmem [#allocation1], 5
      %6832 = vst [vmem:[%s6831] ss:$9 sm:$0xff] %v5697
      %s6833 = scalar_lea.vmem [#allocation1], 6
      %6834 = vst [vmem:[%s6833] ss:$9 sm:$0xff] %v5705
      %s6835 = scalar_lea.vmem [#allocation1], 7
      %6836 = vst [vmem:[%s6835] ss:$9 sm:$0xff] %v5712
      %v6837 = vld [vmem:[#allocation1] sm:$0xff]
      %6838 = vst [vmem:[#allocation1] ss:$9 sm:$0xff] %v5720
      %6839 = vst [vmem:[%s6823] ss:$9 sm:$0xff] %v5728
      %6840 = vst [vmem:[%s6825] ss:$9 sm:$0xff] %v5736
      %6841 = vst [vmem:[%s6827] ss:$9 sm:$0xff] %v5744
      %6842 = vst [vmem:[%s6829] ss:$9 sm:$0xff] %v5751
      %6843 = vst [vmem:[%s6831] ss:$9 sm:$0xff] %v5759
      %6844 = vst [vmem:[%s6833] ss:$9 sm:$0xff] %v5767
      %6845 = vst [vmem:[%s6835] ss:$9 sm:$0xff] %v5775
      %v6846 = vld [vmem:[#allocation1] sm:$0xff]
      %6847 = vst [vmem:[#allocation1] ss:$9 sm:$0xff] %v5782
      %6848 = vst [vmem:[%s6823] ss:$9 sm:$0xff] %v5790
      %6849 = vst [vmem:[%s6825] ss:$9 sm:$0xff] %v6294
      %6850 = vst [vmem:[%s6827] ss:$9 sm:$0xff] %v6301
      %6851 = vst [vmem:[%s6829] ss:$9 sm:$0xff] %v6308
      %6852 = vst [vmem:[%s6831] ss:$9 sm:$0xff] %v6315
      %6853 = vst [vmem:[%s6833] ss:$9 sm:$0xff] %v6322
      %6854 = vst [vmem:[%s6835] ss:$9 sm:$0xff] %v6329
      %v6855 = vld [vmem:[#allocation1] sm:$0xff]
      %6856 = vst [vmem:[#allocation1] ss:$9 sm:$0xff] %v6336
      %6857 = vst [vmem:[%s6823] ss:$9 sm:$0xff] %v6343
      %6858 = vst [vmem:[%s6825] ss:$9 sm:$0xff] %v6351
      %6860 = vst [vmem:[%s6827] ss:$9 sm:$0xff] %v6764
      %6862 = vst [vmem:[%s6829] ss:$9 sm:$0xff] %v6771
      %6864 = vst [vmem:[%s6831] ss:$9 sm:$0xff] %v6778
      %6866 = vst [vmem:[%s6833] ss:$9 sm:$0xff] %v6785
      %6868 = vst [vmem:[%s6835] ss:$9 sm:$0xff] %v6792
      %v6869 = vld [vmem:[#allocation1] sm:$0xff]
      %6871 = vst [vmem:[#allocation1] ss:$9 sm:$0xff] %v6799
      %6873 = vst [vmem:[%s6823] ss:$9 sm:$0xff] %v6806
      %6875 = vst [vmem:[%s6825] ss:$9 sm:$0xff] %v6813
      %6877 = vst [vmem:[%s6827] ss:$9 sm:$0xff] %v6821
      %v6878 = vld [vmem:[#allocation1] sm:$0xff]
      %v6879 = vsel %vm2223, %v6837, 0
      %v6881 = vsel %vm2223, %v6846, 0
      %v6883 = vsel %vm2223, %v6855, 0
      %v6885 = vsel %vm2223, %v6869, 0
      %v6887 = vsel %vm2223, %v6878, 0
      %6889 = vmatpush.bf16.msra.mxu0 0
      %6890 = vmatpush.bf16.msra.mxu0 0
      %6891 = vmatpush.bf16.msra.mxu0 0
      %6892 = vmatpush.bf16.msra.mxu0 0
      %6893 = vmatpush.bf16.msra.mxu0 0
      %6894 = vmatpush.bf16.msra.mxu0 0
      %6895 = vmatpush.bf16.msra.mxu0 0
      %6896 = vmatpush.bf16.msra.mxu0 %v4909
      %6897 = vmatmul.bf16.gmra.mxu0 %v6879
      %v6898 = vpop.f32.mrf.mxu0
      %v6899 = vadd.f32 0.0, %v6898
      %v6900 = vpop.f32.mrf.mxu0
      %v6901 = vadd.f32 0.0, %v6900
      %6902 = vmatmul.bf16.gmra.mxu0 %v6881
      %v6903 = vpop.f32.mrf.mxu0
      %v6904 = vadd.f32 0.0, %v6903
      %v6905 = vpop.f32.mrf.mxu0
      %v6906 = vadd.f32 0.0, %v6905
      %6907 = vmatmul.bf16.gmra.mxu0 %v6883
      %v6908 = vpop.f32.mrf.mxu0
      %v6909 = vadd.f32 0.0, %v6908
      %v6910 = vpop.f32.mrf.mxu0
      %v6911 = vadd.f32 0.0, %v6910
      %6912 = vmatmul.bf16.gmra.mxu0 %v6885
      %v6913 = vpop.f32.mrf.mxu0
      %v6914 = vadd.f32 0.0, %v6913
      %v6915 = vpop.f32.mrf.mxu0
      %v6916 = vadd.f32 0.0, %v6915
      %6917 = vmatmul.bf16.gmra.mxu0 %v6887
      %v6918 = vpop.f32.mrf.mxu0
      %v6919 = vadd.f32 0.0, %v6918
      %v6920 = vpop.f32.mrf.mxu0
      %6921 = vdwg.mxu0
      %v6922 = vadd.f32 %v6746, %v6899
      %v6923 = vadd.f32 %v6747, %v6901
      %v6924 = vadd.f32 %v6748, %v6904
      %v6925 = vadd.f32 %v6749, %v6906
      %v6926 = vadd.f32 %v6750, %v6909
      %v6927 = vadd.f32 %v6751, %v6911
      %v6928 = vadd.f32 %v6752, %v6914
      %v6929 = vadd.f32 %v6753, %v6916
      %v6930 = vadd.f32 %v6754, %v6919
      %6931 = vst [vmem:[#allocation1] sm:$0xff] %v423
      %6932 = vst [vmem:[#allocation1 + $0x20] sm:$0xff] %v424
      %s6933 = scalar_lea.vmem [#allocation1], 1
      %v6934 = vld [vmem:[%s6933] ss:$4 sm:$0xff]
      %s6935 = scalar_lea.vmem [#allocation1], 2
      %v6936 = vld [vmem:[%s6935] ss:$4 sm:$0xff]
      %s6937 = scalar_lea.vmem [#allocation1], 3
      %v6938 = vld [vmem:[%s6937] ss:$4 sm:$0xff]
      %s6939 = scalar_lea.vmem [#allocation1], 32
      %v6940 = vld [vmem:[%s6939] ss:$4 sm:$0xff]
      %s6941 = scalar_lea.vmem [#allocation1], 33
      %v6942 = vld [vmem:[%s6941] ss:$4 sm:$0xff]
      %s6943 = scalar_lea.vmem [#allocation1], 34
      %v6944 = vld [vmem:[%s6943] ss:$4 sm:$0xff]
      %s6945 = scalar_lea.vmem [#allocation1], 35
      %v6946 = vld [vmem:[%s6945] ss:$4 sm:$0xff]
      %6947 = vst [vmem:[#allocation1] sm:$0xff] %v425
      %v6948 = vld [vmem:[#allocation1] ss:$4 sm:$0xff]
      %v6949 = vld [vmem:[%s6933] ss:$4 sm:$0xff]
      %6950 = vst [vmem:[#allocation1 + $0x20] sm:$0xff] %v426
      %v6951 = vld [vmem:[%s6941] ss:$4 sm:$0xff]
      %v6952 = vld [vmem:[%s6943] ss:$4 sm:$0xff]
      %v6953 = vld [vmem:[%s6945] ss:$4 sm:$0xff]
      %6954 = vst [vmem:[#allocation1] sm:$0xff] %v427
      %6955 = vst [vmem:[#allocation1 + $0x20] sm:$0xff] %v428
      %v6956 = vld [vmem:[#allocation1] ss:$4 sm:$0xff]
      %v6957 = vld [vmem:[%s6933] ss:$4 sm:$0xff]
      %v6958 = vld [vmem:[%s6935] ss:$4 sm:$0xff]
      %v6959 = vld [vmem:[%s6937] ss:$4 sm:$0xff]
      %v6960 = vld [vmem:[%s6939] ss:$4 sm:$0xff]
      %v6961 = vld [vmem:[%s6941] ss:$4 sm:$0xff]
      %6962 = vst [vmem:[#allocation1] sm:$0xff] %v429
      %6963 = vst [vmem:[#allocation1 + $0x20] sm:$0xff] %v430
      %v6964 = vld [vmem:[%s6933] ss:$4 sm:$0xff]
      %v6965 = vld [vmem:[%s6935] ss:$4 sm:$0xff]
      %v6966 = vld [vmem:[%s6937] ss:$4 sm:$0xff]
      %v6967 = vld [vmem:[%s6939] ss:$4 sm:$0xff]
      %v6968 = vld [vmem:[%s6941] ss:$4 sm:$0xff]
      %v6969 = vld [vmem:[%s6943] ss:$4 sm:$0xff]
      %v6970 = vld [vmem:[%s6945] ss:$4 sm:$0xff]
      %6971 = vst [vmem:[#allocation1] sm:$0xff] %v431
      %v6972 = vld [vmem:[#allocation1] ss:$4 sm:$0xff]
      %v6973 = vld [vmem:[%s6933] ss:$4 sm:$0xff]
      %6974 = vst [vmem:[#allocation1 + $0x20] sm:$0xff] %v432
      %v6975 = vld [vmem:[%s6941] ss:$4 sm:$0xff]
      %v6976 = vld [vmem:[%s6943] ss:$4 sm:$0xff]
      %v6977 = vld [vmem:[%s6945] ss:$4 sm:$0xff]
      %6978 = vst [vmem:[#allocation1] sm:$0xff] %v433
      %6979 = vst [vmem:[#allocation1 + $0x20] sm:$0xff] %v434
      %v6980 = vld [vmem:[#allocation1] ss:$4 sm:$0xff]
      %v6981 = vld [vmem:[%s6933] ss:$4 sm:$0xff]
      %v6982 = vld [vmem:[%s6935] ss:$4 sm:$0xff]
      %v6983 = vld [vmem:[%s6937] ss:$4 sm:$0xff]
      %v6984 = vld [vmem:[%s6939] ss:$4 sm:$0xff]
      %v6985 = vld [vmem:[%s6941] ss:$4 sm:$0xff]
      %6986 = vst [vmem:[#allocation1] ss:$9 sm:$0xff] %v6934
      %s6987 = scalar_lea.vmem [#allocation1], 1
      %6988 = vst [vmem:[%s6987] ss:$9 sm:$0xff] %v6936
      %s6989 = scalar_lea.vmem [#allocation1], 2
      %6990 = vst [vmem:[%s6989] ss:$9 sm:$0xff] %v6938
      %s6991 = scalar_lea.vmem [#allocation1], 3
      %6992 = vst [vmem:[%s6991] ss:$9 sm:$0xff] %v6940
      %s6993 = scalar_lea.vmem [#allocation1], 4
      %6994 = vst [vmem:[%s6993] ss:$9 sm:$0xff] %v6942
      %s6995 = scalar_lea.vmem [#allocation1], 5
      %6996 = vst [vmem:[%s6995] ss:$9 sm:$0xff] %v6944
      %s6997 = scalar_lea.vmem [#allocation1], 6
      %6998 = vst [vmem:[%s6997] ss:$9 sm:$0xff] %v6946
      %s6999 = scalar_lea.vmem [#allocation1], 7
      %7000 = vst [vmem:[%s6999] ss:$9 sm:$0xff] %v6948
      %v7001 = vld [vmem:[#allocation1] sm:$0xff]
      %7002 = vst [vmem:[#allocation1] ss:$9 sm:$0xff] %v6949
      %7003 = vst [vmem:[%s6987] ss:$9 sm:$0xff] %v6951
      %7004 = vst [vmem:[%s6989] ss:$9 sm:$0xff] %v6952
      %7005 = vst [vmem:[%s6991] ss:$9 sm:$0xff] %v6953
      %7006 = vst [vmem:[%s6993] ss:$9 sm:$0xff] %v6956
      %7007 = vst [vmem:[%s6995] ss:$9 sm:$0xff] %v6957
      %7008 = vst [vmem:[%s6997] ss:$9 sm:$0xff] %v6958
      %7009 = vst [vmem:[%s6999] ss:$9 sm:$0xff] %v6959
      %v7010 = vld [vmem:[#allocation1] sm:$0xff]
      %7011 = vst [vmem:[#allocation1] ss:$9 sm:$0xff] %v6960
      %7012 = vst [vmem:[%s6987] ss:$9 sm:$0xff] %v6961
      %7013 = vst [vmem:[%s6989] ss:$9 sm:$0xff] %v6964
      %7014 = vst [vmem:[%s6991] ss:$9 sm:$0xff] %v6965
      %7015 = vst [vmem:[%s6993] ss:$9 sm:$0xff] %v6966
      %7016 = vst [vmem:[%s6995] ss:$9 sm:$0xff] %v6967
      %7017 = vst [vmem:[%s6997] ss:$9 sm:$0xff] %v6968
      %7018 = vst [vmem:[%s6999] ss:$9 sm:$0xff] %v6969
      %v7019 = vld [vmem:[#allocation1] sm:$0xff]
      %7020 = vst [vmem:[#allocation1] ss:$9 sm:$0xff] %v6970
      %7021 = vst [vmem:[%s6987] ss:$9 sm:$0xff] %v6972
      %7022 = vst [vmem:[%s6989] ss:$9 sm:$0xff] %v6973
      %7023 = vst [vmem:[%s6991] ss:$9 sm:$0xff] %v6975
      %7024 = vst [vmem:[%s6993] ss:$9 sm:$0xff] %v6976
      %7025 = vst [vmem:[%s6995] ss:$9 sm:$0xff] %v6977
      %7026 = vst [vmem:[%s6997] ss:$9 sm:$0xff] %v6980
      %7027 = vst [vmem:[%s6999] ss:$9 sm:$0xff] %v6981
      %v7028 = vld [vmem:[#allocation1] sm:$0xff]
      %7029 = vst [vmem:[#allocation1] ss:$9 sm:$0xff] %v6982
      %7030 = vst [vmem:[%s6987] ss:$9 sm:$0xff] %v6983
      %7031 = vst [vmem:[%s6989] ss:$9 sm:$0xff] %v6984
      %7032 = vst [vmem:[%s6991] ss:$9 sm:$0xff] %v6985
      %v7033 = vld [vmem:[#allocation1] sm:$0xff]
      %v7034 = vsel %vm2223, %v7001, 0
      %v7036 = vsel %vm2223, %v7010, 0
      %v7038 = vsel %vm2223, %v7019, 0
      %v7040 = vsel %vm2223, %v7028, 0
      %v7042 = vsel %vm2223, %v7033, 0
      %7044 = vmatpush.bf16.msra.mxu0 0
      %7045 = vmatpush.bf16.msra.mxu0 0
      %7046 = vmatpush.bf16.msra.mxu0 0
      %7047 = vmatpush.bf16.msra.mxu0 0
      %7048 = vmatpush.bf16.msra.mxu0 0
      %7049 = vmatpush.bf16.msra.mxu0 0
      %7050 = vmatpush.bf16.msra.mxu0 0
      %7051 = vmatpush.bf16.msra.mxu0 %v5389
      %7052 = vmatmul.bf16.gmra.mxu0 %v7034
      %v7053 = vpop.f32.mrf.mxu0
      %v7054 = vadd.f32 0.0, %v7053
      %v7055 = vpop.f32.mrf.mxu0
      %v7056 = vadd.f32 0.0, %v7055
      %7057 = vmatmul.bf16.gmra.mxu0 %v7036
      %v7058 = vpop.f32.mrf.mxu0
      %v7059 = vadd.f32 0.0, %v7058
      %v7060 = vpop.f32.mrf.mxu0
      %v7061 = vadd.f32 0.0, %v7060
      %7062 = vmatmul.bf16.gmra.mxu0 %v7038
      %v7063 = vpop.f32.mrf.mxu0
      %v7064 = vadd.f32 0.0, %v7063
      %v7065 = vpop.f32.mrf.mxu0
      %v7066 = vadd.f32 0.0, %v7065
      %7067 = vmatmul.bf16.gmra.mxu0 %v7040
      %v7068 = vpop.f32.mrf.mxu0
      %v7069 = vadd.f32 0.0, %v7068
      %v7070 = vpop.f32.mrf.mxu0
      %v7071 = vadd.f32 0.0, %v7070
      %7072 = vmatmul.bf16.gmra.mxu0 %v7042
      %v7073 = vpop.f32.mrf.mxu0
      %v7074 = vadd.f32 0.0, %v7073
      %v7075 = vpop.f32.mrf.mxu0
      %7076 = vdwg.mxu0
      %v7077 = vadd.f32 %v6922, %v7054
      %v7078 = vadd.f32 %v6923, %v7056
      %v7079 = vadd.f32 %v6924, %v7059
      %v7080 = vadd.f32 %v6925, %v7061
      %v7081 = vadd.f32 %v6926, %v7064
      %v7082 = vadd.f32 %v6927, %v7066
      %v7083 = vadd.f32 %v6928, %v7069
      %v7084 = vadd.f32 %v6929, %v7071
      %v7085 = vadd.f32 %v6930, %v7074
      %v7086 = vadd.f32 %v7077, %v5513
      %v7087 = vadd.f32 %v7078, %v5513
      %v7088 = vadd.f32 %v7079, %v5513
      %v7089 = vadd.f32 %v7080, %v5513
      %v7090 = vadd.f32 %v7081, %v5513
      %v7091 = vadd.f32 %v7082, %v5513
      %v7092 = vadd.f32 %v7083, %v5513
      %v7093 = vadd.f32 %v7084, %v5513
      %v7094 = vadd.f32 %v7085, %v5513
      %v7095 = vmax.f32 %v7086, 0.0
      %v7096 = vmax.f32 %v7087, 0.0
      %v7097 = vmax.f32 %v7088, 0.0
      %v7098 = vmax.f32 %v7089, 0.0
      %v7099 = vmax.f32 %v7090, 0.0
      %v7100 = vmax.f32 %v7091, 0.0
      %v7101 = vmax.f32 %v7092, 0.0
      %v7102 = vmax.f32 %v7093, 0.0
      %v7103 = vmax.f32 %v7094, 0.0
      %v7136 = vrot.slane %v5547, 2
      %v7137 = vrot.slane %v5547, 4
      %v7138 = vrot.slane %v5547, 6
      %v7139 = vrot.slane %v5548, 2
      %v7140 = vrot.slane %v5548, 4
      %v7141 = vrot.slane %v5548, 6
      %v7142 = vrot.slane %v5549, 2
      %v7143 = vrot.slane %v5549, 4
      %v7144 = vrot.slane %v5549, 6
      %v7145 = vrot.slane %v5550, 2
      %v7146 = vrot.slane %v5550, 4
      %v7147 = vrot.slane %v5550, 6
      %v7148 = vrot.slane %v5551, 2
      %v7149 = vrot.slane %v5551, 4
      %v7150 = vrot.slane %v5551, 6
      %v7151 = vrot.slane %v5552, 2
      %v7152 = vrot.slane %v5552, 4
      %v7153 = vrot.slane %v5552, 6
      %v7154 = vrot.slane %v5553, 2
      %v7155 = vrot.slane %v5553, 4
      %v7156 = vrot.slane %v5553, 6
      %v7157 = vrot.slane %v5554, 2
      %v7158 = vrot.slane %v5554, 4
      %v7159 = vrot.slane %v5554, 6
      %v7160 = vrot.slane %v5555, 2
      %v7161 = vrot.slane %v5555, 4
      %v7162 = vrot.slane %v5555, 6
      %v7163 = vrot.slane %v5556, 2
      %v7164 = vrot.slane %v5556, 4
      %v7165 = vrot.slane %v5556, 6
      %v7166 = vrot.slane %v5557, 2
      %v7167 = vrot.slane %v5557, 4
      %v7168 = vrot.slane %v5557, 6
      %v7169 = vrot.slane %v5558, 2
      %v7170 = vrot.slane %v5558, 4
      %v7171 = vrot.slane %v5558, 6
      %v7172 = vrot.slane %v5559, 2
      %v7173 = vrot.slane %v5559, 4
      %v7174 = vrot.slane %v5559, 6
      %v7175 = vrot.slane %v5560, 2
      %v7176 = vrot.slane %v5560, 4
      %v7177 = vrot.slane %v5560, 6
      %v7178 = vrot.slane %v5561, 2
      %v7179 = vrot.slane %v5561, 4
      %v7180 = vrot.slane %v5561, 6
      %v7181 = vrot.slane %v5562, 2
      %v7182 = vrot.slane %v5562, 4
      %v7183 = vrot.slane %v5562, 6
      %v7184 = vrot.slane %v5563, 2
      %v7185 = vrot.slane %v5563, 4
      %v7186 = vrot.slane %v5563, 6
      %v7187 = vrot.slane %v5564, 2
      %v7188 = vrot.slane %v5564, 4
      %v7189 = vrot.slane %v5564, 6
      %v7190 = vrot.slane %v5565, 2
      %v7191 = vrot.slane %v5565, 4
      %v7192 = vrot.slane %v5565, 6
      %v7193 = vrot.slane %v5566, 2
      %v7194 = vrot.slane %v5566, 4
      %v7195 = vrot.slane %v5566, 6
      %v7196 = vrot.slane %v5567, 2
      %v7197 = vrot.slane %v5567, 4
      %v7198 = vrot.slane %v5567, 6
      %v7199 = vrot.slane %v5568, 2
      %v7200 = vrot.slane %v5568, 4
      %v7201 = vrot.slane %v5568, 6
      %v7202 = vrot.slane %v5569, 2
      %v7203 = vrot.slane %v5569, 4
      %v7204 = vrot.slane %v5569, 6
      %v7205 = vrot.slane %v5570, 2
      %v7206 = vrot.slane %v5570, 4
      %v7207 = vrot.slane %v5570, 6
      %v7208 = vrot.slane %v5571, 2
      %v7209 = vrot.slane %v5571, 4
      %v7210 = vrot.slane %v5571, 6
      %v7211 = vrot.slane %v5572, 2
      %v7212 = vrot.slane %v5572, 4
      %v7213 = vrot.slane %v5572, 6
      %v7214 = vrot.slane %v5573, 2
      %v7215 = vrot.slane %v5573, 4
      %v7216 = vrot.slane %v5573, 6
      %v7217 = vrot.slane %v5574, 2
      %v7218 = vrot.slane %v5574, 4
      %v7219 = vrot.slane %v5574, 6
      %v7220 = vrot.slane %v5575, 2
      %v7221 = vrot.slane %v5575, 4
      %v7222 = vrot.slane %v5575, 6
      %v7223 = vrot.slane %v5576, 2
      %v7224 = vrot.slane %v5576, 4
      %v7225 = vrot.slane %v5576, 6
      %v7226 = vrot.slane %v5577, 2
      %v7227 = vrot.slane %v5577, 4
      %v7228 = vrot.slane %v5577, 6
      %v7229 = vrot.slane %v5578, 2
      %7230 = vst [vmem:[#allocation1] ss:$4 sm:$0xff] %v5547
      %s7231 = scalar_lea.vmem [#allocation1], 1
      %7232 = vst [vmem:[%s7231] ss:$4 sm:$0xff] %v7136
      %s7233 = scalar_lea.vmem [#allocation1], 2
      %7234 = vst [vmem:[%s7233] ss:$4 sm:$0xff] %v7137
      %s7235 = scalar_lea.vmem [#allocation1], 3
      %7236 = vst [vmem:[%s7235] ss:$4 sm:$0xff] %v7138
      %s7237 = scalar_lea.vmem [#allocation1], 32
      %7238 = vst [vmem:[%s7237] ss:$4 sm:$0xff] %v5548
      %s7239 = scalar_lea.vmem [#allocation1], 33
      %7240 = vst [vmem:[%s7239] ss:$4 sm:$0xff] %v7139
      %s7241 = scalar_lea.vmem [#allocation1], 34
      %7242 = vst [vmem:[%s7241] ss:$4 sm:$0xff] %v7140
      %s7243 = scalar_lea.vmem [#allocation1], 35
      %7244 = vst [vmem:[%s7243] ss:$4 sm:$0xff] %v7141
      %v7245 = vld.sshfl [vmem:[#allocation1] sm:$0xff pattern:$0x73625140]
      %v7246 = vld.sshfl [vmem:[#allocation1 + $0x20] sm:$0xff pattern:$0x73625140]
      %7247 = vst [vmem:[#allocation1] ss:$4 sm:$0xff] %v5549
      %v7248 = vld.sshfl [vmem:[#allocation1] sm:$0xff pattern:$0x73625140]
      %7249 = vst [vmem:[%s7237] ss:$4 sm:$0xff] %v7142
      %7250 = vst [vmem:[%s7239] ss:$4 sm:$0xff] %v7143
      %7251 = vst [vmem:[%s7241] ss:$4 sm:$0xff] %v7144
      %7252 = vst [vmem:[%s7243] ss:$4 sm:$0xff] %v5550
      %v7253 = vld.sshfl [vmem:[#allocation1 + $0x20] sm:$0xff pattern:$0x73625140]
      %7254 = vst [vmem:[#allocation1] ss:$4 sm:$0xff] %v7145
      %7255 = vst [vmem:[%s7231] ss:$4 sm:$0xff] %v7146
      %7256 = vst [vmem:[%s7233] ss:$4 sm:$0xff] %v7147
      %7257 = vst [vmem:[%s7235] ss:$4 sm:$0xff] %v5551
      %7258 = vst [vmem:[%s7237] ss:$4 sm:$0xff] %v7148
      %v7259 = vld.sshfl [vmem:[#allocation1] sm:$0xff pattern:$0x73625140]
      %v7260 = vld.sshfl [vmem:[#allocation1 + $0x20] sm:$0xff pattern:$0x73625140]
      %7261 = vst [vmem:[#allocation1] ss:$4 sm:$0xff] %v7149
      %7262 = vst [vmem:[%s7231] ss:$4 sm:$0xff] %v7150
      %7263 = vst [vmem:[%s7233] ss:$4 sm:$0xff] %v5552
      %7264 = vst [vmem:[%s7235] ss:$4 sm:$0xff] %v7151
      %7265 = vst [vmem:[%s7237] ss:$4 sm:$0xff] %v7152
      %7266 = vst [vmem:[%s7239] ss:$4 sm:$0xff] %v7153
      %7267 = vst [vmem:[%s7241] ss:$4 sm:$0xff] %v5553
      %7268 = vst [vmem:[%s7243] ss:$4 sm:$0xff] %v7154
      %v7269 = vld.sshfl [vmem:[#allocation1] sm:$0xff pattern:$0x73625140]
      %v7270 = vld.sshfl [vmem:[#allocation1 + $0x20] sm:$0xff pattern:$0x73625140]
      %7271 = vst [vmem:[#allocation1] ss:$4 sm:$0xff] %v7155
      %v7272 = vld.sshfl [vmem:[#allocation1] sm:$0xff pattern:$0x73625140]
      %7273 = vst [vmem:[%s7237] ss:$4 sm:$0xff] %v7156
      %7274 = vst [vmem:[%s7239] ss:$4 sm:$0xff] %v5554
      %7275 = vst [vmem:[%s7241] ss:$4 sm:$0xff] %v7157
      %7276 = vst [vmem:[%s7243] ss:$4 sm:$0xff] %v7158
      %v7277 = vld.sshfl [vmem:[#allocation1 + $0x20] sm:$0xff pattern:$0x73625140]
      %7278 = vst [vmem:[#allocation1] ss:$4 sm:$0xff] %v7159
      %7279 = vst [vmem:[%s7231] ss:$4 sm:$0xff] %v5555
      %7280 = vst [vmem:[%s7233] ss:$4 sm:$0xff] %v7160
      %7281 = vst [vmem:[%s7235] ss:$4 sm:$0xff] %v7161
      %7282 = vst [vmem:[%s7237] ss:$4 sm:$0xff] %v7162
      %v7283 = vld.sshfl [vmem:[#allocation1] sm:$0xff pattern:$0x73625140]
      %v7284 = vld.sshfl [vmem:[#allocation1 + $0x20] sm:$0xff pattern:$0x73625140]
      %7285 = vst [vmem:[#allocation1] ss:$4 sm:$0xff] %v5556
      %7286 = vst [vmem:[%s7231] ss:$4 sm:$0xff] %v7163
      %7287 = vst [vmem:[%s7233] ss:$4 sm:$0xff] %v7164
      %7288 = vst [vmem:[%s7235] ss:$4 sm:$0xff] %v7165
      %7289 = vst [vmem:[%s7237] ss:$4 sm:$0xff] %v5557
      %7290 = vst [vmem:[%s7239] ss:$4 sm:$0xff] %v7166
      %7291 = vst [vmem:[%s7241] ss:$4 sm:$0xff] %v7167
      %7292 = vst [vmem:[%s7243] ss:$4 sm:$0xff] %v7168
      %v7293 = vld.sshfl [vmem:[#allocation1] sm:$0xff pattern:$0x73625140]
      %v7294 = vld.sshfl [vmem:[#allocation1 + $0x20] sm:$0xff pattern:$0x73625140]
      %7295 = vst [vmem:[#allocation1] ss:$4 sm:$0xff] %v5558
      %v7296 = vld.sshfl [vmem:[#allocation1] sm:$0xff pattern:$0x73625140]
      %7297 = vst [vmem:[%s7237] ss:$4 sm:$0xff] %v7169
      %7298 = vst [vmem:[%s7239] ss:$4 sm:$0xff] %v7170
      %7299 = vst [vmem:[%s7241] ss:$4 sm:$0xff] %v7171
      %7300 = vst [vmem:[%s7243] ss:$4 sm:$0xff] %v5559
      %v7301 = vld.sshfl [vmem:[#allocation1 + $0x20] sm:$0xff pattern:$0x73625140]
      %7302 = vst [vmem:[#allocation1] ss:$4 sm:$0xff] %v7172
      %7303 = vst [vmem:[%s7231] ss:$4 sm:$0xff] %v7173
      %7304 = vst [vmem:[%s7233] ss:$4 sm:$0xff] %v7174
      %7305 = vst [vmem:[%s7235] ss:$4 sm:$0xff] %v5560
      %7306 = vst [vmem:[%s7237] ss:$4 sm:$0xff] %v7175
      %v7307 = vld.sshfl [vmem:[#allocation1] sm:$0xff pattern:$0x73625140]
      %v7308 = vld.sshfl [vmem:[#allocation1 + $0x20] sm:$0xff pattern:$0x73625140]
      %7309 = vst [vmem:[#allocation1] ss:$4 sm:$0xff] %v7176
      %7310 = vst [vmem:[%s7231] ss:$4 sm:$0xff] %v7177
      %7311 = vst [vmem:[%s7233] ss:$4 sm:$0xff] %v5561
      %7312 = vst [vmem:[%s7235] ss:$4 sm:$0xff] %v7178
      %7313 = vst [vmem:[%s7237] ss:$4 sm:$0xff] %v7179
      %7314 = vst [vmem:[%s7239] ss:$4 sm:$0xff] %v7180
      %7315 = vst [vmem:[%s7241] ss:$4 sm:$0xff] %v5562
      %7316 = vst [vmem:[%s7243] ss:$4 sm:$0xff] %v7181
      %v7317 = vld.sshfl [vmem:[#allocation1] sm:$0xff pattern:$0x73625140]
      %v7318 = vld.sshfl [vmem:[#allocation1 + $0x20] sm:$0xff pattern:$0x73625140]
      %7319 = vst [vmem:[#allocation1] ss:$4 sm:$0xff] %v7182
      %v7320 = vld.sshfl [vmem:[#allocation1] sm:$0xff pattern:$0x73625140]
      %7321 = vst [vmem:[%s7237] ss:$4 sm:$0xff] %v7183
      %7322 = vst [vmem:[%s7239] ss:$4 sm:$0xff] %v5563
      %7323 = vst [vmem:[%s7241] ss:$4 sm:$0xff] %v7184
      %7324 = vst [vmem:[%s7243] ss:$4 sm:$0xff] %v7185
      %v7325 = vld.sshfl [vmem:[#allocation1 + $0x20] sm:$0xff pattern:$0x73625140]
      %7326 = vst [vmem:[#allocation1] ss:$4 sm:$0xff] %v7186
      %7327 = vst [vmem:[%s7231] ss:$4 sm:$0xff] %v5564
      %7328 = vst [vmem:[%s7233] ss:$4 sm:$0xff] %v7187
      %7329 = vst [vmem:[%s7235] ss:$4 sm:$0xff] %v7188
      %7330 = vst [vmem:[%s7237] ss:$4 sm:$0xff] %v7189
      %v7331 = vld.sshfl [vmem:[#allocation1] sm:$0xff pattern:$0x73625140]
      %v7332 = vld.sshfl [vmem:[#allocation1 + $0x20] sm:$0xff pattern:$0x73625140]
      %7333 = vst [vmem:[#allocation1] ss:$4 sm:$0xff] %v5565
      %7334 = vst [vmem:[%s7231] ss:$4 sm:$0xff] %v7190
      %7335 = vst [vmem:[%s7233] ss:$4 sm:$0xff] %v7191
      %7336 = vst [vmem:[%s7235] ss:$4 sm:$0xff] %v7192
      %7337 = vst [vmem:[%s7237] ss:$4 sm:$0xff] %v5566
      %7338 = vst [vmem:[%s7239] ss:$4 sm:$0xff] %v7193
      %7339 = vst [vmem:[%s7241] ss:$4 sm:$0xff] %v7194
      %7340 = vst [vmem:[%s7243] ss:$4 sm:$0xff] %v7195
      %v7341 = vld.sshfl [vmem:[#allocation1] sm:$0xff pattern:$0x73625140]
      %v7342 = vld.sshfl [vmem:[#allocation1 + $0x20] sm:$0xff pattern:$0x73625140]
      %7343 = vst [vmem:[#allocation1] ss:$4 sm:$0xff] %v5567
      %v7344 = vld.sshfl [vmem:[#allocation1] sm:$0xff pattern:$0x73625140]
      %7345 = vst [vmem:[%s7237] ss:$4 sm:$0xff] %v7196
      %7346 = vst [vmem:[%s7239] ss:$4 sm:$0xff] %v7197
      %7347 = vst [vmem:[%s7241] ss:$4 sm:$0xff] %v7198
      %7348 = vst [vmem:[%s7243] ss:$4 sm:$0xff] %v5568
      %v7349 = vld.sshfl [vmem:[#allocation1 + $0x20] sm:$0xff pattern:$0x73625140]
      %7350 = vst [vmem:[#allocation1] ss:$4 sm:$0xff] %v7199
      %7351 = vst [vmem:[%s7231] ss:$4 sm:$0xff] %v7200
      %7352 = vst [vmem:[%s7233] ss:$4 sm:$0xff] %v7201
      %7353 = vst [vmem:[%s7235] ss:$4 sm:$0xff] %v5569
      %7354 = vst [vmem:[%s7237] ss:$4 sm:$0xff] %v7202
      %v7355 = vld.sshfl [vmem:[#allocation1] sm:$0xff pattern:$0x73625140]
      %v7356 = vld.sshfl [vmem:[#allocation1 + $0x20] sm:$0xff pattern:$0x73625140]
      %7357 = vst [vmem:[#allocation1] ss:$4 sm:$0xff] %v7203
      %7358 = vst [vmem:[%s7231] ss:$4 sm:$0xff] %v7204
      %7359 = vst [vmem:[%s7233] ss:$4 sm:$0xff] %v5570
      %7360 = vst [vmem:[%s7235] ss:$4 sm:$0xff] %v7205
      %7361 = vst [vmem:[%s7237] ss:$4 sm:$0xff] %v7206
      %7362 = vst [vmem:[%s7239] ss:$4 sm:$0xff] %v7207
      %7363 = vst [vmem:[%s7241] ss:$4 sm:$0xff] %v5571
      %7364 = vst [vmem:[%s7243] ss:$4 sm:$0xff] %v7208
      %v7365 = vld.sshfl [vmem:[#allocation1] sm:$0xff pattern:$0x73625140]
      %v7366 = vld.sshfl [vmem:[#allocation1 + $0x20] sm:$0xff pattern:$0x73625140]
      %7367 = vst [vmem:[#allocation1] ss:$4 sm:$0xff] %v7209
      %v7368 = vld.sshfl [vmem:[#allocation1] sm:$0xff pattern:$0x73625140]
      %7369 = vst [vmem:[%s7237] ss:$4 sm:$0xff] %v7210
      %7370 = vst [vmem:[%s7239] ss:$4 sm:$0xff] %v5572
      %7371 = vst [vmem:[%s7241] ss:$4 sm:$0xff] %v7211
      %7372 = vst [vmem:[%s7243] ss:$4 sm:$0xff] %v7212
      %v7373 = vld.sshfl [vmem:[#allocation1 + $0x20] sm:$0xff pattern:$0x73625140]
      %7374 = vst [vmem:[#allocation1] ss:$4 sm:$0xff] %v7213
      %7375 = vst [vmem:[%s7231] ss:$4 sm:$0xff] %v5573
      %7376 = vst [vmem:[%s7233] ss:$4 sm:$0xff] %v7214
      %7377 = vst [vmem:[%s7235] ss:$4 sm:$0xff] %v7215
      %7378 = vst [vmem:[%s7237] ss:$4 sm:$0xff] %v7216
      %v7379 = vld.sshfl [vmem:[#allocation1] sm:$0xff pattern:$0x73625140]
      %v7380 = vld.sshfl [vmem:[#allocation1 + $0x20] sm:$0xff pattern:$0x73625140]
      %7381 = vst [vmem:[#allocation1] ss:$4 sm:$0xff] %v5574
      %7382 = vst [vmem:[%s7231] ss:$4 sm:$0xff] %v7217
      %7383 = vst [vmem:[%s7233] ss:$4 sm:$0xff] %v7218
      %7384 = vst [vmem:[%s7235] ss:$4 sm:$0xff] %v7219
      %7385 = vst [vmem:[%s7237] ss:$4 sm:$0xff] %v5575
      %7386 = vst [vmem:[%s7239] ss:$4 sm:$0xff] %v7220
      %7387 = vst [vmem:[%s7241] ss:$4 sm:$0xff] %v7221
      %7388 = vst [vmem:[%s7243] ss:$4 sm:$0xff] %v7222
      %v7389 = vld.sshfl [vmem:[#allocation1] sm:$0xff pattern:$0x73625140]
      %v7390 = vld.sshfl [vmem:[#allocation1 + $0x20] sm:$0xff pattern:$0x73625140]
      %7391 = vst [vmem:[#allocation1] ss:$4 sm:$0xff] %v5576
      %v7392 = vld.sshfl [vmem:[#allocation1] sm:$0xff pattern:$0x73625140]
      %7393 = vst [vmem:[%s7237] ss:$4 sm:$0xff] %v7223
      %7394 = vst [vmem:[%s7239] ss:$4 sm:$0xff] %v7224
      %7395 = vst [vmem:[%s7241] ss:$4 sm:$0xff] %v7225
      %7396 = vst [vmem:[%s7243] ss:$4 sm:$0xff] %v5577
      %v7397 = vld.sshfl [vmem:[#allocation1 + $0x20] sm:$0xff pattern:$0x73625140]
      %7398 = vst [vmem:[#allocation1] ss:$4 sm:$0xff] %v7226
      %7399 = vst [vmem:[%s7231] ss:$4 sm:$0xff] %v7227
      %7400 = vst [vmem:[%s7233] ss:$4 sm:$0xff] %v7228
      %7401 = vst [vmem:[%s7235] ss:$4 sm:$0xff] %v5578
      %7402 = vst [vmem:[%s7237] ss:$4 sm:$0xff] %v7229
      %v7403 = vld.sshfl [vmem:[#allocation1] sm:$0xff pattern:$0x73625140]
      %v7404 = vld.sshfl [vmem:[#allocation1 + $0x20] sm:$0xff pattern:$0x73625140]
      %v7447 = vpack.c.bf16 %v7245, %v7245
      %v7448 = vpack.c.bf16 %v7246, %v7246
      %v7449 = vpack.c.bf16 %v7248, %v7248
      %v7450 = vpack.c.bf16 %v7253, %v7253
      %v7451 = vpack.c.bf16 %v7259, %v7259
      %v7452 = vpack.c.bf16 %v7260, %v7260
      %v7453 = vpack.c.bf16 %v7269, %v7269
      %v7454 = vpack.c.bf16 %v7270, %v7270
      %v7455 = vpack.c.bf16 %v7272, %v7272
      %v7456 = vpack.c.bf16 %v7277, %v7277
      %v7457 = vpack.c.bf16 %v7283, %v7283
      %v7458 = vpack.c.bf16 %v7284, %v7284
      %v7459 = vpack.c.bf16 %v7293, %v7293
      %v7460 = vpack.c.bf16 %v7294, %v7294
      %v7461 = vpack.c.bf16 %v7296, %v7296
      %v7462 = vpack.c.bf16 %v7301, %v7301
      %v7463 = vpack.c.bf16 %v7307, %v7307
      %v7464 = vpack.c.bf16 %v7308, %v7308
      %v7465 = vpack.c.bf16 %v7317, %v7317
      %v7466 = vpack.c.bf16 %v7318, %v7318
      %v7467 = vpack.c.bf16 %v7320, %v7320
      %v7468 = vpack.c.bf16 %v7325, %v7325
      %v7469 = vpack.c.bf16 %v7331, %v7331
      %v7470 = vpack.c.bf16 %v7332, %v7332
      %v7471 = vpack.c.bf16 %v7341, %v7341
      %v7472 = vpack.c.bf16 %v7342, %v7342
      %v7473 = vpack.c.bf16 %v7344, %v7344
      %v7474 = vpack.c.bf16 %v7349, %v7349
      %v7475 = vpack.c.bf16 %v7355, %v7355
      %v7476 = vpack.c.bf16 %v7356, %v7356
      %v7477 = vpack.c.bf16 %v7365, %v7365
      %v7478 = vpack.c.bf16 %v7366, %v7366
      %v7479 = vpack.c.bf16 %v7368, %v7368
      %v7480 = vpack.c.bf16 %v7373, %v7373
      %v7481 = vpack.c.bf16 %v7379, %v7379
      %v7482 = vpack.c.bf16 %v7380, %v7380
      %v7483 = vpack.c.bf16 %v7389, %v7389
      %v7484 = vpack.c.bf16 %v7390, %v7390
      %v7485 = vpack.c.bf16 %v7392, %v7392
      %v7486 = vpack.c.bf16 %v7397, %v7397
      %v7487 = vpack.c.bf16 %v7403, %v7403
      %v7488 = vpack.c.bf16 %v7404, %v7404
      %vm7489 = vcmask 60416
      %7490 = vst.msk [vmem:[#allocation2] sm:$0xf] %vm7489, %v7447
      %7491 = vst.msk [vmem:[#allocation2 + $0x4] sm:$0xf] %vm7489, %v7448
      %vm7492 = vcmask 57344
      %7493 = vst.msk [vmem:[#allocation2 + $0x8] sm:$0x1] %vm7492, %v7449
      %7494 = vst.msk [vmem:[#allocation2 + $0xc] sm:$0xf] %vm7489, %v7450
      %7495 = vst.msk [vmem:[#allocation2 + $0x10] sm:$0xf] %vm7489, %v7451
      %7496 = vst.msk [vmem:[#allocation2 + $0x14] sm:$0x1] %vm7492, %v7452
      %7497 = vst.msk [vmem:[#allocation2 + $0x18] sm:$0xf] %vm7489, %v7453
      %7498 = vst.msk [vmem:[#allocation2 + $0x1c] sm:$0xf] %vm7489, %v7454
      %7499 = vst.msk [vmem:[#allocation2 + $0x20] sm:$0x1] %vm7492, %v7455
      %7500 = vst.msk [vmem:[#allocation2 + $0x24] sm:$0xf] %vm7489, %v7456
      %7501 = vst.msk [vmem:[#allocation2 + $0x28] sm:$0xf] %vm7489, %v7457
      %7502 = vst.msk [vmem:[#allocation2 + $0x2c] sm:$0x1] %vm7492, %v7458
      %7503 = vst.msk [vmem:[#allocation2 + $0x30] sm:$0xf] %vm7489, %v7459
      %7504 = vst.msk [vmem:[#allocation2 + $0x34] sm:$0xf] %vm7489, %v7460
      %7505 = vst.msk [vmem:[#allocation2 + $0x38] sm:$0x1] %vm7492, %v7461
      %7506 = vst.msk [vmem:[#allocation2 + $0x3c] sm:$0xf] %vm7489, %v7462
      %7507 = vst.msk [vmem:[#allocation2 + $0x40] sm:$0xf] %vm7489, %v7463
      %7508 = vst.msk [vmem:[#allocation2 + $0x44] sm:$0x1] %vm7492, %v7464
      %7509 = vst.msk [vmem:[#allocation2 + $0x48] sm:$0xf] %vm7489, %v7465
      %7510 = vst.msk [vmem:[#allocation2 + $0x4c] sm:$0xf] %vm7489, %v7466
      %7511 = vst.msk [vmem:[#allocation2 + $0x50] sm:$0x1] %vm7492, %v7467
      %7512 = vst.msk [vmem:[#allocation2 + $0x54] sm:$0xf] %vm7489, %v7468
      %7513 = vst.msk [vmem:[#allocation2 + $0x58] sm:$0xf] %vm7489, %v7469
      %7514 = vst.msk [vmem:[#allocation2 + $0x5c] sm:$0x1] %vm7492, %v7470
      %7515 = vst.msk [vmem:[#allocation2 + $0x60] sm:$0xf] %vm7489, %v7471
      %7516 = vst.msk [vmem:[#allocation2 + $0x64] sm:$0xf] %vm7489, %v7472
      %7517 = vst.msk [vmem:[#allocation2 + $0x68] sm:$0x1] %vm7492, %v7473
      %7518 = vst.msk [vmem:[#allocation2 + $0x6c] sm:$0xf] %vm7489, %v7474
      %7519 = vst.msk [vmem:[#allocation2 + $0x70] sm:$0xf] %vm7489, %v7475
      %7520 = vst.msk [vmem:[#allocation2 + $0x74] sm:$0x1] %vm7492, %v7476
      %7521 = vst.msk [vmem:[#allocation2 + $0x78] sm:$0xf] %vm7489, %v7477
      %7522 = vst.msk [vmem:[#allocation2 + $0x7c] sm:$0xf] %vm7489, %v7478
      %7523 = vst.msk [vmem:[#allocation2 + $0x80] sm:$0x1] %vm7492, %v7479
      %7524 = vst.msk [vmem:[#allocation2 + $0x84] sm:$0xf] %vm7489, %v7480
      %7525 = vst.msk [vmem:[#allocation2 + $0x88] sm:$0xf] %vm7489, %v7481
      %7526 = vst.msk [vmem:[#allocation2 + $0x8c] sm:$0x1] %vm7492, %v7482
      %7527 = vst.msk [vmem:[#allocation2 + $0x90] sm:$0xf] %vm7489, %v7483
      %7528 = vst.msk [vmem:[#allocation2 + $0x94] sm:$0xf] %vm7489, %v7484
      %7529 = vst.msk [vmem:[#allocation2 + $0x98] sm:$0x1] %vm7492, %v7485
      %7530 = vst.msk [vmem:[#allocation2 + $0x9c] sm:$0xf] %vm7489, %v7486
      %7531 = vst.msk [vmem:[#allocation2 + $0xa0] sm:$0xf] %vm7489, %v7487
      %7532 = vst.msk [vmem:[#allocation2 + $0xa4] sm:$0x1] %vm7492, %v7488
      %v7542 = vrot.slane %v7095, 2
      %v7543 = vrot.slane %v7095, 4
      %v7544 = vrot.slane %v7095, 6
      %v7545 = vrot.slane %v7096, 2
      %v7546 = vrot.slane %v7096, 4
      %v7547 = vrot.slane %v7096, 6
      %v7548 = vrot.slane %v7097, 2
      %v7549 = vrot.slane %v7097, 4
      %v7550 = vrot.slane %v7097, 6
      %v7551 = vrot.slane %v7098, 2
      %v7552 = vrot.slane %v7098, 4
      %v7553 = vrot.slane %v7098, 6
      %v7554 = vrot.slane %v7099, 2
      %v7555 = vrot.slane %v7099, 4
      %v7556 = vrot.slane %v7099, 6
      %v7557 = vrot.slane %v7100, 2
      %v7558 = vrot.slane %v7100, 4
      %v7559 = vrot.slane %v7100, 6
      %v7560 = vrot.slane %v7101, 2
      %v7561 = vrot.slane %v7101, 4
      %v7562 = vrot.slane %v7101, 6
      %v7563 = vrot.slane %v7102, 2
      %v7564 = vrot.slane %v7102, 4
      %v7565 = vrot.slane %v7102, 6
      %v7566 = vrot.slane %v7103, 2
      %v7567 = vrot.slane %v7103, 4
      %v7568 = vrot.slane %v7103, 6
      %7569 = vst [vmem:[#allocation1] ss:$4 sm:$0xff] %v7095
      %s7570 = scalar_lea.vmem [#allocation1], 1
      %7571 = vst [vmem:[%s7570] ss:$4 sm:$0xff] %v7542
      %s7572 = scalar_lea.vmem [#allocation1], 2
      %7573 = vst [vmem:[%s7572] ss:$4 sm:$0xff] %v7543
      %s7574 = scalar_lea.vmem [#allocation1], 3
      %7575 = vst [vmem:[%s7574] ss:$4 sm:$0xff] %v7544
      %s7576 = scalar_lea.vmem [#allocation1], 32
      %7577 = vst [vmem:[%s7576] ss:$4 sm:$0xff] %v7096
      %s7578 = scalar_lea.vmem [#allocation1], 33
      %7579 = vst [vmem:[%s7578] ss:$4 sm:$0xff] %v7545
      %s7580 = scalar_lea.vmem [#allocation1], 34
      %7581 = vst [vmem:[%s7580] ss:$4 sm:$0xff] %v7546
      %s7582 = scalar_lea.vmem [#allocation1], 35
      %7583 = vst [vmem:[%s7582] ss:$4 sm:$0xff] %v7547
      %v7584 = vld.sshfl [vmem:[#allocation1] sm:$0xff pattern:$0x73625140]
      %v7585 = vld.sshfl [vmem:[#allocation1 + $0x20] sm:$0xff pattern:$0x73625140]
      %7586 = vst [vmem:[#allocation1] ss:$4 sm:$0xff] %v7097
      %v7587 = vld.sshfl [vmem:[#allocation1] sm:$0xff pattern:$0x73625140]
      %7588 = vst [vmem:[%s7576] ss:$4 sm:$0xff] %v7548
      %7589 = vst [vmem:[%s7578] ss:$4 sm:$0xff] %v7549
      %7590 = vst [vmem:[%s7580] ss:$4 sm:$0xff] %v7550
      %7591 = vst [vmem:[%s7582] ss:$4 sm:$0xff] %v7098
      %v7592 = vld.sshfl [vmem:[#allocation1 + $0x20] sm:$0xff pattern:$0x73625140]
      %7593 = vst [vmem:[#allocation1] ss:$4 sm:$0xff] %v7551
      %7594 = vst [vmem:[%s7570] ss:$4 sm:$0xff] %v7552
      %7595 = vst [vmem:[%s7572] ss:$4 sm:$0xff] %v7553
      %7596 = vst [vmem:[%s7574] ss:$4 sm:$0xff] %v7099
      %7597 = vst [vmem:[%s7576] ss:$4 sm:$0xff] %v7554
      %v7598 = vld.sshfl [vmem:[#allocation1] sm:$0xff pattern:$0x73625140]
      %v7599 = vld.sshfl [vmem:[#allocation1 + $0x20] sm:$0xff pattern:$0x73625140]
      %7600 = vst [vmem:[#allocation1] ss:$4 sm:$0xff] %v7555
      %7601 = vst [vmem:[%s7570] ss:$4 sm:$0xff] %v7556
      %7602 = vst [vmem:[%s7572] ss:$4 sm:$0xff] %v7100
      %7603 = vst [vmem:[%s7574] ss:$4 sm:$0xff] %v7557
      %7604 = vst [vmem:[%s7576] ss:$4 sm:$0xff] %v7558
      %7605 = vst [vmem:[%s7578] ss:$4 sm:$0xff] %v7559
      %7606 = vst [vmem:[%s7580] ss:$4 sm:$0xff] %v7101
      %7607 = vst [vmem:[%s7582] ss:$4 sm:$0xff] %v7560
      %v7608 = vld.sshfl [vmem:[#allocation1] sm:$0xff pattern:$0x73625140]
      %v7609 = vld.sshfl [vmem:[#allocation1 + $0x20] sm:$0xff pattern:$0x73625140]
      %7610 = vst [vmem:[#allocation1] ss:$4 sm:$0xff] %v7561
      %v7611 = vld.sshfl [vmem:[#allocation1] sm:$0xff pattern:$0x73625140]
      %7612 = vst [vmem:[%s7576] ss:$4 sm:$0xff] %v7562
      %7613 = vst [vmem:[%s7578] ss:$4 sm:$0xff] %v7102
      %7614 = vst [vmem:[%s7580] ss:$4 sm:$0xff] %v7563
      %7615 = vst [vmem:[%s7582] ss:$4 sm:$0xff] %v7564
      %v7616 = vld.sshfl [vmem:[#allocation1 + $0x20] sm:$0xff pattern:$0x73625140]
      %7617 = vst [vmem:[#allocation1] ss:$4 sm:$0xff] %v7565
      %7618 = vst [vmem:[%s7570] ss:$4 sm:$0xff] %v7103
      %7619 = vst [vmem:[%s7572] ss:$4 sm:$0xff] %v7566
      %7620 = vst [vmem:[%s7574] ss:$4 sm:$0xff] %v7567
      %7621 = vst [vmem:[%s7576] ss:$4 sm:$0xff] %v7568
      %v7622 = vld.sshfl [vmem:[#allocation1] sm:$0xff pattern:$0x73625140]
      %v7623 = vld.sshfl [vmem:[#allocation1 + $0x20] sm:$0xff pattern:$0x73625140]
      %v7636 = vpack.c.bf16 %v7584, %v7584
      %v7637 = vpack.c.bf16 %v7585, %v7585
      %v7638 = vpack.c.bf16 %v7587, %v7587
      %v7639 = vpack.c.bf16 %v7592, %v7592
      %v7640 = vpack.c.bf16 %v7598, %v7598
      %v7641 = vpack.c.bf16 %v7599, %v7599
      %v7642 = vpack.c.bf16 %v7608, %v7608
      %v7643 = vpack.c.bf16 %v7609, %v7609
      %v7644 = vpack.c.bf16 %v7611, %v7611
      %v7645 = vpack.c.bf16 %v7616, %v7616
      %v7646 = vpack.c.bf16 %v7622, %v7622
      %v7647 = vpack.c.bf16 %v7623, %v7623
      %s7648 = scalar_lea.vmem [#allocation2], 168
      %7649 = vst.msk [vmem:[%s7648] sm:$0xf] %vm7489, %v7636
      %7650 = vst.msk [vmem:[%s7648 + $0x4] sm:$0xf] %vm7489, %v7637
      %7651 = vst.msk [vmem:[%s7648 + $0x8] sm:$0x1] %vm7492, %v7638
      %7652 = vst.msk [vmem:[%s7648 + $0xc] sm:$0xf] %vm7489, %v7639
      %7653 = vst.msk [vmem:[%s7648 + $0x10] sm:$0xf] %vm7489, %v7640
      %7654 = vst.msk [vmem:[%s7648 + $0x14] sm:$0x1] %vm7492, %v7641
      %7655 = vst.msk [vmem:[%s7648 + $0x18] sm:$0xf] %vm7489, %v7642
      %7656 = vst.msk [vmem:[%s7648 + $0x1c] sm:$0xf] %vm7489, %v7643
      %7657 = vst.msk [vmem:[%s7648 + $0x20] sm:$0x1] %vm7492, %v7644
      %7658 = vst.msk [vmem:[%s7648 + $0x24] sm:$0xf] %vm7489, %v7645
      %7659 = vst.msk [vmem:[%s7648 + $0x28] sm:$0xf] %vm7489, %v7646
      %7660 = vst.msk [vmem:[%s7648 + $0x2c] sm:$0x1] %vm7492, %v7647
      %v7661 = vld [vmem:[#allocation2] sm:$0x2]
      %v7662 = vld [vmem:[#allocation2 + $0xc] sm:$0x2]
      %v7663 = vld [vmem:[#allocation2 + $0x18] sm:$0x2]
      %v7664 = vld [vmem:[#allocation2 + $0x24] sm:$0x2]
      %v7665 = vld [vmem:[#allocation2 + $0x30] sm:$0x2]
      %v7666 = vld [vmem:[#allocation2 + $0x3c] sm:$0x2]
      %v7667 = vld [vmem:[#allocation2 + $0x48] sm:$0x2]
      %v7668 = vld [vmem:[#allocation2 + $0x54] sm:$0x2]
      %v7669 = vld [vmem:[#allocation2 + $0x60] sm:$0x2]
      %v7670 = vld [vmem:[#allocation2 + $0x6c] sm:$0x2]
      %v7671 = vld [vmem:[#allocation2 + $0x78] sm:$0x2]
      %v7672 = vld [vmem:[#allocation2 + $0x84] sm:$0x2]
      %v7673 = vld [vmem:[#allocation2 + $0x90] sm:$0x2]
      %v7674 = vld [vmem:[#allocation2 + $0x9c] sm:$0x2]
      %v7675 = vld [vmem:[#allocation2 + $0xa8] sm:$0x2]
      %v7676 = vld [vmem:[#allocation2 + $0xb4] sm:$0x2]
      %v7677 = vld [vmem:[#allocation2 + $0xc0] sm:$0x2]
      %v7678 = vld [vmem:[#allocation2 + $0xcc] sm:$0x2]
      %v7697 = vrot.slane %v7661, 5
      %v7698 = vrot.slane %v7697, 4
      %v7699 = vrot.slane %v7662, 5
      %v7700 = vrot.slane %v7699, 4
      %v7701 = vrot.slane %v7663, 5
      %v7702 = vrot.slane %v7701, 4
      %v7703 = vrot.slane %v7664, 5
      %v7704 = vrot.slane %v7703, 4
      %v7705 = vrot.slane %v7665, 5
      %v7706 = vrot.slane %v7705, 4
      %v7707 = vrot.slane %v7666, 5
      %v7708 = vrot.slane %v7707, 4
      %v7709 = vrot.slane %v7667, 5
      %v7710 = vrot.slane %v7709, 4
      %v7711 = vrot.slane %v7668, 5
      %v7712 = vrot.slane %v7711, 4
      %v7713 = vrot.slane %v7669, 5
      %v7714 = vrot.slane %v7713, 4
      %v7715 = vrot.slane %v7670, 5
      %v7716 = vrot.slane %v7715, 4
      %v7717 = vrot.slane %v7671, 5
      %v7718 = vrot.slane %v7717, 4
      %v7719 = vrot.slane %v7672, 5
      %v7720 = vrot.slane %v7719, 4
      %v7721 = vrot.slane %v7673, 5
      %v7722 = vrot.slane %v7721, 4
      %v7723 = vrot.slane %v7674, 5
      %v7724 = vrot.slane %v7723, 4
      %v7725 = vrot.slane %v7675, 5
      %v7726 = vrot.slane %v7725, 4
      %v7727 = vrot.slane %v7676, 5
      %v7728 = vrot.slane %v7727, 4
      %v7729 = vrot.slane %v7677, 5
      %v7730 = vrot.slane %v7729, 4
      %v7731 = vrot.slane %v7678, 5
      %v7732 = vrot.slane %v7731, 4
      %vm7751 = vcmask 57344
      %vm7752 = vmand %vm7751, %vm953
      %v7753 = vld [vmem:[#allocation2] sm:$0x1]
      %v7754 = vsel %vm7752, %v7698, %v7753
      %7755 = vst [vmem:[#allocation2] sm:$0x1] %v7754
      %v7756 = vld [vmem:[#allocation2 + $0xc] sm:$0x1]
      %v7757 = vsel %vm7752, %v7700, %v7756
      %7758 = vst [vmem:[#allocation2 + $0xc] sm:$0x1] %v7757
      %v7759 = vld [vmem:[#allocation2 + $0x18] sm:$0x1]
      %v7760 = vsel %vm7752, %v7702, %v7759
      %7761 = vst [vmem:[#allocation2 + $0x18] sm:$0x1] %v7760
      %v7762 = vld [vmem:[#allocation2 + $0x24] sm:$0x1]
      %v7763 = vsel %vm7752, %v7704, %v7762
      %7764 = vst [vmem:[#allocation2 + $0x24] sm:$0x1] %v7763
      %v7765 = vld [vmem:[#allocation2 + $0x30] sm:$0x1]
      %v7766 = vsel %vm7752, %v7706, %v7765
      %7767 = vst [vmem:[#allocation2 + $0x30] sm:$0x1] %v7766
      %v7768 = vld [vmem:[#allocation2 + $0x3c] sm:$0x1]
      %v7769 = vsel %vm7752, %v7708, %v7768
      %7770 = vst [vmem:[#allocation2 + $0x3c] sm:$0x1] %v7769
      %v7771 = vld [vmem:[#allocation2 + $0x48] sm:$0x1]
      %v7772 = vsel %vm7752, %v7710, %v7771
      %7773 = vst [vmem:[#allocation2 + $0x48] sm:$0x1] %v7772
      %v7774 = vld [vmem:[#allocation2 + $0x54] sm:$0x1]
      %v7775 = vsel %vm7752, %v7712, %v7774
      %7776 = vst [vmem:[#allocation2 + $0x54] sm:$0x1] %v7775
      %v7777 = vld [vmem:[#allocation2 + $0x60] sm:$0x1]
      %v7778 = vsel %vm7752, %v7714, %v7777
      %7779 = vst [vmem:[#allocation2 + $0x60] sm:$0x1] %v7778
      %v7780 = vld [vmem:[#allocation2 + $0x6c] sm:$0x1]
      %v7781 = vsel %vm7752, %v7716, %v7780
      %7782 = vst [vmem:[#allocation2 + $0x6c] sm:$0x1] %v7781
      %v7783 = vld [vmem:[#allocation2 + $0x78] sm:$0x1]
      %v7784 = vsel %vm7752, %v7718, %v7783
      %7785 = vst [vmem:[#allocation2 + $0x78] sm:$0x1] %v7784
      %v7786 = vld [vmem:[#allocation2 + $0x84] sm:$0x1]
      %v7787 = vsel %vm7752, %v7720, %v7786
      %7788 = vst [vmem:[#allocation2 + $0x84] sm:$0x1] %v7787
      %v7789 = vld [vmem:[#allocation2 + $0x90] sm:$0x1]
      %v7790 = vsel %vm7752, %v7722, %v7789
      %7791 = vst [vmem:[#allocation2 + $0x90] sm:$0x1] %v7790
      %v7792 = vld [vmem:[#allocation2 + $0x9c] sm:$0x1]
      %v7793 = vsel %vm7752, %v7724, %v7792
      %7794 = vst [vmem:[#allocation2 + $0x9c] sm:$0x1] %v7793
      %v7795 = vld [vmem:[#allocation2 + $0xa8] sm:$0x1]
      %v7796 = vsel %vm7752, %v7726, %v7795
      %7797 = vst [vmem:[#allocation2 + $0xa8] sm:$0x1] %v7796
      %v7798 = vld [vmem:[#allocation2 + $0xb4] sm:$0x1]
      %v7799 = vsel %vm7752, %v7728, %v7798
      %7800 = vst [vmem:[#allocation2 + $0xb4] sm:$0x1] %v7799
      %v7801 = vld [vmem:[#allocation2 + $0xc0] sm:$0x1]
      %v7802 = vsel %vm7752, %v7730, %v7801
      %7803 = vst [vmem:[#allocation2 + $0xc0] sm:$0x1] %v7802
      %v7804 = vld [vmem:[#allocation2 + $0xcc] sm:$0x1]
      %v7805 = vsel %vm7752, %v7732, %v7804
      %7806 = vst [vmem:[#allocation2 + $0xcc] sm:$0x1] %v7805
      %v7807 = vld [vmem:[#allocation2 + $0x4] sm:$0x8]
      %v7808 = vld [vmem:[#allocation2 + $0x10] sm:$0x8]
      %v7809 = vld [vmem:[#allocation2 + $0x1c] sm:$0x8]
      %v7810 = vld [vmem:[#allocation2 + $0x28] sm:$0x8]
      %v7811 = vld [vmem:[#allocation2 + $0x34] sm:$0x8]
      %v7812 = vld [vmem:[#allocation2 + $0x40] sm:$0x8]
      %v7813 = vld [vmem:[#allocation2 + $0x4c] sm:$0x8]
      %v7814 = vld [vmem:[#allocation2 + $0x58] sm:$0x8]
      %v7815 = vld [vmem:[#allocation2 + $0x64] sm:$0x8]
      %v7816 = vld [vmem:[#allocation2 + $0x70] sm:$0x8]
      %v7817 = vld [vmem:[#allocation2 + $0x7c] sm:$0x8]
      %v7818 = vld [vmem:[#allocation2 + $0x88] sm:$0x8]
      %v7819 = vld [vmem:[#allocation2 + $0x94] sm:$0x8]
      %v7820 = vld [vmem:[#allocation2 + $0xa0] sm:$0x8]
      %v7821 = vld [vmem:[#allocation2 + $0xac] sm:$0x8]
      %v7822 = vld [vmem:[#allocation2 + $0xb8] sm:$0x8]
      %v7823 = vld [vmem:[#allocation2 + $0xc4] sm:$0x8]
      %v7824 = vld [vmem:[#allocation2 + $0xd0] sm:$0x8]
      %v7843 = vrot.slane %v7807, 7
      %v7844 = vrot.slane %v7843, 4
      %v7845 = vrot.slane %v7808, 7
      %v7846 = vrot.slane %v7845, 4
      %v7847 = vrot.slane %v7809, 7
      %v7848 = vrot.slane %v7847, 4
      %v7849 = vrot.slane %v7810, 7
      %v7850 = vrot.slane %v7849, 4
      %v7851 = vrot.slane %v7811, 7
      %v7852 = vrot.slane %v7851, 4
      %v7853 = vrot.slane %v7812, 7
      %v7854 = vrot.slane %v7853, 4
      %v7855 = vrot.slane %v7813, 7
      %v7856 = vrot.slane %v7855, 4
      %v7857 = vrot.slane %v7814, 7
      %v7858 = vrot.slane %v7857, 4
      %v7859 = vrot.slane %v7815, 7
      %v7860 = vrot.slane %v7859, 4
      %v7861 = vrot.slane %v7816, 7
      %v7862 = vrot.slane %v7861, 4
      %v7863 = vrot.slane %v7817, 7
      %v7864 = vrot.slane %v7863, 4
      %v7865 = vrot.slane %v7818, 7
      %v7866 = vrot.slane %v7865, 4
      %v7867 = vrot.slane %v7819, 7
      %v7868 = vrot.slane %v7867, 4
      %v7869 = vrot.slane %v7820, 7
      %v7870 = vrot.slane %v7869, 4
      %v7871 = vrot.slane %v7821, 7
      %v7872 = vrot.slane %v7871, 4
      %v7873 = vrot.slane %v7822, 7
      %v7874 = vrot.slane %v7873, 4
      %v7875 = vrot.slane %v7823, 7
      %v7876 = vrot.slane %v7875, 4
      %v7877 = vrot.slane %v7824, 7
      %v7878 = vrot.slane %v7877, 4
      %vm7897 = vsmask.f32 7938
      %vm7898 = vmand %vm7751, %vm7897
      %v7899 = vld [vmem:[#allocation2 + $0x8] sm:$0x1]
      %v7900 = vsel %vm7898, %v7844, %v7899
      %7901 = vst [vmem:[#allocation2 + $0x8] sm:$0x1] %v7900
      %v7902 = vld [vmem:[#allocation2 + $0x14] sm:$0x1]
      %v7903 = vsel %vm7898, %v7846, %v7902
      %7904 = vst [vmem:[#allocation2 + $0x14] sm:$0x1] %v7903
      %v7905 = vld [vmem:[#allocation2 + $0x20] sm:$0x1]
      %v7906 = vsel %vm7898, %v7848, %v7905
      %7907 = vst [vmem:[#allocation2 + $0x20] sm:$0x1] %v7906
      %v7908 = vld [vmem:[#allocation2 + $0x2c] sm:$0x1]
      %v7909 = vsel %vm7898, %v7850, %v7908
      %7910 = vst [vmem:[#allocation2 + $0x2c] sm:$0x1] %v7909
      %v7911 = vld [vmem:[#allocation2 + $0x38] sm:$0x1]
      %v7912 = vsel %vm7898, %v7852, %v7911
      %7913 = vst [vmem:[#allocation2 + $0x38] sm:$0x1] %v7912
      %v7914 = vld [vmem:[#allocation2 + $0x44] sm:$0x1]
      %v7915 = vsel %vm7898, %v7854, %v7914
      %7916 = vst [vmem:[#allocation2 + $0x44] sm:$0x1] %v7915
      %v7917 = vld [vmem:[#allocation2 + $0x50] sm:$0x1]
      %v7918 = vsel %vm7898, %v7856, %v7917
      %7919 = vst [vmem:[#allocation2 + $0x50] sm:$0x1] %v7918
      %v7920 = vld [vmem:[#allocation2 + $0x5c] sm:$0x1]
      %v7921 = vsel %vm7898, %v7858, %v7920
      %7922 = vst [vmem:[#allocation2 + $0x5c] sm:$0x1] %v7921
      %v7923 = vld [vmem:[#allocation2 + $0x68] sm:$0x1]
      %v7924 = vsel %vm7898, %v7860, %v7923
      %7925 = vst [vmem:[#allocation2 + $0x68] sm:$0x1] %v7924
      %v7926 = vld [vmem:[#allocation2 + $0x74] sm:$0x1]
      %v7927 = vsel %vm7898, %v7862, %v7926
      %7928 = vst [vmem:[#allocation2 + $0x74] sm:$0x1] %v7927
      %v7929 = vld [vmem:[#allocation2 + $0x80] sm:$0x1]
      %v7930 = vsel %vm7898, %v7864, %v7929
      %7931 = vst [vmem:[#allocation2 + $0x80] sm:$0x1] %v7930
      %v7932 = vld [vmem:[#allocation2 + $0x8c] sm:$0x1]
      %v7933 = vsel %vm7898, %v7866, %v7932
      %7934 = vst [vmem:[#allocation2 + $0x8c] sm:$0x1] %v7933
      %v7935 = vld [vmem:[#allocation2 + $0x98] sm:$0x1]
      %v7936 = vsel %vm7898, %v7868, %v7935
      %7937 = vst [vmem:[#allocation2 + $0x98] sm:$0x1] %v7936
      %v7938 = vld [vmem:[#allocation2 + $0xa4] sm:$0x1]
      %v7939 = vsel %vm7898, %v7870, %v7938
      %7940 = vst [vmem:[#allocation2 + $0xa4] sm:$0x1] %v7939
      %v7941 = vld [vmem:[#allocation2 + $0xb0] sm:$0x1]
      %v7942 = vsel %vm7898, %v7872, %v7941
      %7943 = vst [vmem:[#allocation2 + $0xb0] sm:$0x1] %v7942
      %v7944 = vld [vmem:[#allocation2 + $0xbc] sm:$0x1]
      %v7945 = vsel %vm7898, %v7874, %v7944
      %7946 = vst [vmem:[#allocation2 + $0xbc] sm:$0x1] %v7945
      %v7947 = vld [vmem:[#allocation2 + $0xc8] sm:$0x1]
      %v7948 = vsel %vm7898, %v7876, %v7947
      %7949 = vst [vmem:[#allocation2 + $0xc8] sm:$0x1] %v7948
      %v7950 = vld [vmem:[#allocation2 + $0xd4] sm:$0x1]
      %v7951 = vsel %vm7898, %v7878, %v7950
      %7952 = vst [vmem:[#allocation2 + $0xd4] sm:$0x1] %v7951
      %p7953 = scmp.eq.s32.totalorder %s22, 0
      // Predicated region
      $region45: #{_lambda_.1} parent=43 // pred_check
        %p7954 = pneg %p7953
      $region46: #{_lambda_.1} parent=43 // pred_check_branch
        %7956 = sbr.rel (%p7954) target = $region48
      $region47: #{_lambda_.1} parent=43 // pred_region
        %s7957 = scalar_lea.vmem [#allocation2], 24
        %v7958 = vld [vmem:[%s7957] sm:$0xf]
        %v7959 = vld [vmem:[%s7957 + $0x4] sm:$0xf]
        %v7960 = vld [vmem:[%s7957 + $0x8] sm:$0x1]
        %7961 = vst.msk [vmem:[#allocation2] sm:$0xf] %vm7489, %v7958
        %7962 = vst.msk [vmem:[#allocation2 + $0x4] sm:$0xf] %vm7489, %v7959
        %7963 = vst.msk [vmem:[#allocation2 + $0x8] sm:$0x1] %vm7492, %v7960
        %s7964 = scalar_lea.vmem [#allocation2], 180
        %v7965 = vld [vmem:[%s7964] sm:$0xf]
        %v7966 = vld [vmem:[%s7964 + $0x4] sm:$0xf]
        %v7967 = vld [vmem:[%s7964 + $0x8] sm:$0x1]
        %s7968 = scalar_lea.vmem [#allocation2], 204
        %7969 = vst.msk [vmem:[%s7968] sm:$0xf] %vm7489, %v7965
        %7970 = vst.msk [vmem:[%s7968 + $0x4] sm:$0xf] %vm7489, %v7966
        %7971 = vst.msk [vmem:[%s7968 + $0x8] sm:$0x1] %vm7492, %v7967
      $region48: #{_lambda_.1} parent=43 // pred_fallthru
        _
      %v7972 = vld [vmem:[#allocation2] sm:$0xf]
      %v7973 = vld [vmem:[#allocation2 + $0x4] sm:$0xf]
      %v7974 = vld [vmem:[#allocation2 + $0x8] sm:$0x1]
      %v7975 = vld [vmem:[#allocation2 + $0xc] sm:$0xf]
      %v7976 = vld [vmem:[#allocation2 + $0x10] sm:$0xf]
      %v7977 = vld [vmem:[#allocation2 + $0x14] sm:$0x1]
      %v7978 = vld [vmem:[#allocation2 + $0x18] sm:$0xf]
      %v7979 = vld [vmem:[#allocation2 + $0x1c] sm:$0xf]
      %v7980 = vld [vmem:[#allocation2 + $0x20] sm:$0x1]
      %v7981 = vld [vmem:[#allocation2 + $0x24] sm:$0xf]
      %v7982 = vld [vmem:[#allocation2 + $0x28] sm:$0xf]
      %v7983 = vld [vmem:[#allocation2 + $0x2c] sm:$0x1]
      %v7984 = vld [vmem:[#allocation2 + $0x30] sm:$0xf]
      %v7985 = vld [vmem:[#allocation2 + $0x34] sm:$0xf]
      %v7986 = vld [vmem:[#allocation2 + $0x38] sm:$0x1]
      %v7987 = vld [vmem:[#allocation2 + $0x3c] sm:$0xf]
      %v7988 = vld [vmem:[#allocation2 + $0x40] sm:$0xf]
      %v7989 = vld [vmem:[#allocation2 + $0x44] sm:$0x1]
      %v7990 = vld [vmem:[#allocation2 + $0x48] sm:$0xf]
      %v7991 = vld [vmem:[#allocation2 + $0x4c] sm:$0xf]
      %v7992 = vld [vmem:[#allocation2 + $0x50] sm:$0x1]
      %v7993 = vld [vmem:[#allocation2 + $0x54] sm:$0xf]
      %v7994 = vld [vmem:[#allocation2 + $0x58] sm:$0xf]
      %v7995 = vld [vmem:[#allocation2 + $0x5c] sm:$0x1]
      %v7996 = vld [vmem:[#allocation2 + $0x60] sm:$0xf]
      %v7997 = vld [vmem:[#allocation2 + $0x64] sm:$0xf]
      %v7998 = vld [vmem:[#allocation2 + $0x68] sm:$0x1]
      %v7999 = vld [vmem:[#allocation2 + $0x6c] sm:$0xf]
      %v8000 = vld [vmem:[#allocation2 + $0x70] sm:$0xf]
      %v8001 = vld [vmem:[#allocation2 + $0x74] sm:$0x1]
      %v8002 = vld [vmem:[#allocation2 + $0x78] sm:$0xf]
      %v8003 = vld [vmem:[#allocation2 + $0x7c] sm:$0xf]
      %v8004 = vld [vmem:[#allocation2 + $0x80] sm:$0x1]
      %v8005 = vld [vmem:[#allocation2 + $0x84] sm:$0xf]
      %v8006 = vld [vmem:[#allocation2 + $0x88] sm:$0xf]
      %v8007 = vld [vmem:[#allocation2 + $0x8c] sm:$0x1]
      %v8008 = vld [vmem:[#allocation2 + $0x90] sm:$0xf]
      %v8009 = vld [vmem:[#allocation2 + $0x94] sm:$0xf]
      %v8010 = vld [vmem:[#allocation2 + $0x98] sm:$0x1]
      %v8011 = vld [vmem:[#allocation2 + $0x9c] sm:$0xf]
      %v8012 = vld [vmem:[#allocation2 + $0xa0] sm:$0xf]
      %v8013 = vld [vmem:[#allocation2 + $0xa4] sm:$0x1]
      %v8014 = vld [vmem:[#allocation2 + $0xa8] sm:$0xf]
      %v8015 = vld [vmem:[#allocation2 + $0xac] sm:$0xf]
      %v8016 = vld [vmem:[#allocation2 + $0xb0] sm:$0x1]
      %v8017 = vld [vmem:[#allocation2 + $0xb4] sm:$0xf]
      %v8018 = vld [vmem:[#allocation2 + $0xb8] sm:$0xf]
      %v8019 = vld [vmem:[#allocation2 + $0xbc] sm:$0x1]
      %v8020 = vld [vmem:[#allocation2 + $0xc0] sm:$0xf]
      %v8021 = vld [vmem:[#allocation2 + $0xc4] sm:$0xf]
      %v8022 = vld [vmem:[#allocation2 + $0xc8] sm:$0x1]
      %v8023 = vld [vmem:[#allocation2 + $0xcc] sm:$0xf]
      %v8024 = vld [vmem:[#allocation2 + $0xd0] sm:$0xf]
      %v8025 = vld [vmem:[#allocation2 + $0xd4] sm:$0x1]
      %v8026 = vld [vmem:[%s4] sm:$0xf]
      %v8027 = vld [vmem:[%s4 + $0x4] sm:$0xf]
      %v8028 = vld [vmem:[%s4 + $0x8] sm:$0xf]
      %v8029 = vld [vmem:[%s4 + $0xc] sm:$0xf]
      %v8030 = vld [vmem:[%s4 + $0x10] sm:$0xf]
      %v8031 = vld [vmem:[%s4 + $0x14] sm:$0xf]
      %v8032 = vld [vmem:[%s4 + $0x18] sm:$0xf]
      %v8033 = vld [vmem:[%s4 + $0x1c] sm:$0xf]
      %v8034 = vld [vmem:[%s4 + $0x20] sm:$0xf]
      %v8035 = vld [vmem:[%s5] sm:$0x1]
      %vm8036 = vsmask.f32 3328
      %vm8037 = vsmask.f32 7440
      %vm8038 = vmor %vm8036, %vm8037
      %v8040 = vshrl.u32 %v7972, 16
      %v8042 = vrot.slane %v8040, 4
      %v8043 = vshll.u32 %v7972, 16
      %v8045 = vrot.slane %v8043, 5
      %v8046 = vor.u32 %v8042, %v8045
      %v8047 = vrot.slane %v8046, 4
      %v8049 = vshll.u32 %v7973, 16
      %v8051 = vrot.slane %v8049, 5
      %v8052 = vsel %vm8038, %v8047, %v8051
      %v8053 = vshrl.u32 %v7973, 16
      %v8055 = vrot.slane %v8053, 4
      %v8056 = vor.u32 %v8055, %v8051
      %v8057 = vrot.slane %v8056, 4
      %v8059 = vshll.u32 %v7974, 16
      %v8061 = vrot.slane %v8059, 5
      %v8062 = vsel %vm8038, %v8057, %v8061
      %v8064 = vshrl.u32 %v7975, 16
      %v8066 = vrot.slane %v8064, 4
      %v8067 = vshll.u32 %v7975, 16
      %v8069 = vrot.slane %v8067, 5
      %v8070 = vor.u32 %v8066, %v8069
      %v8071 = vrot.slane %v8070, 4
      %v8073 = vshll.u32 %v7976, 16
      %v8075 = vrot.slane %v8073, 5
      %v8076 = vsel %vm8038, %v8071, %v8075
      %v8077 = vshrl.u32 %v7976, 16
      %v8079 = vrot.slane %v8077, 4
      %v8080 = vor.u32 %v8079, %v8075
      %v8081 = vrot.slane %v8080, 4
      %v8083 = vshll.u32 %v7977, 16
      %v8085 = vrot.slane %v8083, 5
      %v8086 = vsel %vm8038, %v8081, %v8085
      %v8088 = vshrl.u32 %v7978, 16
      %v8090 = vrot.slane %v8088, 4
      %v8091 = vshll.u32 %v7978, 16
      %v8093 = vrot.slane %v8091, 5
      %v8094 = vor.u32 %v8090, %v8093
      %v8095 = vrot.slane %v8094, 4
      %v8097 = vshll.u32 %v7979, 16
      %v8099 = vrot.slane %v8097, 5
      %v8100 = vsel %vm8038, %v8095, %v8099
      %v8101 = vshrl.u32 %v7979, 16
      %v8103 = vrot.slane %v8101, 4
      %v8104 = vor.u32 %v8103, %v8099
      %v8105 = vrot.slane %v8104, 4
      %v8107 = vshll.u32 %v7980, 16
      %v8109 = vrot.slane %v8107, 5
      %v8110 = vsel %vm8038, %v8105, %v8109
      %v8112 = vshrl.u32 %v7981, 16
      %v8114 = vrot.slane %v8112, 4
      %v8115 = vshll.u32 %v7981, 16
      %v8117 = vrot.slane %v8115, 5
      %v8118 = vor.u32 %v8114, %v8117
      %v8119 = vrot.slane %v8118, 4
      %v8121 = vshll.u32 %v7982, 16
      %v8123 = vrot.slane %v8121, 5
      %v8124 = vsel %vm8038, %v8119, %v8123
      %v8125 = vshrl.u32 %v7982, 16
      %v8127 = vrot.slane %v8125, 4
      %v8128 = vor.u32 %v8127, %v8123
      %v8129 = vrot.slane %v8128, 4
      %v8131 = vshll.u32 %v7983, 16
      %v8133 = vrot.slane %v8131, 5
      %v8134 = vsel %vm8038, %v8129, %v8133
      %v8136 = vshrl.u32 %v7984, 16
      %v8138 = vrot.slane %v8136, 4
      %v8139 = vshll.u32 %v7984, 16
      %v8141 = vrot.slane %v8139, 5
      %v8142 = vor.u32 %v8138, %v8141
      %v8143 = vrot.slane %v8142, 4
      %v8145 = vshll.u32 %v7985, 16
      %v8147 = vrot.slane %v8145, 5
      %v8148 = vsel %vm8038, %v8143, %v8147
      %v8149 = vshrl.u32 %v7985, 16
      %v8151 = vrot.slane %v8149, 4
      %v8152 = vor.u32 %v8151, %v8147
      %v8153 = vrot.slane %v8152, 4
      %v8155 = vshll.u32 %v7986, 16
      %v8157 = vrot.slane %v8155, 5
      %v8158 = vsel %vm8038, %v8153, %v8157
      %v8160 = vshrl.u32 %v7987, 16
      %v8162 = vrot.slane %v8160, 4
      %v8163 = vshll.u32 %v7987, 16
      %v8165 = vrot.slane %v8163, 5
      %v8166 = vor.u32 %v8162, %v8165
      %v8167 = vrot.slane %v8166, 4
      %v8169 = vshll.u32 %v7988, 16
      %v8171 = vrot.slane %v8169, 5
      %v8172 = vsel %vm8038, %v8167, %v8171
      %v8173 = vshrl.u32 %v7988, 16
      %v8175 = vrot.slane %v8173, 4
      %v8176 = vor.u32 %v8175, %v8171
      %v8177 = vrot.slane %v8176, 4
      %v8179 = vshll.u32 %v7989, 16
      %v8181 = vrot.slane %v8179, 5
      %v8182 = vsel %vm8038, %v8177, %v8181
      %v8184 = vshrl.u32 %v7990, 16
      %v8186 = vrot.slane %v8184, 4
      %v8187 = vshll.u32 %v7990, 16
      %v8189 = vrot.slane %v8187, 5
      %v8190 = vor.u32 %v8186, %v8189
      %v8191 = vrot.slane %v8190, 4
      %v8193 = vshll.u32 %v7991, 16
      %v8195 = vrot.slane %v8193, 5
      %v8196 = vsel %vm8038, %v8191, %v8195
      %v8197 = vshrl.u32 %v7991, 16
      %v8199 = vrot.slane %v8197, 4
      %v8200 = vor.u32 %v8199, %v8195
      %v8201 = vrot.slane %v8200, 4
      %v8203 = vshll.u32 %v7992, 16
      %v8205 = vrot.slane %v8203, 5
      %v8206 = vsel %vm8038, %v8201, %v8205
      %v8208 = vshrl.u32 %v7993, 16
      %v8210 = vrot.slane %v8208, 4
      %v8211 = vshll.u32 %v7993, 16
      %v8213 = vrot.slane %v8211, 5
      %v8214 = vor.u32 %v8210, %v8213
      %v8215 = vrot.slane %v8214, 4
      %v8217 = vshll.u32 %v7994, 16
      %v8219 = vrot.slane %v8217, 5
      %v8220 = vsel %vm8038, %v8215, %v8219
      %v8221 = vshrl.u32 %v7994, 16
      %v8223 = vrot.slane %v8221, 4
      %v8224 = vor.u32 %v8223, %v8219
      %v8225 = vrot.slane %v8224, 4
      %v8227 = vshll.u32 %v7995, 16
      %v8229 = vrot.slane %v8227, 5
      %v8230 = vsel %vm8038, %v8225, %v8229
      %v8232 = vshrl.u32 %v7996, 16
      %v8234 = vrot.slane %v8232, 4
      %v8235 = vshll.u32 %v7996, 16
      %v8237 = vrot.slane %v8235, 5
      %v8238 = vor.u32 %v8234, %v8237
      %v8239 = vrot.slane %v8238, 4
      %v8241 = vshll.u32 %v7997, 16
      %v8243 = vrot.slane %v8241, 5
      %v8244 = vsel %vm8038, %v8239, %v8243
      %v8245 = vshrl.u32 %v7997, 16
      %v8247 = vrot.slane %v8245, 4
      %v8248 = vor.u32 %v8247, %v8243
      %v8249 = vrot.slane %v8248, 4
      %v8251 = vshll.u32 %v7998, 16
      %v8253 = vrot.slane %v8251, 5
      %v8254 = vsel %vm8038, %v8249, %v8253
      %v8256 = vshrl.u32 %v7999, 16
      %v8258 = vrot.slane %v8256, 4
      %v8259 = vshll.u32 %v7999, 16
      %v8261 = vrot.slane %v8259, 5
      %v8262 = vor.u32 %v8258, %v8261
      %v8263 = vrot.slane %v8262, 4
      %v8265 = vshll.u32 %v8000, 16
      %v8267 = vrot.slane %v8265, 5
      %v8268 = vsel %vm8038, %v8263, %v8267
      %v8269 = vshrl.u32 %v8000, 16
      %v8271 = vrot.slane %v8269, 4
      %v8272 = vor.u32 %v8271, %v8267
      %v8273 = vrot.slane %v8272, 4
      %v8275 = vshll.u32 %v8001, 16
      %v8277 = vrot.slane %v8275, 5
      %v8278 = vsel %vm8038, %v8273, %v8277
      %v8280 = vshrl.u32 %v8002, 16
      %v8282 = vrot.slane %v8280, 4
      %v8283 = vshll.u32 %v8002, 16
      %v8285 = vrot.slane %v8283, 5
      %v8286 = vor.u32 %v8282, %v8285
      %v8287 = vrot.slane %v8286, 4
      %v8289 = vshll.u32 %v8003, 16
      %v8291 = vrot.slane %v8289, 5
      %v8292 = vsel %vm8038, %v8287, %v8291
      %v8293 = vshrl.u32 %v8003, 16
      %v8295 = vrot.slane %v8293, 4
      %v8296 = vor.u32 %v8295, %v8291
      %v8297 = vrot.slane %v8296, 4
      %v8299 = vshll.u32 %v8004, 16
      %v8301 = vrot.slane %v8299, 5
      %v8302 = vsel %vm8038, %v8297, %v8301
      %v8304 = vshrl.u32 %v8005, 16
      %v8306 = vrot.slane %v8304, 4
      %v8307 = vshll.u32 %v8005, 16
      %v8309 = vrot.slane %v8307, 5
      %v8310 = vor.u32 %v8306, %v8309
      %v8311 = vrot.slane %v8310, 4
      %v8313 = vshll.u32 %v8006, 16
      %v8315 = vrot.slane %v8313, 5
      %v8316 = vsel %vm8038, %v8311, %v8315
      %v8317 = vshrl.u32 %v8006, 16
      %v8319 = vrot.slane %v8317, 4
      %v8320 = vor.u32 %v8319, %v8315
      %v8321 = vrot.slane %v8320, 4
      %v8323 = vshll.u32 %v8007, 16
      %v8325 = vrot.slane %v8323, 5
      %v8326 = vsel %vm8038, %v8321, %v8325
      %v8328 = vshrl.u32 %v8008, 16
      %v8330 = vrot.slane %v8328, 4
      %v8331 = vshll.u32 %v8008, 16
      %v8333 = vrot.slane %v8331, 5
      %v8334 = vor.u32 %v8330, %v8333
      %v8335 = vrot.slane %v8334, 4
      %v8337 = vshll.u32 %v8009, 16
      %v8339 = vrot.slane %v8337, 5
      %v8340 = vsel %vm8038, %v8335, %v8339
      %v8341 = vshrl.u32 %v8009, 16
      %v8343 = vrot.slane %v8341, 4
      %v8344 = vor.u32 %v8343, %v8339
      %v8345 = vrot.slane %v8344, 4
      %v8347 = vshll.u32 %v8010, 16
      %v8349 = vrot.slane %v8347, 5
      %v8350 = vsel %vm8038, %v8345, %v8349
      %v8352 = vshrl.u32 %v8011, 16
      %v8354 = vrot.slane %v8352, 4
      %v8355 = vshll.u32 %v8011, 16
      %v8357 = vrot.slane %v8355, 5
      %v8358 = vor.u32 %v8354, %v8357
      %v8359 = vrot.slane %v8358, 4
      %v8361 = vshll.u32 %v8012, 16
      %v8363 = vrot.slane %v8361, 5
      %v8364 = vsel %vm8038, %v8359, %v8363
      %v8365 = vshrl.u32 %v8012, 16
      %v8367 = vrot.slane %v8365, 4
      %v8368 = vor.u32 %v8367, %v8363
      %v8369 = vrot.slane %v8368, 4
      %v8371 = vshll.u32 %v8013, 16
      %v8373 = vrot.slane %v8371, 5
      %v8374 = vsel %vm8038, %v8369, %v8373
      %v8376 = vshrl.u32 %v8014, 16
      %v8378 = vrot.slane %v8376, 4
      %v8379 = vshll.u32 %v8014, 16
      %v8381 = vrot.slane %v8379, 5
      %v8382 = vor.u32 %v8378, %v8381
      %v8383 = vrot.slane %v8382, 4
      %v8385 = vshll.u32 %v8015, 16
      %v8387 = vrot.slane %v8385, 5
      %v8388 = vsel %vm8038, %v8383, %v8387
      %v8389 = vshrl.u32 %v8015, 16
      %v8391 = vrot.slane %v8389, 4
      %v8392 = vor.u32 %v8391, %v8387
      %v8393 = vrot.slane %v8392, 4
      %v8395 = vshll.u32 %v8016, 16
      %v8397 = vrot.slane %v8395, 5
      %v8398 = vsel %vm8038, %v8393, %v8397
      %v8400 = vshrl.u32 %v8017, 16
      %v8402 = vrot.slane %v8400, 4
      %v8403 = vshll.u32 %v8017, 16
      %v8405 = vrot.slane %v8403, 5
      %v8406 = vor.u32 %v8402, %v8405
      %v8407 = vrot.slane %v8406, 4
      %v8409 = vshll.u32 %v8018, 16
      %v8411 = vrot.slane %v8409, 5
      %v8412 = vsel %vm8038, %v8407, %v8411
      %v8413 = vshrl.u32 %v8018, 16
      %v8415 = vrot.slane %v8413, 4
      %v8416 = vor.u32 %v8415, %v8411
      %v8417 = vrot.slane %v8416, 4
      %v8419 = vshll.u32 %v8019, 16
      %v8421 = vrot.slane %v8419, 5
      %v8422 = vsel %vm8038, %v8417, %v8421
      %v8423 = vunpack.c.l.b16 %v8052
      %v8424 = vunpack.c.l.b16 %v8062
      %v8425 = vunpack.c.l.b16 %v8076
      %v8426 = vunpack.c.l.b16 %v8086
      %v8427 = vunpack.c.l.b16 %v8100
      %v8428 = vunpack.c.l.b16 %v8110
      %v8429 = vunpack.c.l.b16 %v8124
      %v8430 = vunpack.c.l.b16 %v8134
      %v8431 = vunpack.c.l.b16 %v8148
      %v8432 = vunpack.c.l.b16 %v8158
      %v8433 = vunpack.c.l.b16 %v8172
      %v8434 = vunpack.c.l.b16 %v8182
      %v8435 = vunpack.c.l.b16 %v8196
      %v8436 = vunpack.c.l.b16 %v8206
      %v8437 = vunpack.c.l.b16 %v8220
      %v8438 = vunpack.c.l.b16 %v8230
      %v8439 = vunpack.c.l.b16 %v8244
      %v8440 = vunpack.c.l.b16 %v8254
      %v8441 = vunpack.c.l.b16 %v8268
      %v8442 = vunpack.c.l.b16 %v8278
      %v8443 = vunpack.c.l.b16 %v8292
      %v8444 = vunpack.c.l.b16 %v8302
      %v8445 = vunpack.c.l.b16 %v8316
      %v8446 = vunpack.c.l.b16 %v8326
      %v8447 = vunpack.c.l.b16 %v8340
      %v8448 = vunpack.c.l.b16 %v8350
      %v8449 = vunpack.c.l.b16 %v8364
      %v8450 = vunpack.c.l.b16 %v8374
      %v8451 = vunpack.c.l.b16 %v8388
      %v8452 = vunpack.c.l.b16 %v8398
      %v8453 = vunpack.c.l.b16 %v8412
      %v8454 = vunpack.c.l.b16 %v8422
      %v8455 = vpack.c.b16 %v8424, %v8423
      %v8456 = vpack.c.b16 %v8426, %v8425
      %v8457 = vpack.c.b16 %v8428, %v8427
      %v8458 = vpack.c.b16 %v8430, %v8429
      %v8459 = vpack.c.b16 %v8432, %v8431
      %v8460 = vpack.c.b16 %v8434, %v8433
      %v8461 = vpack.c.b16 %v8436, %v8435
      %v8462 = vpack.c.b16 %v8438, %v8437
      %v8463 = vpack.c.b16 %v8440, %v8439
      %v8464 = vpack.c.b16 %v8442, %v8441
      %v8465 = vpack.c.b16 %v8444, %v8443
      %v8466 = vpack.c.b16 %v8446, %v8445
      %v8467 = vpack.c.b16 %v8448, %v8447
      %v8468 = vpack.c.b16 %v8450, %v8449
      %v8469 = vpack.c.b16 %v8452, %v8451
      %v8470 = vpack.c.b16 %v8454, %v8453
      %vm8471 = vcmask 64512
      %v8473 = vsel %vm8471, %v8455, 0
      %v8476 = vsel %vm8471, %v8456, 0
      %v8479 = vsel %vm8471, %v8457, 0
      %v8482 = vsel %vm8471, %v8458, 0
      %v8485 = vsel %vm8471, %v8459, 0
      %v8488 = vsel %vm8471, %v8460, 0
      %v8491 = vsel %vm8471, %v8461, 0
      %v8494 = vsel %vm8471, %v8462, 0
      %v8497 = vsel %vm8471, %v8463, 0
      %v8500 = vsel %vm8471, %v8464, 0
      %v8503 = vsel %vm8471, %v8465, 0
      %v8506 = vsel %vm8471, %v8466, 0
      %v8509 = vsel %vm8471, %v8467, 0
      %v8512 = vsel %vm8471, %v8468, 0
      %v8515 = vsel %vm8471, %v8469, 0
      %v8518 = vsel %vm8471, %v8470, 0
      %vm8520 = vcmask 1043456
      %v8522 = vsel %vm8520, %v8027, 0
      %8524 = vmatpush.bf16.msra.mxu0 0
      %8525 = vmatpush.bf16.msra.mxu0 0
      %8526 = vmatpush.bf16.msra.mxu0 0
      %8527 = vmatpush.bf16.msra.mxu0 0
      %8528 = vmatpush.bf16.msra.mxu0 0
      %8529 = vmatpush.bf16.msra.mxu0 0
      %8530 = vmatpush.bf16.msra.mxu0 0
      %8531 = vmatpush.bf16.msra.mxu0 %v8522
      %8532 = vmatmul.bf16.gmra.mxu0 %v8473
      %v8533 = vpop.f32.mrf.mxu0
      %v8534 = vadd.f32 0.0, %v8533
      %v8535 = vpop.f32.mrf.mxu0
      %v8536 = vadd.f32 0.0, %v8535
      %8537 = vmatmul.bf16.gmra.mxu0 %v8476
      %v8538 = vpop.f32.mrf.mxu0
      %v8539 = vadd.f32 0.0, %v8538
      %v8540 = vpop.f32.mrf.mxu0
      %v8541 = vadd.f32 0.0, %v8540
      %8542 = vmatmul.bf16.gmra.mxu0 %v8479
      %v8543 = vpop.f32.mrf.mxu0
      %v8544 = vadd.f32 0.0, %v8543
      %v8545 = vpop.f32.mrf.mxu0
      %v8546 = vadd.f32 0.0, %v8545
      %8547 = vmatmul.bf16.gmra.mxu0 %v8482
      %v8548 = vpop.f32.mrf.mxu0
      %v8549 = vadd.f32 0.0, %v8548
      %v8550 = vpop.f32.mrf.mxu0
      %v8551 = vadd.f32 0.0, %v8550
      %8552 = vmatmul.bf16.gmra.mxu0 %v8485
      %v8553 = vpop.f32.mrf.mxu0
      %v8554 = vadd.f32 0.0, %v8553
      %v8555 = vpop.f32.mrf.mxu0
      %v8556 = vadd.f32 0.0, %v8555
      %8557 = vmatmul.bf16.gmra.mxu0 %v8488
      %v8558 = vpop.f32.mrf.mxu0
      %v8559 = vadd.f32 0.0, %v8558
      %v8560 = vpop.f32.mrf.mxu0
      %v8561 = vadd.f32 0.0, %v8560
      %8562 = vmatmul.bf16.gmra.mxu0 %v8491
      %v8563 = vpop.f32.mrf.mxu0
      %v8564 = vadd.f32 0.0, %v8563
      %v8565 = vpop.f32.mrf.mxu0
      %v8566 = vadd.f32 0.0, %v8565
      %8567 = vmatmul.bf16.gmra.mxu0 %v8494
      %v8568 = vpop.f32.mrf.mxu0
      %v8569 = vadd.f32 0.0, %v8568
      %v8570 = vpop.f32.mrf.mxu0
      %v8571 = vadd.f32 0.0, %v8570
      %8572 = vmatmul.bf16.gmra.mxu0 %v8497
      %v8573 = vpop.f32.mrf.mxu0
      %v8574 = vadd.f32 0.0, %v8573
      %v8575 = vpop.f32.mrf.mxu0
      %v8576 = vadd.f32 0.0, %v8575
      %8577 = vmatmul.bf16.gmra.mxu0 %v8500
      %v8578 = vpop.f32.mrf.mxu0
      %v8579 = vadd.f32 0.0, %v8578
      %v8580 = vpop.f32.mrf.mxu0
      %v8581 = vadd.f32 0.0, %v8580
      %8582 = vmatmul.bf16.gmra.mxu0 %v8503
      %v8583 = vpop.f32.mrf.mxu0
      %v8584 = vadd.f32 0.0, %v8583
      %v8585 = vpop.f32.mrf.mxu0
      %v8586 = vadd.f32 0.0, %v8585
      %8587 = vmatmul.bf16.gmra.mxu0 %v8506
      %v8588 = vpop.f32.mrf.mxu0
      %v8589 = vadd.f32 0.0, %v8588
      %v8590 = vpop.f32.mrf.mxu0
      %v8591 = vadd.f32 0.0, %v8590
      %8592 = vmatmul.bf16.gmra.mxu0 %v8509
      %v8593 = vpop.f32.mrf.mxu0
      %v8594 = vadd.f32 0.0, %v8593
      %v8595 = vpop.f32.mrf.mxu0
      %v8596 = vadd.f32 0.0, %v8595
      %8597 = vmatmul.bf16.gmra.mxu0 %v8512
      %v8598 = vpop.f32.mrf.mxu0
      %v8599 = vadd.f32 0.0, %v8598
      %v8600 = vpop.f32.mrf.mxu0
      %v8601 = vadd.f32 0.0, %v8600
      %8602 = vmatmul.bf16.gmra.mxu0 %v8515
      %v8603 = vpop.f32.mrf.mxu0
      %v8604 = vadd.f32 0.0, %v8603
      %v8605 = vpop.f32.mrf.mxu0
      %v8606 = vadd.f32 0.0, %v8605
      %8607 = vmatmul.bf16.gmra.mxu0 %v8518
      %v8608 = vpop.f32.mrf.mxu0
      %v8609 = vadd.f32 0.0, %v8608
      %v8610 = vpop.f32.mrf.mxu0
      %v8611 = vadd.f32 0.0, %v8610
      %8612 = vdwg.mxu0
      %v8645 = vunpack.c.l.b16 %v7972
      %v8646 = vunpack.c.l.b16 %v7973
      %v8647 = vunpack.c.l.b16 %v7975
      %v8648 = vunpack.c.l.b16 %v7976
      %v8649 = vunpack.c.l.b16 %v7978
      %v8650 = vunpack.c.l.b16 %v7979
      %v8651 = vunpack.c.l.b16 %v7981
      %v8652 = vunpack.c.l.b16 %v7982
      %v8653 = vunpack.c.l.b16 %v7984
      %v8654 = vunpack.c.l.b16 %v7985
      %v8655 = vunpack.c.l.b16 %v7987
      %v8656 = vunpack.c.l.b16 %v7988
      %v8657 = vunpack.c.l.b16 %v7990
      %v8658 = vunpack.c.l.b16 %v7991
      %v8659 = vunpack.c.l.b16 %v7993
      %v8660 = vunpack.c.l.b16 %v7994
      %v8661 = vunpack.c.l.b16 %v7996
      %v8662 = vunpack.c.l.b16 %v7997
      %v8663 = vunpack.c.l.b16 %v7999
      %v8664 = vunpack.c.l.b16 %v8000
      %v8665 = vunpack.c.l.b16 %v8002
      %v8666 = vunpack.c.l.b16 %v8003
      %v8667 = vunpack.c.l.b16 %v8005
      %v8668 = vunpack.c.l.b16 %v8006
      %v8669 = vunpack.c.l.b16 %v8008
      %v8670 = vunpack.c.l.b16 %v8009
      %v8671 = vunpack.c.l.b16 %v8011
      %v8672 = vunpack.c.l.b16 %v8012
      %v8673 = vunpack.c.l.b16 %v8014
      %v8674 = vunpack.c.l.b16 %v8015
      %v8675 = vunpack.c.l.b16 %v8017
      %v8676 = vunpack.c.l.b16 %v8018
      %v8677 = vpack.c.b16 %v8646, %v8645
      %v8678 = vpack.c.b16 %v8648, %v8647
      %v8679 = vpack.c.b16 %v8650, %v8649
      %v8680 = vpack.c.b16 %v8652, %v8651
      %v8681 = vpack.c.b16 %v8654, %v8653
      %v8682 = vpack.c.b16 %v8656, %v8655
      %v8683 = vpack.c.b16 %v8658, %v8657
      %v8684 = vpack.c.b16 %v8660, %v8659
      %v8685 = vpack.c.b16 %v8662, %v8661
      %v8686 = vpack.c.b16 %v8664, %v8663
      %v8687 = vpack.c.b16 %v8666, %v8665
      %v8688 = vpack.c.b16 %v8668, %v8667
      %v8689 = vpack.c.b16 %v8670, %v8669
      %v8690 = vpack.c.b16 %v8672, %v8671
      %v8691 = vpack.c.b16 %v8674, %v8673
      %v8692 = vpack.c.b16 %v8676, %v8675
      %v8694 = vsel %vm8471, %v8677, 0
      %v8697 = vsel %vm8471, %v8678, 0
      %v8700 = vsel %vm8471, %v8679, 0
      %v8703 = vsel %vm8471, %v8680, 0
      %v8706 = vsel %vm8471, %v8681, 0
      %v8709 = vsel %vm8471, %v8682, 0
      %v8712 = vsel %vm8471, %v8683, 0
      %v8715 = vsel %vm8471, %v8684, 0
      %v8718 = vsel %vm8471, %v8685, 0
      %v8721 = vsel %vm8471, %v8686, 0
      %v8724 = vsel %vm8471, %v8687, 0
      %v8727 = vsel %vm8471, %v8688, 0
      %v8730 = vsel %vm8471, %v8689, 0
      %v8733 = vsel %vm8471, %v8690, 0
      %v8736 = vsel %vm8471, %v8691, 0
      %v8739 = vsel %vm8471, %v8692, 0
      %v8742 = vsel %vm8520, %v8026, 0
      %8744 = vmatpush.bf16.msra.mxu0 0
      %8745 = vmatpush.bf16.msra.mxu0 0
      %8746 = vmatpush.bf16.msra.mxu0 0
      %8747 = vmatpush.bf16.msra.mxu0 0
      %8748 = vmatpush.bf16.msra.mxu0 0
      %8749 = vmatpush.bf16.msra.mxu0 0
      %8750 = vmatpush.bf16.msra.mxu0 0
      %8751 = vmatpush.bf16.msra.mxu0 %v8742
      %8752 = vmatmul.bf16.gmra.mxu0 %v8694
      %v8753 = vpop.f32.mrf.mxu0
      %v8754 = vadd.f32 %v8534, %v8753
      %v8755 = vpop.f32.mrf.mxu0
      %v8756 = vadd.f32 %v8536, %v8755
      %8757 = vmatmul.bf16.gmra.mxu0 %v8697
      %v8758 = vpop.f32.mrf.mxu0
      %v8759 = vadd.f32 %v8539, %v8758
      %v8760 = vpop.f32.mrf.mxu0
      %v8761 = vadd.f32 %v8541, %v8760
      %8762 = vmatmul.bf16.gmra.mxu0 %v8700
      %v8763 = vpop.f32.mrf.mxu0
      %v8764 = vadd.f32 %v8544, %v8763
      %v8765 = vpop.f32.mrf.mxu0
      %v8766 = vadd.f32 %v8546, %v8765
      %8767 = vmatmul.bf16.gmra.mxu0 %v8703
      %v8768 = vpop.f32.mrf.mxu0
      %v8769 = vadd.f32 %v8549, %v8768
      %v8770 = vpop.f32.mrf.mxu0
      %v8771 = vadd.f32 %v8551, %v8770
      %8772 = vmatmul.bf16.gmra.mxu0 %v8706
      %v8773 = vpop.f32.mrf.mxu0
      %v8774 = vadd.f32 %v8554, %v8773
      %v8775 = vpop.f32.mrf.mxu0
      %v8776 = vadd.f32 %v8556, %v8775
      %8777 = vmatmul.bf16.gmra.mxu0 %v8709
      %v8778 = vpop.f32.mrf.mxu0
      %v8779 = vadd.f32 %v8559, %v8778
      %v8780 = vpop.f32.mrf.mxu0
      %v8781 = vadd.f32 %v8561, %v8780
      %8782 = vmatmul.bf16.gmra.mxu0 %v8712
      %v8783 = vpop.f32.mrf.mxu0
      %v8784 = vadd.f32 %v8564, %v8783
      %v8785 = vpop.f32.mrf.mxu0
      %v8786 = vadd.f32 %v8566, %v8785
      %8787 = vmatmul.bf16.gmra.mxu0 %v8715
      %v8788 = vpop.f32.mrf.mxu0
      %v8789 = vadd.f32 %v8569, %v8788
      %v8790 = vpop.f32.mrf.mxu0
      %v8791 = vadd.f32 %v8571, %v8790
      %8792 = vmatmul.bf16.gmra.mxu0 %v8718
      %v8793 = vpop.f32.mrf.mxu0
      %v8794 = vadd.f32 %v8574, %v8793
      %v8795 = vpop.f32.mrf.mxu0
      %v8796 = vadd.f32 %v8576, %v8795
      %8797 = vmatmul.bf16.gmra.mxu0 %v8721
      %v8798 = vpop.f32.mrf.mxu0
      %v8799 = vadd.f32 %v8579, %v8798
      %v8800 = vpop.f32.mrf.mxu0
      %v8801 = vadd.f32 %v8581, %v8800
      %8802 = vmatmul.bf16.gmra.mxu0 %v8724
      %v8803 = vpop.f32.mrf.mxu0
      %v8804 = vadd.f32 %v8584, %v8803
      %v8805 = vpop.f32.mrf.mxu0
      %v8806 = vadd.f32 %v8586, %v8805
      %8807 = vmatmul.bf16.gmra.mxu0 %v8727
      %v8808 = vpop.f32.mrf.mxu0
      %v8809 = vadd.f32 %v8589, %v8808
      %v8810 = vpop.f32.mrf.mxu0
      %v8811 = vadd.f32 %v8591, %v8810
      %8812 = vmatmul.bf16.gmra.mxu0 %v8730
      %v8813 = vpop.f32.mrf.mxu0
      %v8814 = vadd.f32 %v8594, %v8813
      %v8815 = vpop.f32.mrf.mxu0
      %v8816 = vadd.f32 %v8596, %v8815
      %8817 = vmatmul.bf16.gmra.mxu0 %v8733
      %v8818 = vpop.f32.mrf.mxu0
      %v8819 = vadd.f32 %v8599, %v8818
      %v8820 = vpop.f32.mrf.mxu0
      %v8821 = vadd.f32 %v8601, %v8820
      %8822 = vmatmul.bf16.gmra.mxu0 %v8736
      %v8823 = vpop.f32.mrf.mxu0
      %v8824 = vadd.f32 %v8604, %v8823
      %v8825 = vpop.f32.mrf.mxu0
      %v8826 = vadd.f32 %v8606, %v8825
      %8827 = vmatmul.bf16.gmra.mxu0 %v8739
      %v8828 = vpop.f32.mrf.mxu0
      %v8829 = vadd.f32 %v8609, %v8828
      %v8830 = vpop.f32.mrf.mxu0
      %v8831 = vadd.f32 %v8611, %v8830
      %8832 = vdwg.mxu0
      %vm8849 = vcmask 1042432
      %vm8850 = vcmask 1046532
      %vm8851 = vmor %vm8849, %vm8850
      %v8852 = vrot.slane %v7972, 5
      %v8853 = vrot.slane %v8852, 4
      %v8854 = vrot.slane %v7973, 5
      %v8855 = vsel %vm8851, %v8853, %v8854
      %v8856 = vrot.slane %v8854, 4
      %v8857 = vrot.slane %v7974, 5
      %v8858 = vsel %vm8851, %v8856, %v8857
      %v8859 = vrot.slane %v7975, 5
      %v8860 = vrot.slane %v8859, 4
      %v8861 = vrot.slane %v7976, 5
      %v8862 = vsel %vm8851, %v8860, %v8861
      %v8863 = vrot.slane %v8861, 4
      %v8864 = vrot.slane %v7977, 5
      %v8865 = vsel %vm8851, %v8863, %v8864
      %v8866 = vrot.slane %v7978, 5
      %v8867 = vrot.slane %v8866, 4
      %v8868 = vrot.slane %v7979, 5
      %v8869 = vsel %vm8851, %v8867, %v8868
      %v8870 = vrot.slane %v8868, 4
      %v8871 = vrot.slane %v7980, 5
      %v8872 = vsel %vm8851, %v8870, %v8871
      %v8873 = vrot.slane %v7981, 5
      %v8874 = vrot.slane %v8873, 4
      %v8875 = vrot.slane %v7982, 5
      %v8876 = vsel %vm8851, %v8874, %v8875
      %v8877 = vrot.slane %v8875, 4
      %v8878 = vrot.slane %v7983, 5
      %v8879 = vsel %vm8851, %v8877, %v8878
      %v8880 = vrot.slane %v7984, 5
      %v8881 = vrot.slane %v8880, 4
      %v8882 = vrot.slane %v7985, 5
      %v8883 = vsel %vm8851, %v8881, %v8882
      %v8884 = vrot.slane %v8882, 4
      %v8885 = vrot.slane %v7986, 5
      %v8886 = vsel %vm8851, %v8884, %v8885
      %v8887 = vrot.slane %v7987, 5
      %v8888 = vrot.slane %v8887, 4
      %v8889 = vrot.slane %v7988, 5
      %v8890 = vsel %vm8851, %v8888, %v8889
      %v8891 = vrot.slane %v8889, 4
      %v8892 = vrot.slane %v7989, 5
      %v8893 = vsel %vm8851, %v8891, %v8892
      %v8894 = vrot.slane %v7990, 5
      %v8895 = vrot.slane %v8894, 4
      %v8896 = vrot.slane %v7991, 5
      %v8897 = vsel %vm8851, %v8895, %v8896
      %v8898 = vrot.slane %v8896, 4
      %v8899 = vrot.slane %v7992, 5
      %v8900 = vsel %vm8851, %v8898, %v8899
      %v8901 = vrot.slane %v7993, 5
      %v8902 = vrot.slane %v8901, 4
      %v8903 = vrot.slane %v7994, 5
      %v8904 = vsel %vm8851, %v8902, %v8903
      %v8905 = vrot.slane %v8903, 4
      %v8906 = vrot.slane %v7995, 5
      %v8907 = vsel %vm8851, %v8905, %v8906
      %v8908 = vrot.slane %v7996, 5
      %v8909 = vrot.slane %v8908, 4
      %v8910 = vrot.slane %v7997, 5
      %v8911 = vsel %vm8851, %v8909, %v8910
      %v8912 = vrot.slane %v8910, 4
      %v8913 = vrot.slane %v7998, 5
      %v8914 = vsel %vm8851, %v8912, %v8913
      %v8915 = vrot.slane %v7999, 5
      %v8916 = vrot.slane %v8915, 4
      %v8917 = vrot.slane %v8000, 5
      %v8918 = vsel %vm8851, %v8916, %v8917
      %v8919 = vrot.slane %v8917, 4
      %v8920 = vrot.slane %v8001, 5
      %v8921 = vsel %vm8851, %v8919, %v8920
      %v8922 = vrot.slane %v8002, 5
      %v8923 = vrot.slane %v8922, 4
      %v8924 = vrot.slane %v8003, 5
      %v8925 = vsel %vm8851, %v8923, %v8924
      %v8926 = vrot.slane %v8924, 4
      %v8927 = vrot.slane %v8004, 5
      %v8928 = vsel %vm8851, %v8926, %v8927
      %v8929 = vrot.slane %v8005, 5
      %v8930 = vrot.slane %v8929, 4
      %v8931 = vrot.slane %v8006, 5
      %v8932 = vsel %vm8851, %v8930, %v8931
      %v8933 = vrot.slane %v8931, 4
      %v8934 = vrot.slane %v8007, 5
      %v8935 = vsel %vm8851, %v8933, %v8934
      %v8936 = vrot.slane %v8008, 5
      %v8937 = vrot.slane %v8936, 4
      %v8938 = vrot.slane %v8009, 5
      %v8939 = vsel %vm8851, %v8937, %v8938
      %v8940 = vrot.slane %v8938, 4
      %v8941 = vrot.slane %v8010, 5
      %v8942 = vsel %vm8851, %v8940, %v8941
      %v8943 = vrot.slane %v8011, 5
      %v8944 = vrot.slane %v8943, 4
      %v8945 = vrot.slane %v8012, 5
      %v8946 = vsel %vm8851, %v8944, %v8945
      %v8947 = vrot.slane %v8945, 4
      %v8948 = vrot.slane %v8013, 5
      %v8949 = vsel %vm8851, %v8947, %v8948
      %v8950 = vrot.slane %v8014, 5
      %v8951 = vrot.slane %v8950, 4
      %v8952 = vrot.slane %v8015, 5
      %v8953 = vsel %vm8851, %v8951, %v8952
      %v8954 = vrot.slane %v8952, 4
      %v8955 = vrot.slane %v8016, 5
      %v8956 = vsel %vm8851, %v8954, %v8955
      %v8957 = vrot.slane %v8017, 5
      %v8958 = vrot.slane %v8957, 4
      %v8959 = vrot.slane %v8018, 5
      %v8960 = vsel %vm8851, %v8958, %v8959
      %v8961 = vrot.slane %v8959, 4
      %v8962 = vrot.slane %v8019, 5
      %v8963 = vsel %vm8851, %v8961, %v8962
      %v8964 = vunpack.c.l.b16 %v8855
      %v8965 = vunpack.c.l.b16 %v8858
      %v8966 = vunpack.c.l.b16 %v8862
      %v8967 = vunpack.c.l.b16 %v8865
      %v8968 = vunpack.c.l.b16 %v8869
      %v8969 = vunpack.c.l.b16 %v8872
      %v8970 = vunpack.c.l.b16 %v8876
      %v8971 = vunpack.c.l.b16 %v8879
      %v8972 = vunpack.c.l.b16 %v8883
      %v8973 = vunpack.c.l.b16 %v8886
      %v8974 = vunpack.c.l.b16 %v8890
      %v8975 = vunpack.c.l.b16 %v8893
      %v8976 = vunpack.c.l.b16 %v8897
      %v8977 = vunpack.c.l.b16 %v8900
      %v8978 = vunpack.c.l.b16 %v8904
      %v8979 = vunpack.c.l.b16 %v8907
      %v8980 = vunpack.c.l.b16 %v8911
      %v8981 = vunpack.c.l.b16 %v8914
      %v8982 = vunpack.c.l.b16 %v8918
      %v8983 = vunpack.c.l.b16 %v8921
      %v8984 = vunpack.c.l.b16 %v8925
      %v8985 = vunpack.c.l.b16 %v8928
      %v8986 = vunpack.c.l.b16 %v8932
      %v8987 = vunpack.c.l.b16 %v8935
      %v8988 = vunpack.c.l.b16 %v8939
      %v8989 = vunpack.c.l.b16 %v8942
      %v8990 = vunpack.c.l.b16 %v8946
      %v8991 = vunpack.c.l.b16 %v8949
      %v8992 = vunpack.c.l.b16 %v8953
      %v8993 = vunpack.c.l.b16 %v8956
      %v8994 = vunpack.c.l.b16 %v8960
      %v8995 = vunpack.c.l.b16 %v8963
      %v8996 = vpack.c.b16 %v8965, %v8964
      %v8997 = vpack.c.b16 %v8967, %v8966
      %v8998 = vpack.c.b16 %v8969, %v8968
      %v8999 = vpack.c.b16 %v8971, %v8970
      %v9000 = vpack.c.b16 %v8973, %v8972
      %v9001 = vpack.c.b16 %v8975, %v8974
      %v9002 = vpack.c.b16 %v8977, %v8976
      %v9003 = vpack.c.b16 %v8979, %v8978
      %v9004 = vpack.c.b16 %v8981, %v8980
      %v9005 = vpack.c.b16 %v8983, %v8982
      %v9006 = vpack.c.b16 %v8985, %v8984
      %v9007 = vpack.c.b16 %v8987, %v8986
      %v9008 = vpack.c.b16 %v8989, %v8988
      %v9009 = vpack.c.b16 %v8991, %v8990
      %v9010 = vpack.c.b16 %v8993, %v8992
      %v9011 = vpack.c.b16 %v8995, %v8994
      %v9013 = vsel %vm8471, %v8996, 0
      %v9016 = vsel %vm8471, %v8997, 0
      %v9019 = vsel %vm8471, %v8998, 0
      %v9022 = vsel %vm8471, %v8999, 0
      %v9025 = vsel %vm8471, %v9000, 0
      %v9028 = vsel %vm8471, %v9001, 0
      %v9031 = vsel %vm8471, %v9002, 0
      %v9034 = vsel %vm8471, %v9003, 0
      %v9037 = vsel %vm8471, %v9004, 0
      %v9040 = vsel %vm8471, %v9005, 0
      %v9043 = vsel %vm8471, %v9006, 0
      %v9046 = vsel %vm8471, %v9007, 0
      %v9049 = vsel %vm8471, %v9008, 0
      %v9052 = vsel %vm8471, %v9009, 0
      %v9055 = vsel %vm8471, %v9010, 0
      %v9058 = vsel %vm8471, %v9011, 0
      %v9061 = vsel %vm8520, %v8028, 0
      %9063 = vmatpush.bf16.msra.mxu0 0
      %9064 = vmatpush.bf16.msra.mxu0 0
      %9065 = vmatpush.bf16.msra.mxu0 0
      %9066 = vmatpush.bf16.msra.mxu0 0
      %9067 = vmatpush.bf16.msra.mxu0 0
      %9068 = vmatpush.bf16.msra.mxu0 0
      %9069 = vmatpush.bf16.msra.mxu0 0
      %9070 = vmatpush.bf16.msra.mxu0 %v9061
      %9071 = vmatmul.bf16.gmra.mxu0 %v9013
      %v9072 = vpop.f32.mrf.mxu0
      %v9073 = vadd.f32 0.0, %v9072
      %v9074 = vpop.f32.mrf.mxu0
      %v9075 = vadd.f32 0.0, %v9074
      %9076 = vmatmul.bf16.gmra.mxu0 %v9016
      %v9077 = vpop.f32.mrf.mxu0
      %v9078 = vadd.f32 0.0, %v9077
      %v9079 = vpop.f32.mrf.mxu0
      %v9080 = vadd.f32 0.0, %v9079
      %9081 = vmatmul.bf16.gmra.mxu0 %v9019
      %v9082 = vpop.f32.mrf.mxu0
      %v9083 = vadd.f32 0.0, %v9082
      %v9084 = vpop.f32.mrf.mxu0
      %v9085 = vadd.f32 0.0, %v9084
      %9086 = vmatmul.bf16.gmra.mxu0 %v9022
      %v9087 = vpop.f32.mrf.mxu0
      %v9088 = vadd.f32 0.0, %v9087
      %v9089 = vpop.f32.mrf.mxu0
      %v9090 = vadd.f32 0.0, %v9089
      %9091 = vmatmul.bf16.gmra.mxu0 %v9025
      %v9092 = vpop.f32.mrf.mxu0
      %v9093 = vadd.f32 0.0, %v9092
      %v9094 = vpop.f32.mrf.mxu0
      %v9095 = vadd.f32 0.0, %v9094
      %9096 = vmatmul.bf16.gmra.mxu0 %v9028
      %v9097 = vpop.f32.mrf.mxu0
      %v9098 = vadd.f32 0.0, %v9097
      %v9099 = vpop.f32.mrf.mxu0
      %v9100 = vadd.f32 0.0, %v9099
      %9101 = vmatmul.bf16.gmra.mxu0 %v9031
      %v9102 = vpop.f32.mrf.mxu0
      %v9103 = vadd.f32 0.0, %v9102
      %v9104 = vpop.f32.mrf.mxu0
      %v9105 = vadd.f32 0.0, %v9104
      %9106 = vmatmul.bf16.gmra.mxu0 %v9034
      %v9107 = vpop.f32.mrf.mxu0
      %v9108 = vadd.f32 0.0, %v9107
      %v9109 = vpop.f32.mrf.mxu0
      %v9110 = vadd.f32 0.0, %v9109
      %9111 = vmatmul.bf16.gmra.mxu0 %v9037
      %v9112 = vpop.f32.mrf.mxu0
      %v9113 = vadd.f32 0.0, %v9112
      %v9114 = vpop.f32.mrf.mxu0
      %v9115 = vadd.f32 0.0, %v9114
      %9116 = vmatmul.bf16.gmra.mxu0 %v9040
      %v9117 = vpop.f32.mrf.mxu0
      %v9118 = vadd.f32 0.0, %v9117
      %v9119 = vpop.f32.mrf.mxu0
      %v9120 = vadd.f32 0.0, %v9119
      %9121 = vmatmul.bf16.gmra.mxu0 %v9043
      %v9122 = vpop.f32.mrf.mxu0
      %v9123 = vadd.f32 0.0, %v9122
      %v9124 = vpop.f32.mrf.mxu0
      %v9125 = vadd.f32 0.0, %v9124
      %9126 = vmatmul.bf16.gmra.mxu0 %v9046
      %v9127 = vpop.f32.mrf.mxu0
      %v9128 = vadd.f32 0.0, %v9127
      %v9129 = vpop.f32.mrf.mxu0
      %v9130 = vadd.f32 0.0, %v9129
      %9131 = vmatmul.bf16.gmra.mxu0 %v9049
      %v9132 = vpop.f32.mrf.mxu0
      %v9133 = vadd.f32 0.0, %v9132
      %v9134 = vpop.f32.mrf.mxu0
      %v9135 = vadd.f32 0.0, %v9134
      %9136 = vmatmul.bf16.gmra.mxu0 %v9052
      %v9137 = vpop.f32.mrf.mxu0
      %v9138 = vadd.f32 0.0, %v9137
      %v9139 = vpop.f32.mrf.mxu0
      %v9140 = vadd.f32 0.0, %v9139
      %9141 = vmatmul.bf16.gmra.mxu0 %v9055
      %v9142 = vpop.f32.mrf.mxu0
      %v9143 = vadd.f32 0.0, %v9142
      %v9144 = vpop.f32.mrf.mxu0
      %v9145 = vadd.f32 0.0, %v9144
      %9146 = vmatmul.bf16.gmra.mxu0 %v9058
      %v9147 = vpop.f32.mrf.mxu0
      %v9148 = vadd.f32 0.0, %v9147
      %v9149 = vpop.f32.mrf.mxu0
      %v9150 = vadd.f32 0.0, %v9149
      %9151 = vdwg.mxu0
      %v9152 = vadd.f32 %v8754, %v9073
      %v9153 = vadd.f32 %v8756, %v9075
      %v9154 = vadd.f32 %v8759, %v9078
      %v9155 = vadd.f32 %v8761, %v9080
      %v9156 = vadd.f32 %v8764, %v9083
      %v9157 = vadd.f32 %v8766, %v9085
      %v9158 = vadd.f32 %v8769, %v9088
      %v9159 = vadd.f32 %v8771, %v9090
      %v9160 = vadd.f32 %v8774, %v9093
      %v9161 = vadd.f32 %v8776, %v9095
      %v9162 = vadd.f32 %v8779, %v9098
      %v9163 = vadd.f32 %v8781, %v9100
      %v9164 = vadd.f32 %v8784, %v9103
      %v9165 = vadd.f32 %v8786, %v9105
      %v9166 = vadd.f32 %v8789, %v9108
      %v9167 = vadd.f32 %v8791, %v9110
      %v9168 = vadd.f32 %v8794, %v9113
      %v9169 = vadd.f32 %v8796, %v9115
      %v9170 = vadd.f32 %v8799, %v9118
      %v9171 = vadd.f32 %v8801, %v9120
      %v9172 = vadd.f32 %v8804, %v9123
      %v9173 = vadd.f32 %v8806, %v9125
      %v9174 = vadd.f32 %v8809, %v9128
      %v9175 = vadd.f32 %v8811, %v9130
      %v9176 = vadd.f32 %v8814, %v9133
      %v9177 = vadd.f32 %v8816, %v9135
      %v9178 = vadd.f32 %v8819, %v9138
      %v9179 = vadd.f32 %v8821, %v9140
      %v9180 = vadd.f32 %v8824, %v9143
      %v9181 = vadd.f32 %v8826, %v9145
      %v9182 = vadd.f32 %v8829, %v9148
      %v9183 = vadd.f32 %v8831, %v9150
      %v9186 = vunpack.c.l.b16 %v8020
      %v9187 = vunpack.c.l.b16 %v8021
      %v9188 = vpack.c.b16 %v9187, %v9186
      %v9190 = vsel %vm8471, %v9188, 0
      %v9193 = vsel %vm8520, %v8029, 0
      %9195 = vmatpush.bf16.msra.mxu0 0
      %9196 = vmatpush.bf16.msra.mxu0 0
      %9197 = vmatpush.bf16.msra.mxu0 0
      %9198 = vmatpush.bf16.msra.mxu0 0
      %9199 = vmatpush.bf16.msra.mxu0 0
      %9200 = vmatpush.bf16.msra.mxu0 0
      %9201 = vmatpush.bf16.msra.mxu0 0
      %9202 = vmatpush.bf16.msra.mxu0 %v9193
      %9203 = vmatmul.bf16.gmra.mxu0 %v8697
      %v9204 = vpop.f32.mrf.mxu0
      %v9205 = vadd.f32 0.0, %v9204
      %v9206 = vpop.f32.mrf.mxu0
      %v9207 = vadd.f32 0.0, %v9206
      %9208 = vmatmul.bf16.gmra.mxu0 %v8700
      %v9209 = vpop.f32.mrf.mxu0
      %v9210 = vadd.f32 0.0, %v9209
      %v9211 = vpop.f32.mrf.mxu0
      %v9212 = vadd.f32 0.0, %v9211
      %9213 = vmatmul.bf16.gmra.mxu0 %v8703
      %v9214 = vpop.f32.mrf.mxu0
      %v9215 = vadd.f32 0.0, %v9214
      %v9216 = vpop.f32.mrf.mxu0
      %v9217 = vadd.f32 0.0, %v9216
      %9218 = vmatmul.bf16.gmra.mxu0 %v8706
      %v9219 = vpop.f32.mrf.mxu0
      %v9220 = vadd.f32 0.0, %v9219
      %v9221 = vpop.f32.mrf.mxu0
      %v9222 = vadd.f32 0.0, %v9221
      %9223 = vmatmul.bf16.gmra.mxu0 %v8709
      %v9224 = vpop.f32.mrf.mxu0
      %v9225 = vadd.f32 0.0, %v9224
      %v9226 = vpop.f32.mrf.mxu0
      %v9227 = vadd.f32 0.0, %v9226
      %9228 = vmatmul.bf16.gmra.mxu0 %v8712
      %v9229 = vpop.f32.mrf.mxu0
      %v9230 = vadd.f32 0.0, %v9229
      %v9231 = vpop.f32.mrf.mxu0
      %v9232 = vadd.f32 0.0, %v9231
      %9233 = vmatmul.bf16.gmra.mxu0 %v8715
      %v9234 = vpop.f32.mrf.mxu0
      %v9235 = vadd.f32 0.0, %v9234
      %v9236 = vpop.f32.mrf.mxu0
      %v9237 = vadd.f32 0.0, %v9236
      %9238 = vmatmul.bf16.gmra.mxu0 %v8718
      %v9239 = vpop.f32.mrf.mxu0
      %v9240 = vadd.f32 0.0, %v9239
      %v9241 = vpop.f32.mrf.mxu0
      %v9242 = vadd.f32 0.0, %v9241
      %9243 = vmatmul.bf16.gmra.mxu0 %v8721
      %v9244 = vpop.f32.mrf.mxu0
      %v9245 = vadd.f32 0.0, %v9244
      %v9246 = vpop.f32.mrf.mxu0
      %v9247 = vadd.f32 0.0, %v9246
      %9248 = vmatmul.bf16.gmra.mxu0 %v8724
      %v9249 = vpop.f32.mrf.mxu0
      %v9250 = vadd.f32 0.0, %v9249
      %v9251 = vpop.f32.mrf.mxu0
      %v9252 = vadd.f32 0.0, %v9251
      %9253 = vmatmul.bf16.gmra.mxu0 %v8727
      %v9254 = vpop.f32.mrf.mxu0
      %v9255 = vadd.f32 0.0, %v9254
      %v9256 = vpop.f32.mrf.mxu0
      %v9257 = vadd.f32 0.0, %v9256
      %9258 = vmatmul.bf16.gmra.mxu0 %v8730
      %v9259 = vpop.f32.mrf.mxu0
      %v9260 = vadd.f32 0.0, %v9259
      %v9261 = vpop.f32.mrf.mxu0
      %v9262 = vadd.f32 0.0, %v9261
      %9263 = vmatmul.bf16.gmra.mxu0 %v8733
      %v9264 = vpop.f32.mrf.mxu0
      %v9265 = vadd.f32 0.0, %v9264
      %v9266 = vpop.f32.mrf.mxu0
      %v9267 = vadd.f32 0.0, %v9266
      %9268 = vmatmul.bf16.gmra.mxu0 %v8736
      %v9269 = vpop.f32.mrf.mxu0
      %v9270 = vadd.f32 0.0, %v9269
      %v9271 = vpop.f32.mrf.mxu0
      %v9272 = vadd.f32 0.0, %v9271
      %9273 = vmatmul.bf16.gmra.mxu0 %v8739
      %v9274 = vpop.f32.mrf.mxu0
      %v9275 = vadd.f32 0.0, %v9274
      %v9276 = vpop.f32.mrf.mxu0
      %v9277 = vadd.f32 0.0, %v9276
      %9278 = vmatmul.bf16.gmra.mxu0 %v9190
      %v9279 = vpop.f32.mrf.mxu0
      %v9280 = vadd.f32 0.0, %v9279
      %v9281 = vpop.f32.mrf.mxu0
      %v9282 = vadd.f32 0.0, %v9281
      %9283 = vdwg.mxu0
      %v9284 = vadd.f32 %v9152, %v9205
      %v9285 = vadd.f32 %v9153, %v9207
      %v9286 = vadd.f32 %v9154, %v9210
      %v9287 = vadd.f32 %v9155, %v9212
      %v9288 = vadd.f32 %v9156, %v9215
      %v9289 = vadd.f32 %v9157, %v9217
      %v9290 = vadd.f32 %v9158, %v9220
      %v9291 = vadd.f32 %v9159, %v9222
      %v9292 = vadd.f32 %v9160, %v9225
      %v9293 = vadd.f32 %v9161, %v9227
      %v9294 = vadd.f32 %v9162, %v9230
      %v9295 = vadd.f32 %v9163, %v9232
      %v9296 = vadd.f32 %v9164, %v9235
      %v9297 = vadd.f32 %v9165, %v9237
      %v9298 = vadd.f32 %v9166, %v9240
      %v9299 = vadd.f32 %v9167, %v9242
      %v9300 = vadd.f32 %v9168, %v9245
      %v9301 = vadd.f32 %v9169, %v9247
      %v9302 = vadd.f32 %v9170, %v9250
      %v9303 = vadd.f32 %v9171, %v9252
      %v9304 = vadd.f32 %v9172, %v9255
      %v9305 = vadd.f32 %v9173, %v9257
      %v9306 = vadd.f32 %v9174, %v9260
      %v9307 = vadd.f32 %v9175, %v9262
      %v9308 = vadd.f32 %v9176, %v9265
      %v9309 = vadd.f32 %v9177, %v9267
      %v9310 = vadd.f32 %v9178, %v9270
      %v9311 = vadd.f32 %v9179, %v9272
      %v9312 = vadd.f32 %v9180, %v9275
      %v9313 = vadd.f32 %v9181, %v9277
      %v9314 = vadd.f32 %v9182, %v9280
      %v9315 = vadd.f32 %v9183, %v9282
      %v9317 = vshrl.u32 %v8020, 16
      %v9319 = vrot.slane %v9317, 4
      %v9320 = vshll.u32 %v8020, 16
      %v9322 = vrot.slane %v9320, 5
      %v9323 = vor.u32 %v9319, %v9322
      %v9324 = vrot.slane %v9323, 4
      %v9326 = vshll.u32 %v8021, 16
      %v9328 = vrot.slane %v9326, 5
      %v9329 = vsel %vm8038, %v9324, %v9328
      %v9330 = vshrl.u32 %v8021, 16
      %v9332 = vrot.slane %v9330, 4
      %v9333 = vor.u32 %v9332, %v9328
      %v9334 = vrot.slane %v9333, 4
      %v9336 = vshll.u32 %v8022, 16
      %v9338 = vrot.slane %v9336, 5
      %v9339 = vsel %vm8038, %v9334, %v9338
      %v9340 = vunpack.c.l.b16 %v9329
      %v9341 = vunpack.c.l.b16 %v9339
      %v9342 = vpack.c.b16 %v9341, %v9340
      %v9344 = vsel %vm8471, %v9342, 0
      %v9347 = vsel %vm8520, %v8030, 0
      %9349 = vmatpush.bf16.msra.mxu0 0
      %9350 = vmatpush.bf16.msra.mxu0 0
      %9351 = vmatpush.bf16.msra.mxu0 0
      %9352 = vmatpush.bf16.msra.mxu0 0
      %9353 = vmatpush.bf16.msra.mxu0 0
      %9354 = vmatpush.bf16.msra.mxu0 0
      %9355 = vmatpush.bf16.msra.mxu0 0
      %9356 = vmatpush.bf16.msra.mxu0 %v9347
      %9357 = vmatmul.bf16.gmra.mxu0 %v8476
      %v9358 = vpop.f32.mrf.mxu0
      %v9359 = vadd.f32 0.0, %v9358
      %v9360 = vpop.f32.mrf.mxu0
      %v9361 = vadd.f32 0.0, %v9360
      %9362 = vmatmul.bf16.gmra.mxu0 %v8479
      %v9363 = vpop.f32.mrf.mxu0
      %v9364 = vadd.f32 0.0, %v9363
      %v9365 = vpop.f32.mrf.mxu0
      %v9366 = vadd.f32 0.0, %v9365
      %9367 = vmatmul.bf16.gmra.mxu0 %v8482
      %v9368 = vpop.f32.mrf.mxu0
      %v9369 = vadd.f32 0.0, %v9368
      %v9370 = vpop.f32.mrf.mxu0
      %v9371 = vadd.f32 0.0, %v9370
      %9372 = vmatmul.bf16.gmra.mxu0 %v8485
      %v9373 = vpop.f32.mrf.mxu0
      %v9374 = vadd.f32 0.0, %v9373
      %v9375 = vpop.f32.mrf.mxu0
      %v9376 = vadd.f32 0.0, %v9375
      %9377 = vmatmul.bf16.gmra.mxu0 %v8488
      %v9378 = vpop.f32.mrf.mxu0
      %v9379 = vadd.f32 0.0, %v9378
      %v9380 = vpop.f32.mrf.mxu0
      %v9381 = vadd.f32 0.0, %v9380
      %9382 = vmatmul.bf16.gmra.mxu0 %v8491
      %v9383 = vpop.f32.mrf.mxu0
      %v9384 = vadd.f32 0.0, %v9383
      %v9385 = vpop.f32.mrf.mxu0
      %v9386 = vadd.f32 0.0, %v9385
      %9387 = vmatmul.bf16.gmra.mxu0 %v8494
      %v9388 = vpop.f32.mrf.mxu0
      %v9389 = vadd.f32 0.0, %v9388
      %v9390 = vpop.f32.mrf.mxu0
      %v9391 = vadd.f32 0.0, %v9390
      %9392 = vmatmul.bf16.gmra.mxu0 %v8497
      %v9393 = vpop.f32.mrf.mxu0
      %v9394 = vadd.f32 0.0, %v9393
      %v9395 = vpop.f32.mrf.mxu0
      %v9396 = vadd.f32 0.0, %v9395
      %9397 = vmatmul.bf16.gmra.mxu0 %v8500
      %v9398 = vpop.f32.mrf.mxu0
      %v9399 = vadd.f32 0.0, %v9398
      %v9400 = vpop.f32.mrf.mxu0
      %v9401 = vadd.f32 0.0, %v9400
      %9402 = vmatmul.bf16.gmra.mxu0 %v8503
      %v9403 = vpop.f32.mrf.mxu0
      %v9404 = vadd.f32 0.0, %v9403
      %v9405 = vpop.f32.mrf.mxu0
      %v9406 = vadd.f32 0.0, %v9405
      %9407 = vmatmul.bf16.gmra.mxu0 %v8506
      %v9408 = vpop.f32.mrf.mxu0
      %v9409 = vadd.f32 0.0, %v9408
      %v9410 = vpop.f32.mrf.mxu0
      %v9411 = vadd.f32 0.0, %v9410
      %9412 = vmatmul.bf16.gmra.mxu0 %v8509
      %v9413 = vpop.f32.mrf.mxu0
      %v9414 = vadd.f32 0.0, %v9413
      %v9415 = vpop.f32.mrf.mxu0
      %v9416 = vadd.f32 0.0, %v9415
      %9417 = vmatmul.bf16.gmra.mxu0 %v8512
      %v9418 = vpop.f32.mrf.mxu0
      %v9419 = vadd.f32 0.0, %v9418
      %v9420 = vpop.f32.mrf.mxu0
      %v9421 = vadd.f32 0.0, %v9420
      %9422 = vmatmul.bf16.gmra.mxu0 %v8515
      %v9423 = vpop.f32.mrf.mxu0
      %v9424 = vadd.f32 0.0, %v9423
      %v9425 = vpop.f32.mrf.mxu0
      %v9426 = vadd.f32 0.0, %v9425
      %9427 = vmatmul.bf16.gmra.mxu0 %v8518
      %v9428 = vpop.f32.mrf.mxu0
      %v9429 = vadd.f32 0.0, %v9428
      %v9430 = vpop.f32.mrf.mxu0
      %v9431 = vadd.f32 0.0, %v9430
      %9432 = vmatmul.bf16.gmra.mxu0 %v9344
      %v9433 = vpop.f32.mrf.mxu0
      %v9434 = vadd.f32 0.0, %v9433
      %v9435 = vpop.f32.mrf.mxu0
      %v9436 = vadd.f32 0.0, %v9435
      %9437 = vdwg.mxu0
      %v9438 = vadd.f32 %v9284, %v9359
      %v9439 = vadd.f32 %v9285, %v9361
      %v9440 = vadd.f32 %v9286, %v9364
      %v9441 = vadd.f32 %v9287, %v9366
      %v9442 = vadd.f32 %v9288, %v9369
      %v9443 = vadd.f32 %v9289, %v9371
      %v9444 = vadd.f32 %v9290, %v9374
      %v9445 = vadd.f32 %v9291, %v9376
      %v9446 = vadd.f32 %v9292, %v9379
      %v9447 = vadd.f32 %v9293, %v9381
      %v9448 = vadd.f32 %v9294, %v9384
      %v9449 = vadd.f32 %v9295, %v9386
      %v9450 = vadd.f32 %v9296, %v9389
      %v9451 = vadd.f32 %v9297, %v9391
      %v9452 = vadd.f32 %v9298, %v9394
      %v9453 = vadd.f32 %v9299, %v9396
      %v9454 = vadd.f32 %v9300, %v9399
      %v9455 = vadd.f32 %v9301, %v9401
      %v9456 = vadd.f32 %v9302, %v9404
      %v9457 = vadd.f32 %v9303, %v9406
      %v9458 = vadd.f32 %v9304, %v9409
      %v9459 = vadd.f32 %v9305, %v9411
      %v9460 = vadd.f32 %v9306, %v9414
      %v9461 = vadd.f32 %v9307, %v9416
      %v9462 = vadd.f32 %v9308, %v9419
      %v9463 = vadd.f32 %v9309, %v9421
      %v9464 = vadd.f32 %v9310, %v9424
      %v9465 = vadd.f32 %v9311, %v9426
      %v9466 = vadd.f32 %v9312, %v9429
      %v9467 = vadd.f32 %v9313, %v9431
      %v9468 = vadd.f32 %v9314, %v9434
      %v9469 = vadd.f32 %v9315, %v9436
      %v9471 = vrot.slane %v8020, 5
      %v9472 = vrot.slane %v9471, 4
      %v9473 = vrot.slane %v8021, 5
      %v9474 = vsel %vm8851, %v9472, %v9473
      %v9475 = vrot.slane %v9473, 4
      %v9476 = vrot.slane %v8022, 5
      %v9477 = vsel %vm8851, %v9475, %v9476
      %v9478 = vunpack.c.l.b16 %v9474
      %v9479 = vunpack.c.l.b16 %v9477
      %v9480 = vpack.c.b16 %v9479, %v9478
      %v9482 = vsel %vm8471, %v9480, 0
      %v9485 = vsel %vm8520, %v8031, 0
      %9487 = vmatpush.bf16.msra.mxu0 0
      %9488 = vmatpush.bf16.msra.mxu0 0
      %9489 = vmatpush.bf16.msra.mxu0 0
      %9490 = vmatpush.bf16.msra.mxu0 0
      %9491 = vmatpush.bf16.msra.mxu0 0
      %9492 = vmatpush.bf16.msra.mxu0 0
      %9493 = vmatpush.bf16.msra.mxu0 0
      %9494 = vmatpush.bf16.msra.mxu0 %v9485
      %9495 = vmatmul.bf16.gmra.mxu0 %v9016
      %v9496 = vpop.f32.mrf.mxu0
      %v9497 = vadd.f32 0.0, %v9496
      %v9498 = vpop.f32.mrf.mxu0
      %v9499 = vadd.f32 0.0, %v9498
      %9500 = vmatmul.bf16.gmra.mxu0 %v9019
      %v9501 = vpop.f32.mrf.mxu0
      %v9502 = vadd.f32 0.0, %v9501
      %v9503 = vpop.f32.mrf.mxu0
      %v9504 = vadd.f32 0.0, %v9503
      %9505 = vmatmul.bf16.gmra.mxu0 %v9022
      %v9506 = vpop.f32.mrf.mxu0
      %v9507 = vadd.f32 0.0, %v9506
      %v9508 = vpop.f32.mrf.mxu0
      %v9509 = vadd.f32 0.0, %v9508
      %9510 = vmatmul.bf16.gmra.mxu0 %v9025
      %v9511 = vpop.f32.mrf.mxu0
      %v9512 = vadd.f32 0.0, %v9511
      %v9513 = vpop.f32.mrf.mxu0
      %v9514 = vadd.f32 0.0, %v9513
      %9515 = vmatmul.bf16.gmra.mxu0 %v9028
      %v9516 = vpop.f32.mrf.mxu0
      %v9517 = vadd.f32 0.0, %v9516
      %v9518 = vpop.f32.mrf.mxu0
      %v9519 = vadd.f32 0.0, %v9518
      %9520 = vmatmul.bf16.gmra.mxu0 %v9031
      %v9521 = vpop.f32.mrf.mxu0
      %v9522 = vadd.f32 0.0, %v9521
      %v9523 = vpop.f32.mrf.mxu0
      %v9524 = vadd.f32 0.0, %v9523
      %9525 = vmatmul.bf16.gmra.mxu0 %v9034
      %v9526 = vpop.f32.mrf.mxu0
      %v9527 = vadd.f32 0.0, %v9526
      %v9528 = vpop.f32.mrf.mxu0
      %v9529 = vadd.f32 0.0, %v9528
      %9530 = vmatmul.bf16.gmra.mxu0 %v9037
      %v9531 = vpop.f32.mrf.mxu0
      %v9532 = vadd.f32 0.0, %v9531
      %v9533 = vpop.f32.mrf.mxu0
      %v9534 = vadd.f32 0.0, %v9533
      %9535 = vmatmul.bf16.gmra.mxu0 %v9040
      %v9536 = vpop.f32.mrf.mxu0
      %v9537 = vadd.f32 0.0, %v9536
      %v9538 = vpop.f32.mrf.mxu0
      %v9539 = vadd.f32 0.0, %v9538
      %9540 = vmatmul.bf16.gmra.mxu0 %v9043
      %v9541 = vpop.f32.mrf.mxu0
      %v9542 = vadd.f32 0.0, %v9541
      %v9543 = vpop.f32.mrf.mxu0
      %v9544 = vadd.f32 0.0, %v9543
      %9545 = vmatmul.bf16.gmra.mxu0 %v9046
      %v9546 = vpop.f32.mrf.mxu0
      %v9547 = vadd.f32 0.0, %v9546
      %v9548 = vpop.f32.mrf.mxu0
      %v9549 = vadd.f32 0.0, %v9548
      %9550 = vmatmul.bf16.gmra.mxu0 %v9049
      %v9551 = vpop.f32.mrf.mxu0
      %v9552 = vadd.f32 0.0, %v9551
      %v9553 = vpop.f32.mrf.mxu0
      %v9554 = vadd.f32 0.0, %v9553
      %9555 = vmatmul.bf16.gmra.mxu0 %v9052
      %v9556 = vpop.f32.mrf.mxu0
      %v9557 = vadd.f32 0.0, %v9556
      %v9558 = vpop.f32.mrf.mxu0
      %v9559 = vadd.f32 0.0, %v9558
      %9560 = vmatmul.bf16.gmra.mxu0 %v9055
      %v9561 = vpop.f32.mrf.mxu0
      %v9562 = vadd.f32 0.0, %v9561
      %v9563 = vpop.f32.mrf.mxu0
      %v9564 = vadd.f32 0.0, %v9563
      %9565 = vmatmul.bf16.gmra.mxu0 %v9058
      %v9566 = vpop.f32.mrf.mxu0
      %v9567 = vadd.f32 0.0, %v9566
      %v9568 = vpop.f32.mrf.mxu0
      %v9569 = vadd.f32 0.0, %v9568
      %9570 = vmatmul.bf16.gmra.mxu0 %v9482
      %v9571 = vpop.f32.mrf.mxu0
      %v9572 = vadd.f32 0.0, %v9571
      %v9573 = vpop.f32.mrf.mxu0
      %v9574 = vadd.f32 0.0, %v9573
      %9575 = vdwg.mxu0
      %v9576 = vadd.f32 %v9438, %v9497
      %v9577 = vadd.f32 %v9439, %v9499
      %v9578 = vadd.f32 %v9440, %v9502
      %v9579 = vadd.f32 %v9441, %v9504
      %v9580 = vadd.f32 %v9442, %v9507
      %v9581 = vadd.f32 %v9443, %v9509
      %v9582 = vadd.f32 %v9444, %v9512
      %v9583 = vadd.f32 %v9445, %v9514
      %v9584 = vadd.f32 %v9446, %v9517
      %v9585 = vadd.f32 %v9447, %v9519
      %v9586 = vadd.f32 %v9448, %v9522
      %v9587 = vadd.f32 %v9449, %v9524
      %v9588 = vadd.f32 %v9450, %v9527
      %v9589 = vadd.f32 %v9451, %v9529
      %v9590 = vadd.f32 %v9452, %v9532
      %v9591 = vadd.f32 %v9453, %v9534
      %v9592 = vadd.f32 %v9454, %v9537
      %v9593 = vadd.f32 %v9455, %v9539
      %v9594 = vadd.f32 %v9456, %v9542
      %v9595 = vadd.f32 %v9457, %v9544
      %v9596 = vadd.f32 %v9458, %v9547
      %v9597 = vadd.f32 %v9459, %v9549
      %v9598 = vadd.f32 %v9460, %v9552
      %v9599 = vadd.f32 %v9461, %v9554
      %v9600 = vadd.f32 %v9462, %v9557
      %v9601 = vadd.f32 %v9463, %v9559
      %v9602 = vadd.f32 %v9464, %v9562
      %v9603 = vadd.f32 %v9465, %v9564
      %v9604 = vadd.f32 %v9466, %v9567
      %v9605 = vadd.f32 %v9467, %v9569
      %v9606 = vadd.f32 %v9468, %v9572
      %v9607 = vadd.f32 %v9469, %v9574
      %v9610 = vunpack.c.l.b16 %v8023
      %v9611 = vunpack.c.l.b16 %v8024
      %v9612 = vpack.c.b16 %v9611, %v9610
      %v9614 = vsel %vm8471, %v9612, 0
      %v9617 = vsel %vm8520, %v8032, 0
      %9619 = vmatpush.bf16.msra.mxu0 0
      %9620 = vmatpush.bf16.msra.mxu0 0
      %9621 = vmatpush.bf16.msra.mxu0 0
      %9622 = vmatpush.bf16.msra.mxu0 0
      %9623 = vmatpush.bf16.msra.mxu0 0
      %9624 = vmatpush.bf16.msra.mxu0 0
      %9625 = vmatpush.bf16.msra.mxu0 0
      %9626 = vmatpush.bf16.msra.mxu0 %v9617
      %9627 = vmatmul.bf16.gmra.mxu0 %v8700
      %v9628 = vpop.f32.mrf.mxu0
      %v9629 = vadd.f32 0.0, %v9628
      %v9630 = vpop.f32.mrf.mxu0
      %v9631 = vadd.f32 0.0, %v9630
      %9632 = vmatmul.bf16.gmra.mxu0 %v8703
      %v9633 = vpop.f32.mrf.mxu0
      %v9634 = vadd.f32 0.0, %v9633
      %v9635 = vpop.f32.mrf.mxu0
      %v9636 = vadd.f32 0.0, %v9635
      %9637 = vmatmul.bf16.gmra.mxu0 %v8706
      %v9638 = vpop.f32.mrf.mxu0
      %v9639 = vadd.f32 0.0, %v9638
      %v9640 = vpop.f32.mrf.mxu0
      %v9641 = vadd.f32 0.0, %v9640
      %9642 = vmatmul.bf16.gmra.mxu0 %v8709
      %v9643 = vpop.f32.mrf.mxu0
      %v9644 = vadd.f32 0.0, %v9643
      %v9645 = vpop.f32.mrf.mxu0
      %v9646 = vadd.f32 0.0, %v9645
      %9647 = vmatmul.bf16.gmra.mxu0 %v8712
      %v9648 = vpop.f32.mrf.mxu0
      %v9649 = vadd.f32 0.0, %v9648
      %v9650 = vpop.f32.mrf.mxu0
      %v9651 = vadd.f32 0.0, %v9650
      %9652 = vmatmul.bf16.gmra.mxu0 %v8715
      %v9653 = vpop.f32.mrf.mxu0
      %v9654 = vadd.f32 0.0, %v9653
      %v9655 = vpop.f32.mrf.mxu0
      %v9656 = vadd.f32 0.0, %v9655
      %9657 = vmatmul.bf16.gmra.mxu0 %v8718
      %v9658 = vpop.f32.mrf.mxu0
      %v9659 = vadd.f32 0.0, %v9658
      %v9660 = vpop.f32.mrf.mxu0
      %v9661 = vadd.f32 0.0, %v9660
      %9662 = vmatmul.bf16.gmra.mxu0 %v8721
      %v9663 = vpop.f32.mrf.mxu0
      %v9664 = vadd.f32 0.0, %v9663
      %v9665 = vpop.f32.mrf.mxu0
      %v9666 = vadd.f32 0.0, %v9665
      %9667 = vmatmul.bf16.gmra.mxu0 %v8724
      %v9668 = vpop.f32.mrf.mxu0
      %v9669 = vadd.f32 0.0, %v9668
      %v9670 = vpop.f32.mrf.mxu0
      %v9671 = vadd.f32 0.0, %v9670
      %9672 = vmatmul.bf16.gmra.mxu0 %v8727
      %v9673 = vpop.f32.mrf.mxu0
      %v9674 = vadd.f32 0.0, %v9673
      %v9675 = vpop.f32.mrf.mxu0
      %v9676 = vadd.f32 0.0, %v9675
      %9677 = vmatmul.bf16.gmra.mxu0 %v8730
      %v9678 = vpop.f32.mrf.mxu0
      %v9679 = vadd.f32 0.0, %v9678
      %v9680 = vpop.f32.mrf.mxu0
      %v9681 = vadd.f32 0.0, %v9680
      %9682 = vmatmul.bf16.gmra.mxu0 %v8733
      %v9683 = vpop.f32.mrf.mxu0
      %v9684 = vadd.f32 0.0, %v9683
      %v9685 = vpop.f32.mrf.mxu0
      %v9686 = vadd.f32 0.0, %v9685
      %9687 = vmatmul.bf16.gmra.mxu0 %v8736
      %v9688 = vpop.f32.mrf.mxu0
      %v9689 = vadd.f32 0.0, %v9688
      %v9690 = vpop.f32.mrf.mxu0
      %v9691 = vadd.f32 0.0, %v9690
      %9692 = vmatmul.bf16.gmra.mxu0 %v8739
      %v9693 = vpop.f32.mrf.mxu0
      %v9694 = vadd.f32 0.0, %v9693
      %v9695 = vpop.f32.mrf.mxu0
      %v9696 = vadd.f32 0.0, %v9695
      %9697 = vmatmul.bf16.gmra.mxu0 %v9190
      %v9698 = vpop.f32.mrf.mxu0
      %v9699 = vadd.f32 0.0, %v9698
      %v9700 = vpop.f32.mrf.mxu0
      %v9701 = vadd.f32 0.0, %v9700
      %9702 = vmatmul.bf16.gmra.mxu0 %v9614
      %v9703 = vpop.f32.mrf.mxu0
      %v9704 = vadd.f32 0.0, %v9703
      %v9705 = vpop.f32.mrf.mxu0
      %v9706 = vadd.f32 0.0, %v9705
      %9707 = vdwg.mxu0
      %v9708 = vadd.f32 %v9576, %v9629
      %v9709 = vadd.f32 %v9577, %v9631
      %v9710 = vadd.f32 %v9578, %v9634
      %v9711 = vadd.f32 %v9579, %v9636
      %v9712 = vadd.f32 %v9580, %v9639
      %v9713 = vadd.f32 %v9581, %v9641
      %v9714 = vadd.f32 %v9582, %v9644
      %v9715 = vadd.f32 %v9583, %v9646
      %v9716 = vadd.f32 %v9584, %v9649
      %v9717 = vadd.f32 %v9585, %v9651
      %v9718 = vadd.f32 %v9586, %v9654
      %v9719 = vadd.f32 %v9587, %v9656
      %v9720 = vadd.f32 %v9588, %v9659
      %v9721 = vadd.f32 %v9589, %v9661
      %v9722 = vadd.f32 %v9590, %v9664
      %v9723 = vadd.f32 %v9591, %v9666
      %v9724 = vadd.f32 %v9592, %v9669
      %v9725 = vadd.f32 %v9593, %v9671
      %v9726 = vadd.f32 %v9594, %v9674
      %v9727 = vadd.f32 %v9595, %v9676
      %v9728 = vadd.f32 %v9596, %v9679
      %v9729 = vadd.f32 %v9597, %v9681
      %v9730 = vadd.f32 %v9598, %v9684
      %v9731 = vadd.f32 %v9599, %v9686
      %v9732 = vadd.f32 %v9600, %v9689
      %v9733 = vadd.f32 %v9601, %v9691
      %v9734 = vadd.f32 %v9602, %v9694
      %v9735 = vadd.f32 %v9603, %v9696
      %v9736 = vadd.f32 %v9604, %v9699
      %v9737 = vadd.f32 %v9605, %v9701
      %v9738 = vadd.f32 %v9606, %v9704
      %v9739 = vadd.f32 %v9607, %v9706
      %v9741 = vshrl.u32 %v8023, 16
      %v9743 = vrot.slane %v9741, 4
      %v9744 = vshll.u32 %v8023, 16
      %v9746 = vrot.slane %v9744, 5
      %v9747 = vor.u32 %v9743, %v9746
      %v9748 = vrot.slane %v9747, 4
      %v9750 = vshll.u32 %v8024, 16
      %v9752 = vrot.slane %v9750, 5
      %v9753 = vsel %vm8038, %v9748, %v9752
      %v9754 = vshrl.u32 %v8024, 16
      %v9756 = vrot.slane %v9754, 4
      %v9757 = vor.u32 %v9756, %v9752
      %v9758 = vrot.slane %v9757, 4
      %v9760 = vshll.u32 %v8025, 16
      %v9762 = vrot.slane %v9760, 5
      %v9763 = vsel %vm8038, %v9758, %v9762
      %v9764 = vunpack.c.l.b16 %v9753
      %v9765 = vunpack.c.l.b16 %v9763
      %v9766 = vpack.c.b16 %v9765, %v9764
      %v9768 = vsel %vm8471, %v9766, 0
      %v9771 = vsel %vm8520, %v8033, 0
      %9773 = vmatpush.bf16.msra.mxu0 0
      %9774 = vmatpush.bf16.msra.mxu0 0
      %9775 = vmatpush.bf16.msra.mxu0 0
      %9776 = vmatpush.bf16.msra.mxu0 0
      %9777 = vmatpush.bf16.msra.mxu0 0
      %9778 = vmatpush.bf16.msra.mxu0 0
      %9779 = vmatpush.bf16.msra.mxu0 0
      %9780 = vmatpush.bf16.msra.mxu0 %v9771
      %9781 = vmatmul.bf16.gmra.mxu0 %v8479
      %v9782 = vpop.f32.mrf.mxu0
      %v9783 = vadd.f32 0.0, %v9782
      %v9784 = vpop.f32.mrf.mxu0
      %v9785 = vadd.f32 0.0, %v9784
      %9786 = vmatmul.bf16.gmra.mxu0 %v8482
      %v9787 = vpop.f32.mrf.mxu0
      %v9788 = vadd.f32 0.0, %v9787
      %v9789 = vpop.f32.mrf.mxu0
      %v9790 = vadd.f32 0.0, %v9789
      %9791 = vmatmul.bf16.gmra.mxu0 %v8485
      %v9792 = vpop.f32.mrf.mxu0
      %v9793 = vadd.f32 0.0, %v9792
      %v9794 = vpop.f32.mrf.mxu0
      %v9795 = vadd.f32 0.0, %v9794
      %9796 = vmatmul.bf16.gmra.mxu0 %v8488
      %v9797 = vpop.f32.mrf.mxu0
      %v9798 = vadd.f32 0.0, %v9797
      %v9799 = vpop.f32.mrf.mxu0
      %v9800 = vadd.f32 0.0, %v9799
      %9801 = vmatmul.bf16.gmra.mxu0 %v8491
      %v9802 = vpop.f32.mrf.mxu0
      %v9803 = vadd.f32 0.0, %v9802
      %v9804 = vpop.f32.mrf.mxu0
      %v9805 = vadd.f32 0.0, %v9804
      %9806 = vmatmul.bf16.gmra.mxu0 %v8494
      %v9807 = vpop.f32.mrf.mxu0
      %v9808 = vadd.f32 0.0, %v9807
      %v9809 = vpop.f32.mrf.mxu0
      %v9810 = vadd.f32 0.0, %v9809
      %9811 = vmatmul.bf16.gmra.mxu0 %v8497
      %v9812 = vpop.f32.mrf.mxu0
      %v9813 = vadd.f32 0.0, %v9812
      %v9814 = vpop.f32.mrf.mxu0
      %v9815 = vadd.f32 0.0, %v9814
      %9816 = vmatmul.bf16.gmra.mxu0 %v8500
      %v9817 = vpop.f32.mrf.mxu0
      %v9818 = vadd.f32 0.0, %v9817
      %v9819 = vpop.f32.mrf.mxu0
      %v9820 = vadd.f32 0.0, %v9819
      %9821 = vmatmul.bf16.gmra.mxu0 %v8503
      %v9822 = vpop.f32.mrf.mxu0
      %v9823 = vadd.f32 0.0, %v9822
      %v9824 = vpop.f32.mrf.mxu0
      %v9825 = vadd.f32 0.0, %v9824
      %9826 = vmatmul.bf16.gmra.mxu0 %v8506
      %v9827 = vpop.f32.mrf.mxu0
      %v9828 = vadd.f32 0.0, %v9827
      %v9829 = vpop.f32.mrf.mxu0
      %v9830 = vadd.f32 0.0, %v9829
      %9831 = vmatmul.bf16.gmra.mxu0 %v8509
      %v9832 = vpop.f32.mrf.mxu0
      %v9833 = vadd.f32 0.0, %v9832
      %v9834 = vpop.f32.mrf.mxu0
      %v9835 = vadd.f32 0.0, %v9834
      %9836 = vmatmul.bf16.gmra.mxu0 %v8512
      %v9837 = vpop.f32.mrf.mxu0
      %v9838 = vadd.f32 0.0, %v9837
      %v9839 = vpop.f32.mrf.mxu0
      %v9840 = vadd.f32 0.0, %v9839
      %9841 = vmatmul.bf16.gmra.mxu0 %v8515
      %v9842 = vpop.f32.mrf.mxu0
      %v9843 = vadd.f32 0.0, %v9842
      %v9844 = vpop.f32.mrf.mxu0
      %v9845 = vadd.f32 0.0, %v9844
      %9846 = vmatmul.bf16.gmra.mxu0 %v8518
      %v9847 = vpop.f32.mrf.mxu0
      %v9848 = vadd.f32 0.0, %v9847
      %v9849 = vpop.f32.mrf.mxu0
      %v9850 = vadd.f32 0.0, %v9849
      %9851 = vmatmul.bf16.gmra.mxu0 %v9344
      %v9852 = vpop.f32.mrf.mxu0
      %v9853 = vadd.f32 0.0, %v9852
      %v9854 = vpop.f32.mrf.mxu0
      %v9855 = vadd.f32 0.0, %v9854
      %9856 = vmatmul.bf16.gmra.mxu0 %v9768
      %v9857 = vpop.f32.mrf.mxu0
      %v9858 = vadd.f32 0.0, %v9857
      %v9859 = vpop.f32.mrf.mxu0
      %v9860 = vadd.f32 0.0, %v9859
      %9861 = vdwg.mxu0
      %v9862 = vadd.f32 %v9708, %v9783
      %v9863 = vadd.f32 %v9709, %v9785
      %v9864 = vadd.f32 %v9710, %v9788
      %v9865 = vadd.f32 %v9711, %v9790
      %v9866 = vadd.f32 %v9712, %v9793
      %v9867 = vadd.f32 %v9713, %v9795
      %v9868 = vadd.f32 %v9714, %v9798
      %v9869 = vadd.f32 %v9715, %v9800
      %v9870 = vadd.f32 %v9716, %v9803
      %v9871 = vadd.f32 %v9717, %v9805
      %v9872 = vadd.f32 %v9718, %v9808
      %v9873 = vadd.f32 %v9719, %v9810
      %v9874 = vadd.f32 %v9720, %v9813
      %v9875 = vadd.f32 %v9721, %v9815
      %v9876 = vadd.f32 %v9722, %v9818
      %v9877 = vadd.f32 %v9723, %v9820
      %v9878 = vadd.f32 %v9724, %v9823
      %v9879 = vadd.f32 %v9725, %v9825
      %v9880 = vadd.f32 %v9726, %v9828
      %v9881 = vadd.f32 %v9727, %v9830
      %v9882 = vadd.f32 %v9728, %v9833
      %v9883 = vadd.f32 %v9729, %v9835
      %v9884 = vadd.f32 %v9730, %v9838
      %v9885 = vadd.f32 %v9731, %v9840
      %v9886 = vadd.f32 %v9732, %v9843
      %v9887 = vadd.f32 %v9733, %v9845
      %v9888 = vadd.f32 %v9734, %v9848
      %v9889 = vadd.f32 %v9735, %v9850
      %v9890 = vadd.f32 %v9736, %v9853
      %v9891 = vadd.f32 %v9737, %v9855
      %v9892 = vadd.f32 %v9738, %v9858
      %v9893 = vadd.f32 %v9739, %v9860
      %v9895 = vrot.slane %v8023, 5
      %v9896 = vrot.slane %v9895, 4
      %v9897 = vrot.slane %v8024, 5
      %v9898 = vsel %vm8851, %v9896, %v9897
      %v9899 = vrot.slane %v9897, 4
      %v9900 = vrot.slane %v8025, 5
      %v9901 = vsel %vm8851, %v9899, %v9900
      %v9902 = vunpack.c.l.b16 %v9898
      %v9903 = vunpack.c.l.b16 %v9901
      %v9904 = vpack.c.b16 %v9903, %v9902
      %v9906 = vsel %vm8471, %v9904, 0
      %v9909 = vsel %vm8520, %v8034, 0
      %9911 = vmatpush.bf16.msra.mxu0 0
      %9912 = vmatpush.bf16.msra.mxu0 0
      %9913 = vmatpush.bf16.msra.mxu0 0
      %9914 = vmatpush.bf16.msra.mxu0 0
      %9915 = vmatpush.bf16.msra.mxu0 0
      %9916 = vmatpush.bf16.msra.mxu0 0
      %9917 = vmatpush.bf16.msra.mxu0 0
      %9918 = vmatpush.bf16.msra.mxu0 %v9909
      %9919 = vmatmul.bf16.gmra.mxu0 %v9019
      %v9920 = vpop.f32.mrf.mxu0
      %v9921 = vadd.f32 0.0, %v9920
      %v9922 = vpop.f32.mrf.mxu0
      %v9923 = vadd.f32 0.0, %v9922
      %9924 = vmatmul.bf16.gmra.mxu0 %v9022
      %v9925 = vpop.f32.mrf.mxu0
      %v9926 = vadd.f32 0.0, %v9925
      %v9927 = vpop.f32.mrf.mxu0
      %v9928 = vadd.f32 0.0, %v9927
      %9929 = vmatmul.bf16.gmra.mxu0 %v9025
      %v9930 = vpop.f32.mrf.mxu0
      %v9931 = vadd.f32 0.0, %v9930
      %v9932 = vpop.f32.mrf.mxu0
      %v9933 = vadd.f32 0.0, %v9932
      %9934 = vmatmul.bf16.gmra.mxu0 %v9028
      %v9935 = vpop.f32.mrf.mxu0
      %v9936 = vadd.f32 0.0, %v9935
      %v9937 = vpop.f32.mrf.mxu0
      %v9938 = vadd.f32 0.0, %v9937
      %9939 = vmatmul.bf16.gmra.mxu0 %v9031
      %v9940 = vpop.f32.mrf.mxu0
      %v9941 = vadd.f32 0.0, %v9940
      %v9942 = vpop.f32.mrf.mxu0
      %v9943 = vadd.f32 0.0, %v9942
      %9944 = vmatmul.bf16.gmra.mxu0 %v9034
      %v9945 = vpop.f32.mrf.mxu0
      %v9946 = vadd.f32 0.0, %v9945
      %v9947 = vpop.f32.mrf.mxu0
      %v9948 = vadd.f32 0.0, %v9947
      %9949 = vmatmul.bf16.gmra.mxu0 %v9037
      %v9950 = vpop.f32.mrf.mxu0
      %v9951 = vadd.f32 0.0, %v9950
      %v9952 = vpop.f32.mrf.mxu0
      %v9953 = vadd.f32 0.0, %v9952
      %9954 = vmatmul.bf16.gmra.mxu0 %v9040
      %v9955 = vpop.f32.mrf.mxu0
      %v9956 = vadd.f32 0.0, %v9955
      %v9957 = vpop.f32.mrf.mxu0
      %v9958 = vadd.f32 0.0, %v9957
      %9959 = vmatmul.bf16.gmra.mxu0 %v9043
      %v9960 = vpop.f32.mrf.mxu0
      %v9961 = vadd.f32 0.0, %v9960
      %v9962 = vpop.f32.mrf.mxu0
      %v9963 = vadd.f32 0.0, %v9962
      %9964 = vmatmul.bf16.gmra.mxu0 %v9046
      %v9965 = vpop.f32.mrf.mxu0
      %v9966 = vadd.f32 0.0, %v9965
      %v9967 = vpop.f32.mrf.mxu0
      %v9968 = vadd.f32 0.0, %v9967
      %9969 = vmatmul.bf16.gmra.mxu0 %v9049
      %v9970 = vpop.f32.mrf.mxu0
      %v9971 = vadd.f32 0.0, %v9970
      %v9972 = vpop.f32.mrf.mxu0
      %v9973 = vadd.f32 0.0, %v9972
      %9974 = vmatmul.bf16.gmra.mxu0 %v9052
      %v9975 = vpop.f32.mrf.mxu0
      %v9976 = vadd.f32 0.0, %v9975
      %v9977 = vpop.f32.mrf.mxu0
      %v9978 = vadd.f32 0.0, %v9977
      %9979 = vmatmul.bf16.gmra.mxu0 %v9055
      %v9980 = vpop.f32.mrf.mxu0
      %v9981 = vadd.f32 0.0, %v9980
      %v9982 = vpop.f32.mrf.mxu0
      %v9983 = vadd.f32 0.0, %v9982
      %9984 = vmatmul.bf16.gmra.mxu0 %v9058
      %v9985 = vpop.f32.mrf.mxu0
      %v9986 = vadd.f32 0.0, %v9985
      %v9987 = vpop.f32.mrf.mxu0
      %v9988 = vadd.f32 0.0, %v9987
      %9989 = vmatmul.bf16.gmra.mxu0 %v9482
      %v9990 = vpop.f32.mrf.mxu0
      %v9991 = vadd.f32 0.0, %v9990
      %v9992 = vpop.f32.mrf.mxu0
      %v9993 = vadd.f32 0.0, %v9992
      %9994 = vmatmul.bf16.gmra.mxu0 %v9906
      %v9995 = vpop.f32.mrf.mxu0
      %v9996 = vadd.f32 0.0, %v9995
      %v9997 = vpop.f32.mrf.mxu0
      %v9998 = vadd.f32 0.0, %v9997
      %9999 = vdwg.mxu0
      %v10000 = vadd.f32 %v9862, %v9921
      %v10001 = vadd.f32 %v9863, %v9923
      %v10002 = vadd.f32 %v9864, %v9926
      %v10003 = vadd.f32 %v9865, %v9928
      %v10004 = vadd.f32 %v9866, %v9931
      %v10005 = vadd.f32 %v9867, %v9933
      %v10006 = vadd.f32 %v9868, %v9936
      %v10007 = vadd.f32 %v9869, %v9938
      %v10008 = vadd.f32 %v9870, %v9941
      %v10009 = vadd.f32 %v9871, %v9943
      %v10010 = vadd.f32 %v9872, %v9946
      %v10011 = vadd.f32 %v9873, %v9948
      %v10012 = vadd.f32 %v9874, %v9951
      %v10013 = vadd.f32 %v9875, %v9953
      %v10014 = vadd.f32 %v9876, %v9956
      %v10015 = vadd.f32 %v9877, %v9958
      %v10016 = vadd.f32 %v9878, %v9961
      %v10017 = vadd.f32 %v9879, %v9963
      %v10018 = vadd.f32 %v9880, %v9966
      %v10019 = vadd.f32 %v9881, %v9968
      %v10020 = vadd.f32 %v9882, %v9971
      %v10021 = vadd.f32 %v9883, %v9973
      %v10022 = vadd.f32 %v9884, %v9976
      %v10023 = vadd.f32 %v9885, %v9978
      %v10024 = vadd.f32 %v9886, %v9981
      %v10025 = vadd.f32 %v9887, %v9983
      %v10026 = vadd.f32 %v9888, %v9986
      %v10027 = vadd.f32 %v9889, %v9988
      %v10028 = vadd.f32 %v9890, %v9991
      %v10029 = vadd.f32 %v9891, %v9993
      %v10030 = vadd.f32 %v9892, %v9996
      %v10031 = vadd.f32 %v9893, %v9998
      %v10033 = vperm.slane %v8035, 0
      %v10035 = vadd.f32 %v10000, %v10033
      %v10036 = vadd.f32 %v10001, %v10033
      %v10037 = vadd.f32 %v10002, %v10033
      %v10038 = vadd.f32 %v10003, %v10033
      %v10039 = vadd.f32 %v10004, %v10033
      %v10040 = vadd.f32 %v10005, %v10033
      %v10041 = vadd.f32 %v10006, %v10033
      %v10042 = vadd.f32 %v10007, %v10033
      %v10043 = vadd.f32 %v10008, %v10033
      %v10044 = vadd.f32 %v10009, %v10033
      %v10045 = vadd.f32 %v10010, %v10033
      %v10046 = vadd.f32 %v10011, %v10033
      %v10047 = vadd.f32 %v10012, %v10033
      %v10048 = vadd.f32 %v10013, %v10033
      %v10049 = vadd.f32 %v10014, %v10033
      %v10050 = vadd.f32 %v10015, %v10033
      %v10051 = vadd.f32 %v10016, %v10033
      %v10052 = vadd.f32 %v10017, %v10033
      %v10053 = vadd.f32 %v10018, %v10033
      %v10054 = vadd.f32 %v10019, %v10033
      %v10055 = vadd.f32 %v10020, %v10033
      %v10056 = vadd.f32 %v10021, %v10033
      %v10057 = vadd.f32 %v10022, %v10033
      %v10058 = vadd.f32 %v10023, %v10033
      %v10059 = vadd.f32 %v10024, %v10033
      %v10060 = vadd.f32 %v10025, %v10033
      %v10061 = vadd.f32 %v10026, %v10033
      %v10062 = vadd.f32 %v10027, %v10033
      %v10063 = vadd.f32 %v10028, %v10033
      %v10064 = vadd.f32 %v10029, %v10033
      %v10065 = vadd.f32 %v10030, %v10033
      %v10066 = vadd.f32 %v10031, %v10033
      %v10067 = vmax.f32 %v10035, 0.0
      %v10068 = vmax.f32 %v10036, 0.0
      %v10069 = vmax.f32 %v10037, 0.0
      %v10070 = vmax.f32 %v10038, 0.0
      %v10071 = vmax.f32 %v10039, 0.0
      %v10072 = vmax.f32 %v10040, 0.0
      %v10073 = vmax.f32 %v10041, 0.0
      %v10074 = vmax.f32 %v10042, 0.0
      %v10075 = vmax.f32 %v10043, 0.0
      %v10076 = vmax.f32 %v10044, 0.0
      %v10077 = vmax.f32 %v10045, 0.0
      %v10078 = vmax.f32 %v10046, 0.0
      %v10079 = vmax.f32 %v10047, 0.0
      %v10080 = vmax.f32 %v10048, 0.0
      %v10081 = vmax.f32 %v10049, 0.0
      %v10082 = vmax.f32 %v10050, 0.0
      %v10083 = vmax.f32 %v10051, 0.0
      %v10084 = vmax.f32 %v10052, 0.0
      %v10085 = vmax.f32 %v10053, 0.0
      %v10086 = vmax.f32 %v10054, 0.0
      %v10087 = vmax.f32 %v10055, 0.0
      %v10088 = vmax.f32 %v10056, 0.0
      %v10089 = vmax.f32 %v10057, 0.0
      %v10090 = vmax.f32 %v10058, 0.0
      %v10091 = vmax.f32 %v10059, 0.0
      %v10092 = vmax.f32 %v10060, 0.0
      %v10093 = vmax.f32 %v10061, 0.0
      %v10094 = vmax.f32 %v10062, 0.0
      %v10095 = vmax.f32 %v10063, 0.0
      %v10096 = vmax.f32 %v10064, 0.0
      %v10097 = vmax.f32 %v10065, 0.0
      %v10098 = vmax.f32 %v10066, 0.0
      %10099 = vst.msk [vmem:[%s372] sm:$0xff] %vm8471, %v10067
      %10100 = vst.msk [vmem:[%s372 + $0x8] sm:$0xff] %vm8471, %v10068
      %10101 = vst.msk [vmem:[%s372 + $0x10] sm:$0xff] %vm8471, %v10069
      %10102 = vst.msk [vmem:[%s372 + $0x18] sm:$0xff] %vm8471, %v10070
      %10103 = vst.msk [vmem:[%s372 + $0x20] sm:$0xff] %vm8471, %v10071
      %10104 = vst.msk [vmem:[%s372 + $0x28] sm:$0xff] %vm8471, %v10072
      %10105 = vst.msk [vmem:[%s372 + $0x30] sm:$0xff] %vm8471, %v10073
      %10106 = vst.msk [vmem:[%s372 + $0x38] sm:$0xff] %vm8471, %v10074
      %10107 = vst.msk [vmem:[%s372 + $0x40] sm:$0xff] %vm8471, %v10075
      %10108 = vst.msk [vmem:[%s372 + $0x48] sm:$0xff] %vm8471, %v10076
      %10109 = vst.msk [vmem:[%s372 + $0x50] sm:$0xff] %vm8471, %v10077
      %10110 = vst.msk [vmem:[%s372 + $0x58] sm:$0xff] %vm8471, %v10078
      %10111 = vst.msk [vmem:[%s372 + $0x60] sm:$0xff] %vm8471, %v10079
      %10112 = vst.msk [vmem:[%s372 + $0x68] sm:$0xff] %vm8471, %v10080
      %10113 = vst.msk [vmem:[%s372 + $0x70] sm:$0xff] %vm8471, %v10081
      %10114 = vst.msk [vmem:[%s372 + $0x78] sm:$0xff] %vm8471, %v10082
      %10115 = vst.msk [vmem:[%s372 + $0x80] sm:$0xff] %vm8471, %v10083
      %10116 = vst.msk [vmem:[%s372 + $0x88] sm:$0xff] %vm8471, %v10084
      %10117 = vst.msk [vmem:[%s372 + $0x90] sm:$0xff] %vm8471, %v10085
      %10118 = vst.msk [vmem:[%s372 + $0x98] sm:$0xff] %vm8471, %v10086
      %10119 = vst.msk [vmem:[%s372 + $0xa0] sm:$0xff] %vm8471, %v10087
      %10120 = vst.msk [vmem:[%s372 + $0xa8] sm:$0xff] %vm8471, %v10088
      %10121 = vst.msk [vmem:[%s372 + $0xb0] sm:$0xff] %vm8471, %v10089
      %10122 = vst.msk [vmem:[%s372 + $0xb8] sm:$0xff] %vm8471, %v10090
      %10123 = vst.msk [vmem:[%s372 + $0xc0] sm:$0xff] %vm8471, %v10091
      %10124 = vst.msk [vmem:[%s372 + $0xc8] sm:$0xff] %vm8471, %v10092
      %10125 = vst.msk [vmem:[%s372 + $0xd0] sm:$0xff] %vm8471, %v10093
      %10126 = vst.msk [vmem:[%s372 + $0xd8] sm:$0xff] %vm8471, %v10094
      %10127 = vst.msk [vmem:[%s372 + $0xe0] sm:$0xff] %vm8471, %v10095
      %10128 = vst.msk [vmem:[%s372 + $0xe8] sm:$0xff] %vm8471, %v10096
      %10129 = vst.msk [vmem:[%s372 + $0xf0] sm:$0xff] %vm8471, %v10097
      %10130 = vst.msk [vmem:[%s372 + $0xf8] sm:$0xff] %vm8471, %v10098
      %s10131 = smul.u32 16, %s22
      %p10132 = scmp.lt.s32.totalorder %s21, 1
      %s10133 = scalar_select %p10132, %s21, 1
      %p10134 = scmp.lt.s32.totalorder %s10131, 15
      %s10135 = scalar_select %p10134, %s10131, 15
      %s10136 = smul.addr %s10135, 2
      %s10137 = smul.addr %s10133, 32
      %s10138 = sadd.s32 %s10136, %s10137
      %s10139 = smul.addr %s10138, 8
      %s10140 = scalar_lea.vmem %s6, %s10139
      // Predicated region
      $region49: #{_lambda_.1} parent=43 // pred_check
        %p10141 = pneg %p193
      $region50: #{_lambda_.1} parent=43 // pred_check_branch
        %10143 = sbr.rel (%p10141) target = $region52
      $region51: #{_lambda_.1} parent=43 // pred_region
        %s10144 = smul.u32 16, %s22
      $region52: #{_lambda_.1} parent=43 // pred_fallthru
        _
    $region44: #{_lambda_.1} parent=5 // pred_fallthru
      _
    %p10145 = scmp.le.s32.totalorder 2, %s12
    // Predicated region
    $region53: #{_lambda_.1} parent=5 // pred_check
      %p10146 = pneg %p10145
    $region54: #{_lambda_.1} parent=5 // pred_check_branch
      %10148 = sbr.rel (%p10146) target = $region56
    $region55: #{_lambda_.1} parent=5 // pred_region
      %s10149 = ssub.s32 %s12, 2
      // Predicated region
      $region57: #{_lambda_.1} parent=55 // pred_check
        %p10150 = pneg %p199
      $region58: #{_lambda_.1} parent=55 // pred_check_branch
        %10152 = sbr.rel (%p10150) target = $region60
      $region59: #{_lambda_.1} parent=55 // pred_region
        %s10153 = smul.u32 16, %s24
        %p10154 = scmp.lt.s32.totalorder %s23, 1
        %s10155 = scalar_select %p10154, %s23, 1
        %p10156 = scmp.lt.s32.totalorder %s10153, 15
        %s10157 = scalar_select %p10156, %s10153, 15
        %s10158 = smul.addr %s10157, 2
        %s10159 = smul.addr %s10155, 32
        %s10160 = sadd.s32 %s10158, %s10159
        %s10161 = smul.addr %s10160, 8
        %s10162 = scalar_lea.vmem %s6, %s10161
      $region60: #{_lambda_.1} parent=55 // pred_fallthru
        _
    $region56: #{_lambda_.1} parent=5 // pred_fallthru
      _
  $region6: #{_lambda_.1} parent=0 // loop_footer
    %s16 = sadd.s32 1, %s12
  $region7: #{_lambda_.1} parent=0 // loop_footer_branch
    %11 = sbr.rel target = $region3
  $region8: #{_lambda_.1} parent=0 // loop_exit
    _

</llo_original>
